<compile_context>
chip_gen: v7x
topology: tpu7x:2x2x1
jax: 0.10.0
libtpu: 0.0.40
codegen_flags: <defaults>
</compile_context>

<pallas_src>
import jax
import jax.numpy as jnp
from jax.experimental import pallas as pl
from jax.experimental.pallas import tpu as pltpu


# ----------------------------- static geometry ------------------------------
H_IN = W_IN = 32          # CIFAR-10 spatial size implied by x.view(-1, 16*5*5)
C_IN = 3
KS = 5                    # conv kernel size
C1, C2 = 6, 16            # real conv1 / conv2 output channels
LANES = 128               # padded lane width (lane-dense tiles)

CONV1_ROWS = 896          # conv1 rows p = oh*32+ow computed (covers oh < 28)
P1_ROWS = 200             # pool1 rows (196 = 14*14 real, padded to 200)
POOL1_W = 14              # pool1 spatial width == conv2 row stride
PW_ROWS = 192             # kw-packed pool1 rows needed by conv2 (>= 135 + 4*14)
CONV2_ROWS = 136          # conv2 rows p = oh*14+ow computed (covers valid 10x10)
P2_ROWS = 32              # pool2 rows (25 = 5*5 real, padded to 32)


# ------------------------------- Pallas kernel -------------------------------

def _lenet_kernel(x_ref, w1_ref, b1_ref, w2_ref, b2_ref,
                  f1w_ref, f1b_ref, f2w_ref, f2b_ref, f3w_ref, f3b_ref,
                  out_ref,
                  c1_scr, p1_scr, pw_scr, c2_scr, p2_scr):
    f32, bf16 = jnp.float32, jnp.bfloat16

    # ---- conv1 + bias + ReLU : ONE matmul, K = 75 real lanes -----------------
    # x_ref[0] is the fully im2col'ed input [896, 128] (bf16); w1 replicates the
    # 6 output channels into 5 kw lane-groups (lanes kw*6 + c) for conv2's pack.
    c1 = jnp.dot(x_ref[0], w1_ref[...], preferred_element_type=f32)
    c1_scr[...] = jnp.maximum(c1 + b1_ref[...], 0.0)             # [896, 128] f32

    # ---- 2x2 max-pool #1 : strided row gathers (no select matmul) ------------
    # pool row q = 14*i + j  <-  conv1 rows {64i+2j, +1, +32, +33}
    for i in range(14):
        r = 64 * i
        m = jnp.maximum(
            jnp.maximum(c1_scr[pl.ds(r, 14, stride=2), :],
                        c1_scr[pl.ds(r + 1, 14, stride=2), :]),
            jnp.maximum(c1_scr[pl.ds(r + 32, 14, stride=2), :],
                        c1_scr[pl.ds(r + 33, 14, stride=2), :]))
        p1_scr[pl.ds(14 * i, 14), :] = m                         # rows 14i..14i+13

    # ---- pack kw taps into lanes: pw[r, kw*6 + c] = pool1[r + kw, c] ---------
    # (pool1 carries channels replicated in all 5 lane-groups, so the pack is a
    #  row-shifted slice masked to its own lane group -- pure VPU, no rolls.)
    lane = jax.lax.broadcasted_iota(jnp.int32, (PW_ROWS, LANES), 1)
    pw = jnp.where(lane < C1, p1_scr[0:PW_ROWS, :], 0.0)
    for kw in range(1, KS):
        sel = (lane >= kw * C1) & (lane < (kw + 1) * C1)
        pw = pw + jnp.where(sel, p1_scr[kw:kw + PW_ROWS, :], 0.0)
    pw_scr[...] = pw.astype(bf16)                                # [192, 128] bf16

    # ---- conv2 + bias + ReLU : 5 kh-matmuls, K packs (kw, c) in lanes --------
    acc = jnp.dot(pw_scr[0:CONV2_ROWS, :], w2_ref[0], preferred_element_type=f32)
    for kh in range(1, KS):
        sh = kh * POOL1_W
        acc = acc + jnp.dot(pw_scr[sh:sh + CONV2_ROWS, :], w2_ref[kh],
                            preferred_element_type=f32)
    c2_scr[...] = jnp.maximum(acc + b2_ref[...], 0.0)            # [136, 128] f32

    # ---- 2x2 max-pool #2 : strided row gathers -------------------------------
    # pool row q = 5*i + j  <-  conv2 rows {28i+2j, +1, +14, +15}
    for i in range(5):
        r = 28 * i
        m = jnp.maximum(
            jnp.maximum(c2_scr[pl.ds(r, 5, stride=2), :],
                        c2_scr[pl.ds(r + 1, 5, stride=2), :]),
            jnp.maximum(c2_scr[pl.ds(r + 14, 5, stride=2), :],
                        c2_scr[pl.ds(r + 15, 5, stride=2), :]))
        p2_scr[pl.ds(5 * i, 5), :] = m                           # rows 5i..5i+4

    # ---- fc1 (+ReLU): sum over the 25 (h,w) positions, PyTorch CHW order -----
    y = f1b_ref[...]                                             # [1, 128] f32
    for hw in range(KS * KS):
        y = y + jnp.dot(p2_scr[pl.ds(hw, 1), :].astype(bf16), f1w_ref[hw],
                        preferred_element_type=f32)
    y = jnp.maximum(y, 0.0)

    # ---- fc2 (+ReLU), fc3 -----------------------------------------------------
    y = jnp.maximum(
        jnp.dot(y.astype(bf16), f2w_ref[...], preferred_element_type=f32)
        + f2b_ref[...], 0.0)
    y = jnp.dot(y.astype(bf16), f3w_ref[...], preferred_element_type=f32) \
        + f3b_ref[...]

    # lane-dense, sublane-aligned store; wrapper reads row 0, lanes :10
    out_ref[0] = jnp.broadcast_to(y, (8, LANES))


# --------------------------- one-time weight packing --------------------------

def pack_params(p):
    """Hoist all transposes / reshapes / zero-padding / bf16 casts offline."""
    f32, bf16 = jnp.float32, jnp.bfloat16

    def pad_to(a, shape, dtype):
        a = jnp.asarray(a, f32)
        a = jnp.pad(a, [(0, s - d) for d, s in zip(a.shape, shape)])
        return a.astype(dtype)

    # conv1: [OC,IC,KH,KW] -> [KH,KW,IC,OC] -> [75, 6], then replicate the 6
    # output channels into the 5 kw lane-groups used by conv2's lane packing.
    w1 = jnp.transpose(jnp.asarray(p["conv1_w"], f32),
                       (2, 3, 1, 0)).reshape(KS * KS * C_IN, C1)
    w1 = jnp.concatenate([w1] * KS, axis=1)                       # [75, 30]
    b1 = jnp.tile(jnp.asarray(p["conv1_b"], f32), KS).reshape(1, KS * C1)

    # conv2: [OC,IC,KH,KW] -> [KH, KW*IC, OC] = [5, 30, 16]
    w2 = jnp.transpose(jnp.asarray(p["conv2_w"], f32),
                       (2, 3, 1, 0)).reshape(KS, KS * C1, C2)

    # fc1: [120, 400 = 16*25] -> [25(hw), 16(c), 120]  (PyTorch CHW flatten)
    f1 = jnp.transpose(jnp.asarray(p["fc1_w"], f32).reshape(120, C2, KS * KS),
                       (2, 1, 0))

    return dict(
        w1=pad_to(w1, (LANES, LANES), bf16),
        b1=pad_to(b1, (1, LANES), f32),
        w2=pad_to(w2, (KS, LANES, LANES), bf16),
        b2=pad_to(jnp.asarray(p["conv2_b"], f32).reshape(1, C2), (1, LANES), f32),
        f1w=pad_to(f1, (KS * KS, LANES, LANES), bf16),
        f1b=pad_to(jnp.asarray(p["fc1_b"], f32).reshape(1, 120), (1, LANES), f32),
        f2w=pad_to(jnp.asarray(p["fc2_w"], f32).T, (LANES, LANES), bf16),
        f2b=pad_to(jnp.asarray(p["fc2_b"], f32).reshape(1, 84), (1, LANES), f32),
        f3w=pad_to(jnp.asarray(p["fc3_w"], f32).T, (LANES, LANES), bf16),
        f3b=pad_to(jnp.asarray(p["fc3_b"], f32).reshape(1, 10), (1, LANES), f32),
    )


# ---------------------------------- forward -----------------------------------

def _wspec(a):
    if a.ndim == 2:
        return pl.BlockSpec(a.shape, lambda b: (0, 0))
    return pl.BlockSpec(a.shape, lambda b: (0, 0, 0))


@jax.jit
def net_forward(packed, x_nchw):
    B = x_nchw.shape[0]
    assert x_nchw.shape[1:] == (C_IN, H_IN, W_IN)

    # NCHW -> flattened NHWC rows [B, 1024, 3]; full conv1 im2col in the wrapper:
    # x_wide[b, p, (kh*5+kw)*3 + c] = x[b, p + kh*32 + kw, c],  p = oh*32 + ow.
    x = jnp.transpose(x_nchw, (0, 2, 3, 1)).astype(jnp.float32)
    x = x.reshape(B, H_IN * W_IN, C_IN)
    x = jnp.pad(x, ((0, 0), (0, (KS - 1) * (W_IN + 1)), (0, 0)))
    cols = [x[:, kh * W_IN + kw: kh * W_IN + kw + CONV1_ROWS, :]
            for kh in range(KS) for kw in range(KS)]
    x_wide = jnp.concatenate(cols, axis=-1)                       # [B, 896, 75]
    x_wide = jnp.pad(x_wide, ((0, 0), (0, 0), (0, LANES - KS * KS * C_IN)))
    x_wide = x_wide.astype(jnp.bfloat16)                          # [B, 896, 128]

    args = (x_wide, packed["w1"], packed["b1"], packed["w2"], packed["b2"],
            packed["f1w"], packed["f1b"], packed["f2w"], packed["f2b"],
            packed["f3w"], packed["f3b"])

    in_specs = [pl.BlockSpec((1, CONV1_ROWS, LANES), lambda b: (b, 0, 0))]
    in_specs += [_wspec(a) for a in args[1:]]

    out = pl.pallas_call(
        _lenet_kernel,
        out_shape=jax.ShapeDtypeStruct((B, 8, LANES), jnp.float32),
        grid_spec=pltpu.PrefetchScalarGridSpec(
            num_scalar_prefetch=0,
            grid=(B,),
            in_specs=in_specs,
            out_specs=pl.BlockSpec((1, 8, LANES), lambda b: (b, 0, 0)),
            scratch_shapes=[
                pltpu.VMEM((CONV1_ROWS, LANES), jnp.float32),   # conv1 output
                pltpu.VMEM((P1_ROWS, LANES), jnp.float32),      # pool1 output
                pltpu.VMEM((PW_ROWS, LANES), jnp.bfloat16),     # kw-packed pool1
                pltpu.VMEM((CONV2_ROWS, LANES), jnp.float32),   # conv2 output
                pltpu.VMEM((P2_ROWS, LANES), jnp.float32),      # pool2 output
            ]),
        compiler_params=pltpu.CompilerParams(
            dimension_semantics=("parallel",),
            vmem_limit_bytes=16 * 1024 * 1024),
    )(*args)
    return out[:, 0, :10]


# ------------------------------ params / reference ----------------------------

def init_params(key):
    """Deterministic PyTorch-default-style uniform(-1/sqrt(fan_in), +) init."""
    ks = jax.random.split(key, 10)

    def u(k, shape, fan_in):
        bound = 1.0 / (fan_in ** 0.5)
        return jax.random.uniform(k, shape, jnp.float32, -bound, bound)

    return {
        "conv1_w": u(ks[0], (6, 3, 5, 5), 3 * 5 * 5),
        "conv1_b": u(ks[1], (6,), 3 * 5 * 5),
        "conv2_w": u(ks[2], (16, 6, 5, 5), 6 * 5 * 5),
        "conv2_b": u(ks[3], (16,), 6 * 5 * 5),
        "fc1_w": u(ks[4], (120, 400), 400),   # PyTorch Linear: [out, in]
        "fc1_b": u(ks[5], (120,), 400),
        "fc2_w": u(ks[6], (84, 120), 120),
        "fc2_b": u(ks[7], (84,), 120),
        "fc3_w": u(ks[8], (10, 84), 84),
        "fc3_b": u(ks[9], (10,), 84),
    }


def reference_forward(params, x):
    """Pure-JAX re-implementation of the PyTorch Net.forward (for checking)."""
    def conv(x, w, b):
        y = jax.lax.conv_general_dilated(
            x, w, window_strides=(1, 1), padding="VALID",
            dimension_numbers=("NCHW", "OIHW", "NCHW"))
        return y + b[None, :, None, None]

    def pool(x):
        b, c, h, w = x.shape
        return x.reshape(b, c, h // 2, 2, w // 2, 2).max(axis=(3, 5))

    x = pool(jax.nn.relu(conv(x, params["conv1_w"], params["conv1_b"])))
    x = pool(jax.nn.relu(conv(x, params["conv2_w"], params["conv2_b"])))
    x = x.reshape(x.shape[0], 16 * 5 * 5)          # NCHW reshape == CHW order
    x = jax.nn.relu(x @ params["fc1_w"].T + params["fc1_b"])
    x = jax.nn.relu(x @ params["fc2_w"].T + params["fc2_b"])
    return x @ params["fc3_w"].T + params["fc3_b"]


if __name__ == "__main__":
    key = jax.random.PRNGKey(0)
    k_params, k_x = jax.random.split(key)
    params = init_params(k_params)
    packed = pack_params(params)
    # Module's x.view(-1, 16*5*5) implies 32x32 spatial input; small batch of 2.
    x = jax.random.normal(k_x, (2, C_IN, H_IN, W_IN), dtype=jnp.float32)

    out = net_forward(packed, x)
    out = jax.block_until_ready(out)

    assert out.shape == (2, 10), out.shape
    assert out.dtype == jnp.float32
    assert bool(jnp.all(jnp.isfinite(out)))

    # correctness vs. a pure-JAX reference of the PyTorch module
    # (bf16 MXU feeds with f32 accumulation -> expected max abs err ~1e-2)
    ref = reference_forward(params, x)
    err = float(jnp.max(jnp.abs(out - ref)))
    assert err < 5e-2, f"max abs error vs reference: {err}"

    print("KERNEL_OK")
</pallas_src>

<mosaic_0001>
module attributes {stable_mosaic.version = 11 : i64} {
  func.func @_lenet_kernel(%arg0: i32, %arg1: memref<1x896x128xbf16, #tpu.memory_space<vmem>>, %arg2: memref<128x128xbf16, #tpu.memory_space<vmem>>, %arg3: memref<1x128xf32, #tpu.memory_space<vmem>>, %arg4: memref<5x128x128xbf16, #tpu.memory_space<vmem>>, %arg5: memref<1x128xf32, #tpu.memory_space<vmem>>, %arg6: memref<25x128x128xbf16, #tpu.memory_space<vmem>>, %arg7: memref<1x128xf32, #tpu.memory_space<vmem>>, %arg8: memref<128x128xbf16, #tpu.memory_space<vmem>>, %arg9: memref<1x128xf32, #tpu.memory_space<vmem>>, %arg10: memref<128x128xbf16, #tpu.memory_space<vmem>>, %arg11: memref<1x128xf32, #tpu.memory_space<vmem>>, %arg12: memref<1x8x128xf32, #tpu.memory_space<vmem>>, %arg13: memref<896x128xf32, #tpu.memory_space<vmem>>, %arg14: memref<200x128xf32, #tpu.memory_space<vmem>>, %arg15: memref<192x128xbf16, #tpu.memory_space<vmem>>, %arg16: memref<136x128xf32, #tpu.memory_space<vmem>>, %arg17: memref<32x128xf32, #tpu.memory_space<vmem>>) attributes {dimension_semantics = [#tpu.dimension_semantics<parallel>], iteration_bounds = array<i64: 2>, scalar_prefetch = 0 : i64, scratch_operands = 5 : i64, tpu.core_type = #tpu.core_type<tc>, window_params = [{transform_indices = @transform_0, window_bounds = array<i64: 1, 896, 128>}, {pipeline_mode = #tpu.pipeline_mode<synchronous>, transform_indices = @transform_1, window_bounds = array<i64: 128, 128>}, {pipeline_mode = #tpu.pipeline_mode<synchronous>, transform_indices = @transform_2, window_bounds = array<i64: 1, 128>}, {pipeline_mode = #tpu.pipeline_mode<synchronous>, transform_indices = @transform_3, window_bounds = array<i64: 5, 128, 128>}, {pipeline_mode = #tpu.pipeline_mode<synchronous>, transform_indices = @transform_4, window_bounds = array<i64: 1, 128>}, {pipeline_mode = #tpu.pipeline_mode<synchronous>, transform_indices = @transform_5, window_bounds = array<i64: 25, 128, 128>}, {pipeline_mode = #tpu.pipeline_mode<synchronous>, transform_indices = @transform_6, window_bounds = array<i64: 1, 128>}, {pipeline_mode = #tpu.pipeline_mode<synchronous>, transform_indices = @transform_7, window_bounds = array<i64: 128, 128>}, {pipeline_mode = #tpu.pipeline_mode<synchronous>, transform_indices = @transform_8, window_bounds = array<i64: 1, 128>}, {pipeline_mode = #tpu.pipeline_mode<synchronous>, transform_indices = @transform_9, window_bounds = array<i64: 128, 128>}, {pipeline_mode = #tpu.pipeline_mode<synchronous>, transform_indices = @transform_10, window_bounds = array<i64: 1, 128>}, {transform_indices = @transform_11, window_bounds = array<i64: 1, 8, 128>}]} {
    %c0 = arith.constant 0 : index
    %c0_0 = arith.constant 0 : index
    %c0_1 = arith.constant 0 : index
    %0 = vector.load %arg1[%c0, %c0_0, %c0_1] : memref<1x896x128xbf16, #tpu.memory_space<vmem>>, vector<1x896x128xbf16>
    %1 = vector.shape_cast %0 : vector<1x896x128xbf16> to vector<896x128xbf16>
    %c0_2 = arith.constant 0 : index
    %c0_3 = arith.constant 0 : index
    %2 = vector.load %arg2[%c0_2, %c0_3] : memref<128x128xbf16, #tpu.memory_space<vmem>>, vector<128x128xbf16>
    %cst = arith.constant dense<0.000000e+00> : vector<896x128xf32>
    %3 = tpu.matmul %1, %2, %cst {dimension_numbers = #tpu.dot_dimension_numbers<[1], [0], [0], [1], [0, 0, 1, 1], [], []>} : vector<896x128xbf16>, vector<128x128xbf16>, vector<896x128xf32> -> vector<896x128xf32>
    %c0_4 = arith.constant 0 : index
    %c0_5 = arith.constant 0 : index
    %4 = vector.load %arg3[%c0_4, %c0_5] : memref<1x128xf32, #tpu.memory_space<vmem>>, vector<1x128xf32>
    %5 = vector.broadcast %4 : vector<1x128xf32> to vector<896x128xf32>
    %6 = arith.addf %3, %5 : vector<896x128xf32>
    %cst_6 = arith.constant 0.000000e+00 : f32
    %7 = vector.broadcast %cst_6 : f32 to vector<896x128xf32>
    %8 = arith.maximumf %6, %7 : vector<896x128xf32>
    %c0_7 = arith.constant 0 : index
    %c0_8 = arith.constant 0 : index
    %9 = vector.load %arg13[%c0_7, %c0_8] : memref<896x128xf32, #tpu.memory_space<vmem>>, vector<896x128xf32>
    tpu.vector_store %arg13[%c0_7, %c0_8], %8 {strides = array<i32>} : memref<896x128xf32, #tpu.memory_space<vmem>>, vector<896x128xf32>,
    %c0_9 = arith.constant 0 : index
    %c0_10 = arith.constant 0 : index
    %10 = tpu.strided_load %arg13[%c0_9, %c0_10] {strides = array<i32: 2, 1>} : memref<896x128xf32, #tpu.memory_space<vmem>>, vector<14x128xf32>
    %c1 = arith.constant 1 : index
    %c0_11 = arith.constant 0 : index
    %11 = tpu.strided_load %arg13[%c1, %c0_11] {strides = array<i32: 2, 1>} : memref<896x128xf32, #tpu.memory_space<vmem>>, vector<14x128xf32>
    %12 = arith.maximumf %10, %11 : vector<14x128xf32>
    %c32 = arith.constant 32 : index
    %c0_12 = arith.constant 0 : index
    %13 = tpu.strided_load %arg13[%c32, %c0_12] {strides = array<i32: 2, 1>} : memref<896x128xf32, #tpu.memory_space<vmem>>, vector<14x128xf32>
    %c33 = arith.constant 33 : index
    %c0_13 = arith.constant 0 : index
    %14 = tpu.strided_load %arg13[%c33, %c0_13] {strides = array<i32: 2, 1>} : memref<896x128xf32, #tpu.memory_space<vmem>>, vector<14x128xf32>
    %15 = arith.maximumf %13, %14 : vector<14x128xf32>
    %16 = arith.maximumf %12, %15 : vector<14x128xf32>
    %c0_14 = arith.constant 0 : index
    %c0_15 = arith.constant 0 : index
    %17 = vector.load %arg14[%c0_14, %c0_15] : memref<200x128xf32, #tpu.memory_space<vmem>>, vector<14x128xf32>
    tpu.vector_store %arg14[%c0_14, %c0_15], %16 {strides = array<i32>} : memref<200x128xf32, #tpu.memory_space<vmem>>, vector<14x128xf32>,
    %c64 = arith.constant 64 : index
    %c0_16 = arith.constant 0 : index
    %18 = tpu.strided_load %arg13[%c64, %c0_16] {strides = array<i32: 2, 1>} : memref<896x128xf32, #tpu.memory_space<vmem>>, vector<14x128xf32>
    %c65 = arith.constant 65 : index
    %c0_17 = arith.constant 0 : index
    %19 = tpu.strided_load %arg13[%c65, %c0_17] {strides = array<i32: 2, 1>} : memref<896x128xf32, #tpu.memory_space<vmem>>, vector<14x128xf32>
    %20 = arith.maximumf %18, %19 : vector<14x128xf32>
    %c96 = arith.constant 96 : index
    %c0_18 = arith.constant 0 : index
    %21 = tpu.strided_load %arg13[%c96, %c0_18] {strides = array<i32: 2, 1>} : memref<896x128xf32, #tpu.memory_space<vmem>>, vector<14x128xf32>
    %c97 = arith.constant 97 : index
    %c0_19 = arith.constant 0 : index
    %22 = tpu.strided_load %arg13[%c97, %c0_19] {strides = array<i32: 2, 1>} : memref<896x128xf32, #tpu.memory_space<vmem>>, vector<14x128xf32>
    %23 = arith.maximumf %21, %22 : vector<14x128xf32>
    %24 = arith.maximumf %20, %23 : vector<14x128xf32>
    %c14 = arith.constant 14 : index
    %c0_20 = arith.constant 0 : index
    %25 = vector.load %arg14[%c14, %c0_20] : memref<200x128xf32, #tpu.memory_space<vmem>>, vector<14x128xf32>
    tpu.vector_store %arg14[%c14, %c0_20], %24 {strides = array<i32>} : memref<200x128xf32, #tpu.memory_space<vmem>>, vector<14x128xf32>,
    %c128 = arith.constant 128 : index
    %c0_21 = arith.constant 0 : index
    %26 = tpu.strided_load %arg13[%c128, %c0_21] {strides = array<i32: 2, 1>} : memref<896x128xf32, #tpu.memory_space<vmem>>, vector<14x128xf32>
    %c129 = arith.constant 129 : index
    %c0_22 = arith.constant 0 : index
    %27 = tpu.strided_load %arg13[%c129, %c0_22] {strides = array<i32: 2, 1>} : memref<896x128xf32, #tpu.memory_space<vmem>>, vector<14x128xf32>
    %28 = arith.maximumf %26, %27 : vector<14x128xf32>
    %c160 = arith.constant 160 : index
    %c0_23 = arith.constant 0 : index
    %29 = tpu.strided_load %arg13[%c160, %c0_23] {strides = array<i32: 2, 1>} : memref<896x128xf32, #tpu.memory_space<vmem>>, vector<14x128xf32>
    %c161 = arith.constant 161 : index
    %c0_24 = arith.constant 0 : index
    %30 = tpu.strided_load %arg13[%c161, %c0_24] {strides = array<i32: 2, 1>} : memref<896x128xf32, #tpu.memory_space<vmem>>, vector<14x128xf32>
    %31 = arith.maximumf %29, %30 : vector<14x128xf32>
    %32 = arith.maximumf %28, %31 : vector<14x128xf32>
    %c28 = arith.constant 28 : index
    %c0_25 = arith.constant 0 : index
    %33 = vector.load %arg14[%c28, %c0_25] : memref<200x128xf32, #tpu.memory_space<vmem>>, vector<14x128xf32>
    tpu.vector_store %arg14[%c28, %c0_25], %32 {strides = array<i32>} : memref<200x128xf32, #tpu.memory_space<vmem>>, vector<14x128xf32>,
    %c192 = arith.constant 192 : index
    %c0_26 = arith.constant 0 : index
    %34 = tpu.strided_load %arg13[%c192, %c0_26] {strides = array<i32: 2, 1>} : memref<896x128xf32, #tpu.memory_space<vmem>>, vector<14x128xf32>
    %c193 = arith.constant 193 : index
    %c0_27 = arith.constant 0 : index
    %35 = tpu.strided_load %arg13[%c193, %c0_27] {strides = array<i32: 2, 1>} : memref<896x128xf32, #tpu.memory_space<vmem>>, vector<14x128xf32>
    %36 = arith.maximumf %34, %35 : vector<14x128xf32>
    %c224 = arith.constant 224 : index
    %c0_28 = arith.constant 0 : index
    %37 = tpu.strided_load %arg13[%c224, %c0_28] {strides = array<i32: 2, 1>} : memref<896x128xf32, #tpu.memory_space<vmem>>, vector<14x128xf32>
    %c225 = arith.constant 225 : index
    %c0_29 = arith.constant 0 : index
    %38 = tpu.strided_load %arg13[%c225, %c0_29] {strides = array<i32: 2, 1>} : memref<896x128xf32, #tpu.memory_space<vmem>>, vector<14x128xf32>
    %39 = arith.maximumf %37, %38 : vector<14x128xf32>
    %40 = arith.maximumf %36, %39 : vector<14x128xf32>
    %c42 = arith.constant 42 : index
    %c0_30 = arith.constant 0 : index
    %41 = vector.load %arg14[%c42, %c0_30] : memref<200x128xf32, #tpu.memory_space<vmem>>, vector<14x128xf32>
    tpu.vector_store %arg14[%c42, %c0_30], %40 {strides = array<i32>} : memref<200x128xf32, #tpu.memory_space<vmem>>, vector<14x128xf32>,
    %c256 = arith.constant 256 : index
    %c0_31 = arith.constant 0 : index
    %42 = tpu.strided_load %arg13[%c256, %c0_31] {strides = array<i32: 2, 1>} : memref<896x128xf32, #tpu.memory_space<vmem>>, vector<14x128xf32>
    %c257 = arith.constant 257 : index
    %c0_32 = arith.constant 0 : index
    %43 = tpu.strided_load %arg13[%c257, %c0_32] {strides = array<i32: 2, 1>} : memref<896x128xf32, #tpu.memory_space<vmem>>, vector<14x128xf32>
    %44 = arith.maximumf %42, %43 : vector<14x128xf32>
    %c288 = arith.constant 288 : index
    %c0_33 = arith.constant 0 : index
    %45 = tpu.strided_load %arg13[%c288, %c0_33] {strides = array<i32: 2, 1>} : memref<896x128xf32, #tpu.memory_space<vmem>>, vector<14x128xf32>
    %c289 = arith.constant 289 : index
    %c0_34 = arith.constant 0 : index
    %46 = tpu.strided_load %arg13[%c289, %c0_34] {strides = array<i32: 2, 1>} : memref<896x128xf32, #tpu.memory_space<vmem>>, vector<14x128xf32>
    %47 = arith.maximumf %45, %46 : vector<14x128xf32>
    %48 = arith.maximumf %44, %47 : vector<14x128xf32>
    %c56 = arith.constant 56 : index
    %c0_35 = arith.constant 0 : index
    %49 = vector.load %arg14[%c56, %c0_35] : memref<200x128xf32, #tpu.memory_space<vmem>>, vector<14x128xf32>
    tpu.vector_store %arg14[%c56, %c0_35], %48 {strides = array<i32>} : memref<200x128xf32, #tpu.memory_space<vmem>>, vector<14x128xf32>,
    %c320 = arith.constant 320 : index
    %c0_36 = arith.constant 0 : index
    %50 = tpu.strided_load %arg13[%c320, %c0_36] {strides = array<i32: 2, 1>} : memref<896x128xf32, #tpu.memory_space<vmem>>, vector<14x128xf32>
    %c321 = arith.constant 321 : index
    %c0_37 = arith.constant 0 : index
    %51 = tpu.strided_load %arg13[%c321, %c0_37] {strides = array<i32: 2, 1>} : memref<896x128xf32, #tpu.memory_space<vmem>>, vector<14x128xf32>
    %52 = arith.maximumf %50, %51 : vector<14x128xf32>
    %c352 = arith.constant 352 : index
    %c0_38 = arith.constant 0 : index
    %53 = tpu.strided_load %arg13[%c352, %c0_38] {strides = array<i32: 2, 1>} : memref<896x128xf32, #tpu.memory_space<vmem>>, vector<14x128xf32>
    %c353 = arith.constant 353 : index
    %c0_39 = arith.constant 0 : index
    %54 = tpu.strided_load %arg13[%c353, %c0_39] {strides = array<i32: 2, 1>} : memref<896x128xf32, #tpu.memory_space<vmem>>, vector<14x128xf32>
    %55 = arith.maximumf %53, %54 : vector<14x128xf32>
    %56 = arith.maximumf %52, %55 : vector<14x128xf32>
    %c70 = arith.constant 70 : index
    %c0_40 = arith.constant 0 : index
    %57 = vector.load %arg14[%c70, %c0_40] : memref<200x128xf32, #tpu.memory_space<vmem>>, vector<14x128xf32>
    tpu.vector_store %arg14[%c70, %c0_40], %56 {strides = array<i32>} : memref<200x128xf32, #tpu.memory_space<vmem>>, vector<14x128xf32>,
    %c384 = arith.constant 384 : index
    %c0_41 = arith.constant 0 : index
    %58 = tpu.strided_load %arg13[%c384, %c0_41] {strides = array<i32: 2, 1>} : memref<896x128xf32, #tpu.memory_space<vmem>>, vector<14x128xf32>
    %c385 = arith.constant 385 : index
    %c0_42 = arith.constant 0 : index
    %59 = tpu.strided_load %arg13[%c385, %c0_42] {strides = array<i32: 2, 1>} : memref<896x128xf32, #tpu.memory_space<vmem>>, vector<14x128xf32>
    %60 = arith.maximumf %58, %59 : vector<14x128xf32>
    %c416 = arith.constant 416 : index
    %c0_43 = arith.constant 0 : index
    %61 = tpu.strided_load %arg13[%c416, %c0_43] {strides = array<i32: 2, 1>} : memref<896x128xf32, #tpu.memory_space<vmem>>, vector<14x128xf32>
    %c417 = arith.constant 417 : index
    %c0_44 = arith.constant 0 : index
    %62 = tpu.strided_load %arg13[%c417, %c0_44] {strides = array<i32: 2, 1>} : memref<896x128xf32, #tpu.memory_space<vmem>>, vector<14x128xf32>
    %63 = arith.maximumf %61, %62 : vector<14x128xf32>
    %64 = arith.maximumf %60, %63 : vector<14x128xf32>
    %c84 = arith.constant 84 : index
    %c0_45 = arith.constant 0 : index
    %65 = vector.load %arg14[%c84, %c0_45] : memref<200x128xf32, #tpu.memory_space<vmem>>, vector<14x128xf32>
    tpu.vector_store %arg14[%c84, %c0_45], %64 {strides = array<i32>} : memref<200x128xf32, #tpu.memory_space<vmem>>, vector<14x128xf32>,
    %c448 = arith.constant 448 : index
    %c0_46 = arith.constant 0 : index
    %66 = tpu.strided_load %arg13[%c448, %c0_46] {strides = array<i32: 2, 1>} : memref<896x128xf32, #tpu.memory_space<vmem>>, vector<14x128xf32>
    %c449 = arith.constant 449 : index
    %c0_47 = arith.constant 0 : index
    %67 = tpu.strided_load %arg13[%c449, %c0_47] {strides = array<i32: 2, 1>} : memref<896x128xf32, #tpu.memory_space<vmem>>, vector<14x128xf32>
    %68 = arith.maximumf %66, %67 : vector<14x128xf32>
    %c480 = arith.constant 480 : index
    %c0_48 = arith.constant 0 : index
    %69 = tpu.strided_load %arg13[%c480, %c0_48] {strides = array<i32: 2, 1>} : memref<896x128xf32, #tpu.memory_space<vmem>>, vector<14x128xf32>
    %c481 = arith.constant 481 : index
    %c0_49 = arith.constant 0 : index
    %70 = tpu.strided_load %arg13[%c481, %c0_49] {strides = array<i32: 2, 1>} : memref<896x128xf32, #tpu.memory_space<vmem>>, vector<14x128xf32>
    %71 = arith.maximumf %69, %70 : vector<14x128xf32>
    %72 = arith.maximumf %68, %71 : vector<14x128xf32>
    %c98 = arith.constant 98 : index
    %c0_50 = arith.constant 0 : index
    %73 = vector.load %arg14[%c98, %c0_50] : memref<200x128xf32, #tpu.memory_space<vmem>>, vector<14x128xf32>
    tpu.vector_store %arg14[%c98, %c0_50], %72 {strides = array<i32>} : memref<200x128xf32, #tpu.memory_space<vmem>>, vector<14x128xf32>,
    %c512 = arith.constant 512 : index
    %c0_51 = arith.constant 0 : index
    %74 = tpu.strided_load %arg13[%c512, %c0_51] {strides = array<i32: 2, 1>} : memref<896x128xf32, #tpu.memory_space<vmem>>, vector<14x128xf32>
    %c513 = arith.constant 513 : index
    %c0_52 = arith.constant 0 : index
    %75 = tpu.strided_load %arg13[%c513, %c0_52] {strides = array<i32: 2, 1>} : memref<896x128xf32, #tpu.memory_space<vmem>>, vector<14x128xf32>
    %76 = arith.maximumf %74, %75 : vector<14x128xf32>
    %c544 = arith.constant 544 : index
    %c0_53 = arith.constant 0 : index
    %77 = tpu.strided_load %arg13[%c544, %c0_53] {strides = array<i32: 2, 1>} : memref<896x128xf32, #tpu.memory_space<vmem>>, vector<14x128xf32>
    %c545 = arith.constant 545 : index
    %c0_54 = arith.constant 0 : index
    %78 = tpu.strided_load %arg13[%c545, %c0_54] {strides = array<i32: 2, 1>} : memref<896x128xf32, #tpu.memory_space<vmem>>, vector<14x128xf32>
    %79 = arith.maximumf %77, %78 : vector<14x128xf32>
    %80 = arith.maximumf %76, %79 : vector<14x128xf32>
    %c112 = arith.constant 112 : index
    %c0_55 = arith.constant 0 : index
    %81 = vector.load %arg14[%c112, %c0_55] : memref<200x128xf32, #tpu.memory_space<vmem>>, vector<14x128xf32>
    tpu.vector_store %arg14[%c112, %c0_55], %80 {strides = array<i32>} : memref<200x128xf32, #tpu.memory_space<vmem>>, vector<14x128xf32>,
    %c576 = arith.constant 576 : index
    %c0_56 = arith.constant 0 : index
    %82 = tpu.strided_load %arg13[%c576, %c0_56] {strides = array<i32: 2, 1>} : memref<896x128xf32, #tpu.memory_space<vmem>>, vector<14x128xf32>
    %c577 = arith.constant 577 : index
    %c0_57 = arith.constant 0 : index
    %83 = tpu.strided_load %arg13[%c577, %c0_57] {strides = array<i32: 2, 1>} : memref<896x128xf32, #tpu.memory_space<vmem>>, vector<14x128xf32>
    %84 = arith.maximumf %82, %83 : vector<14x128xf32>
    %c608 = arith.constant 608 : index
    %c0_58 = arith.constant 0 : index
    %85 = tpu.strided_load %arg13[%c608, %c0_58] {strides = array<i32: 2, 1>} : memref<896x128xf32, #tpu.memory_space<vmem>>, vector<14x128xf32>
    %c609 = arith.constant 609 : index
    %c0_59 = arith.constant 0 : index
    %86 = tpu.strided_load %arg13[%c609, %c0_59] {strides = array<i32: 2, 1>} : memref<896x128xf32, #tpu.memory_space<vmem>>, vector<14x128xf32>
    %87 = arith.maximumf %85, %86 : vector<14x128xf32>
    %88 = arith.maximumf %84, %87 : vector<14x128xf32>
    %c126 = arith.constant 126 : index
    %c0_60 = arith.constant 0 : index
    %89 = vector.load %arg14[%c126, %c0_60] : memref<200x128xf32, #tpu.memory_space<vmem>>, vector<14x128xf32>
    tpu.vector_store %arg14[%c126, %c0_60], %88 {strides = array<i32>} : memref<200x128xf32, #tpu.memory_space<vmem>>, vector<14x128xf32>,
    %c640 = arith.constant 640 : index
    %c0_61 = arith.constant 0 : index
    %90 = tpu.strided_load %arg13[%c640, %c0_61] {strides = array<i32: 2, 1>} : memref<896x128xf32, #tpu.memory_space<vmem>>, vector<14x128xf32>
    %c641 = arith.constant 641 : index
    %c0_62 = arith.constant 0 : index
    %91 = tpu.strided_load %arg13[%c641, %c0_62] {strides = array<i32: 2, 1>} : memref<896x128xf32, #tpu.memory_space<vmem>>, vector<14x128xf32>
    %92 = arith.maximumf %90, %91 : vector<14x128xf32>
    %c672 = arith.constant 672 : index
    %c0_63 = arith.constant 0 : index
    %93 = tpu.strided_load %arg13[%c672, %c0_63] {strides = array<i32: 2, 1>} : memref<896x128xf32, #tpu.memory_space<vmem>>, vector<14x128xf32>
    %c673 = arith.constant 673 : index
    %c0_64 = arith.constant 0 : index
    %94 = tpu.strided_load %arg13[%c673, %c0_64] {strides = array<i32: 2, 1>} : memref<896x128xf32, #tpu.memory_space<vmem>>, vector<14x128xf32>
    %95 = arith.maximumf %93, %94 : vector<14x128xf32>
    %96 = arith.maximumf %92, %95 : vector<14x128xf32>
    %c140 = arith.constant 140 : index
    %c0_65 = arith.constant 0 : index
    %97 = vector.load %arg14[%c140, %c0_65] : memref<200x128xf32, #tpu.memory_space<vmem>>, vector<14x128xf32>
    tpu.vector_store %arg14[%c140, %c0_65], %96 {strides = array<i32>} : memref<200x128xf32, #tpu.memory_space<vmem>>, vector<14x128xf32>,
    %c704 = arith.constant 704 : index
    %c0_66 = arith.constant 0 : index
    %98 = tpu.strided_load %arg13[%c704, %c0_66] {strides = array<i32: 2, 1>} : memref<896x128xf32, #tpu.memory_space<vmem>>, vector<14x128xf32>
    %c705 = arith.constant 705 : index
    %c0_67 = arith.constant 0 : index
    %99 = tpu.strided_load %arg13[%c705, %c0_67] {strides = array<i32: 2, 1>} : memref<896x128xf32, #tpu.memory_space<vmem>>, vector<14x128xf32>
    %100 = arith.maximumf %98, %99 : vector<14x128xf32>
    %c736 = arith.constant 736 : index
    %c0_68 = arith.constant 0 : index
    %101 = tpu.strided_load %arg13[%c736, %c0_68] {strides = array<i32: 2, 1>} : memref<896x128xf32, #tpu.memory_space<vmem>>, vector<14x128xf32>
    %c737 = arith.constant 737 : index
    %c0_69 = arith.constant 0 : index
    %102 = tpu.strided_load %arg13[%c737, %c0_69] {strides = array<i32: 2, 1>} : memref<896x128xf32, #tpu.memory_space<vmem>>, vector<14x128xf32>
    %103 = arith.maximumf %101, %102 : vector<14x128xf32>
    %104 = arith.maximumf %100, %103 : vector<14x128xf32>
    %c154 = arith.constant 154 : index
    %c0_70 = arith.constant 0 : index
    %105 = vector.load %arg14[%c154, %c0_70] : memref<200x128xf32, #tpu.memory_space<vmem>>, vector<14x128xf32>
    tpu.vector_store %arg14[%c154, %c0_70], %104 {strides = array<i32>} : memref<200x128xf32, #tpu.memory_space<vmem>>, vector<14x128xf32>,
    %c768 = arith.constant 768 : index
    %c0_71 = arith.constant 0 : index
    %106 = tpu.strided_load %arg13[%c768, %c0_71] {strides = array<i32: 2, 1>} : memref<896x128xf32, #tpu.memory_space<vmem>>, vector<14x128xf32>
    %c769 = arith.constant 769 : index
    %c0_72 = arith.constant 0 : index
    %107 = tpu.strided_load %arg13[%c769, %c0_72] {strides = array<i32: 2, 1>} : memref<896x128xf32, #tpu.memory_space<vmem>>, vector<14x128xf32>
    %108 = arith.maximumf %106, %107 : vector<14x128xf32>
    %c800 = arith.constant 800 : index
    %c0_73 = arith.constant 0 : index
    %109 = tpu.strided_load %arg13[%c800, %c0_73] {strides = array<i32: 2, 1>} : memref<896x128xf32, #tpu.memory_space<vmem>>, vector<14x128xf32>
    %c801 = arith.constant 801 : index
    %c0_74 = arith.constant 0 : index
    %110 = tpu.strided_load %arg13[%c801, %c0_74] {strides = array<i32: 2, 1>} : memref<896x128xf32, #tpu.memory_space<vmem>>, vector<14x128xf32>
    %111 = arith.maximumf %109, %110 : vector<14x128xf32>
    %112 = arith.maximumf %108, %111 : vector<14x128xf32>
    %c168 = arith.constant 168 : index
    %c0_75 = arith.constant 0 : index
    %113 = vector.load %arg14[%c168, %c0_75] : memref<200x128xf32, #tpu.memory_space<vmem>>, vector<14x128xf32>
    tpu.vector_store %arg14[%c168, %c0_75], %112 {strides = array<i32>} : memref<200x128xf32, #tpu.memory_space<vmem>>, vector<14x128xf32>,
    %c832 = arith.constant 832 : index
    %c0_76 = arith.constant 0 : index
    %114 = tpu.strided_load %arg13[%c832, %c0_76] {strides = array<i32: 2, 1>} : memref<896x128xf32, #tpu.memory_space<vmem>>, vector<14x128xf32>
    %c833 = arith.constant 833 : index
    %c0_77 = arith.constant 0 : index
    %115 = tpu.strided_load %arg13[%c833, %c0_77] {strides = array<i32: 2, 1>} : memref<896x128xf32, #tpu.memory_space<vmem>>, vector<14x128xf32>
    %116 = arith.maximumf %114, %115 : vector<14x128xf32>
    %c864 = arith.constant 864 : index
    %c0_78 = arith.constant 0 : index
    %117 = tpu.strided_load %arg13[%c864, %c0_78] {strides = array<i32: 2, 1>} : memref<896x128xf32, #tpu.memory_space<vmem>>, vector<14x128xf32>
    %c865 = arith.constant 865 : index
    %c0_79 = arith.constant 0 : index
    %118 = tpu.strided_load %arg13[%c865, %c0_79] {strides = array<i32: 2, 1>} : memref<896x128xf32, #tpu.memory_space<vmem>>, vector<14x128xf32>
    %119 = arith.maximumf %117, %118 : vector<14x128xf32>
    %120 = arith.maximumf %116, %119 : vector<14x128xf32>
    %c182 = arith.constant 182 : index
    %c0_80 = arith.constant 0 : index
    %121 = vector.load %arg14[%c182, %c0_80] : memref<200x128xf32, #tpu.memory_space<vmem>>, vector<14x128xf32>
    tpu.vector_store %arg14[%c182, %c0_80], %120 {strides = array<i32>} : memref<200x128xf32, #tpu.memory_space<vmem>>, vector<14x128xf32>,
    %122 = tpu.iota {dimensions = array<i32: 1>} : vector<192x128xi32>
    %c6_i32 = arith.constant 6 : i32
    %123 = vector.broadcast %c6_i32 : i32 to vector<192x128xi32>
    %124 = arith.cmpi slt, %122, %123 : vector<192x128xi32>
    %c0_81 = arith.constant 0 : index
    %c0_82 = arith.constant 0 : index
    %125 = vector.load %arg14[%c0_81, %c0_82] : memref<200x128xf32, #tpu.memory_space<vmem>>, vector<192x128xf32>
    %cst_83 = arith.constant 0.000000e+00 : f32
    %126 = vector.broadcast %cst_83 : f32 to vector<192x128xf32>
    %127 = arith.select %124, %125, %126 : vector<192x128xi1>, vector<192x128xf32>
    %c6_i32_84 = arith.constant 6 : i32
    %128 = vector.broadcast %c6_i32_84 : i32 to vector<192x128xi32>
    %129 = arith.cmpi sge, %122, %128 : vector<192x128xi32>
    %c12_i32 = arith.constant 12 : i32
    %130 = vector.broadcast %c12_i32 : i32 to vector<192x128xi32>
    %131 = arith.cmpi slt, %122, %130 : vector<192x128xi32>
    %132 = arith.andi %129, %131 : vector<192x128xi1>
    %c1_85 = arith.constant 1 : index
    %c0_86 = arith.constant 0 : index
    %133 = vector.load %arg14[%c1_85, %c0_86] : memref<200x128xf32, #tpu.memory_space<vmem>>, vector<192x128xf32>
    %cst_87 = arith.constant 0.000000e+00 : f32
    %134 = vector.broadcast %cst_87 : f32 to vector<192x128xf32>
    %135 = arith.select %132, %133, %134 : vector<192x128xi1>, vector<192x128xf32>
    %136 = arith.addf %127, %135 : vector<192x128xf32>
    %c12_i32_88 = arith.constant 12 : i32
    %137 = vector.broadcast %c12_i32_88 : i32 to vector<192x128xi32>
    %138 = arith.cmpi sge, %122, %137 : vector<192x128xi32>
    %c18_i32 = arith.constant 18 : i32
    %139 = vector.broadcast %c18_i32 : i32 to vector<192x128xi32>
    %140 = arith.cmpi slt, %122, %139 : vector<192x128xi32>
    %141 = arith.andi %138, %140 : vector<192x128xi1>
    %c2 = arith.constant 2 : index
    %c0_89 = arith.constant 0 : index
    %142 = vector.load %arg14[%c2, %c0_89] : memref<200x128xf32, #tpu.memory_space<vmem>>, vector<192x128xf32>
    %cst_90 = arith.constant 0.000000e+00 : f32
    %143 = vector.broadcast %cst_90 : f32 to vector<192x128xf32>
    %144 = arith.select %141, %142, %143 : vector<192x128xi1>, vector<192x128xf32>
    %145 = arith.addf %136, %144 : vector<192x128xf32>
    %c18_i32_91 = arith.constant 18 : i32
    %146 = vector.broadcast %c18_i32_91 : i32 to vector<192x128xi32>
    %147 = arith.cmpi sge, %122, %146 : vector<192x128xi32>
    %c24_i32 = arith.constant 24 : i32
    %148 = vector.broadcast %c24_i32 : i32 to vector<192x128xi32>
    %149 = arith.cmpi slt, %122, %148 : vector<192x128xi32>
    %150 = arith.andi %147, %149 : vector<192x128xi1>
    %c3 = arith.constant 3 : index
    %c0_92 = arith.constant 0 : index
    %151 = vector.load %arg14[%c3, %c0_92] : memref<200x128xf32, #tpu.memory_space<vmem>>, vector<192x128xf32>
    %cst_93 = arith.constant 0.000000e+00 : f32
    %152 = vector.broadcast %cst_93 : f32 to vector<192x128xf32>
    %153 = arith.select %150, %151, %152 : vector<192x128xi1>, vector<192x128xf32>
    %154 = arith.addf %145, %153 : vector<192x128xf32>
    %c24_i32_94 = arith.constant 24 : i32
    %155 = vector.broadcast %c24_i32_94 : i32 to vector<192x128xi32>
    %156 = arith.cmpi sge, %122, %155 : vector<192x128xi32>
    %c30_i32 = arith.constant 30 : i32
    %157 = vector.broadcast %c30_i32 : i32 to vector<192x128xi32>
    %158 = arith.cmpi slt, %122, %157 : vector<192x128xi32>
    %159 = arith.andi %156, %158 : vector<192x128xi1>
    %c4 = arith.constant 4 : index
    %c0_95 = arith.constant 0 : index
    %160 = vector.load %arg14[%c4, %c0_95] : memref<200x128xf32, #tpu.memory_space<vmem>>, vector<192x128xf32>
    %cst_96 = arith.constant 0.000000e+00 : f32
    %161 = vector.broadcast %cst_96 : f32 to vector<192x128xf32>
    %162 = arith.select %159, %160, %161 : vector<192x128xi1>, vector<192x128xf32>
    %163 = arith.addf %154, %162 : vector<192x128xf32>
    %164 = arith.truncf %163 : vector<192x128xf32> to vector<192x128xbf16>
    %c0_97 = arith.constant 0 : index
    %c0_98 = arith.constant 0 : index
    %165 = vector.load %arg15[%c0_97, %c0_98] : memref<192x128xbf16, #tpu.memory_space<vmem>>, vector<192x128xbf16>
    tpu.vector_store %arg15[%c0_97, %c0_98], %164 {strides = array<i32>} : memref<192x128xbf16, #tpu.memory_space<vmem>>, vector<192x128xbf16>,
    %c0_99 = arith.constant 0 : index
    %c0_100 = arith.constant 0 : index
    %166 = vector.load %arg15[%c0_99, %c0_100] : memref<192x128xbf16, #tpu.memory_space<vmem>>, vector<136x128xbf16>
    %c0_101 = arith.constant 0 : index
    %c0_102 = arith.constant 0 : index
    %c0_103 = arith.constant 0 : index
    %167 = vector.load %arg4[%c0_101, %c0_102, %c0_103] : memref<5x128x128xbf16, #tpu.memory_space<vmem>>, vector<1x128x128xbf16>
    %168 = vector.shape_cast %167 : vector<1x128x128xbf16> to vector<128x128xbf16>
    %cst_104 = arith.constant dense<0.000000e+00> : vector<136x128xf32>
    %169 = tpu.matmul %166, %168, %cst_104 {dimension_numbers = #tpu.dot_dimension_numbers<[1], [0], [0], [1], [0, 0, 1, 1], [], []>} : vector<136x128xbf16>, vector<128x128xbf16>, vector<136x128xf32> -> vector<136x128xf32>
    %c14_105 = arith.constant 14 : index
    %c0_106 = arith.constant 0 : index
    %170 = vector.load %arg15[%c14_105, %c0_106] : memref<192x128xbf16, #tpu.memory_space<vmem>>, vector<136x128xbf16>
    %c1_107 = arith.constant 1 : index
    %c0_108 = arith.constant 0 : index
    %c0_109 = arith.constant 0 : index
    %171 = vector.load %arg4[%c1_107, %c0_108, %c0_109] : memref<5x128x128xbf16, #tpu.memory_space<vmem>>, vector<1x128x128xbf16>
    %172 = vector.shape_cast %171 : vector<1x128x128xbf16> to vector<128x128xbf16>
    %cst_110 = arith.constant dense<0.000000e+00> : vector<136x128xf32>
    %173 = tpu.matmul %170, %172, %cst_110 {dimension_numbers = #tpu.dot_dimension_numbers<[1], [0], [0], [1], [0, 0, 1, 1], [], []>} : vector<136x128xbf16>, vector<128x128xbf16>, vector<136x128xf32> -> vector<136x128xf32>
    %174 = arith.addf %169, %173 : vector<136x128xf32>
    %c28_111 = arith.constant 28 : index
    %c0_112 = arith.constant 0 : index
    %175 = vector.load %arg15[%c28_111, %c0_112] : memref<192x128xbf16, #tpu.memory_space<vmem>>, vector<136x128xbf16>
    %c2_113 = arith.constant 2 : index
    %c0_114 = arith.constant 0 : index
    %c0_115 = arith.constant 0 : index
    %176 = vector.load %arg4[%c2_113, %c0_114, %c0_115] : memref<5x128x128xbf16, #tpu.memory_space<vmem>>, vector<1x128x128xbf16>
    %177 = vector.shape_cast %176 : vector<1x128x128xbf16> to vector<128x128xbf16>
    %cst_116 = arith.constant dense<0.000000e+00> : vector<136x128xf32>
    %178 = tpu.matmul %175, %177, %cst_116 {dimension_numbers = #tpu.dot_dimension_numbers<[1], [0], [0], [1], [0, 0, 1, 1], [], []>} : vector<136x128xbf16>, vector<128x128xbf16>, vector<136x128xf32> -> vector<136x128xf32>
    %179 = arith.addf %174, %178 : vector<136x128xf32>
    %c42_117 = arith.constant 42 : index
    %c0_118 = arith.constant 0 : index
    %180 = vector.load %arg15[%c42_117, %c0_118] : memref<192x128xbf16, #tpu.memory_space<vmem>>, vector<136x128xbf16>
    %c3_119 = arith.constant 3 : index
    %c0_120 = arith.constant 0 : index
    %c0_121 = arith.constant 0 : index
    %181 = vector.load %arg4[%c3_119, %c0_120, %c0_121] : memref<5x128x128xbf16, #tpu.memory_space<vmem>>, vector<1x128x128xbf16>
    %182 = vector.shape_cast %181 : vector<1x128x128xbf16> to vector<128x128xbf16>
    %cst_122 = arith.constant dense<0.000000e+00> : vector<136x128xf32>
    %183 = tpu.matmul %180, %182, %cst_122 {dimension_numbers = #tpu.dot_dimension_numbers<[1], [0], [0], [1], [0, 0, 1, 1], [], []>} : vector<136x128xbf16>, vector<128x128xbf16>, vector<136x128xf32> -> vector<136x128xf32>
    %184 = arith.addf %179, %183 : vector<136x128xf32>
    %c56_123 = arith.constant 56 : index
    %c0_124 = arith.constant 0 : index
    %185 = vector.load %arg15[%c56_123, %c0_124] : memref<192x128xbf16, #tpu.memory_space<vmem>>, vector<136x128xbf16>
    %c4_125 = arith.constant 4 : index
    %c0_126 = arith.constant 0 : index
    %c0_127 = arith.constant 0 : index
    %186 = vector.load %arg4[%c4_125, %c0_126, %c0_127] : memref<5x128x128xbf16, #tpu.memory_space<vmem>>, vector<1x128x128xbf16>
    %187 = vector.shape_cast %186 : vector<1x128x128xbf16> to vector<128x128xbf16>
    %cst_128 = arith.constant dense<0.000000e+00> : vector<136x128xf32>
    %188 = tpu.matmul %185, %187, %cst_128 {dimension_numbers = #tpu.dot_dimension_numbers<[1], [0], [0], [1], [0, 0, 1, 1], [], []>} : vector<136x128xbf16>, vector<128x128xbf16>, vector<136x128xf32> -> vector<136x128xf32>
    %189 = arith.addf %184, %188 : vector<136x128xf32>
    %c0_129 = arith.constant 0 : index
    %c0_130 = arith.constant 0 : index
    %190 = vector.load %arg5[%c0_129, %c0_130] : memref<1x128xf32, #tpu.memory_space<vmem>>, vector<1x128xf32>
    %191 = vector.broadcast %190 : vector<1x128xf32> to vector<136x128xf32>
    %192 = arith.addf %189, %191 : vector<136x128xf32>
    %cst_131 = arith.constant 0.000000e+00 : f32
    %193 = vector.broadcast %cst_131 : f32 to vector<136x128xf32>
    %194 = arith.maximumf %192, %193 : vector<136x128xf32>
    %c0_132 = arith.constant 0 : index
    %c0_133 = arith.constant 0 : index
    %195 = vector.load %arg16[%c0_132, %c0_133] : memref<136x128xf32, #tpu.memory_space<vmem>>, vector<136x128xf32>
    tpu.vector_store %arg16[%c0_132, %c0_133], %194 {strides = array<i32>} : memref<136x128xf32, #tpu.memory_space<vmem>>, vector<136x128xf32>,
    %c0_134 = arith.constant 0 : index
    %c0_135 = arith.constant 0 : index
    %196 = tpu.strided_load %arg16[%c0_134, %c0_135] {strides = array<i32: 2, 1>} : memref<136x128xf32, #tpu.memory_space<vmem>>, vector<5x128xf32>
    %c1_136 = arith.constant 1 : index
    %c0_137 = arith.constant 0 : index
    %197 = tpu.strided_load %arg16[%c1_136, %c0_137] {strides = array<i32: 2, 1>} : memref<136x128xf32, #tpu.memory_space<vmem>>, vector<5x128xf32>
    %198 = arith.maximumf %196, %197 : vector<5x128xf32>
    %c14_138 = arith.constant 14 : index
    %c0_139 = arith.constant 0 : index
    %199 = tpu.strided_load %arg16[%c14_138, %c0_139] {strides = array<i32: 2, 1>} : memref<136x128xf32, #tpu.memory_space<vmem>>, vector<5x128xf32>
    %c15 = arith.constant 15 : index
    %c0_140 = arith.constant 0 : index
    %200 = tpu.strided_load %arg16[%c15, %c0_140] {strides = array<i32: 2, 1>} : memref<136x128xf32, #tpu.memory_space<vmem>>, vector<5x128xf32>
    %201 = arith.maximumf %199, %200 : vector<5x128xf32>
    %202 = arith.maximumf %198, %201 : vector<5x128xf32>
    %c0_141 = arith.constant 0 : index
    %c0_142 = arith.constant 0 : index
    %203 = vector.load %arg17[%c0_141, %c0_142] : memref<32x128xf32, #tpu.memory_space<vmem>>, vector<5x128xf32>
    tpu.vector_store %arg17[%c0_141, %c0_142], %202 {strides = array<i32>} : memref<32x128xf32, #tpu.memory_space<vmem>>, vector<5x128xf32>,
    %c28_143 = arith.constant 28 : index
    %c0_144 = arith.constant 0 : index
    %204 = tpu.strided_load %arg16[%c28_143, %c0_144] {strides = array<i32: 2, 1>} : memref<136x128xf32, #tpu.memory_space<vmem>>, vector<5x128xf32>
    %c29 = arith.constant 29 : index
    %c0_145 = arith.constant 0 : index
    %205 = tpu.strided_load %arg16[%c29, %c0_145] {strides = array<i32: 2, 1>} : memref<136x128xf32, #tpu.memory_space<vmem>>, vector<5x128xf32>
    %206 = arith.maximumf %204, %205 : vector<5x128xf32>
    %c42_146 = arith.constant 42 : index
    %c0_147 = arith.constant 0 : index
    %207 = tpu.strided_load %arg16[%c42_146, %c0_147] {strides = array<i32: 2, 1>} : memref<136x128xf32, #tpu.memory_space<vmem>>, vector<5x128xf32>
    %c43 = arith.constant 43 : index
    %c0_148 = arith.constant 0 : index
    %208 = tpu.strided_load %arg16[%c43, %c0_148] {strides = array<i32: 2, 1>} : memref<136x128xf32, #tpu.memory_space<vmem>>, vector<5x128xf32>
    %209 = arith.maximumf %207, %208 : vector<5x128xf32>
    %210 = arith.maximumf %206, %209 : vector<5x128xf32>
    %c5 = arith.constant 5 : index
    %c0_149 = arith.constant 0 : index
    %211 = vector.load %arg17[%c5, %c0_149] : memref<32x128xf32, #tpu.memory_space<vmem>>, vector<5x128xf32>
    tpu.vector_store %arg17[%c5, %c0_149], %210 {strides = array<i32>} : memref<32x128xf32, #tpu.memory_space<vmem>>, vector<5x128xf32>,
    %c56_150 = arith.constant 56 : index
    %c0_151 = arith.constant 0 : index
    %212 = tpu.strided_load %arg16[%c56_150, %c0_151] {strides = array<i32: 2, 1>} : memref<136x128xf32, #tpu.memory_space<vmem>>, vector<5x128xf32>
    %c57 = arith.constant 57 : index
    %c0_152 = arith.constant 0 : index
    %213 = tpu.strided_load %arg16[%c57, %c0_152] {strides = array<i32: 2, 1>} : memref<136x128xf32, #tpu.memory_space<vmem>>, vector<5x128xf32>
    %214 = arith.maximumf %212, %213 : vector<5x128xf32>
    %c70_153 = arith.constant 70 : index
    %c0_154 = arith.constant 0 : index
    %215 = tpu.strided_load %arg16[%c70_153, %c0_154] {strides = array<i32: 2, 1>} : memref<136x128xf32, #tpu.memory_space<vmem>>, vector<5x128xf32>
    %c71 = arith.constant 71 : index
    %c0_155 = arith.constant 0 : index
    %216 = tpu.strided_load %arg16[%c71, %c0_155] {strides = array<i32: 2, 1>} : memref<136x128xf32, #tpu.memory_space<vmem>>, vector<5x128xf32>
    %217 = arith.maximumf %215, %216 : vector<5x128xf32>
    %218 = arith.maximumf %214, %217 : vector<5x128xf32>
    %c10 = arith.constant 10 : index
    %c0_156 = arith.constant 0 : index
    %219 = vector.load %arg17[%c10, %c0_156] : memref<32x128xf32, #tpu.memory_space<vmem>>, vector<5x128xf32>
    tpu.vector_store %arg17[%c10, %c0_156], %218 {strides = array<i32>} : memref<32x128xf32, #tpu.memory_space<vmem>>, vector<5x128xf32>,
    %c84_157 = arith.constant 84 : index
    %c0_158 = arith.constant 0 : index
    %220 = tpu.strided_load %arg16[%c84_157, %c0_158] {strides = array<i32: 2, 1>} : memref<136x128xf32, #tpu.memory_space<vmem>>, vector<5x128xf32>
    %c85 = arith.constant 85 : index
    %c0_159 = arith.constant 0 : index
    %221 = tpu.strided_load %arg16[%c85, %c0_159] {strides = array<i32: 2, 1>} : memref<136x128xf32, #tpu.memory_space<vmem>>, vector<5x128xf32>
    %222 = arith.maximumf %220, %221 : vector<5x128xf32>
    %c98_160 = arith.constant 98 : index
    %c0_161 = arith.constant 0 : index
    %223 = tpu.strided_load %arg16[%c98_160, %c0_161] {strides = array<i32: 2, 1>} : memref<136x128xf32, #tpu.memory_space<vmem>>, vector<5x128xf32>
    %c99 = arith.constant 99 : index
    %c0_162 = arith.constant 0 : index
    %224 = tpu.strided_load %arg16[%c99, %c0_162] {strides = array<i32: 2, 1>} : memref<136x128xf32, #tpu.memory_space<vmem>>, vector<5x128xf32>
    %225 = arith.maximumf %223, %224 : vector<5x128xf32>
    %226 = arith.maximumf %222, %225 : vector<5x128xf32>
    %c15_163 = arith.constant 15 : index
    %c0_164 = arith.constant 0 : index
    %227 = vector.load %arg17[%c15_163, %c0_164] : memref<32x128xf32, #tpu.memory_space<vmem>>, vector<5x128xf32>
    tpu.vector_store %arg17[%c15_163, %c0_164], %226 {strides = array<i32>} : memref<32x128xf32, #tpu.memory_space<vmem>>, vector<5x128xf32>,
    %c112_165 = arith.constant 112 : index
    %c0_166 = arith.constant 0 : index
    %228 = tpu.strided_load %arg16[%c112_165, %c0_166] {strides = array<i32: 2, 1>} : memref<136x128xf32, #tpu.memory_space<vmem>>, vector<5x128xf32>
    %c113 = arith.constant 113 : index
    %c0_167 = arith.constant 0 : index
    %229 = tpu.strided_load %arg16[%c113, %c0_167] {strides = array<i32: 2, 1>} : memref<136x128xf32, #tpu.memory_space<vmem>>, vector<5x128xf32>
    %230 = arith.maximumf %228, %229 : vector<5x128xf32>
    %c126_168 = arith.constant 126 : index
    %c0_169 = arith.constant 0 : index
    %231 = tpu.strided_load %arg16[%c126_168, %c0_169] {strides = array<i32: 2, 1>} : memref<136x128xf32, #tpu.memory_space<vmem>>, vector<5x128xf32>
    %c127 = arith.constant 127 : index
    %c0_170 = arith.constant 0 : index
    %232 = tpu.strided_load %arg16[%c127, %c0_170] {strides = array<i32: 2, 1>} : memref<136x128xf32, #tpu.memory_space<vmem>>, vector<5x128xf32>
    %233 = arith.maximumf %231, %232 : vector<5x128xf32>
    %234 = arith.maximumf %230, %233 : vector<5x128xf32>
    %c20 = arith.constant 20 : index
    %c0_171 = arith.constant 0 : index
    %235 = vector.load %arg17[%c20, %c0_171] : memref<32x128xf32, #tpu.memory_space<vmem>>, vector<5x128xf32>
    tpu.vector_store %arg17[%c20, %c0_171], %234 {strides = array<i32>} : memref<32x128xf32, #tpu.memory_space<vmem>>, vector<5x128xf32>,
    %c0_172 = arith.constant 0 : index
    %c0_173 = arith.constant 0 : index
    %236 = vector.load %arg7[%c0_172, %c0_173] : memref<1x128xf32, #tpu.memory_space<vmem>>, vector<1x128xf32>
    %c0_174 = arith.constant 0 : index
    %c0_175 = arith.constant 0 : index
    %237 = vector.load %arg17[%c0_174, %c0_175] : memref<32x128xf32, #tpu.memory_space<vmem>>, vector<1x128xf32>
    %238 = arith.truncf %237 : vector<1x128xf32> to vector<1x128xbf16>
    %c0_176 = arith.constant 0 : index
    %c0_177 = arith.constant 0 : index
    %c0_178 = arith.constant 0 : index
    %239 = vector.load %arg6[%c0_176, %c0_177, %c0_178] : memref<25x128x128xbf16, #tpu.memory_space<vmem>>, vector<1x128x128xbf16>
    %240 = vector.shape_cast %239 : vector<1x128x128xbf16> to vector<128x128xbf16>
    %cst_179 = arith.constant dense<0.000000e+00> : vector<1x128xf32>
    %241 = tpu.matmul %238, %240, %cst_179 {dimension_numbers = #tpu.dot_dimension_numbers<[1], [0], [0], [1], [0, 0, 1, 1], [], []>} : vector<1x128xbf16>, vector<128x128xbf16>, vector<1x128xf32> -> vector<1x128xf32>
    %242 = arith.addf %236, %241 : vector<1x128xf32>
    %c1_180 = arith.constant 1 : index
    %c0_181 = arith.constant 0 : index
    %243 = vector.load %arg17[%c1_180, %c0_181] : memref<32x128xf32, #tpu.memory_space<vmem>>, vector<1x128xf32>
    %244 = arith.truncf %243 : vector<1x128xf32> to vector<1x128xbf16>
    %c1_182 = arith.constant 1 : index
    %c0_183 = arith.constant 0 : index
    %c0_184 = arith.constant 0 : index
    %245 = vector.load %arg6[%c1_182, %c0_183, %c0_184] : memref<25x128x128xbf16, #tpu.memory_space<vmem>>, vector<1x128x128xbf16>
    %246 = vector.shape_cast %245 : vector<1x128x128xbf16> to vector<128x128xbf16>
    %cst_185 = arith.constant dense<0.000000e+00> : vector<1x128xf32>
    %247 = tpu.matmul %244, %246, %cst_185 {dimension_numbers = #tpu.dot_dimension_numbers<[1], [0], [0], [1], [0, 0, 1, 1], [], []>} : vector<1x128xbf16>, vector<128x128xbf16>, vector<1x128xf32> -> vector<1x128xf32>
    %248 = arith.addf %242, %247 : vector<1x128xf32>
    %c2_186 = arith.constant 2 : index
    %c0_187 = arith.constant 0 : index
    %249 = vector.load %arg17[%c2_186, %c0_187] : memref<32x128xf32, #tpu.memory_space<vmem>>, vector<1x128xf32>
    %250 = arith.truncf %249 : vector<1x128xf32> to vector<1x128xbf16>
    %c2_188 = arith.constant 2 : index
    %c0_189 = arith.constant 0 : index
    %c0_190 = arith.constant 0 : index
    %251 = vector.load %arg6[%c2_188, %c0_189, %c0_190] : memref<25x128x128xbf16, #tpu.memory_space<vmem>>, vector<1x128x128xbf16>
    %252 = vector.shape_cast %251 : vector<1x128x128xbf16> to vector<128x128xbf16>
    %cst_191 = arith.constant dense<0.000000e+00> : vector<1x128xf32>
    %253 = tpu.matmul %250, %252, %cst_191 {dimension_numbers = #tpu.dot_dimension_numbers<[1], [0], [0], [1], [0, 0, 1, 1], [], []>} : vector<1x128xbf16>, vector<128x128xbf16>, vector<1x128xf32> -> vector<1x128xf32>
    %254 = arith.addf %248, %253 : vector<1x128xf32>
    %c3_192 = arith.constant 3 : index
    %c0_193 = arith.constant 0 : index
    %255 = vector.load %arg17[%c3_192, %c0_193] : memref<32x128xf32, #tpu.memory_space<vmem>>, vector<1x128xf32>
    %256 = arith.truncf %255 : vector<1x128xf32> to vector<1x128xbf16>
    %c3_194 = arith.constant 3 : index
    %c0_195 = arith.constant 0 : index
    %c0_196 = arith.constant 0 : index
    %257 = vector.load %arg6[%c3_194, %c0_195, %c0_196] : memref<25x128x128xbf16, #tpu.memory_space<vmem>>, vector<1x128x128xbf16>
    %258 = vector.shape_cast %257 : vector<1x128x128xbf16> to vector<128x128xbf16>
    %cst_197 = arith.constant dense<0.000000e+00> : vector<1x128xf32>
    %259 = tpu.matmul %256, %258, %cst_197 {dimension_numbers = #tpu.dot_dimension_numbers<[1], [0], [0], [1], [0, 0, 1, 1], [], []>} : vector<1x128xbf16>, vector<128x128xbf16>, vector<1x128xf32> -> vector<1x128xf32>
    %260 = arith.addf %254, %259 : vector<1x128xf32>
    %c4_198 = arith.constant 4 : index
    %c0_199 = arith.constant 0 : index
    %261 = vector.load %arg17[%c4_198, %c0_199] : memref<32x128xf32, #tpu.memory_space<vmem>>, vector<1x128xf32>
    %262 = arith.truncf %261 : vector<1x128xf32> to vector<1x128xbf16>
    %c4_200 = arith.constant 4 : index
    %c0_201 = arith.constant 0 : index
    %c0_202 = arith.constant 0 : index
    %263 = vector.load %arg6[%c4_200, %c0_201, %c0_202] : memref<25x128x128xbf16, #tpu.memory_space<vmem>>, vector<1x128x128xbf16>
    %264 = vector.shape_cast %263 : vector<1x128x128xbf16> to vector<128x128xbf16>
    %cst_203 = arith.constant dense<0.000000e+00> : vector<1x128xf32>
    %265 = tpu.matmul %262, %264, %cst_203 {dimension_numbers = #tpu.dot_dimension_numbers<[1], [0], [0], [1], [0, 0, 1, 1], [], []>} : vector<1x128xbf16>, vector<128x128xbf16>, vector<1x128xf32> -> vector<1x128xf32>
    %266 = arith.addf %260, %265 : vector<1x128xf32>
    %c5_204 = arith.constant 5 : index
    %c0_205 = arith.constant 0 : index
    %267 = vector.load %arg17[%c5_204, %c0_205] : memref<32x128xf32, #tpu.memory_space<vmem>>, vector<1x128xf32>
    %268 = arith.truncf %267 : vector<1x128xf32> to vector<1x128xbf16>
    %c5_206 = arith.constant 5 : index
    %c0_207 = arith.constant 0 : index
    %c0_208 = arith.constant 0 : index
    %269 = vector.load %arg6[%c5_206, %c0_207, %c0_208] : memref<25x128x128xbf16, #tpu.memory_space<vmem>>, vector<1x128x128xbf16>
    %270 = vector.shape_cast %269 : vector<1x128x128xbf16> to vector<128x128xbf16>
    %cst_209 = arith.constant dense<0.000000e+00> : vector<1x128xf32>
    %271 = tpu.matmul %268, %270, %cst_209 {dimension_numbers = #tpu.dot_dimension_numbers<[1], [0], [0], [1], [0, 0, 1, 1], [], []>} : vector<1x128xbf16>, vector<128x128xbf16>, vector<1x128xf32> -> vector<1x128xf32>
    %272 = arith.addf %266, %271 : vector<1x128xf32>
    %c6 = arith.constant 6 : index
    %c0_210 = arith.constant 0 : index
    %273 = vector.load %arg17[%c6, %c0_210] : memref<32x128xf32, #tpu.memory_space<vmem>>, vector<1x128xf32>
    %274 = arith.truncf %273 : vector<1x128xf32> to vector<1x128xbf16>
    %c6_211 = arith.constant 6 : index
    %c0_212 = arith.constant 0 : index
    %c0_213 = arith.constant 0 : index
    %275 = vector.load %arg6[%c6_211, %c0_212, %c0_213] : memref<25x128x128xbf16, #tpu.memory_space<vmem>>, vector<1x128x128xbf16>
    %276 = vector.shape_cast %275 : vector<1x128x128xbf16> to vector<128x128xbf16>
    %cst_214 = arith.constant dense<0.000000e+00> : vector<1x128xf32>
    %277 = tpu.matmul %274, %276, %cst_214 {dimension_numbers = #tpu.dot_dimension_numbers<[1], [0], [0], [1], [0, 0, 1, 1], [], []>} : vector<1x128xbf16>, vector<128x128xbf16>, vector<1x128xf32> -> vector<1x128xf32>
    %278 = arith.addf %272, %277 : vector<1x128xf32>
    %c7 = arith.constant 7 : index
    %c0_215 = arith.constant 0 : index
    %279 = vector.load %arg17[%c7, %c0_215] : memref<32x128xf32, #tpu.memory_space<vmem>>, vector<1x128xf32>
    %280 = arith.truncf %279 : vector<1x128xf32> to vector<1x128xbf16>
    %c7_216 = arith.constant 7 : index
    %c0_217 = arith.constant 0 : index
    %c0_218 = arith.constant 0 : index
    %281 = vector.load %arg6[%c7_216, %c0_217, %c0_218] : memref<25x128x128xbf16, #tpu.memory_space<vmem>>, vector<1x128x128xbf16>
    %282 = vector.shape_cast %281 : vector<1x128x128xbf16> to vector<128x128xbf16>
    %cst_219 = arith.constant dense<0.000000e+00> : vector<1x128xf32>
    %283 = tpu.matmul %280, %282, %cst_219 {dimension_numbers = #tpu.dot_dimension_numbers<[1], [0], [0], [1], [0, 0, 1, 1], [], []>} : vector<1x128xbf16>, vector<128x128xbf16>, vector<1x128xf32> -> vector<1x128xf32>
    %284 = arith.addf %278, %283 : vector<1x128xf32>
    %c8 = arith.constant 8 : index
    %c0_220 = arith.constant 0 : index
    %285 = vector.load %arg17[%c8, %c0_220] : memref<32x128xf32, #tpu.memory_space<vmem>>, vector<1x128xf32>
    %286 = arith.truncf %285 : vector<1x128xf32> to vector<1x128xbf16>
    %c8_221 = arith.constant 8 : index
    %c0_222 = arith.constant 0 : index
    %c0_223 = arith.constant 0 : index
    %287 = vector.load %arg6[%c8_221, %c0_222, %c0_223] : memref<25x128x128xbf16, #tpu.memory_space<vmem>>, vector<1x128x128xbf16>
    %288 = vector.shape_cast %287 : vector<1x128x128xbf16> to vector<128x128xbf16>
    %cst_224 = arith.constant dense<0.000000e+00> : vector<1x128xf32>
    %289 = tpu.matmul %286, %288, %cst_224 {dimension_numbers = #tpu.dot_dimension_numbers<[1], [0], [0], [1], [0, 0, 1, 1], [], []>} : vector<1x128xbf16>, vector<128x128xbf16>, vector<1x128xf32> -> vector<1x128xf32>
    %290 = arith.addf %284, %289 : vector<1x128xf32>
    %c9 = arith.constant 9 : index
    %c0_225 = arith.constant 0 : index
    %291 = vector.load %arg17[%c9, %c0_225] : memref<32x128xf32, #tpu.memory_space<vmem>>, vector<1x128xf32>
    %292 = arith.truncf %291 : vector<1x128xf32> to vector<1x128xbf16>
    %c9_226 = arith.constant 9 : index
    %c0_227 = arith.constant 0 : index
    %c0_228 = arith.constant 0 : index
    %293 = vector.load %arg6[%c9_226, %c0_227, %c0_228] : memref<25x128x128xbf16, #tpu.memory_space<vmem>>, vector<1x128x128xbf16>
    %294 = vector.shape_cast %293 : vector<1x128x128xbf16> to vector<128x128xbf16>
    %cst_229 = arith.constant dense<0.000000e+00> : vector<1x128xf32>
    %295 = tpu.matmul %292, %294, %cst_229 {dimension_numbers = #tpu.dot_dimension_numbers<[1], [0], [0], [1], [0, 0, 1, 1], [], []>} : vector<1x128xbf16>, vector<128x128xbf16>, vector<1x128xf32> -> vector<1x128xf32>
    %296 = arith.addf %290, %295 : vector<1x128xf32>
    %c10_230 = arith.constant 10 : index
    %c0_231 = arith.constant 0 : index
    %297 = vector.load %arg17[%c10_230, %c0_231] : memref<32x128xf32, #tpu.memory_space<vmem>>, vector<1x128xf32>
    %298 = arith.truncf %297 : vector<1x128xf32> to vector<1x128xbf16>
    %c10_232 = arith.constant 10 : index
    %c0_233 = arith.constant 0 : index
    %c0_234 = arith.constant 0 : index
    %299 = vector.load %arg6[%c10_232, %c0_233, %c0_234] : memref<25x128x128xbf16, #tpu.memory_space<vmem>>, vector<1x128x128xbf16>
    %300 = vector.shape_cast %299 : vector<1x128x128xbf16> to vector<128x128xbf16>
    %cst_235 = arith.constant dense<0.000000e+00> : vector<1x128xf32>
    %301 = tpu.matmul %298, %300, %cst_235 {dimension_numbers = #tpu.dot_dimension_numbers<[1], [0], [0], [1], [0, 0, 1, 1], [], []>} : vector<1x128xbf16>, vector<128x128xbf16>, vector<1x128xf32> -> vector<1x128xf32>
    %302 = arith.addf %296, %301 : vector<1x128xf32>
    %c11 = arith.constant 11 : index
    %c0_236 = arith.constant 0 : index
    %303 = vector.load %arg17[%c11, %c0_236] : memref<32x128xf32, #tpu.memory_space<vmem>>, vector<1x128xf32>
    %304 = arith.truncf %303 : vector<1x128xf32> to vector<1x128xbf16>
    %c11_237 = arith.constant 11 : index
    %c0_238 = arith.constant 0 : index
    %c0_239 = arith.constant 0 : index
    %305 = vector.load %arg6[%c11_237, %c0_238, %c0_239] : memref<25x128x128xbf16, #tpu.memory_space<vmem>>, vector<1x128x128xbf16>
    %306 = vector.shape_cast %305 : vector<1x128x128xbf16> to vector<128x128xbf16>
    %cst_240 = arith.constant dense<0.000000e+00> : vector<1x128xf32>
    %307 = tpu.matmul %304, %306, %cst_240 {dimension_numbers = #tpu.dot_dimension_numbers<[1], [0], [0], [1], [0, 0, 1, 1], [], []>} : vector<1x128xbf16>, vector<128x128xbf16>, vector<1x128xf32> -> vector<1x128xf32>
    %308 = arith.addf %302, %307 : vector<1x128xf32>
    %c12 = arith.constant 12 : index
    %c0_241 = arith.constant 0 : index
    %309 = vector.load %arg17[%c12, %c0_241] : memref<32x128xf32, #tpu.memory_space<vmem>>, vector<1x128xf32>
    %310 = arith.truncf %309 : vector<1x128xf32> to vector<1x128xbf16>
    %c12_242 = arith.constant 12 : index
    %c0_243 = arith.constant 0 : index
    %c0_244 = arith.constant 0 : index
    %311 = vector.load %arg6[%c12_242, %c0_243, %c0_244] : memref<25x128x128xbf16, #tpu.memory_space<vmem>>, vector<1x128x128xbf16>
    %312 = vector.shape_cast %311 : vector<1x128x128xbf16> to vector<128x128xbf16>
    %cst_245 = arith.constant dense<0.000000e+00> : vector<1x128xf32>
    %313 = tpu.matmul %310, %312, %cst_245 {dimension_numbers = #tpu.dot_dimension_numbers<[1], [0], [0], [1], [0, 0, 1, 1], [], []>} : vector<1x128xbf16>, vector<128x128xbf16>, vector<1x128xf32> -> vector<1x128xf32>
    %314 = arith.addf %308, %313 : vector<1x128xf32>
    %c13 = arith.constant 13 : index
    %c0_246 = arith.constant 0 : index
    %315 = vector.load %arg17[%c13, %c0_246] : memref<32x128xf32, #tpu.memory_space<vmem>>, vector<1x128xf32>
    %316 = arith.truncf %315 : vector<1x128xf32> to vector<1x128xbf16>
    %c13_247 = arith.constant 13 : index
    %c0_248 = arith.constant 0 : index
    %c0_249 = arith.constant 0 : index
    %317 = vector.load %arg6[%c13_247, %c0_248, %c0_249] : memref<25x128x128xbf16, #tpu.memory_space<vmem>>, vector<1x128x128xbf16>
    %318 = vector.shape_cast %317 : vector<1x128x128xbf16> to vector<128x128xbf16>
    %cst_250 = arith.constant dense<0.000000e+00> : vector<1x128xf32>
    %319 = tpu.matmul %316, %318, %cst_250 {dimension_numbers = #tpu.dot_dimension_numbers<[1], [0], [0], [1], [0, 0, 1, 1], [], []>} : vector<1x128xbf16>, vector<128x128xbf16>, vector<1x128xf32> -> vector<1x128xf32>
    %320 = arith.addf %314, %319 : vector<1x128xf32>
    %c14_251 = arith.constant 14 : index
    %c0_252 = arith.constant 0 : index
    %321 = vector.load %arg17[%c14_251, %c0_252] : memref<32x128xf32, #tpu.memory_space<vmem>>, vector<1x128xf32>
    %322 = arith.truncf %321 : vector<1x128xf32> to vector<1x128xbf16>
    %c14_253 = arith.constant 14 : index
    %c0_254 = arith.constant 0 : index
    %c0_255 = arith.constant 0 : index
    %323 = vector.load %arg6[%c14_253, %c0_254, %c0_255] : memref<25x128x128xbf16, #tpu.memory_space<vmem>>, vector<1x128x128xbf16>
    %324 = vector.shape_cast %323 : vector<1x128x128xbf16> to vector<128x128xbf16>
    %cst_256 = arith.constant dense<0.000000e+00> : vector<1x128xf32>
    %325 = tpu.matmul %322, %324, %cst_256 {dimension_numbers = #tpu.dot_dimension_numbers<[1], [0], [0], [1], [0, 0, 1, 1], [], []>} : vector<1x128xbf16>, vector<128x128xbf16>, vector<1x128xf32> -> vector<1x128xf32>
    %326 = arith.addf %320, %325 : vector<1x128xf32>
    %c15_257 = arith.constant 15 : index
    %c0_258 = arith.constant 0 : index
    %327 = vector.load %arg17[%c15_257, %c0_258] : memref<32x128xf32, #tpu.memory_space<vmem>>, vector<1x128xf32>
    %328 = arith.truncf %327 : vector<1x128xf32> to vector<1x128xbf16>
    %c15_259 = arith.constant 15 : index
    %c0_260 = arith.constant 0 : index
    %c0_261 = arith.constant 0 : index
    %329 = vector.load %arg6[%c15_259, %c0_260, %c0_261] : memref<25x128x128xbf16, #tpu.memory_space<vmem>>, vector<1x128x128xbf16>
    %330 = vector.shape_cast %329 : vector<1x128x128xbf16> to vector<128x128xbf16>
    %cst_262 = arith.constant dense<0.000000e+00> : vector<1x128xf32>
    %331 = tpu.matmul %328, %330, %cst_262 {dimension_numbers = #tpu.dot_dimension_numbers<[1], [0], [0], [1], [0, 0, 1, 1], [], []>} : vector<1x128xbf16>, vector<128x128xbf16>, vector<1x128xf32> -> vector<1x128xf32>
    %332 = arith.addf %326, %331 : vector<1x128xf32>
    %c16 = arith.constant 16 : index
    %c0_263 = arith.constant 0 : index
    %333 = vector.load %arg17[%c16, %c0_263] : memref<32x128xf32, #tpu.memory_space<vmem>>, vector<1x128xf32>
    %334 = arith.truncf %333 : vector<1x128xf32> to vector<1x128xbf16>
    %c16_264 = arith.constant 16 : index
    %c0_265 = arith.constant 0 : index
    %c0_266 = arith.constant 0 : index
    %335 = vector.load %arg6[%c16_264, %c0_265, %c0_266] : memref<25x128x128xbf16, #tpu.memory_space<vmem>>, vector<1x128x128xbf16>
    %336 = vector.shape_cast %335 : vector<1x128x128xbf16> to vector<128x128xbf16>
    %cst_267 = arith.constant dense<0.000000e+00> : vector<1x128xf32>
    %337 = tpu.matmul %334, %336, %cst_267 {dimension_numbers = #tpu.dot_dimension_numbers<[1], [0], [0], [1], [0, 0, 1, 1], [], []>} : vector<1x128xbf16>, vector<128x128xbf16>, vector<1x128xf32> -> vector<1x128xf32>
    %338 = arith.addf %332, %337 : vector<1x128xf32>
    %c17 = arith.constant 17 : index
    %c0_268 = arith.constant 0 : index
    %339 = vector.load %arg17[%c17, %c0_268] : memref<32x128xf32, #tpu.memory_space<vmem>>, vector<1x128xf32>
    %340 = arith.truncf %339 : vector<1x128xf32> to vector<1x128xbf16>
    %c17_269 = arith.constant 17 : index
    %c0_270 = arith.constant 0 : index
    %c0_271 = arith.constant 0 : index
    %341 = vector.load %arg6[%c17_269, %c0_270, %c0_271] : memref<25x128x128xbf16, #tpu.memory_space<vmem>>, vector<1x128x128xbf16>
    %342 = vector.shape_cast %341 : vector<1x128x128xbf16> to vector<128x128xbf16>
    %cst_272 = arith.constant dense<0.000000e+00> : vector<1x128xf32>
    %343 = tpu.matmul %340, %342, %cst_272 {dimension_numbers = #tpu.dot_dimension_numbers<[1], [0], [0], [1], [0, 0, 1, 1], [], []>} : vector<1x128xbf16>, vector<128x128xbf16>, vector<1x128xf32> -> vector<1x128xf32>
    %344 = arith.addf %338, %343 : vector<1x128xf32>
    %c18 = arith.constant 18 : index
    %c0_273 = arith.constant 0 : index
    %345 = vector.load %arg17[%c18, %c0_273] : memref<32x128xf32, #tpu.memory_space<vmem>>, vector<1x128xf32>
    %346 = arith.truncf %345 : vector<1x128xf32> to vector<1x128xbf16>
    %c18_274 = arith.constant 18 : index
    %c0_275 = arith.constant 0 : index
    %c0_276 = arith.constant 0 : index
    %347 = vector.load %arg6[%c18_274, %c0_275, %c0_276] : memref<25x128x128xbf16, #tpu.memory_space<vmem>>, vector<1x128x128xbf16>
    %348 = vector.shape_cast %347 : vector<1x128x128xbf16> to vector<128x128xbf16>
    %cst_277 = arith.constant dense<0.000000e+00> : vector<1x128xf32>
    %349 = tpu.matmul %346, %348, %cst_277 {dimension_numbers = #tpu.dot_dimension_numbers<[1], [0], [0], [1], [0, 0, 1, 1], [], []>} : vector<1x128xbf16>, vector<128x128xbf16>, vector<1x128xf32> -> vector<1x128xf32>
    %350 = arith.addf %344, %349 : vector<1x128xf32>
    %c19 = arith.constant 19 : index
    %c0_278 = arith.constant 0 : index
    %351 = vector.load %arg17[%c19, %c0_278] : memref<32x128xf32, #tpu.memory_space<vmem>>, vector<1x128xf32>
    %352 = arith.truncf %351 : vector<1x128xf32> to vector<1x128xbf16>
    %c19_279 = arith.constant 19 : index
    %c0_280 = arith.constant 0 : index
    %c0_281 = arith.constant 0 : index
    %353 = vector.load %arg6[%c19_279, %c0_280, %c0_281] : memref<25x128x128xbf16, #tpu.memory_space<vmem>>, vector<1x128x128xbf16>
    %354 = vector.shape_cast %353 : vector<1x128x128xbf16> to vector<128x128xbf16>
    %cst_282 = arith.constant dense<0.000000e+00> : vector<1x128xf32>
    %355 = tpu.matmul %352, %354, %cst_282 {dimension_numbers = #tpu.dot_dimension_numbers<[1], [0], [0], [1], [0, 0, 1, 1], [], []>} : vector<1x128xbf16>, vector<128x128xbf16>, vector<1x128xf32> -> vector<1x128xf32>
    %356 = arith.addf %350, %355 : vector<1x128xf32>
    %c20_283 = arith.constant 20 : index
    %c0_284 = arith.constant 0 : index
    %357 = vector.load %arg17[%c20_283, %c0_284] : memref<32x128xf32, #tpu.memory_space<vmem>>, vector<1x128xf32>
    %358 = arith.truncf %357 : vector<1x128xf32> to vector<1x128xbf16>
    %c20_285 = arith.constant 20 : index
    %c0_286 = arith.constant 0 : index
    %c0_287 = arith.constant 0 : index
    %359 = vector.load %arg6[%c20_285, %c0_286, %c0_287] : memref<25x128x128xbf16, #tpu.memory_space<vmem>>, vector<1x128x128xbf16>
    %360 = vector.shape_cast %359 : vector<1x128x128xbf16> to vector<128x128xbf16>
    %cst_288 = arith.constant dense<0.000000e+00> : vector<1x128xf32>
    %361 = tpu.matmul %358, %360, %cst_288 {dimension_numbers = #tpu.dot_dimension_numbers<[1], [0], [0], [1], [0, 0, 1, 1], [], []>} : vector<1x128xbf16>, vector<128x128xbf16>, vector<1x128xf32> -> vector<1x128xf32>
    %362 = arith.addf %356, %361 : vector<1x128xf32>
    %c21 = arith.constant 21 : index
    %c0_289 = arith.constant 0 : index
    %363 = vector.load %arg17[%c21, %c0_289] : memref<32x128xf32, #tpu.memory_space<vmem>>, vector<1x128xf32>
    %364 = arith.truncf %363 : vector<1x128xf32> to vector<1x128xbf16>
    %c21_290 = arith.constant 21 : index
    %c0_291 = arith.constant 0 : index
    %c0_292 = arith.constant 0 : index
    %365 = vector.load %arg6[%c21_290, %c0_291, %c0_292] : memref<25x128x128xbf16, #tpu.memory_space<vmem>>, vector<1x128x128xbf16>
    %366 = vector.shape_cast %365 : vector<1x128x128xbf16> to vector<128x128xbf16>
    %cst_293 = arith.constant dense<0.000000e+00> : vector<1x128xf32>
    %367 = tpu.matmul %364, %366, %cst_293 {dimension_numbers = #tpu.dot_dimension_numbers<[1], [0], [0], [1], [0, 0, 1, 1], [], []>} : vector<1x128xbf16>, vector<128x128xbf16>, vector<1x128xf32> -> vector<1x128xf32>
    %368 = arith.addf %362, %367 : vector<1x128xf32>
    %c22 = arith.constant 22 : index
    %c0_294 = arith.constant 0 : index
    %369 = vector.load %arg17[%c22, %c0_294] : memref<32x128xf32, #tpu.memory_space<vmem>>, vector<1x128xf32>
    %370 = arith.truncf %369 : vector<1x128xf32> to vector<1x128xbf16>
    %c22_295 = arith.constant 22 : index
    %c0_296 = arith.constant 0 : index
    %c0_297 = arith.constant 0 : index
    %371 = vector.load %arg6[%c22_295, %c0_296, %c0_297] : memref<25x128x128xbf16, #tpu.memory_space<vmem>>, vector<1x128x128xbf16>
    %372 = vector.shape_cast %371 : vector<1x128x128xbf16> to vector<128x128xbf16>
    %cst_298 = arith.constant dense<0.000000e+00> : vector<1x128xf32>
    %373 = tpu.matmul %370, %372, %cst_298 {dimension_numbers = #tpu.dot_dimension_numbers<[1], [0], [0], [1], [0, 0, 1, 1], [], []>} : vector<1x128xbf16>, vector<128x128xbf16>, vector<1x128xf32> -> vector<1x128xf32>
    %374 = arith.addf %368, %373 : vector<1x128xf32>
    %c23 = arith.constant 23 : index
    %c0_299 = arith.constant 0 : index
    %375 = vector.load %arg17[%c23, %c0_299] : memref<32x128xf32, #tpu.memory_space<vmem>>, vector<1x128xf32>
    %376 = arith.truncf %375 : vector<1x128xf32> to vector<1x128xbf16>
    %c23_300 = arith.constant 23 : index
    %c0_301 = arith.constant 0 : index
    %c0_302 = arith.constant 0 : index
    %377 = vector.load %arg6[%c23_300, %c0_301, %c0_302] : memref<25x128x128xbf16, #tpu.memory_space<vmem>>, vector<1x128x128xbf16>
    %378 = vector.shape_cast %377 : vector<1x128x128xbf16> to vector<128x128xbf16>
    %cst_303 = arith.constant dense<0.000000e+00> : vector<1x128xf32>
    %379 = tpu.matmul %376, %378, %cst_303 {dimension_numbers = #tpu.dot_dimension_numbers<[1], [0], [0], [1], [0, 0, 1, 1], [], []>} : vector<1x128xbf16>, vector<128x128xbf16>, vector<1x128xf32> -> vector<1x128xf32>
    %380 = arith.addf %374, %379 : vector<1x128xf32>
    %c24 = arith.constant 24 : index
    %c0_304 = arith.constant 0 : index
    %381 = vector.load %arg17[%c24, %c0_304] : memref<32x128xf32, #tpu.memory_space<vmem>>, vector<1x128xf32>
    %382 = arith.truncf %381 : vector<1x128xf32> to vector<1x128xbf16>
    %c24_305 = arith.constant 24 : index
    %c0_306 = arith.constant 0 : index
    %c0_307 = arith.constant 0 : index
    %383 = vector.load %arg6[%c24_305, %c0_306, %c0_307] : memref<25x128x128xbf16, #tpu.memory_space<vmem>>, vector<1x128x128xbf16>
    %384 = vector.shape_cast %383 : vector<1x128x128xbf16> to vector<128x128xbf16>
    %cst_308 = arith.constant dense<0.000000e+00> : vector<1x128xf32>
    %385 = tpu.matmul %382, %384, %cst_308 {dimension_numbers = #tpu.dot_dimension_numbers<[1], [0], [0], [1], [0, 0, 1, 1], [], []>} : vector<1x128xbf16>, vector<128x128xbf16>, vector<1x128xf32> -> vector<1x128xf32>
    %386 = arith.addf %380, %385 : vector<1x128xf32>
    %cst_309 = arith.constant 0.000000e+00 : f32
    %387 = vector.broadcast %cst_309 : f32 to vector<1x128xf32>
    %388 = arith.maximumf %386, %387 : vector<1x128xf32>
    %389 = arith.truncf %388 : vector<1x128xf32> to vector<1x128xbf16>
    %c0_310 = arith.constant 0 : index
    %c0_311 = arith.constant 0 : index
    %390 = vector.load %arg8[%c0_310, %c0_311] : memref<128x128xbf16, #tpu.memory_space<vmem>>, vector<128x128xbf16>
    %cst_312 = arith.constant dense<0.000000e+00> : vector<1x128xf32>
    %391 = tpu.matmul %389, %390, %cst_312 {dimension_numbers = #tpu.dot_dimension_numbers<[1], [0], [0], [1], [0, 0, 1, 1], [], []>} : vector<1x128xbf16>, vector<128x128xbf16>, vector<1x128xf32> -> vector<1x128xf32>
    %c0_313 = arith.constant 0 : index
    %c0_314 = arith.constant 0 : index
    %392 = vector.load %arg9[%c0_313, %c0_314] : memref<1x128xf32, #tpu.memory_space<vmem>>, vector<1x128xf32>
    %393 = arith.addf %391, %392 : vector<1x128xf32>
    %cst_315 = arith.constant 0.000000e+00 : f32
    %394 = vector.broadcast %cst_315 : f32 to vector<1x128xf32>
    %395 = arith.maximumf %393, %394 : vector<1x128xf32>
    %396 = arith.truncf %395 : vector<1x128xf32> to vector<1x128xbf16>
    %c0_316 = arith.constant 0 : index
    %c0_317 = arith.constant 0 : index
    %397 = vector.load %arg10[%c0_316, %c0_317] : memref<128x128xbf16, #tpu.memory_space<vmem>>, vector<128x128xbf16>
    %cst_318 = arith.constant dense<0.000000e+00> : vector<1x128xf32>
    %398 = tpu.matmul %396, %397, %cst_318 {dimension_numbers = #tpu.dot_dimension_numbers<[1], [0], [0], [1], [0, 0, 1, 1], [], []>} : vector<1x128xbf16>, vector<128x128xbf16>, vector<1x128xf32> -> vector<1x128xf32>
    %c0_319 = arith.constant 0 : index
    %c0_320 = arith.constant 0 : index
    %399 = vector.load %arg11[%c0_319, %c0_320] : memref<1x128xf32, #tpu.memory_space<vmem>>, vector<1x128xf32>
    %400 = arith.addf %398, %399 : vector<1x128xf32>
    %401 = vector.shape_cast %400 : vector<1x128xf32> to vector<1x128xf32>
    %402 = vector.broadcast %401 : vector<1x128xf32> to vector<8x128xf32>
    %c0_321 = arith.constant 0 : index
    %c0_322 = arith.constant 0 : index
    %c0_323 = arith.constant 0 : index
    %403 = vector.load %arg12[%c0_321, %c0_322, %c0_323] : memref<1x8x128xf32, #tpu.memory_space<vmem>>, vector<1x8x128xf32>
    %404 = vector.shape_cast %403 : vector<1x8x128xf32> to vector<8x128xf32>
    %405 = vector.shape_cast %402 : vector<8x128xf32> to vector<1x8x128xf32>
    tpu.vector_store %arg12[%c0_321, %c0_322, %c0_323], %405 {strides = array<i32>} : memref<1x8x128xf32, #tpu.memory_space<vmem>>, vector<1x8x128xf32>,
    return
  }
  func.func @transform_0(%arg0: i32) -> (i32, i32, i32) {
    %c0_i32 = arith.constant 0 : i32
    %c0_i32_0 = arith.constant 0 : i32
    %c0_i32_1 = arith.constant 0 : i32
    return %arg0, %c0_i32, %c0_i32_0 : i32, i32, i32
  }
  func.func @transform_1(%arg0: i32) -> (i32, i32) {
    %c0_i32 = arith.constant 0 : i32
    %c0_i32_0 = arith.constant 0 : i32
    %c0_i32_1 = arith.constant 0 : i32
    return %c0_i32, %c0_i32_0 : i32, i32
  }
  func.func @transform_2(%arg0: i32) -> (i32, i32) {
    %c0_i32 = arith.constant 0 : i32
    %c0_i32_0 = arith.constant 0 : i32
    %c0_i32_1 = arith.constant 0 : i32
    return %c0_i32, %c0_i32_0 : i32, i32
  }
  func.func @transform_3(%arg0: i32) -> (i32, i32, i32) {
    %c0_i32 = arith.constant 0 : i32
    %c0_i32_0 = arith.constant 0 : i32
    %c0_i32_1 = arith.constant 0 : i32
    %c0_i32_2 = arith.constant 0 : i32
    return %c0_i32, %c0_i32_0, %c0_i32_1 : i32, i32, i32
  }
  func.func @transform_4(%arg0: i32) -> (i32, i32) {
    %c0_i32 = arith.constant 0 : i32
    %c0_i32_0 = arith.constant 0 : i32
    %c0_i32_1 = arith.constant 0 : i32
    return %c0_i32, %c0_i32_0 : i32, i32
  }
  func.func @transform_5(%arg0: i32) -> (i32, i32, i32) {
    %c0_i32 = arith.constant 0 : i32
    %c0_i32_0 = arith.constant 0 : i32
    %c0_i32_1 = arith.constant 0 : i32
    %c0_i32_2 = arith.constant 0 : i32
    return %c0_i32, %c0_i32_0, %c0_i32_1 : i32, i32, i32
  }
  func.func @transform_6(%arg0: i32) -> (i32, i32) {
    %c0_i32 = arith.constant 0 : i32
    %c0_i32_0 = arith.constant 0 : i32
    %c0_i32_1 = arith.constant 0 : i32
    return %c0_i32, %c0_i32_0 : i32, i32
  }
  func.func @transform_7(%arg0: i32) -> (i32, i32) {
    %c0_i32 = arith.constant 0 : i32
    %c0_i32_0 = arith.constant 0 : i32
    %c0_i32_1 = arith.constant 0 : i32
    return %c0_i32, %c0_i32_0 : i32, i32
  }
  func.func @transform_8(%arg0: i32) -> (i32, i32) {
    %c0_i32 = arith.constant 0 : i32
    %c0_i32_0 = arith.constant 0 : i32
    %c0_i32_1 = arith.constant 0 : i32
    return %c0_i32, %c0_i32_0 : i32, i32
  }
  func.func @transform_9(%arg0: i32) -> (i32, i32) {
    %c0_i32 = arith.constant 0 : i32
    %c0_i32_0 = arith.constant 0 : i32
    %c0_i32_1 = arith.constant 0 : i32
    return %c0_i32, %c0_i32_0 : i32, i32
  }
  func.func @transform_10(%arg0: i32) -> (i32, i32) {
    %c0_i32 = arith.constant 0 : i32
    %c0_i32_0 = arith.constant 0 : i32
    %c0_i32_1 = arith.constant 0 : i32
    return %c0_i32, %c0_i32_0 : i32, i32
  }
  func.func @transform_11(%arg0: i32) -> (i32, i32, i32) {
    %c0_i32 = arith.constant 0 : i32
    %c0_i32_0 = arith.constant 0 : i32
    %c0_i32_1 = arith.constant 0 : i32
    return %arg0, %c0_i32, %c0_i32_0 : i32, i32, i32
  }
}

</mosaic_0001>

<llo_original>
// kernel: net_forward.1
$region0: #{net_forward.1}
  #allocation0 [shape = 'u32[]', space=smem, size = 0x4, offset = 0x4, fixed_abs, tag = 'smem constant byte address 0x4 - core index']
  #allocation1 [shape = 'u32[144,128]{1,0:T(1,128)}', space=vmem, size = 0x12000, scoped, tag = 'internal scratch']
  #allocation2 [shape = 'f32[896,128]{1,0:T(8,128)}', space=vmem, size = 0x70000, scoped, tag = 'scratch operand']
  #allocation3 [shape = 'f32[200,128]{1,0:T(8,128)}', space=vmem, size = 0x19000, scoped, tag = 'scratch operand']
  #allocation4 [shape = 'bf16[192,128]{1,0:T(16,128)(2,1)}', space=vmem, size = 0xc000, scoped, tag = 'scratch operand']
  #allocation5 [shape = 'f32[136,128]{1,0:T(8,128)}', space=vmem, size = 0x11000, scoped, tag = 'scratch operand']
  #allocation6 [shape = 'f32[32,128]{1,0:T(8,128)}', space=vmem, size = 0x4000, scoped, tag = 'scratch operand']
  %s0 = inlined_call_operand.vmem [shape: bf16[2,896,128], index: 0, kind: input, shape index: {}]
  %s1 = inlined_call_operand.vmem [shape: bf16[128,128], index: 1, kind: input, shape index: {}]
  %s2 = inlined_call_operand.vmem [shape: f32[1,128], index: 2, kind: input, shape index: {}]
  %s3 = inlined_call_operand.vmem [shape: bf16[5,128,128], index: 3, kind: input, shape index: {}]
  %s4 = inlined_call_operand.vmem [shape: f32[1,128], index: 4, kind: input, shape index: {}]
  %s5 = inlined_call_operand.vmem [shape: bf16[25,128,128], index: 5, kind: input, shape index: {}]
  %s6 = inlined_call_operand.vmem [shape: f32[1,128], index: 6, kind: input, shape index: {}]
  %s7 = inlined_call_operand.vmem [shape: bf16[128,128], index: 7, kind: input, shape index: {}]
  %s8 = inlined_call_operand.vmem [shape: f32[1,128], index: 8, kind: input, shape index: {}]
  %s9 = inlined_call_operand.vmem [shape: bf16[128,128], index: 9, kind: input, shape index: {}]
  %s10 = inlined_call_operand.vmem [shape: f32[1,128], index: 10, kind: input, shape index: {}]
  %s11 = inlined_call_operand.vmem [shape: f32[2,8,128], index: 11, kind: output, shape index: {}]
  %s12 = sld [smem:[#allocation0]]
  $region77: #{net_forward.1} parent=0
    _
  %s14 = ssub.s32 1, %s12
  %s15 = scalar_select 0, %s14, %s12
  loop: start=0, step=1, limit=4
  $region2: #{net_forward.1} parent=0 // loop_pre_header
    _
  $region3: #{net_forward.1} parent=0 // loop_header
    %s17 = sphi 0, %s21
    %p18 = scmp.ge.s32.totalorder %s17, 4
    %s27 = sphi 0, %s29
    %s30 = sphi 0, %s27
    %s31 = sphi 0, %s30
    %s47 = sphi 0, %s31
    %s51 = sphi 0, %s51
    %s53 = sphi 0, %s51
    %s54 = sphi 0, %s53
    %s68 = sphi 0, %s54
    %s72 = sphi 0, %s72
    %s74 = sphi 0, %s72
    %s75 = sphi 0, %s74
    %s89 = sphi 0, %s75
    %s93 = sphi 0, %s93
    %s95 = sphi 0, %s93
    %s96 = sphi 0, %s95
    %s110 = sphi 0, %s96
    %s114 = sphi 0, %s114
    %s116 = sphi 0, %s114
    %s117 = sphi 0, %s116
    %s131 = sphi 0, %s117
    %s135 = sphi 0, %s135
    %s137 = sphi 0, %s135
    %s138 = sphi 0, %s137
    %s152 = sphi 0, %s138
    %s156 = sphi 0, %s156
    %s158 = sphi 0, %s156
    %s159 = sphi 0, %s158
    %s173 = sphi 0, %s159
    %s177 = sphi 0, %s177
    %s179 = sphi 0, %s177
    %s180 = sphi 0, %s179
    %s194 = sphi 0, %s180
    %s198 = sphi 0, %s198
    %s200 = sphi 0, %s198
    %s201 = sphi 0, %s200
    %s215 = sphi 0, %s201
    %s219 = sphi 0, %s219
    %s221 = sphi 0, %s219
    %s222 = sphi 0, %s221
    %s236 = sphi 0, %s222
    %s240 = sphi 0, %s240
    %s242 = sphi 0, %s240
    %s243 = sphi 0, %s242
    %s257 = sphi 0, %s243
    %s263 = sphi 0, %s265
    %s266 = sphi 0, %s263
    %s267 = sphi 0, %s266
    %s283 = sphi 0, %s267
  $region4: #{net_forward.1} parent=0 // loop_header_branch
    %20 = sbr.rel (%p18) target = $region8
  $region5: #{net_forward.1} parent=0 // loop_body
    %s22 = ssub.s32 %s17, 1
    %s23 = ssub.s32 %s17, 2
    %s24 = sadd.s32 %s17, 1
    %s25 = ssub.s32 %s17, %s24
    %p26 = scmp.eq.s32.totalorder %s25, 0
    %s28 = sadd.s32 %s27, 1
    %s29 = scalar_select %p26, %s27, %s28
    %p32 = pneg %p26
    %p33 = scmp.eq.s32.totalorder %s17, 1
    %p34 = por %p32, %p33
    %p35 = scmp.ne.s32.totalorder %s27, %s30
    %p36 = scmp.eq.s32.totalorder %s17, 0
    %p37 = por %p35, %p36
    %p38 = scmp.ne.s32.totalorder %s27, %s30
    %p39 = scmp.eq.s32.totalorder %s22, 1
    %p40 = por %p38, %p39
    %p41 = scmp.ne.s32.totalorder %s30, %s31
    %p42 = scmp.eq.s32.totalorder %s22, 0
    %p43 = por %p41, %p42
    %p44 = scmp.ne.s32.totalorder %s30, %s31
    %p45 = scmp.eq.s32.totalorder %s23, 1
    %p46 = por %p44, %p45
    %p48 = scmp.ne.s32.totalorder %s31, %s47
    %p49 = scmp.eq.s32.totalorder %s23, 0
    %p50 = por %p48, %p49
    %s52 = sadd.s32 %s51, 1
    %p55 = scmp.eq.s32.totalorder %s17, 1
    %p56 = scmp.ne.s32.totalorder %s51, %s53
    %p57 = scmp.eq.s32.totalorder %s17, 0
    %p58 = por %p56, %p57
    %p59 = scmp.ne.s32.totalorder %s51, %s53
    %p60 = scmp.eq.s32.totalorder %s22, 1
    %p61 = por %p59, %p60
    %p62 = scmp.ne.s32.totalorder %s53, %s54
    %p63 = scmp.eq.s32.totalorder %s22, 0
    %p64 = por %p62, %p63
    %p65 = scmp.ne.s32.totalorder %s53, %s54
    %p66 = scmp.eq.s32.totalorder %s23, 1
    %p67 = por %p65, %p66
    %p69 = scmp.ne.s32.totalorder %s54, %s68
    %p70 = scmp.eq.s32.totalorder %s23, 0
    %p71 = por %p69, %p70
    %s73 = sadd.s32 %s72, 1
    %p76 = scmp.eq.s32.totalorder %s17, 1
    %p77 = scmp.ne.s32.totalorder %s72, %s74
    %p78 = scmp.eq.s32.totalorder %s17, 0
    %p79 = por %p77, %p78
    %p80 = scmp.ne.s32.totalorder %s72, %s74
    %p81 = scmp.eq.s32.totalorder %s22, 1
    %p82 = por %p80, %p81
    %p83 = scmp.ne.s32.totalorder %s74, %s75
    %p84 = scmp.eq.s32.totalorder %s22, 0
    %p85 = por %p83, %p84
    %p86 = scmp.ne.s32.totalorder %s74, %s75
    %p87 = scmp.eq.s32.totalorder %s23, 1
    %p88 = por %p86, %p87
    %p90 = scmp.ne.s32.totalorder %s75, %s89
    %p91 = scmp.eq.s32.totalorder %s23, 0
    %p92 = por %p90, %p91
    %s94 = sadd.s32 %s93, 1
    %p97 = scmp.eq.s32.totalorder %s17, 1
    %p98 = scmp.ne.s32.totalorder %s93, %s95
    %p99 = scmp.eq.s32.totalorder %s17, 0
    %p100 = por %p98, %p99
    %p101 = scmp.ne.s32.totalorder %s93, %s95
    %p102 = scmp.eq.s32.totalorder %s22, 1
    %p103 = por %p101, %p102
    %p104 = scmp.ne.s32.totalorder %s95, %s96
    %p105 = scmp.eq.s32.totalorder %s22, 0
    %p106 = por %p104, %p105
    %p107 = scmp.ne.s32.totalorder %s95, %s96
    %p108 = scmp.eq.s32.totalorder %s23, 1
    %p109 = por %p107, %p108
    %p111 = scmp.ne.s32.totalorder %s96, %s110
    %p112 = scmp.eq.s32.totalorder %s23, 0
    %p113 = por %p111, %p112
    %s115 = sadd.s32 %s114, 1
    %p118 = scmp.eq.s32.totalorder %s17, 1
    %p119 = scmp.ne.s32.totalorder %s114, %s116
    %p120 = scmp.eq.s32.totalorder %s17, 0
    %p121 = por %p119, %p120
    %p122 = scmp.ne.s32.totalorder %s114, %s116
    %p123 = scmp.eq.s32.totalorder %s22, 1
    %p124 = por %p122, %p123
    %p125 = scmp.ne.s32.totalorder %s116, %s117
    %p126 = scmp.eq.s32.totalorder %s22, 0
    %p127 = por %p125, %p126
    %p128 = scmp.ne.s32.totalorder %s116, %s117
    %p129 = scmp.eq.s32.totalorder %s23, 1
    %p130 = por %p128, %p129
    %p132 = scmp.ne.s32.totalorder %s117, %s131
    %p133 = scmp.eq.s32.totalorder %s23, 0
    %p134 = por %p132, %p133
    %s136 = sadd.s32 %s135, 1
    %p139 = scmp.eq.s32.totalorder %s17, 1
    %p140 = scmp.ne.s32.totalorder %s135, %s137
    %p141 = scmp.eq.s32.totalorder %s17, 0
    %p142 = por %p140, %p141
    %p143 = scmp.ne.s32.totalorder %s135, %s137
    %p144 = scmp.eq.s32.totalorder %s22, 1
    %p145 = por %p143, %p144
    %p146 = scmp.ne.s32.totalorder %s137, %s138
    %p147 = scmp.eq.s32.totalorder %s22, 0
    %p148 = por %p146, %p147
    %p149 = scmp.ne.s32.totalorder %s137, %s138
    %p150 = scmp.eq.s32.totalorder %s23, 1
    %p151 = por %p149, %p150
    %p153 = scmp.ne.s32.totalorder %s138, %s152
    %p154 = scmp.eq.s32.totalorder %s23, 0
    %p155 = por %p153, %p154
    %s157 = sadd.s32 %s156, 1
    %p160 = scmp.eq.s32.totalorder %s17, 1
    %p161 = scmp.ne.s32.totalorder %s156, %s158
    %p162 = scmp.eq.s32.totalorder %s17, 0
    %p163 = por %p161, %p162
    %p164 = scmp.ne.s32.totalorder %s156, %s158
    %p165 = scmp.eq.s32.totalorder %s22, 1
    %p166 = por %p164, %p165
    %p167 = scmp.ne.s32.totalorder %s158, %s159
    %p168 = scmp.eq.s32.totalorder %s22, 0
    %p169 = por %p167, %p168
    %p170 = scmp.ne.s32.totalorder %s158, %s159
    %p171 = scmp.eq.s32.totalorder %s23, 1
    %p172 = por %p170, %p171
    %p174 = scmp.ne.s32.totalorder %s159, %s173
    %p175 = scmp.eq.s32.totalorder %s23, 0
    %p176 = por %p174, %p175
    %s178 = sadd.s32 %s177, 1
    %p181 = scmp.eq.s32.totalorder %s17, 1
    %p182 = scmp.ne.s32.totalorder %s177, %s179
    %p183 = scmp.eq.s32.totalorder %s17, 0
    %p184 = por %p182, %p183
    %p185 = scmp.ne.s32.totalorder %s177, %s179
    %p186 = scmp.eq.s32.totalorder %s22, 1
    %p187 = por %p185, %p186
    %p188 = scmp.ne.s32.totalorder %s179, %s180
    %p189 = scmp.eq.s32.totalorder %s22, 0
    %p190 = por %p188, %p189
    %p191 = scmp.ne.s32.totalorder %s179, %s180
    %p192 = scmp.eq.s32.totalorder %s23, 1
    %p193 = por %p191, %p192
    %p195 = scmp.ne.s32.totalorder %s180, %s194
    %p196 = scmp.eq.s32.totalorder %s23, 0
    %p197 = por %p195, %p196
    %s199 = sadd.s32 %s198, 1
    %p202 = scmp.eq.s32.totalorder %s17, 1
    %p203 = scmp.ne.s32.totalorder %s198, %s200
    %p204 = scmp.eq.s32.totalorder %s17, 0
    %p205 = por %p203, %p204
    %p206 = scmp.ne.s32.totalorder %s198, %s200
    %p207 = scmp.eq.s32.totalorder %s22, 1
    %p208 = por %p206, %p207
    %p209 = scmp.ne.s32.totalorder %s200, %s201
    %p210 = scmp.eq.s32.totalorder %s22, 0
    %p211 = por %p209, %p210
    %p212 = scmp.ne.s32.totalorder %s200, %s201
    %p213 = scmp.eq.s32.totalorder %s23, 1
    %p214 = por %p212, %p213
    %p216 = scmp.ne.s32.totalorder %s201, %s215
    %p217 = scmp.eq.s32.totalorder %s23, 0
    %p218 = por %p216, %p217
    %s220 = sadd.s32 %s219, 1
    %p223 = scmp.eq.s32.totalorder %s17, 1
    %p224 = scmp.ne.s32.totalorder %s219, %s221
    %p225 = scmp.eq.s32.totalorder %s17, 0
    %p226 = por %p224, %p225
    %p227 = scmp.ne.s32.totalorder %s219, %s221
    %p228 = scmp.eq.s32.totalorder %s22, 1
    %p229 = por %p227, %p228
    %p230 = scmp.ne.s32.totalorder %s221, %s222
    %p231 = scmp.eq.s32.totalorder %s22, 0
    %p232 = por %p230, %p231
    %p233 = scmp.ne.s32.totalorder %s221, %s222
    %p234 = scmp.eq.s32.totalorder %s23, 1
    %p235 = por %p233, %p234
    %p237 = scmp.ne.s32.totalorder %s222, %s236
    %p238 = scmp.eq.s32.totalorder %s23, 0
    %p239 = por %p237, %p238
    %s241 = sadd.s32 %s240, 1
    %p244 = scmp.eq.s32.totalorder %s17, 1
    %p245 = scmp.ne.s32.totalorder %s240, %s242
    %p246 = scmp.eq.s32.totalorder %s17, 0
    %p247 = por %p245, %p246
    %p248 = scmp.ne.s32.totalorder %s240, %s242
    %p249 = scmp.eq.s32.totalorder %s22, 1
    %p250 = por %p248, %p249
    %p251 = scmp.ne.s32.totalorder %s242, %s243
    %p252 = scmp.eq.s32.totalorder %s22, 0
    %p253 = por %p251, %p252
    %p254 = scmp.ne.s32.totalorder %s242, %s243
    %p255 = scmp.eq.s32.totalorder %s23, 1
    %p256 = por %p254, %p255
    %p258 = scmp.ne.s32.totalorder %s243, %s257
    %p259 = scmp.eq.s32.totalorder %s23, 0
    %p260 = por %p258, %p259
    %s261 = ssub.s32 %s17, %s24
    %p262 = scmp.eq.s32.totalorder %s261, 0
    %s264 = sadd.s32 %s263, 1
    %s265 = scalar_select %p262, %s263, %s264
    %p268 = pneg %p262
    %p269 = scmp.eq.s32.totalorder %s17, 1
    %p270 = por %p268, %p269
    %p271 = scmp.ne.s32.totalorder %s263, %s266
    %p272 = scmp.eq.s32.totalorder %s17, 0
    %p273 = por %p271, %p272
    %p274 = scmp.ne.s32.totalorder %s263, %s266
    %p275 = scmp.eq.s32.totalorder %s22, 1
    %p276 = por %p274, %p275
    %p277 = scmp.ne.s32.totalorder %s266, %s267
    %p278 = scmp.eq.s32.totalorder %s22, 0
    %p279 = por %p277, %p278
    %p280 = scmp.ne.s32.totalorder %s266, %s267
    %p281 = scmp.eq.s32.totalorder %s23, 1
    %p282 = por %p280, %p281
    %p284 = scmp.ne.s32.totalorder %s267, %s283
    %p285 = scmp.eq.s32.totalorder %s23, 0
    %p286 = por %p284, %p285
    %p287 = scmp.le.s32.totalorder 1, %s17
    %p288 = scmp.lt.s32.totalorder %s17, 3
    %p289 = pnand %p287, %p288
    %p290 = pneg %p289
    // Predicated region
    $region9: #{net_forward.1} parent=5 // pred_check
      _
    $region10: #{net_forward.1} parent=5 // pred_check_branch
      %292 = sbr.rel (%p289) target = $region12
    $region11: #{net_forward.1} parent=5 // pred_region
      %s293 = ssub.s32 %s17, 1
      // Predicated region
      $region13: #{net_forward.1} parent=11 // pred_check
        %p294 = pneg %p64
      $region14: #{net_forward.1} parent=11 // pred_check_branch
        %296 = sbr.rel (%p294) target = $region16
      $region15: #{net_forward.1} parent=11 // pred_region
        _
      $region16: #{net_forward.1} parent=11 // pred_fallthru
        _
      // Predicated region
      $region17: #{net_forward.1} parent=11 // pred_check
        %p297 = pneg %p85
      $region18: #{net_forward.1} parent=11 // pred_check_branch
        %299 = sbr.rel (%p297) target = $region20
      $region19: #{net_forward.1} parent=11 // pred_region
        _
      $region20: #{net_forward.1} parent=11 // pred_fallthru
        _
      // Predicated region
      $region21: #{net_forward.1} parent=11 // pred_check
        %p300 = pneg %p106
      $region22: #{net_forward.1} parent=11 // pred_check_branch
        %302 = sbr.rel (%p300) target = $region24
      $region23: #{net_forward.1} parent=11 // pred_region
        _
      $region24: #{net_forward.1} parent=11 // pred_fallthru
        _
      // Predicated region
      $region25: #{net_forward.1} parent=11 // pred_check
        %p303 = pneg %p127
      $region26: #{net_forward.1} parent=11 // pred_check_branch
        %305 = sbr.rel (%p303) target = $region28
      $region27: #{net_forward.1} parent=11 // pred_region
        _
      $region28: #{net_forward.1} parent=11 // pred_fallthru
        _
      // Predicated region
      $region29: #{net_forward.1} parent=11 // pred_check
        %p306 = pneg %p148
      $region30: #{net_forward.1} parent=11 // pred_check_branch
        %308 = sbr.rel (%p306) target = $region32
      $region31: #{net_forward.1} parent=11 // pred_region
        _
      $region32: #{net_forward.1} parent=11 // pred_fallthru
        _
      // Predicated region
      $region33: #{net_forward.1} parent=11 // pred_check
        %p309 = pneg %p169
      $region34: #{net_forward.1} parent=11 // pred_check_branch
        %311 = sbr.rel (%p309) target = $region36
      $region35: #{net_forward.1} parent=11 // pred_region
        _
      $region36: #{net_forward.1} parent=11 // pred_fallthru
        _
      // Predicated region
      $region37: #{net_forward.1} parent=11 // pred_check
        %p312 = pneg %p190
      $region38: #{net_forward.1} parent=11 // pred_check_branch
        %314 = sbr.rel (%p312) target = $region40
      $region39: #{net_forward.1} parent=11 // pred_region
        _
      $region40: #{net_forward.1} parent=11 // pred_fallthru
        _
      // Predicated region
      $region41: #{net_forward.1} parent=11 // pred_check
        %p315 = pneg %p211
      $region42: #{net_forward.1} parent=11 // pred_check_branch
        %317 = sbr.rel (%p315) target = $region44
      $region43: #{net_forward.1} parent=11 // pred_region
        _
      $region44: #{net_forward.1} parent=11 // pred_fallthru
        _
      // Predicated region
      $region45: #{net_forward.1} parent=11 // pred_check
        %p318 = pneg %p232
      $region46: #{net_forward.1} parent=11 // pred_check_branch
        %320 = sbr.rel (%p318) target = $region48
      $region47: #{net_forward.1} parent=11 // pred_region
        _
      $region48: #{net_forward.1} parent=11 // pred_fallthru
        _
      // Predicated region
      $region49: #{net_forward.1} parent=11 // pred_check
        %p321 = pneg %p253
      $region50: #{net_forward.1} parent=11 // pred_check_branch
        %323 = sbr.rel (%p321) target = $region52
      $region51: #{net_forward.1} parent=11 // pred_region
        _
      $region52: #{net_forward.1} parent=11 // pred_fallthru
        _
    $region12: #{net_forward.1} parent=5 // pred_fallthru
      _
    %p324 = scmp.lt.s32.totalorder %s17, 2
    // Predicated region
    $region53: #{net_forward.1} parent=5 // pred_check
      %p325 = pneg %p324
    $region54: #{net_forward.1} parent=5 // pred_check_branch
      %327 = sbr.rel (%p325) target = $region56
    $region55: #{net_forward.1} parent=5 // pred_region
      // Predicated region
      $region57: #{net_forward.1} parent=55 // pred_check
        %p328 = pneg %p37
      $region58: #{net_forward.1} parent=55 // pred_check_branch
        %330 = sbr.rel (%p328) target = $region60
      $region59: #{net_forward.1} parent=55 // pred_region
        %p331 = scmp.lt.s32.totalorder %s17, 1
        %s332 = scalar_select %p331, %s17, 1
        %s333 = smul.addr %s332, 112
        %s334 = smul.addr %s333, 4
        %s335 = scalar_lea.vmem %s0, %s334
      $region60: #{net_forward.1} parent=55 // pred_fallthru
        _
    $region56: #{net_forward.1} parent=5 // pred_fallthru
      _
    %p336 = scmp.le.s32.totalorder 1, %s17
    %p337 = scmp.lt.s32.totalorder %s17, 3
    %p338 = pnand %p336, %p337
    %p339 = pneg %p338
    // Predicated region
    $region61: #{net_forward.1} parent=5 // pred_check
      _
    $region62: #{net_forward.1} parent=5 // pred_check_branch
      %341 = sbr.rel (%p338) target = $region64
    $region63: #{net_forward.1} parent=5 // pred_region
      %s342 = ssub.s32 %s17, 1
      %p343 = scmp.lt.s32.totalorder %s22, 1
      %s344 = scalar_select %p343, %s22, 1
      %s345 = smul.addr %s344, 112
      %s346 = smul.addr %s345, 4
      %s347 = scalar_lea.vmem %s0, %s346
      %p348 = pneg %p43
      %p349 = pneg %p40
      %p350 = pneg %p64
      %p351 = pneg %p61
      %p352 = pneg %p85
      %p353 = pneg %p82
      %p354 = pneg %p106
      %p355 = pneg %p103
      %p356 = pneg %p127
      %p357 = pneg %p124
      %p358 = pneg %p148
      %p359 = pneg %p145
      %p360 = pneg %p169
      %p361 = pneg %p166
      %p362 = pneg %p190
      %p363 = pneg %p187
      %p364 = pneg %p211
      %p365 = pneg %p208
      %p366 = pneg %p232
      %p367 = pneg %p229
      %p368 = pneg %p253
      %p369 = pneg %p250
      %p370 = pneg %p279
      %p371 = pneg %p276
      %p372 = scmp.lt.s32.totalorder %s22, 1
      %s373 = scalar_select %p372, %s22, 1
      %s374 = smul.addr %s373, 8
      %s375 = scalar_lea.vmem %s11, %s374
      %p376 = scmp.lt.s32.totalorder %s22, 1
      %s377 = scalar_select %p376, %s22, 1
      %s378 = smul.addr %s377, 112
      %s379 = smul.addr %s378, 4
      %s380 = scalar_lea.vmem %s0, %s379
      %p381 = scmp.lt.s32.totalorder %s22, 1
      %s382 = scalar_select %p381, %s22, 1
      %s383 = smul.addr %s382, 8
      %s384 = scalar_lea.vmem %s11, %s383
      %v386 = vld [vmem:[%s380] sm:$0xf]
      %v387 = vld [vmem:[%s380 + $0x4] sm:$0xf]
      %v388 = vld [vmem:[%s380 + $0x8] sm:$0xf]
      %v389 = vld [vmem:[%s380 + $0xc] sm:$0xf]
      %v390 = vld [vmem:[%s380 + $0x10] sm:$0xf]
      %v391 = vld [vmem:[%s380 + $0x14] sm:$0xf]
      %v392 = vld [vmem:[%s380 + $0x18] sm:$0xf]
      %v393 = vld [vmem:[%s380 + $0x1c] sm:$0xf]
      %v394 = vld [vmem:[%s380 + $0x20] sm:$0xf]
      %v395 = vld [vmem:[%s380 + $0x24] sm:$0xf]
      %v396 = vld [vmem:[%s380 + $0x28] sm:$0xf]
      %v397 = vld [vmem:[%s380 + $0x2c] sm:$0xf]
      %v398 = vld [vmem:[%s380 + $0x30] sm:$0xf]
      %v399 = vld [vmem:[%s380 + $0x34] sm:$0xf]
      %v400 = vld [vmem:[%s380 + $0x38] sm:$0xf]
      %v401 = vld [vmem:[%s380 + $0x3c] sm:$0xf]
      %v402 = vld [vmem:[%s380 + $0x40] sm:$0xf]
      %v403 = vld [vmem:[%s380 + $0x44] sm:$0xf]
      %v404 = vld [vmem:[%s380 + $0x48] sm:$0xf]
      %v405 = vld [vmem:[%s380 + $0x4c] sm:$0xf]
      %v406 = vld [vmem:[%s380 + $0x50] sm:$0xf]
      %v407 = vld [vmem:[%s380 + $0x54] sm:$0xf]
      %v408 = vld [vmem:[%s380 + $0x58] sm:$0xf]
      %v409 = vld [vmem:[%s380 + $0x5c] sm:$0xf]
      %v410 = vld [vmem:[%s380 + $0x60] sm:$0xf]
      %v411 = vld [vmem:[%s380 + $0x64] sm:$0xf]
      %v412 = vld [vmem:[%s380 + $0x68] sm:$0xf]
      %v413 = vld [vmem:[%s380 + $0x6c] sm:$0xf]
      %v414 = vld [vmem:[%s380 + $0x70] sm:$0xf]
      %v415 = vld [vmem:[%s380 + $0x74] sm:$0xf]
      %v416 = vld [vmem:[%s380 + $0x78] sm:$0xf]
      %v417 = vld [vmem:[%s380 + $0x7c] sm:$0xf]
      %v418 = vld [vmem:[%s380 + $0x80] sm:$0xf]
      %v419 = vld [vmem:[%s380 + $0x84] sm:$0xf]
      %v420 = vld [vmem:[%s380 + $0x88] sm:$0xf]
      %v421 = vld [vmem:[%s380 + $0x8c] sm:$0xf]
      %v422 = vld [vmem:[%s380 + $0x90] sm:$0xf]
      %v423 = vld [vmem:[%s380 + $0x94] sm:$0xf]
      %v424 = vld [vmem:[%s380 + $0x98] sm:$0xf]
      %v425 = vld [vmem:[%s380 + $0x9c] sm:$0xf]
      %v426 = vld [vmem:[%s380 + $0xa0] sm:$0xf]
      %v427 = vld [vmem:[%s380 + $0xa4] sm:$0xf]
      %v428 = vld [vmem:[%s380 + $0xa8] sm:$0xf]
      %v429 = vld [vmem:[%s380 + $0xac] sm:$0xf]
      %v430 = vld [vmem:[%s380 + $0xb0] sm:$0xf]
      %v431 = vld [vmem:[%s380 + $0xb4] sm:$0xf]
      %v432 = vld [vmem:[%s380 + $0xb8] sm:$0xf]
      %v433 = vld [vmem:[%s380 + $0xbc] sm:$0xf]
      %v434 = vld [vmem:[%s380 + $0xc0] sm:$0xf]
      %v435 = vld [vmem:[%s380 + $0xc4] sm:$0xf]
      %v436 = vld [vmem:[%s380 + $0xc8] sm:$0xf]
      %v437 = vld [vmem:[%s380 + $0xcc] sm:$0xf]
      %v438 = vld [vmem:[%s380 + $0xd0] sm:$0xf]
      %v439 = vld [vmem:[%s380 + $0xd4] sm:$0xf]
      %v440 = vld [vmem:[%s380 + $0xd8] sm:$0xf]
      %v441 = vld [vmem:[%s380 + $0xdc] sm:$0xf]
      %v442 = vld [vmem:[%s380 + $0xe0] sm:$0xf]
      %v443 = vld [vmem:[%s380 + $0xe4] sm:$0xf]
      %v444 = vld [vmem:[%s380 + $0xe8] sm:$0xf]
      %v445 = vld [vmem:[%s380 + $0xec] sm:$0xf]
      %v446 = vld [vmem:[%s380 + $0xf0] sm:$0xf]
      %v447 = vld [vmem:[%s380 + $0xf4] sm:$0xf]
      %v448 = vld [vmem:[%s380 + $0xf8] sm:$0xf]
      %v449 = vld [vmem:[%s380 + $0xfc] sm:$0xf]
      %v450 = vld [vmem:[%s380 + $0x100] sm:$0xf]
      %v451 = vld [vmem:[%s380 + $0x104] sm:$0xf]
      %v452 = vld [vmem:[%s380 + $0x108] sm:$0xf]
      %v453 = vld [vmem:[%s380 + $0x10c] sm:$0xf]
      %v454 = vld [vmem:[%s380 + $0x110] sm:$0xf]
      %v455 = vld [vmem:[%s380 + $0x114] sm:$0xf]
      %v456 = vld [vmem:[%s380 + $0x118] sm:$0xf]
      %v457 = vld [vmem:[%s380 + $0x11c] sm:$0xf]
      %v458 = vld [vmem:[%s380 + $0x120] sm:$0xf]
      %v459 = vld [vmem:[%s380 + $0x124] sm:$0xf]
      %v460 = vld [vmem:[%s380 + $0x128] sm:$0xf]
      %v461 = vld [vmem:[%s380 + $0x12c] sm:$0xf]
      %v462 = vld [vmem:[%s380 + $0x130] sm:$0xf]
      %v463 = vld [vmem:[%s380 + $0x134] sm:$0xf]
      %v464 = vld [vmem:[%s380 + $0x138] sm:$0xf]
      %v465 = vld [vmem:[%s380 + $0x13c] sm:$0xf]
      %v466 = vld [vmem:[%s380 + $0x140] sm:$0xf]
      %v467 = vld [vmem:[%s380 + $0x144] sm:$0xf]
      %v468 = vld [vmem:[%s380 + $0x148] sm:$0xf]
      %v469 = vld [vmem:[%s380 + $0x14c] sm:$0xf]
      %v470 = vld [vmem:[%s380 + $0x150] sm:$0xf]
      %v471 = vld [vmem:[%s380 + $0x154] sm:$0xf]
      %v472 = vld [vmem:[%s380 + $0x158] sm:$0xf]
      %v473 = vld [vmem:[%s380 + $0x15c] sm:$0xf]
      %v474 = vld [vmem:[%s380 + $0x160] sm:$0xf]
      %v475 = vld [vmem:[%s380 + $0x164] sm:$0xf]
      %v476 = vld [vmem:[%s380 + $0x168] sm:$0xf]
      %v477 = vld [vmem:[%s380 + $0x16c] sm:$0xf]
      %v478 = vld [vmem:[%s380 + $0x170] sm:$0xf]
      %v479 = vld [vmem:[%s380 + $0x174] sm:$0xf]
      %v480 = vld [vmem:[%s380 + $0x178] sm:$0xf]
      %v481 = vld [vmem:[%s380 + $0x17c] sm:$0xf]
      %v482 = vld [vmem:[%s380 + $0x180] sm:$0xf]
      %v483 = vld [vmem:[%s380 + $0x184] sm:$0xf]
      %v484 = vld [vmem:[%s380 + $0x188] sm:$0xf]
      %v485 = vld [vmem:[%s380 + $0x18c] sm:$0xf]
      %v486 = vld [vmem:[%s380 + $0x190] sm:$0xf]
      %v487 = vld [vmem:[%s380 + $0x194] sm:$0xf]
      %v488 = vld [vmem:[%s380 + $0x198] sm:$0xf]
      %v489 = vld [vmem:[%s380 + $0x19c] sm:$0xf]
      %v490 = vld [vmem:[%s380 + $0x1a0] sm:$0xf]
      %v491 = vld [vmem:[%s380 + $0x1a4] sm:$0xf]
      %v492 = vld [vmem:[%s380 + $0x1a8] sm:$0xf]
      %v493 = vld [vmem:[%s380 + $0x1ac] sm:$0xf]
      %v494 = vld [vmem:[%s380 + $0x1b0] sm:$0xf]
      %v495 = vld [vmem:[%s380 + $0x1b4] sm:$0xf]
      %v496 = vld [vmem:[%s380 + $0x1b8] sm:$0xf]
      %v497 = vld [vmem:[%s380 + $0x1bc] sm:$0xf]
      %v498 = vld [vmem:[%s1] sm:$0xf]
      %v499 = vld [vmem:[%s1 + $0x4] sm:$0xf]
      %v500 = vld [vmem:[%s1 + $0x8] sm:$0xf]
      %v501 = vld [vmem:[%s1 + $0xc] sm:$0xf]
      %v502 = vld [vmem:[%s1 + $0x10] sm:$0xf]
      %v503 = vld [vmem:[%s1 + $0x14] sm:$0xf]
      %v504 = vld [vmem:[%s1 + $0x18] sm:$0xf]
      %v505 = vld [vmem:[%s1 + $0x1c] sm:$0xf]
      %v506 = vld [vmem:[%s1 + $0x20] sm:$0xf]
      %v507 = vld [vmem:[%s1 + $0x24] sm:$0xf]
      %v508 = vld [vmem:[%s1 + $0x28] sm:$0xf]
      %v509 = vld [vmem:[%s1 + $0x2c] sm:$0xf]
      %v510 = vld [vmem:[%s1 + $0x30] sm:$0xf]
      %v511 = vld [vmem:[%s1 + $0x34] sm:$0xf]
      %v512 = vld [vmem:[%s1 + $0x38] sm:$0xf]
      %v513 = vld [vmem:[%s1 + $0x3c] sm:$0xf]
      %v514 = vld [vmem:[%s2] sm:$0x1]
      %v516 = vlaneseq
      %v517 = vshrl.u32 %v516, 7
      %v518 = vsub.s32 0, %v517
      %v519 = vrot.slane %v514, %v518
      %v633 = vunpack.c.l.b16 %v386
      %v634 = vunpack.c.l.b16 %v387
      %v635 = vunpack.c.l.b16 %v388
      %v636 = vunpack.c.l.b16 %v389
      %v637 = vunpack.c.l.b16 %v390
      %v638 = vunpack.c.l.b16 %v391
      %v639 = vunpack.c.l.b16 %v392
      %v640 = vunpack.c.l.b16 %v393
      %v641 = vunpack.c.l.b16 %v394
      %v642 = vunpack.c.l.b16 %v395
      %v643 = vunpack.c.l.b16 %v396
      %v644 = vunpack.c.l.b16 %v397
      %v645 = vunpack.c.l.b16 %v398
      %v646 = vunpack.c.l.b16 %v399
      %v647 = vunpack.c.l.b16 %v400
      %v648 = vunpack.c.l.b16 %v401
      %v649 = vunpack.c.l.b16 %v402
      %v650 = vunpack.c.l.b16 %v403
      %v651 = vunpack.c.l.b16 %v404
      %v652 = vunpack.c.l.b16 %v405
      %v653 = vunpack.c.l.b16 %v406
      %v654 = vunpack.c.l.b16 %v407
      %v655 = vunpack.c.l.b16 %v408
      %v656 = vunpack.c.l.b16 %v409
      %v657 = vunpack.c.l.b16 %v410
      %v658 = vunpack.c.l.b16 %v411
      %v659 = vunpack.c.l.b16 %v412
      %v660 = vunpack.c.l.b16 %v413
      %v661 = vunpack.c.l.b16 %v414
      %v662 = vunpack.c.l.b16 %v415
      %v663 = vunpack.c.l.b16 %v416
      %v664 = vunpack.c.l.b16 %v417
      %v665 = vunpack.c.l.b16 %v418
      %v666 = vunpack.c.l.b16 %v419
      %v667 = vunpack.c.l.b16 %v420
      %v668 = vunpack.c.l.b16 %v421
      %v669 = vunpack.c.l.b16 %v422
      %v670 = vunpack.c.l.b16 %v423
      %v671 = vunpack.c.l.b16 %v424
      %v672 = vunpack.c.l.b16 %v425
      %v673 = vunpack.c.l.b16 %v426
      %v674 = vunpack.c.l.b16 %v427
      %v675 = vunpack.c.l.b16 %v428
      %v676 = vunpack.c.l.b16 %v429
      %v677 = vunpack.c.l.b16 %v430
      %v678 = vunpack.c.l.b16 %v431
      %v679 = vunpack.c.l.b16 %v432
      %v680 = vunpack.c.l.b16 %v433
      %v681 = vunpack.c.l.b16 %v434
      %v682 = vunpack.c.l.b16 %v435
      %v683 = vunpack.c.l.b16 %v436
      %v684 = vunpack.c.l.b16 %v437
      %v685 = vunpack.c.l.b16 %v438
      %v686 = vunpack.c.l.b16 %v439
      %v687 = vunpack.c.l.b16 %v440
      %v688 = vunpack.c.l.b16 %v441
      %v689 = vunpack.c.l.b16 %v442
      %v690 = vunpack.c.l.b16 %v443
      %v691 = vunpack.c.l.b16 %v444
      %v692 = vunpack.c.l.b16 %v445
      %v693 = vunpack.c.l.b16 %v446
      %v694 = vunpack.c.l.b16 %v447
      %v695 = vunpack.c.l.b16 %v448
      %v696 = vunpack.c.l.b16 %v449
      %v697 = vunpack.c.l.b16 %v450
      %v698 = vunpack.c.l.b16 %v451
      %v699 = vunpack.c.l.b16 %v452
      %v700 = vunpack.c.l.b16 %v453
      %v701 = vunpack.c.l.b16 %v454
      %v702 = vunpack.c.l.b16 %v455
      %v703 = vunpack.c.l.b16 %v456
      %v704 = vunpack.c.l.b16 %v457
      %v705 = vunpack.c.l.b16 %v458
      %v706 = vunpack.c.l.b16 %v459
      %v707 = vunpack.c.l.b16 %v460
      %v708 = vunpack.c.l.b16 %v461
      %v709 = vunpack.c.l.b16 %v462
      %v710 = vunpack.c.l.b16 %v463
      %v711 = vunpack.c.l.b16 %v464
      %v712 = vunpack.c.l.b16 %v465
      %v713 = vunpack.c.l.b16 %v466
      %v714 = vunpack.c.l.b16 %v467
      %v715 = vunpack.c.l.b16 %v468
      %v716 = vunpack.c.l.b16 %v469
      %v717 = vunpack.c.l.b16 %v470
      %v718 = vunpack.c.l.b16 %v471
      %v719 = vunpack.c.l.b16 %v472
      %v720 = vunpack.c.l.b16 %v473
      %v721 = vunpack.c.l.b16 %v474
      %v722 = vunpack.c.l.b16 %v475
      %v723 = vunpack.c.l.b16 %v476
      %v724 = vunpack.c.l.b16 %v477
      %v725 = vunpack.c.l.b16 %v478
      %v726 = vunpack.c.l.b16 %v479
      %v727 = vunpack.c.l.b16 %v480
      %v728 = vunpack.c.l.b16 %v481
      %v729 = vunpack.c.l.b16 %v482
      %v730 = vunpack.c.l.b16 %v483
      %v731 = vunpack.c.l.b16 %v484
      %v732 = vunpack.c.l.b16 %v485
      %v733 = vunpack.c.l.b16 %v486
      %v734 = vunpack.c.l.b16 %v487
      %v735 = vunpack.c.l.b16 %v488
      %v736 = vunpack.c.l.b16 %v489
      %v737 = vunpack.c.l.b16 %v490
      %v738 = vunpack.c.l.b16 %v491
      %v739 = vunpack.c.l.b16 %v492
      %v740 = vunpack.c.l.b16 %v493
      %v741 = vunpack.c.l.b16 %v494
      %v742 = vunpack.c.l.b16 %v495
      %v743 = vunpack.c.l.b16 %v496
      %v744 = vunpack.c.l.b16 %v497
      %v745 = vpack.c.b16 %v634, %v633
      %v746 = vpack.c.b16 %v636, %v635
      %v747 = vpack.c.b16 %v638, %v637
      %v748 = vpack.c.b16 %v640, %v639
      %v749 = vpack.c.b16 %v642, %v641
      %v750 = vpack.c.b16 %v644, %v643
      %v751 = vpack.c.b16 %v646, %v645
      %v752 = vpack.c.b16 %v648, %v647
      %v753 = vpack.c.b16 %v650, %v649
      %v754 = vpack.c.b16 %v652, %v651
      %v755 = vpack.c.b16 %v654, %v653
      %v756 = vpack.c.b16 %v656, %v655
      %v757 = vpack.c.b16 %v658, %v657
      %v758 = vpack.c.b16 %v660, %v659
      %v759 = vpack.c.b16 %v662, %v661
      %v760 = vpack.c.b16 %v664, %v663
      %v761 = vpack.c.b16 %v666, %v665
      %v762 = vpack.c.b16 %v668, %v667
      %v763 = vpack.c.b16 %v670, %v669
      %v764 = vpack.c.b16 %v672, %v671
      %v765 = vpack.c.b16 %v674, %v673
      %v766 = vpack.c.b16 %v676, %v675
      %v767 = vpack.c.b16 %v678, %v677
      %v768 = vpack.c.b16 %v680, %v679
      %v769 = vpack.c.b16 %v682, %v681
      %v770 = vpack.c.b16 %v684, %v683
      %v771 = vpack.c.b16 %v686, %v685
      %v772 = vpack.c.b16 %v688, %v687
      %v773 = vpack.c.b16 %v690, %v689
      %v774 = vpack.c.b16 %v692, %v691
      %v775 = vpack.c.b16 %v694, %v693
      %v776 = vpack.c.b16 %v696, %v695
      %v777 = vpack.c.b16 %v698, %v697
      %v778 = vpack.c.b16 %v700, %v699
      %v779 = vpack.c.b16 %v702, %v701
      %v780 = vpack.c.b16 %v704, %v703
      %v781 = vpack.c.b16 %v706, %v705
      %v782 = vpack.c.b16 %v708, %v707
      %v783 = vpack.c.b16 %v710, %v709
      %v784 = vpack.c.b16 %v712, %v711
      %v785 = vpack.c.b16 %v714, %v713
      %v786 = vpack.c.b16 %v716, %v715
      %v787 = vpack.c.b16 %v718, %v717
      %v788 = vpack.c.b16 %v720, %v719
      %v789 = vpack.c.b16 %v722, %v721
      %v790 = vpack.c.b16 %v724, %v723
      %v791 = vpack.c.b16 %v726, %v725
      %v792 = vpack.c.b16 %v728, %v727
      %v793 = vpack.c.b16 %v730, %v729
      %v794 = vpack.c.b16 %v732, %v731
      %v795 = vpack.c.b16 %v734, %v733
      %v796 = vpack.c.b16 %v736, %v735
      %v797 = vpack.c.b16 %v738, %v737
      %v798 = vpack.c.b16 %v740, %v739
      %v799 = vpack.c.b16 %v742, %v741
      %v800 = vpack.c.b16 %v744, %v743
      %v873 = vunpack.c.l.b16 %v498
      %v874 = vunpack.c.l.b16 %v499
      %v875 = vunpack.c.l.b16 %v500
      %v876 = vunpack.c.l.b16 %v501
      %v877 = vunpack.c.l.b16 %v502
      %v878 = vunpack.c.l.b16 %v503
      %v879 = vunpack.c.l.b16 %v504
      %v880 = vunpack.c.l.b16 %v505
      %v881 = vunpack.c.l.b16 %v506
      %v882 = vunpack.c.l.b16 %v507
      %v883 = vunpack.c.l.b16 %v508
      %v884 = vunpack.c.l.b16 %v509
      %v885 = vunpack.c.l.b16 %v510
      %v886 = vunpack.c.l.b16 %v511
      %v887 = vunpack.c.l.b16 %v512
      %v888 = vunpack.c.l.b16 %v513
      %v889 = vpack.c.b16 %v874, %v873
      %v890 = vpack.c.b16 %v876, %v875
      %v891 = vpack.c.b16 %v878, %v877
      %v892 = vpack.c.b16 %v880, %v879
      %v893 = vpack.c.b16 %v882, %v881
      %v894 = vpack.c.b16 %v884, %v883
      %v895 = vpack.c.b16 %v886, %v885
      %v896 = vpack.c.b16 %v888, %v887
      %905 = vmatprep.subr.bf16.mxu0 0
      %906 = vmatpush1.bf16.msra.mxu0 %v889
      %907 = vmatprep.subr.bf16.mxu0 0
      %908 = vmatpush1.bf16.msra.mxu0 %v890
      %909 = vmatprep.subr.bf16.mxu0 0
      %910 = vmatpush1.bf16.msra.mxu0 %v891
      %911 = vmatprep.subr.bf16.mxu0 0
      %912 = vmatpush1.bf16.msra.mxu0 %v892
      %913 = vmatprep.subr.bf16.mxu0 0
      %914 = vmatpush1.bf16.msra.mxu0 %v893
      %915 = vmatprep.subr.bf16.mxu0 0
      %916 = vmatpush1.bf16.msra.mxu0 %v894
      %917 = vmatprep.subr.bf16.mxu0 0
      %918 = vmatpush1.bf16.msra.mxu0 %v895
      %919 = vmatprep.subr.bf16.mxu0 0
      %920 = vmatpush1.bf16.msra.mxu0 %v896
      %921 = vmatprep.subr.bf16.mxu0 0
      %922 = vmatpush1.bf16.msra.mxu0 0
      %923 = vmatprep.subr.bf16.mxu0 0
      %924 = vmatpush1.bf16.msra.mxu0 0
      %925 = vmatprep.subr.bf16.mxu0 0
      %926 = vmatpush1.bf16.msra.mxu0 0
      %927 = vmatprep.subr.bf16.mxu0 0
      %928 = vmatpush1.bf16.msra.mxu0 0
      %929 = vmatprep.subr.bf16.mxu0 0
      %930 = vmatpush1.bf16.msra.mxu0 0
      %931 = vmatprep.subr.bf16.mxu0 0
      %932 = vmatpush1.bf16.msra.mxu0 0
      %933 = vmatprep.subr.bf16.mxu0 0
      %934 = vmatpush1.bf16.msra.mxu0 0
      %935 = vmatprep.subr.bf16.mxu0 0
      %936 = vmatpush1.bf16.msra.mxu0 0
      %937 = vmatprep.mubr.bf16.mxu0 0
      %938 = vmatmul.mubr.bf16.gmra.mrb[0].mxu0 %v745
      %v939 = vpop.f32.mrb[0].mxu0
      %v940 = vadd.f32 %v519, %v939
      %v941 = vpop.f32.mrb[0].mxu0
      %v942 = vpop.f32.mrb[0].mxu0
      %v943 = vadd.f32 %v519, %v942
      %v944 = vpop.f32.mrb[0].mxu0
      %945 = vmatprep.mubr.bf16.mxu0 0
      %946 = vmatmul.mubr.bf16.gmra.mrb[0].mxu0 %v746
      %v947 = vpop.f32.mrb[0].mxu0
      %v948 = vadd.f32 %v519, %v947
      %v949 = vpop.f32.mrb[0].mxu0
      %v950 = vpop.f32.mrb[0].mxu0
      %v951 = vadd.f32 %v519, %v950
      %v952 = vpop.f32.mrb[0].mxu0
      %953 = vmatprep.mubr.bf16.mxu0 0
      %954 = vmatmul.mubr.bf16.gmra.mrb[0].mxu0 %v747
      %v955 = vpop.f32.mrb[0].mxu0
      %v956 = vadd.f32 %v519, %v955
      %v957 = vpop.f32.mrb[0].mxu0
      %v958 = vpop.f32.mrb[0].mxu0
      %v959 = vadd.f32 %v519, %v958
      %v960 = vpop.f32.mrb[0].mxu0
      %961 = vmatprep.mubr.bf16.mxu0 0
      %962 = vmatmul.mubr.bf16.gmra.mrb[0].mxu0 %v748
      %v963 = vpop.f32.mrb[0].mxu0
      %v964 = vadd.f32 %v519, %v963
      %v965 = vpop.f32.mrb[0].mxu0
      %v966 = vpop.f32.mrb[0].mxu0
      %v967 = vadd.f32 %v519, %v966
      %v968 = vpop.f32.mrb[0].mxu0
      %969 = vmatprep.mubr.bf16.mxu0 0
      %970 = vmatmul.mubr.bf16.gmra.mrb[0].mxu0 %v749
      %v971 = vpop.f32.mrb[0].mxu0
      %v972 = vadd.f32 %v519, %v971
      %v973 = vpop.f32.mrb[0].mxu0
      %v974 = vpop.f32.mrb[0].mxu0
      %v975 = vadd.f32 %v519, %v974
      %v976 = vpop.f32.mrb[0].mxu0
      %977 = vmatprep.mubr.bf16.mxu0 0
      %978 = vmatmul.mubr.bf16.gmra.mrb[0].mxu0 %v750
      %v979 = vpop.f32.mrb[0].mxu0
      %v980 = vadd.f32 %v519, %v979
      %v981 = vpop.f32.mrb[0].mxu0
      %v982 = vpop.f32.mrb[0].mxu0
      %v983 = vadd.f32 %v519, %v982
      %v984 = vpop.f32.mrb[0].mxu0
      %985 = vmatprep.mubr.bf16.mxu0 0
      %986 = vmatmul.mubr.bf16.gmra.mrb[0].mxu0 %v751
      %v987 = vpop.f32.mrb[0].mxu0
      %v988 = vadd.f32 %v519, %v987
      %v989 = vpop.f32.mrb[0].mxu0
      %v990 = vpop.f32.mrb[0].mxu0
      %v991 = vadd.f32 %v519, %v990
      %v992 = vpop.f32.mrb[0].mxu0
      %993 = vmatprep.mubr.bf16.mxu0 0
      %994 = vmatmul.mubr.bf16.gmra.mrb[0].mxu0 %v752
      %v995 = vpop.f32.mrb[0].mxu0
      %v996 = vadd.f32 %v519, %v995
      %v997 = vpop.f32.mrb[0].mxu0
      %v998 = vpop.f32.mrb[0].mxu0
      %v999 = vadd.f32 %v519, %v998
      %v1000 = vpop.f32.mrb[0].mxu0
      %1001 = vmatprep.mubr.bf16.mxu0 0
      %1002 = vmatmul.mubr.bf16.gmra.mrb[0].mxu0 %v753
      %v1003 = vpop.f32.mrb[0].mxu0
      %v1004 = vadd.f32 %v519, %v1003
      %v1005 = vpop.f32.mrb[0].mxu0
      %v1006 = vpop.f32.mrb[0].mxu0
      %v1007 = vadd.f32 %v519, %v1006
      %v1008 = vpop.f32.mrb[0].mxu0
      %1009 = vmatprep.mubr.bf16.mxu0 0
      %1010 = vmatmul.mubr.bf16.gmra.mrb[0].mxu0 %v754
      %v1011 = vpop.f32.mrb[0].mxu0
      %v1012 = vadd.f32 %v519, %v1011
      %v1013 = vpop.f32.mrb[0].mxu0
      %v1014 = vpop.f32.mrb[0].mxu0
      %v1015 = vadd.f32 %v519, %v1014
      %v1016 = vpop.f32.mrb[0].mxu0
      %1017 = vmatprep.mubr.bf16.mxu0 0
      %1018 = vmatmul.mubr.bf16.gmra.mrb[0].mxu0 %v755
      %v1019 = vpop.f32.mrb[0].mxu0
      %v1020 = vadd.f32 %v519, %v1019
      %v1021 = vpop.f32.mrb[0].mxu0
      %v1022 = vpop.f32.mrb[0].mxu0
      %v1023 = vadd.f32 %v519, %v1022
      %v1024 = vpop.f32.mrb[0].mxu0
      %1025 = vmatprep.mubr.bf16.mxu0 0
      %1026 = vmatmul.mubr.bf16.gmra.mrb[0].mxu0 %v756
      %v1027 = vpop.f32.mrb[0].mxu0
      %v1028 = vadd.f32 %v519, %v1027
      %v1029 = vpop.f32.mrb[0].mxu0
      %v1030 = vpop.f32.mrb[0].mxu0
      %v1031 = vadd.f32 %v519, %v1030
      %v1032 = vpop.f32.mrb[0].mxu0
      %1033 = vmatprep.mubr.bf16.mxu0 0
      %1034 = vmatmul.mubr.bf16.gmra.mrb[0].mxu0 %v757
      %v1035 = vpop.f32.mrb[0].mxu0
      %v1036 = vadd.f32 %v519, %v1035
      %v1037 = vpop.f32.mrb[0].mxu0
      %v1038 = vpop.f32.mrb[0].mxu0
      %v1039 = vadd.f32 %v519, %v1038
      %v1040 = vpop.f32.mrb[0].mxu0
      %1041 = vmatprep.mubr.bf16.mxu0 0
      %1042 = vmatmul.mubr.bf16.gmra.mrb[0].mxu0 %v758
      %v1043 = vpop.f32.mrb[0].mxu0
      %v1044 = vadd.f32 %v519, %v1043
      %v1045 = vpop.f32.mrb[0].mxu0
      %v1046 = vpop.f32.mrb[0].mxu0
      %v1047 = vadd.f32 %v519, %v1046
      %v1048 = vpop.f32.mrb[0].mxu0
      %1049 = vmatprep.mubr.bf16.mxu0 0
      %1050 = vmatmul.mubr.bf16.gmra.mrb[0].mxu0 %v759
      %v1051 = vpop.f32.mrb[0].mxu0
      %v1052 = vadd.f32 %v519, %v1051
      %v1053 = vpop.f32.mrb[0].mxu0
      %v1054 = vpop.f32.mrb[0].mxu0
      %v1055 = vadd.f32 %v519, %v1054
      %v1056 = vpop.f32.mrb[0].mxu0
      %1057 = vmatprep.mubr.bf16.mxu0 0
      %1058 = vmatmul.mubr.bf16.gmra.mrb[0].mxu0 %v760
      %v1059 = vpop.f32.mrb[0].mxu0
      %v1060 = vadd.f32 %v519, %v1059
      %v1061 = vpop.f32.mrb[0].mxu0
      %v1062 = vpop.f32.mrb[0].mxu0
      %v1063 = vadd.f32 %v519, %v1062
      %v1064 = vpop.f32.mrb[0].mxu0
      %1065 = vmatprep.mubr.bf16.mxu0 0
      %1066 = vmatmul.mubr.bf16.gmra.mrb[0].mxu0 %v761
      %v1067 = vpop.f32.mrb[0].mxu0
      %v1068 = vadd.f32 %v519, %v1067
      %v1069 = vpop.f32.mrb[0].mxu0
      %v1070 = vpop.f32.mrb[0].mxu0
      %v1071 = vadd.f32 %v519, %v1070
      %v1072 = vpop.f32.mrb[0].mxu0
      %1073 = vmatprep.mubr.bf16.mxu0 0
      %1074 = vmatmul.mubr.bf16.gmra.mrb[0].mxu0 %v762
      %v1075 = vpop.f32.mrb[0].mxu0
      %v1076 = vadd.f32 %v519, %v1075
      %v1077 = vpop.f32.mrb[0].mxu0
      %v1078 = vpop.f32.mrb[0].mxu0
      %v1079 = vadd.f32 %v519, %v1078
      %v1080 = vpop.f32.mrb[0].mxu0
      %1081 = vmatprep.mubr.bf16.mxu0 0
      %1082 = vmatmul.mubr.bf16.gmra.mrb[0].mxu0 %v763
      %v1083 = vpop.f32.mrb[0].mxu0
      %v1084 = vadd.f32 %v519, %v1083
      %v1085 = vpop.f32.mrb[0].mxu0
      %v1086 = vpop.f32.mrb[0].mxu0
      %v1087 = vadd.f32 %v519, %v1086
      %v1088 = vpop.f32.mrb[0].mxu0
      %1089 = vmatprep.mubr.bf16.mxu0 0
      %1090 = vmatmul.mubr.bf16.gmra.mrb[0].mxu0 %v764
      %v1091 = vpop.f32.mrb[0].mxu0
      %v1092 = vadd.f32 %v519, %v1091
      %v1093 = vpop.f32.mrb[0].mxu0
      %v1094 = vpop.f32.mrb[0].mxu0
      %v1095 = vadd.f32 %v519, %v1094
      %v1096 = vpop.f32.mrb[0].mxu0
      %1097 = vmatprep.mubr.bf16.mxu0 0
      %1098 = vmatmul.mubr.bf16.gmra.mrb[0].mxu0 %v765
      %v1099 = vpop.f32.mrb[0].mxu0
      %v1100 = vadd.f32 %v519, %v1099
      %v1101 = vpop.f32.mrb[0].mxu0
      %v1102 = vpop.f32.mrb[0].mxu0
      %v1103 = vadd.f32 %v519, %v1102
      %v1104 = vpop.f32.mrb[0].mxu0
      %1105 = vmatprep.mubr.bf16.mxu0 0
      %1106 = vmatmul.mubr.bf16.gmra.mrb[0].mxu0 %v766
      %v1107 = vpop.f32.mrb[0].mxu0
      %v1108 = vadd.f32 %v519, %v1107
      %v1109 = vpop.f32.mrb[0].mxu0
      %v1110 = vpop.f32.mrb[0].mxu0
      %v1111 = vadd.f32 %v519, %v1110
      %v1112 = vpop.f32.mrb[0].mxu0
      %1113 = vmatprep.mubr.bf16.mxu0 0
      %1114 = vmatmul.mubr.bf16.gmra.mrb[0].mxu0 %v767
      %v1115 = vpop.f32.mrb[0].mxu0
      %v1116 = vadd.f32 %v519, %v1115
      %v1117 = vpop.f32.mrb[0].mxu0
      %v1118 = vpop.f32.mrb[0].mxu0
      %v1119 = vadd.f32 %v519, %v1118
      %v1120 = vpop.f32.mrb[0].mxu0
      %1121 = vmatprep.mubr.bf16.mxu0 0
      %1122 = vmatmul.mubr.bf16.gmra.mrb[0].mxu0 %v768
      %v1123 = vpop.f32.mrb[0].mxu0
      %v1124 = vadd.f32 %v519, %v1123
      %v1125 = vpop.f32.mrb[0].mxu0
      %v1126 = vpop.f32.mrb[0].mxu0
      %v1127 = vadd.f32 %v519, %v1126
      %v1128 = vpop.f32.mrb[0].mxu0
      %1129 = vmatprep.mubr.bf16.mxu0 0
      %1130 = vmatmul.mubr.bf16.gmra.mrb[0].mxu0 %v769
      %v1131 = vpop.f32.mrb[0].mxu0
      %v1132 = vadd.f32 %v519, %v1131
      %v1133 = vpop.f32.mrb[0].mxu0
      %v1134 = vpop.f32.mrb[0].mxu0
      %v1135 = vadd.f32 %v519, %v1134
      %v1136 = vpop.f32.mrb[0].mxu0
      %1137 = vmatprep.mubr.bf16.mxu0 0
      %1138 = vmatmul.mubr.bf16.gmra.mrb[0].mxu0 %v770
      %v1139 = vpop.f32.mrb[0].mxu0
      %v1140 = vadd.f32 %v519, %v1139
      %v1141 = vpop.f32.mrb[0].mxu0
      %v1142 = vpop.f32.mrb[0].mxu0
      %v1143 = vadd.f32 %v519, %v1142
      %v1144 = vpop.f32.mrb[0].mxu0
      %1145 = vmatprep.mubr.bf16.mxu0 0
      %1146 = vmatmul.mubr.bf16.gmra.mrb[0].mxu0 %v771
      %v1147 = vpop.f32.mrb[0].mxu0
      %v1148 = vadd.f32 %v519, %v1147
      %v1149 = vpop.f32.mrb[0].mxu0
      %v1150 = vpop.f32.mrb[0].mxu0
      %v1151 = vadd.f32 %v519, %v1150
      %v1152 = vpop.f32.mrb[0].mxu0
      %1153 = vmatprep.mubr.bf16.mxu0 0
      %1154 = vmatmul.mubr.bf16.gmra.mrb[0].mxu0 %v772
      %v1155 = vpop.f32.mrb[0].mxu0
      %v1156 = vadd.f32 %v519, %v1155
      %v1157 = vpop.f32.mrb[0].mxu0
      %v1158 = vpop.f32.mrb[0].mxu0
      %v1159 = vadd.f32 %v519, %v1158
      %v1160 = vpop.f32.mrb[0].mxu0
      %1161 = vmatprep.mubr.bf16.mxu0 0
      %1162 = vmatmul.mubr.bf16.gmra.mrb[0].mxu0 %v773
      %v1163 = vpop.f32.mrb[0].mxu0
      %v1164 = vadd.f32 %v519, %v1163
      %v1165 = vpop.f32.mrb[0].mxu0
      %v1166 = vpop.f32.mrb[0].mxu0
      %v1167 = vadd.f32 %v519, %v1166
      %v1168 = vpop.f32.mrb[0].mxu0
      %1169 = vmatprep.mubr.bf16.mxu0 0
      %1170 = vmatmul.mubr.bf16.gmra.mrb[0].mxu0 %v774
      %v1171 = vpop.f32.mrb[0].mxu0
      %v1172 = vadd.f32 %v519, %v1171
      %v1173 = vpop.f32.mrb[0].mxu0
      %v1174 = vpop.f32.mrb[0].mxu0
      %v1175 = vadd.f32 %v519, %v1174
      %v1176 = vpop.f32.mrb[0].mxu0
      %1177 = vmatprep.mubr.bf16.mxu0 0
      %1178 = vmatmul.mubr.bf16.gmra.mrb[0].mxu0 %v775
      %v1179 = vpop.f32.mrb[0].mxu0
      %v1180 = vadd.f32 %v519, %v1179
      %v1181 = vpop.f32.mrb[0].mxu0
      %v1182 = vpop.f32.mrb[0].mxu0
      %v1183 = vadd.f32 %v519, %v1182
      %v1184 = vpop.f32.mrb[0].mxu0
      %1185 = vmatprep.mubr.bf16.mxu0 0
      %1186 = vmatmul.mubr.bf16.gmra.mrb[0].mxu0 %v776
      %v1187 = vpop.f32.mrb[0].mxu0
      %v1188 = vadd.f32 %v519, %v1187
      %v1189 = vpop.f32.mrb[0].mxu0
      %v1190 = vpop.f32.mrb[0].mxu0
      %v1191 = vadd.f32 %v519, %v1190
      %v1192 = vpop.f32.mrb[0].mxu0
      %1193 = vmatprep.mubr.bf16.mxu0 0
      %1194 = vmatmul.mubr.bf16.gmra.mrb[0].mxu0 %v777
      %v1195 = vpop.f32.mrb[0].mxu0
      %v1196 = vadd.f32 %v519, %v1195
      %v1197 = vpop.f32.mrb[0].mxu0
      %v1198 = vpop.f32.mrb[0].mxu0
      %v1199 = vadd.f32 %v519, %v1198
      %v1200 = vpop.f32.mrb[0].mxu0
      %1201 = vmatprep.mubr.bf16.mxu0 0
      %1202 = vmatmul.mubr.bf16.gmra.mrb[0].mxu0 %v778
      %v1203 = vpop.f32.mrb[0].mxu0
      %v1204 = vadd.f32 %v519, %v1203
      %v1205 = vpop.f32.mrb[0].mxu0
      %v1206 = vpop.f32.mrb[0].mxu0
      %v1207 = vadd.f32 %v519, %v1206
      %v1208 = vpop.f32.mrb[0].mxu0
      %1209 = vmatprep.mubr.bf16.mxu0 0
      %1210 = vmatmul.mubr.bf16.gmra.mrb[0].mxu0 %v779
      %v1211 = vpop.f32.mrb[0].mxu0
      %v1212 = vadd.f32 %v519, %v1211
      %v1213 = vpop.f32.mrb[0].mxu0
      %v1214 = vpop.f32.mrb[0].mxu0
      %v1215 = vadd.f32 %v519, %v1214
      %v1216 = vpop.f32.mrb[0].mxu0
      %1217 = vmatprep.mubr.bf16.mxu0 0
      %1218 = vmatmul.mubr.bf16.gmra.mrb[0].mxu0 %v780
      %v1219 = vpop.f32.mrb[0].mxu0
      %v1220 = vadd.f32 %v519, %v1219
      %v1221 = vpop.f32.mrb[0].mxu0
      %v1222 = vpop.f32.mrb[0].mxu0
      %v1223 = vadd.f32 %v519, %v1222
      %v1224 = vpop.f32.mrb[0].mxu0
      %1225 = vmatprep.mubr.bf16.mxu0 0
      %1226 = vmatmul.mubr.bf16.gmra.mrb[0].mxu0 %v781
      %v1227 = vpop.f32.mrb[0].mxu0
      %v1228 = vadd.f32 %v519, %v1227
      %v1229 = vpop.f32.mrb[0].mxu0
      %v1230 = vpop.f32.mrb[0].mxu0
      %v1231 = vadd.f32 %v519, %v1230
      %v1232 = vpop.f32.mrb[0].mxu0
      %1233 = vmatprep.mubr.bf16.mxu0 0
      %1234 = vmatmul.mubr.bf16.gmra.mrb[0].mxu0 %v782
      %v1235 = vpop.f32.mrb[0].mxu0
      %v1236 = vadd.f32 %v519, %v1235
      %v1237 = vpop.f32.mrb[0].mxu0
      %v1238 = vpop.f32.mrb[0].mxu0
      %v1239 = vadd.f32 %v519, %v1238
      %v1240 = vpop.f32.mrb[0].mxu0
      %1241 = vmatprep.mubr.bf16.mxu0 0
      %1242 = vmatmul.mubr.bf16.gmra.mrb[0].mxu0 %v783
      %v1243 = vpop.f32.mrb[0].mxu0
      %v1244 = vadd.f32 %v519, %v1243
      %v1245 = vpop.f32.mrb[0].mxu0
      %v1246 = vpop.f32.mrb[0].mxu0
      %v1247 = vadd.f32 %v519, %v1246
      %v1248 = vpop.f32.mrb[0].mxu0
      %1249 = vmatprep.mubr.bf16.mxu0 0
      %1250 = vmatmul.mubr.bf16.gmra.mrb[0].mxu0 %v784
      %v1251 = vpop.f32.mrb[0].mxu0
      %v1252 = vadd.f32 %v519, %v1251
      %v1253 = vpop.f32.mrb[0].mxu0
      %v1254 = vpop.f32.mrb[0].mxu0
      %v1255 = vadd.f32 %v519, %v1254
      %v1256 = vpop.f32.mrb[0].mxu0
      %1257 = vmatprep.mubr.bf16.mxu0 0
      %1258 = vmatmul.mubr.bf16.gmra.mrb[0].mxu0 %v785
      %v1259 = vpop.f32.mrb[0].mxu0
      %v1260 = vadd.f32 %v519, %v1259
      %v1261 = vpop.f32.mrb[0].mxu0
      %v1262 = vpop.f32.mrb[0].mxu0
      %v1263 = vadd.f32 %v519, %v1262
      %v1264 = vpop.f32.mrb[0].mxu0
      %1265 = vmatprep.mubr.bf16.mxu0 0
      %1266 = vmatmul.mubr.bf16.gmra.mrb[0].mxu0 %v786
      %v1267 = vpop.f32.mrb[0].mxu0
      %v1268 = vadd.f32 %v519, %v1267
      %v1269 = vpop.f32.mrb[0].mxu0
      %v1270 = vpop.f32.mrb[0].mxu0
      %v1271 = vadd.f32 %v519, %v1270
      %v1272 = vpop.f32.mrb[0].mxu0
      %1273 = vmatprep.mubr.bf16.mxu0 0
      %1274 = vmatmul.mubr.bf16.gmra.mrb[0].mxu0 %v787
      %v1275 = vpop.f32.mrb[0].mxu0
      %v1276 = vadd.f32 %v519, %v1275
      %v1277 = vpop.f32.mrb[0].mxu0
      %v1278 = vpop.f32.mrb[0].mxu0
      %v1279 = vadd.f32 %v519, %v1278
      %v1280 = vpop.f32.mrb[0].mxu0
      %1281 = vmatprep.mubr.bf16.mxu0 0
      %1282 = vmatmul.mubr.bf16.gmra.mrb[0].mxu0 %v788
      %v1283 = vpop.f32.mrb[0].mxu0
      %v1284 = vadd.f32 %v519, %v1283
      %v1285 = vpop.f32.mrb[0].mxu0
      %v1286 = vpop.f32.mrb[0].mxu0
      %v1287 = vadd.f32 %v519, %v1286
      %v1288 = vpop.f32.mrb[0].mxu0
      %1289 = vmatprep.mubr.bf16.mxu0 0
      %1290 = vmatmul.mubr.bf16.gmra.mrb[0].mxu0 %v789
      %v1291 = vpop.f32.mrb[0].mxu0
      %v1292 = vadd.f32 %v519, %v1291
      %v1293 = vpop.f32.mrb[0].mxu0
      %v1294 = vpop.f32.mrb[0].mxu0
      %v1295 = vadd.f32 %v519, %v1294
      %v1296 = vpop.f32.mrb[0].mxu0
      %1297 = vmatprep.mubr.bf16.mxu0 0
      %1298 = vmatmul.mubr.bf16.gmra.mrb[0].mxu0 %v790
      %v1299 = vpop.f32.mrb[0].mxu0
      %v1300 = vadd.f32 %v519, %v1299
      %v1301 = vpop.f32.mrb[0].mxu0
      %v1302 = vpop.f32.mrb[0].mxu0
      %v1303 = vadd.f32 %v519, %v1302
      %v1304 = vpop.f32.mrb[0].mxu0
      %1305 = vmatprep.mubr.bf16.mxu0 0
      %1306 = vmatmul.mubr.bf16.gmra.mrb[0].mxu0 %v791
      %v1307 = vpop.f32.mrb[0].mxu0
      %v1308 = vadd.f32 %v519, %v1307
      %v1309 = vpop.f32.mrb[0].mxu0
      %v1310 = vpop.f32.mrb[0].mxu0
      %v1311 = vadd.f32 %v519, %v1310
      %v1312 = vpop.f32.mrb[0].mxu0
      %1313 = vmatprep.mubr.bf16.mxu0 0
      %1314 = vmatmul.mubr.bf16.gmra.mrb[0].mxu0 %v792
      %v1315 = vpop.f32.mrb[0].mxu0
      %v1316 = vadd.f32 %v519, %v1315
      %v1317 = vpop.f32.mrb[0].mxu0
      %v1318 = vpop.f32.mrb[0].mxu0
      %v1319 = vadd.f32 %v519, %v1318
      %v1320 = vpop.f32.mrb[0].mxu0
      %1321 = vmatprep.mubr.bf16.mxu0 0
      %1322 = vmatmul.mubr.bf16.gmra.mrb[0].mxu0 %v793
      %v1323 = vpop.f32.mrb[0].mxu0
      %v1324 = vadd.f32 %v519, %v1323
      %v1325 = vpop.f32.mrb[0].mxu0
      %v1326 = vpop.f32.mrb[0].mxu0
      %v1327 = vadd.f32 %v519, %v1326
      %v1328 = vpop.f32.mrb[0].mxu0
      %1329 = vmatprep.mubr.bf16.mxu0 0
      %1330 = vmatmul.mubr.bf16.gmra.mrb[0].mxu0 %v794
      %v1331 = vpop.f32.mrb[0].mxu0
      %v1332 = vadd.f32 %v519, %v1331
      %v1333 = vpop.f32.mrb[0].mxu0
      %v1334 = vpop.f32.mrb[0].mxu0
      %v1335 = vadd.f32 %v519, %v1334
      %v1336 = vpop.f32.mrb[0].mxu0
      %1337 = vmatprep.mubr.bf16.mxu0 0
      %1338 = vmatmul.mubr.bf16.gmra.mrb[0].mxu0 %v795
      %v1339 = vpop.f32.mrb[0].mxu0
      %v1340 = vadd.f32 %v519, %v1339
      %v1341 = vpop.f32.mrb[0].mxu0
      %v1342 = vpop.f32.mrb[0].mxu0
      %v1343 = vadd.f32 %v519, %v1342
      %v1344 = vpop.f32.mrb[0].mxu0
      %1345 = vmatprep.mubr.bf16.mxu0 0
      %1346 = vmatmul.mubr.bf16.gmra.mrb[0].mxu0 %v796
      %v1347 = vpop.f32.mrb[0].mxu0
      %v1348 = vadd.f32 %v519, %v1347
      %v1349 = vpop.f32.mrb[0].mxu0
      %v1350 = vpop.f32.mrb[0].mxu0
      %v1351 = vadd.f32 %v519, %v1350
      %v1352 = vpop.f32.mrb[0].mxu0
      %1353 = vmatprep.mubr.bf16.mxu0 0
      %1354 = vmatmul.mubr.bf16.gmra.mrb[0].mxu0 %v797
      %v1355 = vpop.f32.mrb[0].mxu0
      %v1356 = vadd.f32 %v519, %v1355
      %v1357 = vpop.f32.mrb[0].mxu0
      %v1358 = vpop.f32.mrb[0].mxu0
      %v1359 = vadd.f32 %v519, %v1358
      %v1360 = vpop.f32.mrb[0].mxu0
      %1361 = vmatprep.mubr.bf16.mxu0 0
      %1362 = vmatmul.mubr.bf16.gmra.mrb[0].mxu0 %v798
      %v1363 = vpop.f32.mrb[0].mxu0
      %v1364 = vadd.f32 %v519, %v1363
      %v1365 = vpop.f32.mrb[0].mxu0
      %v1366 = vpop.f32.mrb[0].mxu0
      %v1367 = vadd.f32 %v519, %v1366
      %v1368 = vpop.f32.mrb[0].mxu0
      %1369 = vmatprep.mubr.bf16.mxu0 0
      %1370 = vmatmul.mubr.bf16.gmra.mrb[0].mxu0 %v799
      %v1371 = vpop.f32.mrb[0].mxu0
      %v1372 = vadd.f32 %v519, %v1371
      %v1373 = vpop.f32.mrb[0].mxu0
      %v1374 = vpop.f32.mrb[0].mxu0
      %v1375 = vadd.f32 %v519, %v1374
      %v1376 = vpop.f32.mrb[0].mxu0
      %1377 = vmatprep.mubr.bf16.mxu0 0
      %1378 = vmatmul.mubr.bf16.gmra.mrb[0].mxu0 %v800
      %v1379 = vpop.f32.mrb[0].mxu0
      %v1380 = vadd.f32 %v519, %v1379
      %v1381 = vpop.f32.mrb[0].mxu0
      %v1382 = vpop.f32.mrb[0].mxu0
      %v1383 = vadd.f32 %v519, %v1382
      %v1384 = vpop.f32.mrb[0].mxu0
      %1385 = vdwg.mxu0
      %v1386 = vmax.f32 %v940, 0.0
      %v1387 = vmax.f32 %v943, 0.0
      %v1388 = vmax.f32 %v948, 0.0
      %v1389 = vmax.f32 %v951, 0.0
      %v1390 = vmax.f32 %v956, 0.0
      %v1391 = vmax.f32 %v959, 0.0
      %v1392 = vmax.f32 %v964, 0.0
      %v1393 = vmax.f32 %v967, 0.0
      %v1394 = vmax.f32 %v972, 0.0
      %v1395 = vmax.f32 %v975, 0.0
      %v1396 = vmax.f32 %v980, 0.0
      %v1397 = vmax.f32 %v983, 0.0
      %v1398 = vmax.f32 %v988, 0.0
      %v1399 = vmax.f32 %v991, 0.0
      %v1400 = vmax.f32 %v996, 0.0
      %v1401 = vmax.f32 %v999, 0.0
      %v1402 = vmax.f32 %v1004, 0.0
      %v1403 = vmax.f32 %v1007, 0.0
      %v1404 = vmax.f32 %v1012, 0.0
      %v1405 = vmax.f32 %v1015, 0.0
      %v1406 = vmax.f32 %v1020, 0.0
      %v1407 = vmax.f32 %v1023, 0.0
      %v1408 = vmax.f32 %v1028, 0.0
      %v1409 = vmax.f32 %v1031, 0.0
      %v1410 = vmax.f32 %v1036, 0.0
      %v1411 = vmax.f32 %v1039, 0.0
      %v1412 = vmax.f32 %v1044, 0.0
      %v1413 = vmax.f32 %v1047, 0.0
      %v1414 = vmax.f32 %v1052, 0.0
      %v1415 = vmax.f32 %v1055, 0.0
      %v1416 = vmax.f32 %v1060, 0.0
      %v1417 = vmax.f32 %v1063, 0.0
      %v1418 = vmax.f32 %v1068, 0.0
      %v1419 = vmax.f32 %v1071, 0.0
      %v1420 = vmax.f32 %v1076, 0.0
      %v1421 = vmax.f32 %v1079, 0.0
      %v1422 = vmax.f32 %v1084, 0.0
      %v1423 = vmax.f32 %v1087, 0.0
      %v1424 = vmax.f32 %v1092, 0.0
      %v1425 = vmax.f32 %v1095, 0.0
      %v1426 = vmax.f32 %v1100, 0.0
      %v1427 = vmax.f32 %v1103, 0.0
      %v1428 = vmax.f32 %v1108, 0.0
      %v1429 = vmax.f32 %v1111, 0.0
      %v1430 = vmax.f32 %v1116, 0.0
      %v1431 = vmax.f32 %v1119, 0.0
      %v1432 = vmax.f32 %v1124, 0.0
      %v1433 = vmax.f32 %v1127, 0.0
      %v1434 = vmax.f32 %v1132, 0.0
      %v1435 = vmax.f32 %v1135, 0.0
      %v1436 = vmax.f32 %v1140, 0.0
      %v1437 = vmax.f32 %v1143, 0.0
      %v1438 = vmax.f32 %v1148, 0.0
      %v1439 = vmax.f32 %v1151, 0.0
      %v1440 = vmax.f32 %v1156, 0.0
      %v1441 = vmax.f32 %v1159, 0.0
      %v1442 = vmax.f32 %v1164, 0.0
      %v1443 = vmax.f32 %v1167, 0.0
      %v1444 = vmax.f32 %v1172, 0.0
      %v1445 = vmax.f32 %v1175, 0.0
      %v1446 = vmax.f32 %v1180, 0.0
      %v1447 = vmax.f32 %v1183, 0.0
      %v1448 = vmax.f32 %v1188, 0.0
      %v1449 = vmax.f32 %v1191, 0.0
      %v1450 = vmax.f32 %v1196, 0.0
      %v1451 = vmax.f32 %v1199, 0.0
      %v1452 = vmax.f32 %v1204, 0.0
      %v1453 = vmax.f32 %v1207, 0.0
      %v1454 = vmax.f32 %v1212, 0.0
      %v1455 = vmax.f32 %v1215, 0.0
      %v1456 = vmax.f32 %v1220, 0.0
      %v1457 = vmax.f32 %v1223, 0.0
      %v1458 = vmax.f32 %v1228, 0.0
      %v1459 = vmax.f32 %v1231, 0.0
      %v1460 = vmax.f32 %v1236, 0.0
      %v1461 = vmax.f32 %v1239, 0.0
      %v1462 = vmax.f32 %v1244, 0.0
      %v1463 = vmax.f32 %v1247, 0.0
      %v1464 = vmax.f32 %v1252, 0.0
      %v1465 = vmax.f32 %v1255, 0.0
      %v1466 = vmax.f32 %v1260, 0.0
      %v1467 = vmax.f32 %v1263, 0.0
      %v1468 = vmax.f32 %v1268, 0.0
      %v1469 = vmax.f32 %v1271, 0.0
      %v1470 = vmax.f32 %v1276, 0.0
      %v1471 = vmax.f32 %v1279, 0.0
      %v1472 = vmax.f32 %v1284, 0.0
      %v1473 = vmax.f32 %v1287, 0.0
      %v1474 = vmax.f32 %v1292, 0.0
      %v1475 = vmax.f32 %v1295, 0.0
      %v1476 = vmax.f32 %v1300, 0.0
      %v1477 = vmax.f32 %v1303, 0.0
      %v1478 = vmax.f32 %v1308, 0.0
      %v1479 = vmax.f32 %v1311, 0.0
      %v1480 = vmax.f32 %v1316, 0.0
      %v1481 = vmax.f32 %v1319, 0.0
      %v1482 = vmax.f32 %v1324, 0.0
      %v1483 = vmax.f32 %v1327, 0.0
      %v1484 = vmax.f32 %v1332, 0.0
      %v1485 = vmax.f32 %v1335, 0.0
      %v1486 = vmax.f32 %v1340, 0.0
      %v1487 = vmax.f32 %v1343, 0.0
      %v1488 = vmax.f32 %v1348, 0.0
      %v1489 = vmax.f32 %v1351, 0.0
      %v1490 = vmax.f32 %v1356, 0.0
      %v1491 = vmax.f32 %v1359, 0.0
      %v1492 = vmax.f32 %v1364, 0.0
      %v1493 = vmax.f32 %v1367, 0.0
      %v1494 = vmax.f32 %v1372, 0.0
      %v1495 = vmax.f32 %v1375, 0.0
      %v1496 = vmax.f32 %v1380, 0.0
      %v1497 = vmax.f32 %v1383, 0.0
      %1498 = vst [vmem:[#allocation2] sm:$0xff] %v1386
      %1499 = vst [vmem:[#allocation2 + $0x8] sm:$0xff] %v1387
      %1500 = vst [vmem:[#allocation2 + $0x10] sm:$0xff] %v1388
      %1501 = vst [vmem:[#allocation2 + $0x18] sm:$0xff] %v1389
      %1502 = vst [vmem:[#allocation2 + $0x20] sm:$0xff] %v1390
      %1503 = vst [vmem:[#allocation2 + $0x28] sm:$0xff] %v1391
      %1504 = vst [vmem:[#allocation2 + $0x30] sm:$0xff] %v1392
      %1505 = vst [vmem:[#allocation2 + $0x38] sm:$0xff] %v1393
      %1506 = vst [vmem:[#allocation2 + $0x40] sm:$0xff] %v1394
      %1507 = vst [vmem:[#allocation2 + $0x48] sm:$0xff] %v1395
      %1508 = vst [vmem:[#allocation2 + $0x50] sm:$0xff] %v1396
      %1509 = vst [vmem:[#allocation2 + $0x58] sm:$0xff] %v1397
      %1510 = vst [vmem:[#allocation2 + $0x60] sm:$0xff] %v1398
      %1511 = vst [vmem:[#allocation2 + $0x68] sm:$0xff] %v1399
      %1512 = vst [vmem:[#allocation2 + $0x70] sm:$0xff] %v1400
      %1513 = vst [vmem:[#allocation2 + $0x78] sm:$0xff] %v1401
      %1514 = vst [vmem:[#allocation2 + $0x80] sm:$0xff] %v1402
      %1515 = vst [vmem:[#allocation2 + $0x88] sm:$0xff] %v1403
      %1516 = vst [vmem:[#allocation2 + $0x90] sm:$0xff] %v1404
      %1517 = vst [vmem:[#allocation2 + $0x98] sm:$0xff] %v1405
      %1518 = vst [vmem:[#allocation2 + $0xa0] sm:$0xff] %v1406
      %1519 = vst [vmem:[#allocation2 + $0xa8] sm:$0xff] %v1407
      %1520 = vst [vmem:[#allocation2 + $0xb0] sm:$0xff] %v1408
      %1521 = vst [vmem:[#allocation2 + $0xb8] sm:$0xff] %v1409
      %1522 = vst [vmem:[#allocation2 + $0xc0] sm:$0xff] %v1410
      %1523 = vst [vmem:[#allocation2 + $0xc8] sm:$0xff] %v1411
      %1524 = vst [vmem:[#allocation2 + $0xd0] sm:$0xff] %v1412
      %1525 = vst [vmem:[#allocation2 + $0xd8] sm:$0xff] %v1413
      %1526 = vst [vmem:[#allocation2 + $0xe0] sm:$0xff] %v1414
      %1527 = vst [vmem:[#allocation2 + $0xe8] sm:$0xff] %v1415
      %1528 = vst [vmem:[#allocation2 + $0xf0] sm:$0xff] %v1416
      %1529 = vst [vmem:[#allocation2 + $0xf8] sm:$0xff] %v1417
      %1530 = vst [vmem:[#allocation2 + $0x100] sm:$0xff] %v1418
      %1531 = vst [vmem:[#allocation2 + $0x108] sm:$0xff] %v1419
      %1532 = vst [vmem:[#allocation2 + $0x110] sm:$0xff] %v1420
      %1533 = vst [vmem:[#allocation2 + $0x118] sm:$0xff] %v1421
      %1534 = vst [vmem:[#allocation2 + $0x120] sm:$0xff] %v1422
      %1535 = vst [vmem:[#allocation2 + $0x128] sm:$0xff] %v1423
      %1536 = vst [vmem:[#allocation2 + $0x130] sm:$0xff] %v1424
      %1537 = vst [vmem:[#allocation2 + $0x138] sm:$0xff] %v1425
      %1538 = vst [vmem:[#allocation2 + $0x140] sm:$0xff] %v1426
      %1539 = vst [vmem:[#allocation2 + $0x148] sm:$0xff] %v1427
      %1540 = vst [vmem:[#allocation2 + $0x150] sm:$0xff] %v1428
      %1541 = vst [vmem:[#allocation2 + $0x158] sm:$0xff] %v1429
      %1542 = vst [vmem:[#allocation2 + $0x160] sm:$0xff] %v1430
      %1543 = vst [vmem:[#allocation2 + $0x168] sm:$0xff] %v1431
      %1544 = vst [vmem:[#allocation2 + $0x170] sm:$0xff] %v1432
      %1545 = vst [vmem:[#allocation2 + $0x178] sm:$0xff] %v1433
      %1546 = vst [vmem:[#allocation2 + $0x180] sm:$0xff] %v1434
      %1547 = vst [vmem:[#allocation2 + $0x188] sm:$0xff] %v1435
      %1548 = vst [vmem:[#allocation2 + $0x190] sm:$0xff] %v1436
      %1549 = vst [vmem:[#allocation2 + $0x198] sm:$0xff] %v1437
      %1550 = vst [vmem:[#allocation2 + $0x1a0] sm:$0xff] %v1438
      %1551 = vst [vmem:[#allocation2 + $0x1a8] sm:$0xff] %v1439
      %1552 = vst [vmem:[#allocation2 + $0x1b0] sm:$0xff] %v1440
      %1553 = vst [vmem:[#allocation2 + $0x1b8] sm:$0xff] %v1441
      %1554 = vst [vmem:[#allocation2 + $0x1c0] sm:$0xff] %v1442
      %1555 = vst [vmem:[#allocation2 + $0x1c8] sm:$0xff] %v1443
      %1556 = vst [vmem:[#allocation2 + $0x1d0] sm:$0xff] %v1444
      %1557 = vst [vmem:[#allocation2 + $0x1d8] sm:$0xff] %v1445
      %1558 = vst [vmem:[#allocation2 + $0x1e0] sm:$0xff] %v1446
      %1559 = vst [vmem:[#allocation2 + $0x1e8] sm:$0xff] %v1447
      %1560 = vst [vmem:[#allocation2 + $0x1f0] sm:$0xff] %v1448
      %1561 = vst [vmem:[#allocation2 + $0x1f8] sm:$0xff] %v1449
      %1562 = vst [vmem:[#allocation2 + $0x200] sm:$0xff] %v1450
      %1563 = vst [vmem:[#allocation2 + $0x208] sm:$0xff] %v1451
      %1564 = vst [vmem:[#allocation2 + $0x210] sm:$0xff] %v1452
      %1565 = vst [vmem:[#allocation2 + $0x218] sm:$0xff] %v1453
      %1566 = vst [vmem:[#allocation2 + $0x220] sm:$0xff] %v1454
      %1567 = vst [vmem:[#allocation2 + $0x228] sm:$0xff] %v1455
      %1568 = vst [vmem:[#allocation2 + $0x230] sm:$0xff] %v1456
      %1569 = vst [vmem:[#allocation2 + $0x238] sm:$0xff] %v1457
      %1570 = vst [vmem:[#allocation2 + $0x240] sm:$0xff] %v1458
      %1571 = vst [vmem:[#allocation2 + $0x248] sm:$0xff] %v1459
      %1572 = vst [vmem:[#allocation2 + $0x250] sm:$0xff] %v1460
      %1573 = vst [vmem:[#allocation2 + $0x258] sm:$0xff] %v1461
      %1574 = vst [vmem:[#allocation2 + $0x260] sm:$0xff] %v1462
      %1575 = vst [vmem:[#allocation2 + $0x268] sm:$0xff] %v1463
      %1576 = vst [vmem:[#allocation2 + $0x270] sm:$0xff] %v1464
      %1577 = vst [vmem:[#allocation2 + $0x278] sm:$0xff] %v1465
      %1578 = vst [vmem:[#allocation2 + $0x280] sm:$0xff] %v1466
      %1579 = vst [vmem:[#allocation2 + $0x288] sm:$0xff] %v1467
      %1580 = vst [vmem:[#allocation2 + $0x290] sm:$0xff] %v1468
      %1581 = vst [vmem:[#allocation2 + $0x298] sm:$0xff] %v1469
      %1582 = vst [vmem:[#allocation2 + $0x2a0] sm:$0xff] %v1470
      %1583 = vst [vmem:[#allocation2 + $0x2a8] sm:$0xff] %v1471
      %1584 = vst [vmem:[#allocation2 + $0x2b0] sm:$0xff] %v1472
      %1585 = vst [vmem:[#allocation2 + $0x2b8] sm:$0xff] %v1473
      %1586 = vst [vmem:[#allocation2 + $0x2c0] sm:$0xff] %v1474
      %1587 = vst [vmem:[#allocation2 + $0x2c8] sm:$0xff] %v1475
      %1588 = vst [vmem:[#allocation2 + $0x2d0] sm:$0xff] %v1476
      %1589 = vst [vmem:[#allocation2 + $0x2d8] sm:$0xff] %v1477
      %1590 = vst [vmem:[#allocation2 + $0x2e0] sm:$0xff] %v1478
      %1591 = vst [vmem:[#allocation2 + $0x2e8] sm:$0xff] %v1479
      %1592 = vst [vmem:[#allocation2 + $0x2f0] sm:$0xff] %v1480
      %1593 = vst [vmem:[#allocation2 + $0x2f8] sm:$0xff] %v1481
      %1594 = vst [vmem:[#allocation2 + $0x300] sm:$0xff] %v1482
      %1595 = vst [vmem:[#allocation2 + $0x308] sm:$0xff] %v1483
      %1596 = vst [vmem:[#allocation2 + $0x310] sm:$0xff] %v1484
      %1597 = vst [vmem:[#allocation2 + $0x318] sm:$0xff] %v1485
      %1598 = vst [vmem:[#allocation2 + $0x320] sm:$0xff] %v1486
      %1599 = vst [vmem:[#allocation2 + $0x328] sm:$0xff] %v1487
      %1600 = vst [vmem:[#allocation2 + $0x330] sm:$0xff] %v1488
      %1601 = vst [vmem:[#allocation2 + $0x338] sm:$0xff] %v1489
      %1602 = vst [vmem:[#allocation2 + $0x340] sm:$0xff] %v1490
      %1603 = vst [vmem:[#allocation2 + $0x348] sm:$0xff] %v1491
      %1604 = vst [vmem:[#allocation2 + $0x350] sm:$0xff] %v1492
      %1605 = vst [vmem:[#allocation2 + $0x358] sm:$0xff] %v1493
      %1606 = vst [vmem:[#allocation2 + $0x360] sm:$0xff] %v1494
      %1607 = vst [vmem:[#allocation2 + $0x368] sm:$0xff] %v1495
      %1608 = vst [vmem:[#allocation2 + $0x370] sm:$0xff] %v1496
      %1609 = vst [vmem:[#allocation2 + $0x378] sm:$0xff] %v1497
      %v1610 = vld [vmem:[#allocation2] ss:$2 sm:$0xff]
      %s1611 = scalar_lea.vmem [#allocation2], 16
      %v1612 = vld [vmem:[%s1611] ss:$2 sm:$0x3f]
      %s1613 = scalar_lea.vmem [#allocation2], 1
      %v1614 = vld [vmem:[%s1613] ss:$2 sm:$0xff]
      %s1615 = scalar_lea.vmem [#allocation2], 17
      %v1616 = vld [vmem:[%s1615] ss:$2 sm:$0x3f]
      %v1617 = vmax.f32 %v1610, %v1614
      %v1618 = vmax.f32 %v1612, %v1616
      %s1619 = scalar_lea.vmem [#allocation2], 32
      %v1620 = vld [vmem:[%s1619] ss:$2 sm:$0xff]
      %s1621 = scalar_lea.vmem [#allocation2], 48
      %v1622 = vld [vmem:[%s1621] ss:$2 sm:$0x3f]
      %s1623 = scalar_lea.vmem [#allocation2], 33
      %v1624 = vld [vmem:[%s1623] ss:$2 sm:$0xff]
      %s1625 = scalar_lea.vmem [#allocation2], 49
      %v1626 = vld [vmem:[%s1625] ss:$2 sm:$0x3f]
      %v1627 = vmax.f32 %v1620, %v1624
      %v1628 = vmax.f32 %v1622, %v1626
      %v1629 = vmax.f32 %v1617, %v1627
      %v1630 = vmax.f32 %v1618, %v1628
      %1631 = vst [vmem:[#allocation3] sm:$0xff] %v1629
      %1632 = vst [vmem:[#allocation3 + $0x8] sm:$0x3f] %v1630
      %s1633 = scalar_lea.vmem [#allocation2], 64
      %v1634 = vld [vmem:[%s1633] ss:$2 sm:$0xff]
      %s1635 = scalar_lea.vmem [#allocation2], 80
      %v1636 = vld [vmem:[%s1635] ss:$2 sm:$0x3f]
      %s1637 = scalar_lea.vmem [#allocation2], 65
      %v1638 = vld [vmem:[%s1637] ss:$2 sm:$0xff]
      %s1639 = scalar_lea.vmem [#allocation2], 81
      %v1640 = vld [vmem:[%s1639] ss:$2 sm:$0x3f]
      %v1641 = vmax.f32 %v1634, %v1638
      %v1642 = vmax.f32 %v1636, %v1640
      %s1643 = scalar_lea.vmem [#allocation2], 96
      %v1644 = vld [vmem:[%s1643] ss:$2 sm:$0xff]
      %s1645 = scalar_lea.vmem [#allocation2], 112
      %v1646 = vld [vmem:[%s1645] ss:$2 sm:$0x3f]
      %s1647 = scalar_lea.vmem [#allocation2], 97
      %v1648 = vld [vmem:[%s1647] ss:$2 sm:$0xff]
      %s1649 = scalar_lea.vmem [#allocation2], 113
      %v1650 = vld [vmem:[%s1649] ss:$2 sm:$0x3f]
      %v1651 = vmax.f32 %v1644, %v1648
      %v1652 = vmax.f32 %v1646, %v1650
      %v1653 = vmax.f32 %v1641, %v1651
      %v1654 = vmax.f32 %v1642, %v1652
      %1655 = vst [vmem:[#allocation3 + $0xe] sm:$0xff] %v1653
      %1656 = vst [vmem:[#allocation3 + $0x16] sm:$0x3f] %v1654
      %s1657 = scalar_lea.vmem [#allocation2], 128
      %v1658 = vld [vmem:[%s1657] ss:$2 sm:$0xff]
      %s1659 = scalar_lea.vmem [#allocation2], 144
      %v1660 = vld [vmem:[%s1659] ss:$2 sm:$0x3f]
      %s1661 = scalar_lea.vmem [#allocation2], 129
      %v1662 = vld [vmem:[%s1661] ss:$2 sm:$0xff]
      %s1663 = scalar_lea.vmem [#allocation2], 145
      %v1664 = vld [vmem:[%s1663] ss:$2 sm:$0x3f]
      %v1665 = vmax.f32 %v1658, %v1662
      %v1666 = vmax.f32 %v1660, %v1664
      %s1667 = scalar_lea.vmem [#allocation2], 160
      %v1668 = vld [vmem:[%s1667] ss:$2 sm:$0xff]
      %s1669 = scalar_lea.vmem [#allocation2], 176
      %v1670 = vld [vmem:[%s1669] ss:$2 sm:$0x3f]
      %s1671 = scalar_lea.vmem [#allocation2], 161
      %v1672 = vld [vmem:[%s1671] ss:$2 sm:$0xff]
      %s1673 = scalar_lea.vmem [#allocation2], 177
      %v1674 = vld [vmem:[%s1673] ss:$2 sm:$0x3f]
      %v1675 = vmax.f32 %v1668, %v1672
      %v1676 = vmax.f32 %v1670, %v1674
      %v1677 = vmax.f32 %v1665, %v1675
      %v1678 = vmax.f32 %v1666, %v1676
      %1679 = vst [vmem:[#allocation3 + $0x1c] sm:$0xff] %v1677
      %1680 = vst [vmem:[#allocation3 + $0x24] sm:$0x3f] %v1678
      %s1681 = scalar_lea.vmem [#allocation2], 192
      %v1682 = vld [vmem:[%s1681] ss:$2 sm:$0xff]
      %s1683 = scalar_lea.vmem [#allocation2], 208
      %v1684 = vld [vmem:[%s1683] ss:$2 sm:$0x3f]
      %s1685 = scalar_lea.vmem [#allocation2], 193
      %v1686 = vld [vmem:[%s1685] ss:$2 sm:$0xff]
      %s1687 = scalar_lea.vmem [#allocation2], 209
      %v1688 = vld [vmem:[%s1687] ss:$2 sm:$0x3f]
      %v1689 = vmax.f32 %v1682, %v1686
      %v1690 = vmax.f32 %v1684, %v1688
      %s1691 = scalar_lea.vmem [#allocation2], 224
      %v1692 = vld [vmem:[%s1691] ss:$2 sm:$0xff]
      %s1693 = scalar_lea.vmem [#allocation2], 240
      %v1694 = vld [vmem:[%s1693] ss:$2 sm:$0x3f]
      %s1695 = scalar_lea.vmem [#allocation2], 225
      %v1696 = vld [vmem:[%s1695] ss:$2 sm:$0xff]
      %s1697 = scalar_lea.vmem [#allocation2], 241
      %v1698 = vld [vmem:[%s1697] ss:$2 sm:$0x3f]
      %v1699 = vmax.f32 %v1692, %v1696
      %v1700 = vmax.f32 %v1694, %v1698
      %v1701 = vmax.f32 %v1689, %v1699
      %v1702 = vmax.f32 %v1690, %v1700
      %1703 = vst [vmem:[#allocation3 + $0x2a] sm:$0xff] %v1701
      %1704 = vst [vmem:[#allocation3 + $0x32] sm:$0x3f] %v1702
      %s1705 = scalar_lea.vmem [#allocation2], 256
      %v1706 = vld [vmem:[%s1705] ss:$2 sm:$0xff]
      %s1707 = scalar_lea.vmem [#allocation2], 272
      %v1708 = vld [vmem:[%s1707] ss:$2 sm:$0x3f]
      %s1709 = scalar_lea.vmem [#allocation2], 257
      %v1710 = vld [vmem:[%s1709] ss:$2 sm:$0xff]
      %s1711 = scalar_lea.vmem [#allocation2], 273
      %v1712 = vld [vmem:[%s1711] ss:$2 sm:$0x3f]
      %v1713 = vmax.f32 %v1706, %v1710
      %v1714 = vmax.f32 %v1708, %v1712
      %s1715 = scalar_lea.vmem [#allocation2], 288
      %v1716 = vld [vmem:[%s1715] ss:$2 sm:$0xff]
      %s1717 = scalar_lea.vmem [#allocation2], 304
      %v1718 = vld [vmem:[%s1717] ss:$2 sm:$0x3f]
      %s1719 = scalar_lea.vmem [#allocation2], 289
      %v1720 = vld [vmem:[%s1719] ss:$2 sm:$0xff]
      %s1721 = scalar_lea.vmem [#allocation2], 305
      %v1722 = vld [vmem:[%s1721] ss:$2 sm:$0x3f]
      %v1723 = vmax.f32 %v1716, %v1720
      %v1724 = vmax.f32 %v1718, %v1722
      %v1725 = vmax.f32 %v1713, %v1723
      %v1726 = vmax.f32 %v1714, %v1724
      %1727 = vst [vmem:[#allocation3 + $0x38] sm:$0xff] %v1725
      %1728 = vst [vmem:[#allocation3 + $0x40] sm:$0x3f] %v1726
      %s1729 = scalar_lea.vmem [#allocation2], 320
      %v1730 = vld [vmem:[%s1729] ss:$2 sm:$0xff]
      %s1731 = scalar_lea.vmem [#allocation2], 336
      %v1732 = vld [vmem:[%s1731] ss:$2 sm:$0x3f]
      %s1733 = scalar_lea.vmem [#allocation2], 321
      %v1734 = vld [vmem:[%s1733] ss:$2 sm:$0xff]
      %s1735 = scalar_lea.vmem [#allocation2], 337
      %v1736 = vld [vmem:[%s1735] ss:$2 sm:$0x3f]
      %v1737 = vmax.f32 %v1730, %v1734
      %v1738 = vmax.f32 %v1732, %v1736
      %s1739 = scalar_lea.vmem [#allocation2], 352
      %v1740 = vld [vmem:[%s1739] ss:$2 sm:$0xff]
      %s1741 = scalar_lea.vmem [#allocation2], 368
      %v1742 = vld [vmem:[%s1741] ss:$2 sm:$0x3f]
      %s1743 = scalar_lea.vmem [#allocation2], 353
      %v1744 = vld [vmem:[%s1743] ss:$2 sm:$0xff]
      %s1745 = scalar_lea.vmem [#allocation2], 369
      %v1746 = vld [vmem:[%s1745] ss:$2 sm:$0x3f]
      %v1747 = vmax.f32 %v1740, %v1744
      %v1748 = vmax.f32 %v1742, %v1746
      %v1749 = vmax.f32 %v1737, %v1747
      %v1750 = vmax.f32 %v1738, %v1748
      %1751 = vst [vmem:[#allocation3 + $0x46] sm:$0xff] %v1749
      %1752 = vst [vmem:[#allocation3 + $0x4e] sm:$0x3f] %v1750
      %s1753 = scalar_lea.vmem [#allocation2], 384
      %v1754 = vld [vmem:[%s1753] ss:$2 sm:$0xff]
      %s1755 = scalar_lea.vmem [#allocation2], 400
      %v1756 = vld [vmem:[%s1755] ss:$2 sm:$0x3f]
      %s1757 = scalar_lea.vmem [#allocation2], 385
      %v1758 = vld [vmem:[%s1757] ss:$2 sm:$0xff]
      %s1759 = scalar_lea.vmem [#allocation2], 401
      %v1760 = vld [vmem:[%s1759] ss:$2 sm:$0x3f]
      %v1761 = vmax.f32 %v1754, %v1758
      %v1762 = vmax.f32 %v1756, %v1760
      %s1763 = scalar_lea.vmem [#allocation2], 416
      %v1764 = vld [vmem:[%s1763] ss:$2 sm:$0xff]
      %s1765 = scalar_lea.vmem [#allocation2], 432
      %v1766 = vld [vmem:[%s1765] ss:$2 sm:$0x3f]
      %s1767 = scalar_lea.vmem [#allocation2], 417
      %v1768 = vld [vmem:[%s1767] ss:$2 sm:$0xff]
      %s1769 = scalar_lea.vmem [#allocation2], 433
      %v1770 = vld [vmem:[%s1769] ss:$2 sm:$0x3f]
      %v1771 = vmax.f32 %v1764, %v1768
      %v1772 = vmax.f32 %v1766, %v1770
      %v1773 = vmax.f32 %v1761, %v1771
      %v1774 = vmax.f32 %v1762, %v1772
      %1775 = vst [vmem:[#allocation3 + $0x54] sm:$0xff] %v1773
      %1776 = vst [vmem:[#allocation3 + $0x5c] sm:$0x3f] %v1774
      %s1777 = scalar_lea.vmem [#allocation2], 448
      %v1778 = vld [vmem:[%s1777] ss:$2 sm:$0xff]
      %s1779 = scalar_lea.vmem [#allocation2], 464
      %v1780 = vld [vmem:[%s1779] ss:$2 sm:$0x3f]
      %s1781 = scalar_lea.vmem [#allocation2], 449
      %v1782 = vld [vmem:[%s1781] ss:$2 sm:$0xff]
      %s1783 = scalar_lea.vmem [#allocation2], 465
      %v1784 = vld [vmem:[%s1783] ss:$2 sm:$0x3f]
      %v1785 = vmax.f32 %v1778, %v1782
      %v1786 = vmax.f32 %v1780, %v1784
      %s1787 = scalar_lea.vmem [#allocation2], 480
      %v1788 = vld [vmem:[%s1787] ss:$2 sm:$0xff]
      %s1789 = scalar_lea.vmem [#allocation2], 496
      %v1790 = vld [vmem:[%s1789] ss:$2 sm:$0x3f]
      %s1791 = scalar_lea.vmem [#allocation2], 481
      %v1792 = vld [vmem:[%s1791] ss:$2 sm:$0xff]
      %s1793 = scalar_lea.vmem [#allocation2], 497
      %v1794 = vld [vmem:[%s1793] ss:$2 sm:$0x3f]
      %v1795 = vmax.f32 %v1788, %v1792
      %v1796 = vmax.f32 %v1790, %v1794
      %v1797 = vmax.f32 %v1785, %v1795
      %v1798 = vmax.f32 %v1786, %v1796
      %1799 = vst [vmem:[#allocation3 + $0x62] sm:$0xff] %v1797
      %1800 = vst [vmem:[#allocation3 + $0x6a] sm:$0x3f] %v1798
      %s1801 = scalar_lea.vmem [#allocation2], 512
      %v1802 = vld [vmem:[%s1801] ss:$2 sm:$0xff]
      %s1803 = scalar_lea.vmem [#allocation2], 528
      %v1804 = vld [vmem:[%s1803] ss:$2 sm:$0x3f]
      %s1805 = scalar_lea.vmem [#allocation2], 513
      %v1806 = vld [vmem:[%s1805] ss:$2 sm:$0xff]
      %s1807 = scalar_lea.vmem [#allocation2], 529
      %v1808 = vld [vmem:[%s1807] ss:$2 sm:$0x3f]
      %v1809 = vmax.f32 %v1802, %v1806
      %v1810 = vmax.f32 %v1804, %v1808
      %s1811 = scalar_lea.vmem [#allocation2], 544
      %v1812 = vld [vmem:[%s1811] ss:$2 sm:$0xff]
      %s1813 = scalar_lea.vmem [#allocation2], 560
      %v1814 = vld [vmem:[%s1813] ss:$2 sm:$0x3f]
      %s1815 = scalar_lea.vmem [#allocation2], 545
      %v1816 = vld [vmem:[%s1815] ss:$2 sm:$0xff]
      %s1817 = scalar_lea.vmem [#allocation2], 561
      %v1818 = vld [vmem:[%s1817] ss:$2 sm:$0x3f]
      %v1819 = vmax.f32 %v1812, %v1816
      %v1820 = vmax.f32 %v1814, %v1818
      %v1821 = vmax.f32 %v1809, %v1819
      %v1822 = vmax.f32 %v1810, %v1820
      %1823 = vst [vmem:[#allocation3 + $0x70] sm:$0xff] %v1821
      %1824 = vst [vmem:[#allocation3 + $0x78] sm:$0x3f] %v1822
      %s1825 = scalar_lea.vmem [#allocation2], 576
      %v1826 = vld [vmem:[%s1825] ss:$2 sm:$0xff]
      %s1827 = scalar_lea.vmem [#allocation2], 592
      %v1828 = vld [vmem:[%s1827] ss:$2 sm:$0x3f]
      %s1829 = scalar_lea.vmem [#allocation2], 577
      %v1830 = vld [vmem:[%s1829] ss:$2 sm:$0xff]
      %s1831 = scalar_lea.vmem [#allocation2], 593
      %v1832 = vld [vmem:[%s1831] ss:$2 sm:$0x3f]
      %v1833 = vmax.f32 %v1826, %v1830
      %v1834 = vmax.f32 %v1828, %v1832
      %s1835 = scalar_lea.vmem [#allocation2], 608
      %v1836 = vld [vmem:[%s1835] ss:$2 sm:$0xff]
      %s1837 = scalar_lea.vmem [#allocation2], 624
      %v1838 = vld [vmem:[%s1837] ss:$2 sm:$0x3f]
      %s1839 = scalar_lea.vmem [#allocation2], 609
      %v1840 = vld [vmem:[%s1839] ss:$2 sm:$0xff]
      %s1841 = scalar_lea.vmem [#allocation2], 625
      %v1842 = vld [vmem:[%s1841] ss:$2 sm:$0x3f]
      %v1843 = vmax.f32 %v1836, %v1840
      %v1844 = vmax.f32 %v1838, %v1842
      %v1845 = vmax.f32 %v1833, %v1843
      %v1846 = vmax.f32 %v1834, %v1844
      %1847 = vst [vmem:[#allocation3 + $0x7e] sm:$0xff] %v1845
      %1848 = vst [vmem:[#allocation3 + $0x86] sm:$0x3f] %v1846
      %s1849 = scalar_lea.vmem [#allocation2], 640
      %v1850 = vld [vmem:[%s1849] ss:$2 sm:$0xff]
      %s1851 = scalar_lea.vmem [#allocation2], 656
      %v1852 = vld [vmem:[%s1851] ss:$2 sm:$0x3f]
      %s1853 = scalar_lea.vmem [#allocation2], 641
      %v1854 = vld [vmem:[%s1853] ss:$2 sm:$0xff]
      %s1855 = scalar_lea.vmem [#allocation2], 657
      %v1856 = vld [vmem:[%s1855] ss:$2 sm:$0x3f]
      %v1857 = vmax.f32 %v1850, %v1854
      %v1858 = vmax.f32 %v1852, %v1856
      %s1859 = scalar_lea.vmem [#allocation2], 672
      %v1860 = vld [vmem:[%s1859] ss:$2 sm:$0xff]
      %s1861 = scalar_lea.vmem [#allocation2], 688
      %v1862 = vld [vmem:[%s1861] ss:$2 sm:$0x3f]
      %s1863 = scalar_lea.vmem [#allocation2], 673
      %v1864 = vld [vmem:[%s1863] ss:$2 sm:$0xff]
      %s1865 = scalar_lea.vmem [#allocation2], 689
      %v1866 = vld [vmem:[%s1865] ss:$2 sm:$0x3f]
      %v1867 = vmax.f32 %v1860, %v1864
      %v1868 = vmax.f32 %v1862, %v1866
      %v1869 = vmax.f32 %v1857, %v1867
      %v1870 = vmax.f32 %v1858, %v1868
      %1871 = vst [vmem:[#allocation3 + $0x8c] sm:$0xff] %v1869
      %1872 = vst [vmem:[#allocation3 + $0x94] sm:$0x3f] %v1870
      %s1873 = scalar_lea.vmem [#allocation2], 704
      %v1874 = vld [vmem:[%s1873] ss:$2 sm:$0xff]
      %s1875 = scalar_lea.vmem [#allocation2], 720
      %v1876 = vld [vmem:[%s1875] ss:$2 sm:$0x3f]
      %s1877 = scalar_lea.vmem [#allocation2], 705
      %v1878 = vld [vmem:[%s1877] ss:$2 sm:$0xff]
      %s1879 = scalar_lea.vmem [#allocation2], 721
      %v1880 = vld [vmem:[%s1879] ss:$2 sm:$0x3f]
      %v1881 = vmax.f32 %v1874, %v1878
      %v1882 = vmax.f32 %v1876, %v1880
      %s1883 = scalar_lea.vmem [#allocation2], 736
      %v1884 = vld [vmem:[%s1883] ss:$2 sm:$0xff]
      %s1885 = scalar_lea.vmem [#allocation2], 752
      %v1886 = vld [vmem:[%s1885] ss:$2 sm:$0x3f]
      %s1887 = scalar_lea.vmem [#allocation2], 737
      %v1888 = vld [vmem:[%s1887] ss:$2 sm:$0xff]
      %s1889 = scalar_lea.vmem [#allocation2], 753
      %v1890 = vld [vmem:[%s1889] ss:$2 sm:$0x3f]
      %v1891 = vmax.f32 %v1884, %v1888
      %v1892 = vmax.f32 %v1886, %v1890
      %v1893 = vmax.f32 %v1881, %v1891
      %v1894 = vmax.f32 %v1882, %v1892
      %1895 = vst [vmem:[#allocation3 + $0x9a] sm:$0xff] %v1893
      %1896 = vst [vmem:[#allocation3 + $0xa2] sm:$0x3f] %v1894
      %s1897 = scalar_lea.vmem [#allocation2], 768
      %v1898 = vld [vmem:[%s1897] ss:$2 sm:$0xff]
      %s1899 = scalar_lea.vmem [#allocation2], 784
      %v1900 = vld [vmem:[%s1899] ss:$2 sm:$0x3f]
      %s1901 = scalar_lea.vmem [#allocation2], 769
      %v1902 = vld [vmem:[%s1901] ss:$2 sm:$0xff]
      %s1903 = scalar_lea.vmem [#allocation2], 785
      %v1904 = vld [vmem:[%s1903] ss:$2 sm:$0x3f]
      %v1905 = vmax.f32 %v1898, %v1902
      %v1906 = vmax.f32 %v1900, %v1904
      %s1907 = scalar_lea.vmem [#allocation2], 800
      %v1908 = vld [vmem:[%s1907] ss:$2 sm:$0xff]
      %s1909 = scalar_lea.vmem [#allocation2], 816
      %v1910 = vld [vmem:[%s1909] ss:$2 sm:$0x3f]
      %s1911 = scalar_lea.vmem [#allocation2], 801
      %v1912 = vld [vmem:[%s1911] ss:$2 sm:$0xff]
      %s1913 = scalar_lea.vmem [#allocation2], 817
      %v1914 = vld [vmem:[%s1913] ss:$2 sm:$0x3f]
      %v1915 = vmax.f32 %v1908, %v1912
      %v1916 = vmax.f32 %v1910, %v1914
      %v1917 = vmax.f32 %v1905, %v1915
      %v1918 = vmax.f32 %v1906, %v1916
      %1919 = vst [vmem:[#allocation3 + $0xa8] sm:$0xff] %v1917
      %1920 = vst [vmem:[#allocation3 + $0xb0] sm:$0x3f] %v1918
      %s1921 = scalar_lea.vmem [#allocation2], 832
      %v1922 = vld [vmem:[%s1921] ss:$2 sm:$0xff]
      %s1923 = scalar_lea.vmem [#allocation2], 848
      %v1924 = vld [vmem:[%s1923] ss:$2 sm:$0x3f]
      %s1925 = scalar_lea.vmem [#allocation2], 833
      %v1926 = vld [vmem:[%s1925] ss:$2 sm:$0xff]
      %s1927 = scalar_lea.vmem [#allocation2], 849
      %v1928 = vld [vmem:[%s1927] ss:$2 sm:$0x3f]
      %v1929 = vmax.f32 %v1922, %v1926
      %v1930 = vmax.f32 %v1924, %v1928
      %s1931 = scalar_lea.vmem [#allocation2], 864
      %v1932 = vld [vmem:[%s1931] ss:$2 sm:$0xff]
      %s1933 = scalar_lea.vmem [#allocation2], 880
      %v1934 = vld [vmem:[%s1933] ss:$2 sm:$0x3f]
      %s1935 = scalar_lea.vmem [#allocation2], 865
      %v1936 = vld [vmem:[%s1935] ss:$2 sm:$0xff]
      %s1937 = scalar_lea.vmem [#allocation2], 881
      %v1938 = vld [vmem:[%s1937] ss:$2 sm:$0x3f]
      %v1939 = vmax.f32 %v1932, %v1936
      %v1940 = vmax.f32 %v1934, %v1938
      %v1941 = vmax.f32 %v1929, %v1939
      %v1942 = vmax.f32 %v1930, %v1940
      %1943 = vst [vmem:[#allocation3 + $0xb6] sm:$0xff] %v1941
      %1944 = vst [vmem:[#allocation3 + $0xbe] sm:$0x3f] %v1942
      %v1945 = vlaneseq
      %v1946 = vand.u32 %v1945, 127
      %vm1947 = vcmp.lt.s32.totalorder %v1946, 6
      %v1948 = vld [vmem:[#allocation3] sm:$0xff]
      %v1949 = vld [vmem:[#allocation3 + $0x8] sm:$0xff]
      %v1950 = vld [vmem:[#allocation3 + $0x10] sm:$0xff]
      %v1951 = vld [vmem:[#allocation3 + $0x18] sm:$0xff]
      %v1952 = vld [vmem:[#allocation3 + $0x20] sm:$0xff]
      %v1953 = vld [vmem:[#allocation3 + $0x28] sm:$0xff]
      %v1954 = vld [vmem:[#allocation3 + $0x30] sm:$0xff]
      %v1955 = vld [vmem:[#allocation3 + $0x38] sm:$0xff]
      %v1956 = vld [vmem:[#allocation3 + $0x40] sm:$0xff]
      %v1957 = vld [vmem:[#allocation3 + $0x48] sm:$0xff]
      %v1958 = vld [vmem:[#allocation3 + $0x50] sm:$0xff]
      %v1959 = vld [vmem:[#allocation3 + $0x58] sm:$0xff]
      %v1960 = vld [vmem:[#allocation3 + $0x60] sm:$0xff]
      %v1961 = vld [vmem:[#allocation3 + $0x68] sm:$0xff]
      %v1962 = vld [vmem:[#allocation3 + $0x70] sm:$0xff]
      %v1963 = vld [vmem:[#allocation3 + $0x78] sm:$0xff]
      %v1964 = vld [vmem:[#allocation3 + $0x80] sm:$0xff]
      %v1965 = vld [vmem:[#allocation3 + $0x88] sm:$0xff]
      %v1966 = vld [vmem:[#allocation3 + $0x90] sm:$0xff]
      %v1967 = vld [vmem:[#allocation3 + $0x98] sm:$0xff]
      %v1968 = vld [vmem:[#allocation3 + $0xa0] sm:$0xff]
      %v1969 = vld [vmem:[#allocation3 + $0xa8] sm:$0xff]
      %v1970 = vld [vmem:[#allocation3 + $0xb0] sm:$0xff]
      %v1971 = vld [vmem:[#allocation3 + $0xb8] sm:$0xff]
      %v1972 = vsel %vm1947, %v1948, 0.0
      %v1973 = vsel %vm1947, %v1949, 0.0
      %v1974 = vsel %vm1947, %v1950, 0.0
      %v1975 = vsel %vm1947, %v1951, 0.0
      %v1976 = vsel %vm1947, %v1952, 0.0
      %v1977 = vsel %vm1947, %v1953, 0.0
      %v1978 = vsel %vm1947, %v1954, 0.0
      %v1979 = vsel %vm1947, %v1955, 0.0
      %v1980 = vsel %vm1947, %v1956, 0.0
      %v1981 = vsel %vm1947, %v1957, 0.0
      %v1982 = vsel %vm1947, %v1958, 0.0
      %v1983 = vsel %vm1947, %v1959, 0.0
      %v1984 = vsel %vm1947, %v1960, 0.0
      %v1985 = vsel %vm1947, %v1961, 0.0
      %v1986 = vsel %vm1947, %v1962, 0.0
      %v1987 = vsel %vm1947, %v1963, 0.0
      %v1988 = vsel %vm1947, %v1964, 0.0
      %v1989 = vsel %vm1947, %v1965, 0.0
      %v1990 = vsel %vm1947, %v1966, 0.0
      %v1991 = vsel %vm1947, %v1967, 0.0
      %v1992 = vsel %vm1947, %v1968, 0.0
      %v1993 = vsel %vm1947, %v1969, 0.0
      %v1994 = vsel %vm1947, %v1970, 0.0
      %v1995 = vsel %vm1947, %v1971, 0.0
      %vm1996 = vcmp.ge.s32.totalorder %v1946, 6
      %vm1997 = vcmp.lt.s32.totalorder %v1946, 12
      %vm1998 = vmand %vm1996, %vm1997
      %v1999 = vld [vmem:[#allocation3 + $0x1] sm:$0xff]
      %v2000 = vld [vmem:[#allocation3 + $0x9] sm:$0xff]
      %v2001 = vld [vmem:[#allocation3 + $0x11] sm:$0xff]
      %v2002 = vld [vmem:[#allocation3 + $0x19] sm:$0xff]
      %v2003 = vld [vmem:[#allocation3 + $0x21] sm:$0xff]
      %v2004 = vld [vmem:[#allocation3 + $0x29] sm:$0xff]
      %v2005 = vld [vmem:[#allocation3 + $0x31] sm:$0xff]
      %v2006 = vld [vmem:[#allocation3 + $0x39] sm:$0xff]
      %v2007 = vld [vmem:[#allocation3 + $0x41] sm:$0xff]
      %v2008 = vld [vmem:[#allocation3 + $0x49] sm:$0xff]
      %v2009 = vld [vmem:[#allocation3 + $0x51] sm:$0xff]
      %v2010 = vld [vmem:[#allocation3 + $0x59] sm:$0xff]
      %v2011 = vld [vmem:[#allocation3 + $0x61] sm:$0xff]
      %v2012 = vld [vmem:[#allocation3 + $0x69] sm:$0xff]
      %v2013 = vld [vmem:[#allocation3 + $0x71] sm:$0xff]
      %v2014 = vld [vmem:[#allocation3 + $0x79] sm:$0xff]
      %v2015 = vld [vmem:[#allocation3 + $0x81] sm:$0xff]
      %v2016 = vld [vmem:[#allocation3 + $0x89] sm:$0xff]
      %v2017 = vld [vmem:[#allocation3 + $0x91] sm:$0xff]
      %v2018 = vld [vmem:[#allocation3 + $0x99] sm:$0xff]
      %v2019 = vld [vmem:[#allocation3 + $0xa1] sm:$0xff]
      %v2020 = vld [vmem:[#allocation3 + $0xa9] sm:$0xff]
      %v2021 = vld [vmem:[#allocation3 + $0xb1] sm:$0xff]
      %v2022 = vld [vmem:[#allocation3 + $0xb9] sm:$0xff]
      %v2023 = vsel %vm1998, %v1999, 0.0
      %v2024 = vsel %vm1998, %v2000, 0.0
      %v2025 = vsel %vm1998, %v2001, 0.0
      %v2026 = vsel %vm1998, %v2002, 0.0
      %v2027 = vsel %vm1998, %v2003, 0.0
      %v2028 = vsel %vm1998, %v2004, 0.0
      %v2029 = vsel %vm1998, %v2005, 0.0
      %v2030 = vsel %vm1998, %v2006, 0.0
      %v2031 = vsel %vm1998, %v2007, 0.0
      %v2032 = vsel %vm1998, %v2008, 0.0
      %v2033 = vsel %vm1998, %v2009, 0.0
      %v2034 = vsel %vm1998, %v2010, 0.0
      %v2035 = vsel %vm1998, %v2011, 0.0
      %v2036 = vsel %vm1998, %v2012, 0.0
      %v2037 = vsel %vm1998, %v2013, 0.0
      %v2038 = vsel %vm1998, %v2014, 0.0
      %v2039 = vsel %vm1998, %v2015, 0.0
      %v2040 = vsel %vm1998, %v2016, 0.0
      %v2041 = vsel %vm1998, %v2017, 0.0
      %v2042 = vsel %vm1998, %v2018, 0.0
      %v2043 = vsel %vm1998, %v2019, 0.0
      %v2044 = vsel %vm1998, %v2020, 0.0
      %v2045 = vsel %vm1998, %v2021, 0.0
      %v2046 = vsel %vm1998, %v2022, 0.0
      %v2047 = vadd.f32 %v1972, %v2023
      %v2048 = vadd.f32 %v1973, %v2024
      %v2049 = vadd.f32 %v1974, %v2025
      %v2050 = vadd.f32 %v1975, %v2026
      %v2051 = vadd.f32 %v1976, %v2027
      %v2052 = vadd.f32 %v1977, %v2028
      %v2053 = vadd.f32 %v1978, %v2029
      %v2054 = vadd.f32 %v1979, %v2030
      %v2055 = vadd.f32 %v1980, %v2031
      %v2056 = vadd.f32 %v1981, %v2032
      %v2057 = vadd.f32 %v1982, %v2033
      %v2058 = vadd.f32 %v1983, %v2034
      %v2059 = vadd.f32 %v1984, %v2035
      %v2060 = vadd.f32 %v1985, %v2036
      %v2061 = vadd.f32 %v1986, %v2037
      %v2062 = vadd.f32 %v1987, %v2038
      %v2063 = vadd.f32 %v1988, %v2039
      %v2064 = vadd.f32 %v1989, %v2040
      %v2065 = vadd.f32 %v1990, %v2041
      %v2066 = vadd.f32 %v1991, %v2042
      %v2067 = vadd.f32 %v1992, %v2043
      %v2068 = vadd.f32 %v1993, %v2044
      %v2069 = vadd.f32 %v1994, %v2045
      %v2070 = vadd.f32 %v1995, %v2046
      %vm2071 = vcmp.ge.s32.totalorder %v1946, 12
      %vm2072 = vcmp.lt.s32.totalorder %v1946, 18
      %vm2073 = vmand %vm2071, %vm2072
      %v2074 = vld [vmem:[#allocation3 + $0x2] sm:$0xff]
      %v2075 = vld [vmem:[#allocation3 + $0xa] sm:$0xff]
      %v2076 = vld [vmem:[#allocation3 + $0x12] sm:$0xff]
      %v2077 = vld [vmem:[#allocation3 + $0x1a] sm:$0xff]
      %v2078 = vld [vmem:[#allocation3 + $0x22] sm:$0xff]
      %v2079 = vld [vmem:[#allocation3 + $0x2a] sm:$0xff]
      %v2080 = vld [vmem:[#allocation3 + $0x32] sm:$0xff]
      %v2081 = vld [vmem:[#allocation3 + $0x3a] sm:$0xff]
      %v2082 = vld [vmem:[#allocation3 + $0x42] sm:$0xff]
      %v2083 = vld [vmem:[#allocation3 + $0x4a] sm:$0xff]
      %v2084 = vld [vmem:[#allocation3 + $0x52] sm:$0xff]
      %v2085 = vld [vmem:[#allocation3 + $0x5a] sm:$0xff]
      %v2086 = vld [vmem:[#allocation3 + $0x62] sm:$0xff]
      %v2087 = vld [vmem:[#allocation3 + $0x6a] sm:$0xff]
      %v2088 = vld [vmem:[#allocation3 + $0x72] sm:$0xff]
      %v2089 = vld [vmem:[#allocation3 + $0x7a] sm:$0xff]
      %v2090 = vld [vmem:[#allocation3 + $0x82] sm:$0xff]
      %v2091 = vld [vmem:[#allocation3 + $0x8a] sm:$0xff]
      %v2092 = vld [vmem:[#allocation3 + $0x92] sm:$0xff]
      %v2093 = vld [vmem:[#allocation3 + $0x9a] sm:$0xff]
      %v2094 = vld [vmem:[#allocation3 + $0xa2] sm:$0xff]
      %v2095 = vld [vmem:[#allocation3 + $0xaa] sm:$0xff]
      %v2096 = vld [vmem:[#allocation3 + $0xb2] sm:$0xff]
      %v2097 = vld [vmem:[#allocation3 + $0xba] sm:$0xff]
      %v2098 = vsel %vm2073, %v2074, 0.0
      %v2099 = vsel %vm2073, %v2075, 0.0
      %v2100 = vsel %vm2073, %v2076, 0.0
      %v2101 = vsel %vm2073, %v2077, 0.0
      %v2102 = vsel %vm2073, %v2078, 0.0
      %v2103 = vsel %vm2073, %v2079, 0.0
      %v2104 = vsel %vm2073, %v2080, 0.0
      %v2105 = vsel %vm2073, %v2081, 0.0
      %v2106 = vsel %vm2073, %v2082, 0.0
      %v2107 = vsel %vm2073, %v2083, 0.0
      %v2108 = vsel %vm2073, %v2084, 0.0
      %v2109 = vsel %vm2073, %v2085, 0.0
      %v2110 = vsel %vm2073, %v2086, 0.0
      %v2111 = vsel %vm2073, %v2087, 0.0
      %v2112 = vsel %vm2073, %v2088, 0.0
      %v2113 = vsel %vm2073, %v2089, 0.0
      %v2114 = vsel %vm2073, %v2090, 0.0
      %v2115 = vsel %vm2073, %v2091, 0.0
      %v2116 = vsel %vm2073, %v2092, 0.0
      %v2117 = vsel %vm2073, %v2093, 0.0
      %v2118 = vsel %vm2073, %v2094, 0.0
      %v2119 = vsel %vm2073, %v2095, 0.0
      %v2120 = vsel %vm2073, %v2096, 0.0
      %v2121 = vsel %vm2073, %v2097, 0.0
      %v2122 = vadd.f32 %v2047, %v2098
      %v2123 = vadd.f32 %v2048, %v2099
      %v2124 = vadd.f32 %v2049, %v2100
      %v2125 = vadd.f32 %v2050, %v2101
      %v2126 = vadd.f32 %v2051, %v2102
      %v2127 = vadd.f32 %v2052, %v2103
      %v2128 = vadd.f32 %v2053, %v2104
      %v2129 = vadd.f32 %v2054, %v2105
      %v2130 = vadd.f32 %v2055, %v2106
      %v2131 = vadd.f32 %v2056, %v2107
      %v2132 = vadd.f32 %v2057, %v2108
      %v2133 = vadd.f32 %v2058, %v2109
      %v2134 = vadd.f32 %v2059, %v2110
      %v2135 = vadd.f32 %v2060, %v2111
      %v2136 = vadd.f32 %v2061, %v2112
      %v2137 = vadd.f32 %v2062, %v2113
      %v2138 = vadd.f32 %v2063, %v2114
      %v2139 = vadd.f32 %v2064, %v2115
      %v2140 = vadd.f32 %v2065, %v2116
      %v2141 = vadd.f32 %v2066, %v2117
      %v2142 = vadd.f32 %v2067, %v2118
      %v2143 = vadd.f32 %v2068, %v2119
      %v2144 = vadd.f32 %v2069, %v2120
      %v2145 = vadd.f32 %v2070, %v2121
      %vm2146 = vcmp.ge.s32.totalorder %v1946, 18
      %vm2147 = vcmp.lt.s32.totalorder %v1946, 24
      %vm2148 = vmand %vm2146, %vm2147
      %v2149 = vld [vmem:[#allocation3 + $0x3] sm:$0xff]
      %v2150 = vld [vmem:[#allocation3 + $0xb] sm:$0xff]
      %v2151 = vld [vmem:[#allocation3 + $0x13] sm:$0xff]
      %v2152 = vld [vmem:[#allocation3 + $0x1b] sm:$0xff]
      %v2153 = vld [vmem:[#allocation3 + $0x23] sm:$0xff]
      %v2154 = vld [vmem:[#allocation3 + $0x2b] sm:$0xff]
      %v2155 = vld [vmem:[#allocation3 + $0x33] sm:$0xff]
      %v2156 = vld [vmem:[#allocation3 + $0x3b] sm:$0xff]
      %v2157 = vld [vmem:[#allocation3 + $0x43] sm:$0xff]
      %v2158 = vld [vmem:[#allocation3 + $0x4b] sm:$0xff]
      %v2159 = vld [vmem:[#allocation3 + $0x53] sm:$0xff]
      %v2160 = vld [vmem:[#allocation3 + $0x5b] sm:$0xff]
      %v2161 = vld [vmem:[#allocation3 + $0x63] sm:$0xff]
      %v2162 = vld [vmem:[#allocation3 + $0x6b] sm:$0xff]
      %v2163 = vld [vmem:[#allocation3 + $0x73] sm:$0xff]
      %v2164 = vld [vmem:[#allocation3 + $0x7b] sm:$0xff]
      %v2165 = vld [vmem:[#allocation3 + $0x83] sm:$0xff]
      %v2166 = vld [vmem:[#allocation3 + $0x8b] sm:$0xff]
      %v2167 = vld [vmem:[#allocation3 + $0x93] sm:$0xff]
      %v2168 = vld [vmem:[#allocation3 + $0x9b] sm:$0xff]
      %v2169 = vld [vmem:[#allocation3 + $0xa3] sm:$0xff]
      %v2170 = vld [vmem:[#allocation3 + $0xab] sm:$0xff]
      %v2171 = vld [vmem:[#allocation3 + $0xb3] sm:$0xff]
      %v2172 = vld [vmem:[#allocation3 + $0xbb] sm:$0xff]
      %v2173 = vsel %vm2148, %v2149, 0.0
      %v2174 = vsel %vm2148, %v2150, 0.0
      %v2175 = vsel %vm2148, %v2151, 0.0
      %v2176 = vsel %vm2148, %v2152, 0.0
      %v2177 = vsel %vm2148, %v2153, 0.0
      %v2178 = vsel %vm2148, %v2154, 0.0
      %v2179 = vsel %vm2148, %v2155, 0.0
      %v2180 = vsel %vm2148, %v2156, 0.0
      %v2181 = vsel %vm2148, %v2157, 0.0
      %v2182 = vsel %vm2148, %v2158, 0.0
      %v2183 = vsel %vm2148, %v2159, 0.0
      %v2184 = vsel %vm2148, %v2160, 0.0
      %v2185 = vsel %vm2148, %v2161, 0.0
      %v2186 = vsel %vm2148, %v2162, 0.0
      %v2187 = vsel %vm2148, %v2163, 0.0
      %v2188 = vsel %vm2148, %v2164, 0.0
      %v2189 = vsel %vm2148, %v2165, 0.0
      %v2190 = vsel %vm2148, %v2166, 0.0
      %v2191 = vsel %vm2148, %v2167, 0.0
      %v2192 = vsel %vm2148, %v2168, 0.0
      %v2193 = vsel %vm2148, %v2169, 0.0
      %v2194 = vsel %vm2148, %v2170, 0.0
      %v2195 = vsel %vm2148, %v2171, 0.0
      %v2196 = vsel %vm2148, %v2172, 0.0
      %v2197 = vadd.f32 %v2122, %v2173
      %v2198 = vadd.f32 %v2123, %v2174
      %v2199 = vadd.f32 %v2124, %v2175
      %v2200 = vadd.f32 %v2125, %v2176
      %v2201 = vadd.f32 %v2126, %v2177
      %v2202 = vadd.f32 %v2127, %v2178
      %v2203 = vadd.f32 %v2128, %v2179
      %v2204 = vadd.f32 %v2129, %v2180
      %v2205 = vadd.f32 %v2130, %v2181
      %v2206 = vadd.f32 %v2131, %v2182
      %v2207 = vadd.f32 %v2132, %v2183
      %v2208 = vadd.f32 %v2133, %v2184
      %v2209 = vadd.f32 %v2134, %v2185
      %v2210 = vadd.f32 %v2135, %v2186
      %v2211 = vadd.f32 %v2136, %v2187
      %v2212 = vadd.f32 %v2137, %v2188
      %v2213 = vadd.f32 %v2138, %v2189
      %v2214 = vadd.f32 %v2139, %v2190
      %v2215 = vadd.f32 %v2140, %v2191
      %v2216 = vadd.f32 %v2141, %v2192
      %v2217 = vadd.f32 %v2142, %v2193
      %v2218 = vadd.f32 %v2143, %v2194
      %v2219 = vadd.f32 %v2144, %v2195
      %v2220 = vadd.f32 %v2145, %v2196
      %vm2221 = vcmp.ge.s32.totalorder %v1946, 24
      %vm2222 = vcmp.lt.s32.totalorder %v1946, 30
      %vm2223 = vmand %vm2221, %vm2222
      %v2224 = vld [vmem:[#allocation3 + $0x4] sm:$0xff]
      %v2225 = vld [vmem:[#allocation3 + $0xc] sm:$0xff]
      %v2226 = vld [vmem:[#allocation3 + $0x14] sm:$0xff]
      %v2227 = vld [vmem:[#allocation3 + $0x1c] sm:$0xff]
      %v2228 = vld [vmem:[#allocation3 + $0x24] sm:$0xff]
      %v2229 = vld [vmem:[#allocation3 + $0x2c] sm:$0xff]
      %v2230 = vld [vmem:[#allocation3 + $0x34] sm:$0xff]
      %v2231 = vld [vmem:[#allocation3 + $0x3c] sm:$0xff]
      %v2232 = vld [vmem:[#allocation3 + $0x44] sm:$0xff]
      %v2233 = vld [vmem:[#allocation3 + $0x4c] sm:$0xff]
      %v2234 = vld [vmem:[#allocation3 + $0x54] sm:$0xff]
      %v2235 = vld [vmem:[#allocation3 + $0x5c] sm:$0xff]
      %v2236 = vld [vmem:[#allocation3 + $0x64] sm:$0xff]
      %v2237 = vld [vmem:[#allocation3 + $0x6c] sm:$0xff]
      %v2238 = vld [vmem:[#allocation3 + $0x74] sm:$0xff]
      %v2239 = vld [vmem:[#allocation3 + $0x7c] sm:$0xff]
      %v2240 = vld [vmem:[#allocation3 + $0x84] sm:$0xff]
      %v2241 = vld [vmem:[#allocation3 + $0x8c] sm:$0xff]
      %v2242 = vld [vmem:[#allocation3 + $0x94] sm:$0xff]
      %v2243 = vld [vmem:[#allocation3 + $0x9c] sm:$0xff]
      %v2244 = vld [vmem:[#allocation3 + $0xa4] sm:$0xff]
      %v2245 = vld [vmem:[#allocation3 + $0xac] sm:$0xff]
      %v2246 = vld [vmem:[#allocation3 + $0xb4] sm:$0xff]
      %v2247 = vld [vmem:[#allocation3 + $0xbc] sm:$0xff]
      %v2248 = vsel %vm2223, %v2224, 0.0
      %v2249 = vsel %vm2223, %v2225, 0.0
      %v2250 = vsel %vm2223, %v2226, 0.0
      %v2251 = vsel %vm2223, %v2227, 0.0
      %v2252 = vsel %vm2223, %v2228, 0.0
      %v2253 = vsel %vm2223, %v2229, 0.0
      %v2254 = vsel %vm2223, %v2230, 0.0
      %v2255 = vsel %vm2223, %v2231, 0.0
      %v2256 = vsel %vm2223, %v2232, 0.0
      %v2257 = vsel %vm2223, %v2233, 0.0
      %v2258 = vsel %vm2223, %v2234, 0.0
      %v2259 = vsel %vm2223, %v2235, 0.0
      %v2260 = vsel %vm2223, %v2236, 0.0
      %v2261 = vsel %vm2223, %v2237, 0.0
      %v2262 = vsel %vm2223, %v2238, 0.0
      %v2263 = vsel %vm2223, %v2239, 0.0
      %v2264 = vsel %vm2223, %v2240, 0.0
      %v2265 = vsel %vm2223, %v2241, 0.0
      %v2266 = vsel %vm2223, %v2242, 0.0
      %v2267 = vsel %vm2223, %v2243, 0.0
      %v2268 = vsel %vm2223, %v2244, 0.0
      %v2269 = vsel %vm2223, %v2245, 0.0
      %v2270 = vsel %vm2223, %v2246, 0.0
      %v2271 = vsel %vm2223, %v2247, 0.0
      %v2272 = vadd.f32 %v2197, %v2248
      %v2273 = vadd.f32 %v2198, %v2249
      %v2274 = vadd.f32 %v2199, %v2250
      %v2275 = vadd.f32 %v2200, %v2251
      %v2276 = vadd.f32 %v2201, %v2252
      %v2277 = vadd.f32 %v2202, %v2253
      %v2278 = vadd.f32 %v2203, %v2254
      %v2279 = vadd.f32 %v2204, %v2255
      %v2280 = vadd.f32 %v2205, %v2256
      %v2281 = vadd.f32 %v2206, %v2257
      %v2282 = vadd.f32 %v2207, %v2258
      %v2283 = vadd.f32 %v2208, %v2259
      %v2284 = vadd.f32 %v2209, %v2260
      %v2285 = vadd.f32 %v2210, %v2261
      %v2286 = vadd.f32 %v2211, %v2262
      %v2287 = vadd.f32 %v2212, %v2263
      %v2288 = vadd.f32 %v2213, %v2264
      %v2289 = vadd.f32 %v2214, %v2265
      %v2290 = vadd.f32 %v2215, %v2266
      %v2291 = vadd.f32 %v2216, %v2267
      %v2292 = vadd.f32 %v2217, %v2268
      %v2293 = vadd.f32 %v2218, %v2269
      %v2294 = vadd.f32 %v2219, %v2270
      %v2295 = vadd.f32 %v2220, %v2271
      %v2296 = vpack.c.bf16 %v2273, %v2272
      %v2297 = vpack.c.bf16 %v2275, %v2274
      %v2298 = vpack.c.bf16 %v2277, %v2276
      %v2299 = vpack.c.bf16 %v2279, %v2278
      %v2300 = vpack.c.bf16 %v2281, %v2280
      %v2301 = vpack.c.bf16 %v2283, %v2282
      %v2302 = vpack.c.bf16 %v2285, %v2284
      %v2303 = vpack.c.bf16 %v2287, %v2286
      %v2304 = vpack.c.bf16 %v2289, %v2288
      %v2305 = vpack.c.bf16 %v2291, %v2290
      %v2306 = vpack.c.bf16 %v2293, %v2292
      %v2307 = vpack.c.bf16 %v2295, %v2294
      %2308 = vst [vmem:[#allocation4] sm:$0xff] %v2296
      %2309 = vst [vmem:[#allocation4 + $0x8] sm:$0xff] %v2297
      %2310 = vst [vmem:[#allocation4 + $0x10] sm:$0xff] %v2298
      %2311 = vst [vmem:[#allocation4 + $0x18] sm:$0xff] %v2299
      %2312 = vst [vmem:[#allocation4 + $0x20] sm:$0xff] %v2300
      %2313 = vst [vmem:[#allocation4 + $0x28] sm:$0xff] %v2301
      %2314 = vst [vmem:[#allocation4 + $0x30] sm:$0xff] %v2302
      %2315 = vst [vmem:[#allocation4 + $0x38] sm:$0xff] %v2303
      %2316 = vst [vmem:[#allocation4 + $0x40] sm:$0xff] %v2304
      %2317 = vst [vmem:[#allocation4 + $0x48] sm:$0xff] %v2305
      %2318 = vst [vmem:[#allocation4 + $0x50] sm:$0xff] %v2306
      %2319 = vst [vmem:[#allocation4 + $0x58] sm:$0xff] %v2307
      %v2320 = vld [vmem:[#allocation4] sm:$0xff]
      %v2321 = vld [vmem:[#allocation4 + $0x8] sm:$0xff]
      %v2322 = vld [vmem:[#allocation4 + $0x10] sm:$0xff]
      %v2323 = vld [vmem:[#allocation4 + $0x18] sm:$0xff]
      %v2324 = vld [vmem:[#allocation4 + $0x20] sm:$0xff]
      %v2325 = vld [vmem:[#allocation4 + $0x28] sm:$0xff]
      %v2326 = vld [vmem:[#allocation4 + $0x30] sm:$0xff]
      %v2327 = vld [vmem:[#allocation4 + $0x38] sm:$0xff]
      %v2328 = vld [vmem:[#allocation4 + $0x40] sm:$0xf]
      %v2329 = vld [vmem:[%s3] sm:$0xf]
      %v2330 = vld [vmem:[%s3 + $0x4] sm:$0xf]
      %v2331 = vld [vmem:[%s3 + $0x8] sm:$0xf]
      %v2332 = vld [vmem:[%s3 + $0xc] sm:$0xf]
      %v2333 = vld [vmem:[%s3 + $0x10] sm:$0xf]
      %v2334 = vld [vmem:[%s3 + $0x14] sm:$0xf]
      %v2335 = vld [vmem:[%s3 + $0x18] sm:$0xf]
      %v2336 = vld [vmem:[%s3 + $0x1c] sm:$0xf]
      %v2337 = vld [vmem:[%s3 + $0x20] sm:$0xf]
      %v2338 = vld [vmem:[%s3 + $0x24] sm:$0xf]
      %v2339 = vld [vmem:[%s3 + $0x28] sm:$0xf]
      %v2340 = vld [vmem:[%s3 + $0x2c] sm:$0xf]
      %v2341 = vld [vmem:[%s3 + $0x30] sm:$0xf]
      %v2342 = vld [vmem:[%s3 + $0x34] sm:$0xf]
      %v2343 = vld [vmem:[%s3 + $0x38] sm:$0xf]
      %v2344 = vld [vmem:[%s3 + $0x3c] sm:$0xf]
      %v2345 = vld [vmem:[#allocation4] sm:$0x80]
      %v2346 = vld [vmem:[#allocation4 + $0x40] sm:$0xff]
      %v2347 = vld [vmem:[#allocation4 + $0x48] sm:$0x7]
      %s2348 = scalar_lea.vmem %s3, 64
      %v2349 = vld [vmem:[%s2348] sm:$0xf]
      %v2350 = vld [vmem:[%s2348 + $0x4] sm:$0xf]
      %v2351 = vld [vmem:[%s2348 + $0x8] sm:$0xf]
      %v2352 = vld [vmem:[%s2348 + $0xc] sm:$0xf]
      %v2353 = vld [vmem:[%s2348 + $0x10] sm:$0xf]
      %v2354 = vld [vmem:[%s2348 + $0x14] sm:$0xf]
      %v2355 = vld [vmem:[%s2348 + $0x18] sm:$0xf]
      %v2356 = vld [vmem:[%s2348 + $0x1c] sm:$0xf]
      %v2357 = vld [vmem:[%s2348 + $0x20] sm:$0xf]
      %v2358 = vld [vmem:[%s2348 + $0x24] sm:$0xf]
      %v2359 = vld [vmem:[%s2348 + $0x28] sm:$0xf]
      %v2360 = vld [vmem:[%s2348 + $0x2c] sm:$0xf]
      %v2361 = vld [vmem:[%s2348 + $0x30] sm:$0xf]
      %v2362 = vld [vmem:[%s2348 + $0x34] sm:$0xf]
      %v2363 = vld [vmem:[%s2348 + $0x38] sm:$0xf]
      %v2364 = vld [vmem:[%s2348 + $0x3c] sm:$0xf]
      %vm2375 = vcmask 1040384
      %v2376 = vrot.slane %v2345, 7
      %v2377 = vrot.slane %v2321, 7
      %v2378 = vsel %vm2375, %v2376, %v2377
      %v2379 = vrot.slane %v2322, 7
      %v2380 = vsel %vm2375, %v2377, %v2379
      %v2381 = vrot.slane %v2323, 7
      %v2382 = vsel %vm2375, %v2379, %v2381
      %v2383 = vrot.slane %v2324, 7
      %v2384 = vsel %vm2375, %v2381, %v2383
      %v2385 = vrot.slane %v2325, 7
      %v2386 = vsel %vm2375, %v2383, %v2385
      %v2387 = vrot.slane %v2326, 7
      %v2388 = vsel %vm2375, %v2385, %v2387
      %v2389 = vrot.slane %v2327, 7
      %v2390 = vsel %vm2375, %v2387, %v2389
      %v2391 = vrot.slane %v2346, 7
      %v2392 = vsel %vm2375, %v2389, %v2391
      %v2393 = vrot.slane %v2347, 7
      %v2394 = vsel %vm2375, %v2391, %v2393
      %v2420 = vunpack.c.l.b16 %v2349
      %v2421 = vunpack.c.l.b16 %v2350
      %v2422 = vunpack.c.l.b16 %v2351
      %v2423 = vunpack.c.l.b16 %v2352
      %v2424 = vunpack.c.l.b16 %v2353
      %v2425 = vunpack.c.l.b16 %v2354
      %v2426 = vunpack.c.l.b16 %v2355
      %v2427 = vunpack.c.l.b16 %v2356
      %v2428 = vunpack.c.l.b16 %v2357
      %v2429 = vunpack.c.l.b16 %v2358
      %v2430 = vunpack.c.l.b16 %v2359
      %v2431 = vunpack.c.l.b16 %v2360
      %v2432 = vunpack.c.l.b16 %v2361
      %v2433 = vunpack.c.l.b16 %v2362
      %v2434 = vunpack.c.l.b16 %v2363
      %v2435 = vunpack.c.l.b16 %v2364
      %v2436 = vpack.c.b16 %v2421, %v2420
      %v2437 = vpack.c.b16 %v2423, %v2422
      %v2438 = vpack.c.b16 %v2425, %v2424
      %v2439 = vpack.c.b16 %v2427, %v2426
      %v2440 = vpack.c.b16 %v2429, %v2428
      %v2441 = vpack.c.b16 %v2431, %v2430
      %v2442 = vpack.c.b16 %v2433, %v2432
      %v2443 = vpack.c.b16 %v2435, %v2434
      %2452 = vmatprep.subr.bf16.mxu0 0
      %2453 = vmatpush1.bf16.msra.mxu0 %v2436
      %2454 = vmatprep.subr.bf16.mxu0 0
      %2455 = vmatpush1.bf16.msra.mxu0 %v2437
      %2456 = vmatprep.subr.bf16.mxu0 0
      %2457 = vmatpush1.bf16.msra.mxu0 %v2438
      %2458 = vmatprep.subr.bf16.mxu0 0
      %2459 = vmatpush1.bf16.msra.mxu0 %v2439
      %2460 = vmatprep.subr.bf16.mxu0 0
      %2461 = vmatpush1.bf16.msra.mxu0 %v2440
      %2462 = vmatprep.subr.bf16.mxu0 0
      %2463 = vmatpush1.bf16.msra.mxu0 %v2441
      %2464 = vmatprep.subr.bf16.mxu0 0
      %2465 = vmatpush1.bf16.msra.mxu0 %v2442
      %2466 = vmatprep.subr.bf16.mxu0 0
      %2467 = vmatpush1.bf16.msra.mxu0 %v2443
      %2468 = vmatprep.subr.bf16.mxu0 0
      %2469 = vmatpush1.bf16.msra.mxu0 0
      %2470 = vmatprep.subr.bf16.mxu0 0
      %2471 = vmatpush1.bf16.msra.mxu0 0
      %2472 = vmatprep.subr.bf16.mxu0 0
      %2473 = vmatpush1.bf16.msra.mxu0 0
      %2474 = vmatprep.subr.bf16.mxu0 0
      %2475 = vmatpush1.bf16.msra.mxu0 0
      %2476 = vmatprep.subr.bf16.mxu0 0
      %2477 = vmatpush1.bf16.msra.mxu0 0
      %2478 = vmatprep.subr.bf16.mxu0 0
      %2479 = vmatpush1.bf16.msra.mxu0 0
      %2480 = vmatprep.subr.bf16.mxu0 0
      %2481 = vmatpush1.bf16.msra.mxu0 0
      %2482 = vmatprep.subr.bf16.mxu0 0
      %2483 = vmatpush1.bf16.msra.mxu0 0
      %2484 = vmatprep.mubr.bf16.mxu0 0
      %2485 = vmatmul.mubr.bf16.gmra.mrb[0].mxu0 %v2378
      %v2486 = vpop.f32.mrb[0].mxu0
      %v2487 = vadd.f32 0.0, %v2486
      %v2488 = vpop.f32.mrb[0].mxu0
      %v2489 = vpop.f32.mrb[0].mxu0
      %v2490 = vadd.f32 0.0, %v2489
      %v2491 = vpop.f32.mrb[0].mxu0
      %2492 = vmatprep.mubr.bf16.mxu0 0
      %2493 = vmatmul.mubr.bf16.gmra.mrb[0].mxu0 %v2380
      %v2494 = vpop.f32.mrb[0].mxu0
      %v2495 = vadd.f32 0.0, %v2494
      %v2496 = vpop.f32.mrb[0].mxu0
      %v2497 = vpop.f32.mrb[0].mxu0
      %v2498 = vadd.f32 0.0, %v2497
      %v2499 = vpop.f32.mrb[0].mxu0
      %2500 = vmatprep.mubr.bf16.mxu0 0
      %2501 = vmatmul.mubr.bf16.gmra.mrb[0].mxu0 %v2382
      %v2502 = vpop.f32.mrb[0].mxu0
      %v2503 = vadd.f32 0.0, %v2502
      %v2504 = vpop.f32.mrb[0].mxu0
      %v2505 = vpop.f32.mrb[0].mxu0
      %v2506 = vadd.f32 0.0, %v2505
      %v2507 = vpop.f32.mrb[0].mxu0
      %2508 = vmatprep.mubr.bf16.mxu0 0
      %2509 = vmatmul.mubr.bf16.gmra.mrb[0].mxu0 %v2384
      %v2510 = vpop.f32.mrb[0].mxu0
      %v2511 = vadd.f32 0.0, %v2510
      %v2512 = vpop.f32.mrb[0].mxu0
      %v2513 = vpop.f32.mrb[0].mxu0
      %v2514 = vadd.f32 0.0, %v2513
      %v2515 = vpop.f32.mrb[0].mxu0
      %2516 = vmatprep.mubr.bf16.mxu0 0
      %2517 = vmatmul.mubr.bf16.gmra.mrb[0].mxu0 %v2386
      %v2518 = vpop.f32.mrb[0].mxu0
      %v2519 = vadd.f32 0.0, %v2518
      %v2520 = vpop.f32.mrb[0].mxu0
      %v2521 = vpop.f32.mrb[0].mxu0
      %v2522 = vadd.f32 0.0, %v2521
      %v2523 = vpop.f32.mrb[0].mxu0
      %2524 = vmatprep.mubr.bf16.mxu0 0
      %2525 = vmatmul.mubr.bf16.gmra.mrb[0].mxu0 %v2388
      %v2526 = vpop.f32.mrb[0].mxu0
      %v2527 = vadd.f32 0.0, %v2526
      %v2528 = vpop.f32.mrb[0].mxu0
      %v2529 = vpop.f32.mrb[0].mxu0
      %v2530 = vadd.f32 0.0, %v2529
      %v2531 = vpop.f32.mrb[0].mxu0
      %2532 = vmatprep.mubr.bf16.mxu0 0
      %2533 = vmatmul.mubr.bf16.gmra.mrb[0].mxu0 %v2390
      %v2534 = vpop.f32.mrb[0].mxu0
      %v2535 = vadd.f32 0.0, %v2534
      %v2536 = vpop.f32.mrb[0].mxu0
      %v2537 = vpop.f32.mrb[0].mxu0
      %v2538 = vadd.f32 0.0, %v2537
      %v2539 = vpop.f32.mrb[0].mxu0
      %2540 = vmatprep.mubr.bf16.mxu0 0
      %2541 = vmatmul.mubr.bf16.gmra.mrb[0].mxu0 %v2392
      %v2542 = vpop.f32.mrb[0].mxu0
      %v2543 = vadd.f32 0.0, %v2542
      %v2544 = vpop.f32.mrb[0].mxu0
      %v2545 = vpop.f32.mrb[0].mxu0
      %v2546 = vadd.f32 0.0, %v2545
      %v2547 = vpop.f32.mrb[0].mxu0
      %2548 = vmatprep.mubr.bf16.mxu0 0
      %2549 = vmatmul.mubr.bf16.gmra.mrb[0].mxu0 %v2394
      %v2550 = vpop.f32.mrb[0].mxu0
      %v2551 = vadd.f32 0.0, %v2550
      %v2552 = vpop.f32.mrb[0].mxu0
      %v2553 = vpop.f32.mrb[0].mxu0
      %v2554 = vpop.f32.mrb[0].mxu0
      %2555 = vdwg.mxu0
      %v2572 = vunpack.c.l.b16 %v2329
      %v2573 = vunpack.c.l.b16 %v2330
      %v2574 = vunpack.c.l.b16 %v2331
      %v2575 = vunpack.c.l.b16 %v2332
      %v2576 = vunpack.c.l.b16 %v2333
      %v2577 = vunpack.c.l.b16 %v2334
      %v2578 = vunpack.c.l.b16 %v2335
      %v2579 = vunpack.c.l.b16 %v2336
      %v2580 = vunpack.c.l.b16 %v2337
      %v2581 = vunpack.c.l.b16 %v2338
      %v2582 = vunpack.c.l.b16 %v2339
      %v2583 = vunpack.c.l.b16 %v2340
      %v2584 = vunpack.c.l.b16 %v2341
      %v2585 = vunpack.c.l.b16 %v2342
      %v2586 = vunpack.c.l.b16 %v2343
      %v2587 = vunpack.c.l.b16 %v2344
      %v2588 = vpack.c.b16 %v2573, %v2572
      %v2589 = vpack.c.b16 %v2575, %v2574
      %v2590 = vpack.c.b16 %v2577, %v2576
      %v2591 = vpack.c.b16 %v2579, %v2578
      %v2592 = vpack.c.b16 %v2581, %v2580
      %v2593 = vpack.c.b16 %v2583, %v2582
      %v2594 = vpack.c.b16 %v2585, %v2584
      %v2595 = vpack.c.b16 %v2587, %v2586
      %2604 = vmatprep.subr.bf16.mxu0 0
      %2605 = vmatpush1.bf16.msra.mxu0 %v2588
      %2606 = vmatprep.subr.bf16.mxu0 0
      %2607 = vmatpush1.bf16.msra.mxu0 %v2589
      %2608 = vmatprep.subr.bf16.mxu0 0
      %2609 = vmatpush1.bf16.msra.mxu0 %v2590
      %2610 = vmatprep.subr.bf16.mxu0 0
      %2611 = vmatpush1.bf16.msra.mxu0 %v2591
      %2612 = vmatprep.subr.bf16.mxu0 0
      %2613 = vmatpush1.bf16.msra.mxu0 %v2592
      %2614 = vmatprep.subr.bf16.mxu0 0
      %2615 = vmatpush1.bf16.msra.mxu0 %v2593
      %2616 = vmatprep.subr.bf16.mxu0 0
      %2617 = vmatpush1.bf16.msra.mxu0 %v2594
      %2618 = vmatprep.subr.bf16.mxu0 0
      %2619 = vmatpush1.bf16.msra.mxu0 %v2595
      %2620 = vmatprep.subr.bf16.mxu0 0
      %2621 = vmatpush1.bf16.msra.mxu0 0
      %2622 = vmatprep.subr.bf16.mxu0 0
      %2623 = vmatpush1.bf16.msra.mxu0 0
      %2624 = vmatprep.subr.bf16.mxu0 0
      %2625 = vmatpush1.bf16.msra.mxu0 0
      %2626 = vmatprep.subr.bf16.mxu0 0
      %2627 = vmatpush1.bf16.msra.mxu0 0
      %2628 = vmatprep.subr.bf16.mxu0 0
      %2629 = vmatpush1.bf16.msra.mxu0 0
      %2630 = vmatprep.subr.bf16.mxu0 0
      %2631 = vmatpush1.bf16.msra.mxu0 0
      %2632 = vmatprep.subr.bf16.mxu0 0
      %2633 = vmatpush1.bf16.msra.mxu0 0
      %2634 = vmatprep.subr.bf16.mxu0 0
      %2635 = vmatpush1.bf16.msra.mxu0 0
      %2636 = vmatprep.mubr.bf16.mxu0 0
      %2637 = vmatmul.mubr.bf16.gmra.mrb[0].mxu0 %v2320
      %v2638 = vpop.f32.mrb[0].mxu0
      %v2639 = vadd.f32 %v2487, %v2638
      %v2640 = vpop.f32.mrb[0].mxu0
      %v2641 = vpop.f32.mrb[0].mxu0
      %v2642 = vadd.f32 %v2490, %v2641
      %v2643 = vpop.f32.mrb[0].mxu0
      %2644 = vmatprep.mubr.bf16.mxu0 0
      %2645 = vmatmul.mubr.bf16.gmra.mrb[0].mxu0 %v2321
      %v2646 = vpop.f32.mrb[0].mxu0
      %v2647 = vadd.f32 %v2495, %v2646
      %v2648 = vpop.f32.mrb[0].mxu0
      %v2649 = vpop.f32.mrb[0].mxu0
      %v2650 = vadd.f32 %v2498, %v2649
      %v2651 = vpop.f32.mrb[0].mxu0
      %2652 = vmatprep.mubr.bf16.mxu0 0
      %2653 = vmatmul.mubr.bf16.gmra.mrb[0].mxu0 %v2322
      %v2654 = vpop.f32.mrb[0].mxu0
      %v2655 = vadd.f32 %v2503, %v2654
      %v2656 = vpop.f32.mrb[0].mxu0
      %v2657 = vpop.f32.mrb[0].mxu0
      %v2658 = vadd.f32 %v2506, %v2657
      %v2659 = vpop.f32.mrb[0].mxu0
      %2660 = vmatprep.mubr.bf16.mxu0 0
      %2661 = vmatmul.mubr.bf16.gmra.mrb[0].mxu0 %v2323
      %v2662 = vpop.f32.mrb[0].mxu0
      %v2663 = vadd.f32 %v2511, %v2662
      %v2664 = vpop.f32.mrb[0].mxu0
      %v2665 = vpop.f32.mrb[0].mxu0
      %v2666 = vadd.f32 %v2514, %v2665
      %v2667 = vpop.f32.mrb[0].mxu0
      %2668 = vmatprep.mubr.bf16.mxu0 0
      %2669 = vmatmul.mubr.bf16.gmra.mrb[0].mxu0 %v2324
      %v2670 = vpop.f32.mrb[0].mxu0
      %v2671 = vadd.f32 %v2519, %v2670
      %v2672 = vpop.f32.mrb[0].mxu0
      %v2673 = vpop.f32.mrb[0].mxu0
      %v2674 = vadd.f32 %v2522, %v2673
      %v2675 = vpop.f32.mrb[0].mxu0
      %2676 = vmatprep.mubr.bf16.mxu0 0
      %2677 = vmatmul.mubr.bf16.gmra.mrb[0].mxu0 %v2325
      %v2678 = vpop.f32.mrb[0].mxu0
      %v2679 = vadd.f32 %v2527, %v2678
      %v2680 = vpop.f32.mrb[0].mxu0
      %v2681 = vpop.f32.mrb[0].mxu0
      %v2682 = vadd.f32 %v2530, %v2681
      %v2683 = vpop.f32.mrb[0].mxu0
      %2684 = vmatprep.mubr.bf16.mxu0 0
      %2685 = vmatmul.mubr.bf16.gmra.mrb[0].mxu0 %v2326
      %v2686 = vpop.f32.mrb[0].mxu0
      %v2687 = vadd.f32 %v2535, %v2686
      %v2688 = vpop.f32.mrb[0].mxu0
      %v2689 = vpop.f32.mrb[0].mxu0
      %v2690 = vadd.f32 %v2538, %v2689
      %v2691 = vpop.f32.mrb[0].mxu0
      %2692 = vmatprep.mubr.bf16.mxu0 0
      %2693 = vmatmul.mubr.bf16.gmra.mrb[0].mxu0 %v2327
      %v2694 = vpop.f32.mrb[0].mxu0
      %v2695 = vadd.f32 %v2543, %v2694
      %v2696 = vpop.f32.mrb[0].mxu0
      %v2697 = vpop.f32.mrb[0].mxu0
      %v2698 = vadd.f32 %v2546, %v2697
      %v2699 = vpop.f32.mrb[0].mxu0
      %2700 = vmatprep.mubr.bf16.mxu0 0
      %2701 = vmatmul.mubr.bf16.gmra.mrb[0].mxu0 %v2328
      %v2702 = vpop.f32.mrb[0].mxu0
      %v2703 = vadd.f32 %v2551, %v2702
      %v2704 = vpop.f32.mrb[0].mxu0
      %v2705 = vpop.f32.mrb[0].mxu0
      %v2706 = vpop.f32.mrb[0].mxu0
      %2707 = vdwg.mxu0
      %v2708 = vld [vmem:[#allocation4 + $0x8] sm:$0xc0]
      %v2709 = vld [vmem:[#allocation4 + $0x10] sm:$0xff]
      %v2710 = vld [vmem:[#allocation4 + $0x18] sm:$0xff]
      %v2711 = vld [vmem:[#allocation4 + $0x20] sm:$0xff]
      %v2712 = vld [vmem:[#allocation4 + $0x28] sm:$0xff]
      %v2713 = vld [vmem:[#allocation4 + $0x30] sm:$0xff]
      %v2714 = vld [vmem:[#allocation4 + $0x38] sm:$0xff]
      %v2715 = vld [vmem:[#allocation4 + $0x40] sm:$0xff]
      %v2716 = vld [vmem:[#allocation4 + $0x48] sm:$0xff]
      %v2717 = vld [vmem:[#allocation4 + $0x50] sm:$0x3]
      %s2718 = scalar_lea.vmem %s3, 128
      %v2719 = vld [vmem:[%s2718] sm:$0xf]
      %v2720 = vld [vmem:[%s2718 + $0x4] sm:$0xf]
      %v2721 = vld [vmem:[%s2718 + $0x8] sm:$0xf]
      %v2722 = vld [vmem:[%s2718 + $0xc] sm:$0xf]
      %v2723 = vld [vmem:[%s2718 + $0x10] sm:$0xf]
      %v2724 = vld [vmem:[%s2718 + $0x14] sm:$0xf]
      %v2725 = vld [vmem:[%s2718 + $0x18] sm:$0xf]
      %v2726 = vld [vmem:[%s2718 + $0x1c] sm:$0xf]
      %v2727 = vld [vmem:[%s2718 + $0x20] sm:$0xf]
      %v2728 = vld [vmem:[%s2718 + $0x24] sm:$0xf]
      %v2729 = vld [vmem:[%s2718 + $0x28] sm:$0xf]
      %v2730 = vld [vmem:[%s2718 + $0x2c] sm:$0xf]
      %v2731 = vld [vmem:[%s2718 + $0x30] sm:$0xf]
      %v2732 = vld [vmem:[%s2718 + $0x34] sm:$0xf]
      %v2733 = vld [vmem:[%s2718 + $0x38] sm:$0xf]
      %v2734 = vld [vmem:[%s2718 + $0x3c] sm:$0xf]
      %vm2745 = vcmask 1041408
      %v2746 = vrot.slane %v2708, 6
      %v2747 = vrot.slane %v2709, 6
      %v2748 = vsel %vm2745, %v2746, %v2747
      %v2749 = vrot.slane %v2710, 6
      %v2750 = vsel %vm2745, %v2747, %v2749
      %v2751 = vrot.slane %v2711, 6
      %v2752 = vsel %vm2745, %v2749, %v2751
      %v2753 = vrot.slane %v2712, 6
      %v2754 = vsel %vm2745, %v2751, %v2753
      %v2755 = vrot.slane %v2713, 6
      %v2756 = vsel %vm2745, %v2753, %v2755
      %v2757 = vrot.slane %v2714, 6
      %v2758 = vsel %vm2745, %v2755, %v2757
      %v2759 = vrot.slane %v2715, 6
      %v2760 = vsel %vm2745, %v2757, %v2759
      %v2761 = vrot.slane %v2716, 6
      %v2762 = vsel %vm2745, %v2759, %v2761
      %v2763 = vrot.slane %v2717, 6
      %v2764 = vsel %vm2745, %v2761, %v2763
      %v2790 = vunpack.c.l.b16 %v2719
      %v2791 = vunpack.c.l.b16 %v2720
      %v2792 = vunpack.c.l.b16 %v2721
      %v2793 = vunpack.c.l.b16 %v2722
      %v2794 = vunpack.c.l.b16 %v2723
      %v2795 = vunpack.c.l.b16 %v2724
      %v2796 = vunpack.c.l.b16 %v2725
      %v2797 = vunpack.c.l.b16 %v2726
      %v2798 = vunpack.c.l.b16 %v2727
      %v2799 = vunpack.c.l.b16 %v2728
      %v2800 = vunpack.c.l.b16 %v2729
      %v2801 = vunpack.c.l.b16 %v2730
      %v2802 = vunpack.c.l.b16 %v2731
      %v2803 = vunpack.c.l.b16 %v2732
      %v2804 = vunpack.c.l.b16 %v2733
      %v2805 = vunpack.c.l.b16 %v2734
      %v2806 = vpack.c.b16 %v2791, %v2790
      %v2807 = vpack.c.b16 %v2793, %v2792
      %v2808 = vpack.c.b16 %v2795, %v2794
      %v2809 = vpack.c.b16 %v2797, %v2796
      %v2810 = vpack.c.b16 %v2799, %v2798
      %v2811 = vpack.c.b16 %v2801, %v2800
      %v2812 = vpack.c.b16 %v2803, %v2802
      %v2813 = vpack.c.b16 %v2805, %v2804
      %2822 = vmatprep.subr.bf16.mxu0 0
      %2823 = vmatpush1.bf16.msra.mxu0 %v2806
      %2824 = vmatprep.subr.bf16.mxu0 0
      %2825 = vmatpush1.bf16.msra.mxu0 %v2807
      %2826 = vmatprep.subr.bf16.mxu0 0
      %2827 = vmatpush1.bf16.msra.mxu0 %v2808
      %2828 = vmatprep.subr.bf16.mxu0 0
      %2829 = vmatpush1.bf16.msra.mxu0 %v2809
      %2830 = vmatprep.subr.bf16.mxu0 0
      %2831 = vmatpush1.bf16.msra.mxu0 %v2810
      %2832 = vmatprep.subr.bf16.mxu0 0
      %2833 = vmatpush1.bf16.msra.mxu0 %v2811
      %2834 = vmatprep.subr.bf16.mxu0 0
      %2835 = vmatpush1.bf16.msra.mxu0 %v2812
      %2836 = vmatprep.subr.bf16.mxu0 0
      %2837 = vmatpush1.bf16.msra.mxu0 %v2813
      %2838 = vmatprep.subr.bf16.mxu0 0
      %2839 = vmatpush1.bf16.msra.mxu0 0
      %2840 = vmatprep.subr.bf16.mxu0 0
      %2841 = vmatpush1.bf16.msra.mxu0 0
      %2842 = vmatprep.subr.bf16.mxu0 0
      %2843 = vmatpush1.bf16.msra.mxu0 0
      %2844 = vmatprep.subr.bf16.mxu0 0
      %2845 = vmatpush1.bf16.msra.mxu0 0
      %2846 = vmatprep.subr.bf16.mxu0 0
      %2847 = vmatpush1.bf16.msra.mxu0 0
      %2848 = vmatprep.subr.bf16.mxu0 0
      %2849 = vmatpush1.bf16.msra.mxu0 0
      %2850 = vmatprep.subr.bf16.mxu0 0
      %2851 = vmatpush1.bf16.msra.mxu0 0
      %2852 = vmatprep.subr.bf16.mxu0 0
      %2853 = vmatpush1.bf16.msra.mxu0 0
      %2854 = vmatprep.mubr.bf16.mxu0 0
      %2855 = vmatmul.mubr.bf16.gmra.mrb[0].mxu0 %v2748
      %v2856 = vpop.f32.mrb[0].mxu0
      %v2857 = vadd.f32 0.0, %v2856
      %v2858 = vpop.f32.mrb[0].mxu0
      %v2859 = vpop.f32.mrb[0].mxu0
      %v2860 = vadd.f32 0.0, %v2859
      %v2861 = vpop.f32.mrb[0].mxu0
      %2862 = vmatprep.mubr.bf16.mxu0 0
      %2863 = vmatmul.mubr.bf16.gmra.mrb[0].mxu0 %v2750
      %v2864 = vpop.f32.mrb[0].mxu0
      %v2865 = vadd.f32 0.0, %v2864
      %v2866 = vpop.f32.mrb[0].mxu0
      %v2867 = vpop.f32.mrb[0].mxu0
      %v2868 = vadd.f32 0.0, %v2867
      %v2869 = vpop.f32.mrb[0].mxu0
      %2870 = vmatprep.mubr.bf16.mxu0 0
      %2871 = vmatmul.mubr.bf16.gmra.mrb[0].mxu0 %v2752
      %v2872 = vpop.f32.mrb[0].mxu0
      %v2873 = vadd.f32 0.0, %v2872
      %v2874 = vpop.f32.mrb[0].mxu0
      %v2875 = vpop.f32.mrb[0].mxu0
      %v2876 = vadd.f32 0.0, %v2875
      %v2877 = vpop.f32.mrb[0].mxu0
      %2878 = vmatprep.mubr.bf16.mxu0 0
      %2879 = vmatmul.mubr.bf16.gmra.mrb[0].mxu0 %v2754
      %v2880 = vpop.f32.mrb[0].mxu0
      %v2881 = vadd.f32 0.0, %v2880
      %v2882 = vpop.f32.mrb[0].mxu0
      %v2883 = vpop.f32.mrb[0].mxu0
      %v2884 = vadd.f32 0.0, %v2883
      %v2885 = vpop.f32.mrb[0].mxu0
      %2886 = vmatprep.mubr.bf16.mxu0 0
      %2887 = vmatmul.mubr.bf16.gmra.mrb[0].mxu0 %v2756
      %v2888 = vpop.f32.mrb[0].mxu0
      %v2889 = vadd.f32 0.0, %v2888
      %v2890 = vpop.f32.mrb[0].mxu0
      %v2891 = vpop.f32.mrb[0].mxu0
      %v2892 = vadd.f32 0.0, %v2891
      %v2893 = vpop.f32.mrb[0].mxu0
      %2894 = vmatprep.mubr.bf16.mxu0 0
      %2895 = vmatmul.mubr.bf16.gmra.mrb[0].mxu0 %v2758
      %v2896 = vpop.f32.mrb[0].mxu0
      %v2897 = vadd.f32 0.0, %v2896
      %v2898 = vpop.f32.mrb[0].mxu0
      %v2899 = vpop.f32.mrb[0].mxu0
      %v2900 = vadd.f32 0.0, %v2899
      %v2901 = vpop.f32.mrb[0].mxu0
      %2902 = vmatprep.mubr.bf16.mxu0 0
      %2903 = vmatmul.mubr.bf16.gmra.mrb[0].mxu0 %v2760
      %v2904 = vpop.f32.mrb[0].mxu0
      %v2905 = vadd.f32 0.0, %v2904
      %v2906 = vpop.f32.mrb[0].mxu0
      %v2907 = vpop.f32.mrb[0].mxu0
      %v2908 = vadd.f32 0.0, %v2907
      %v2909 = vpop.f32.mrb[0].mxu0
      %2910 = vmatprep.mubr.bf16.mxu0 0
      %2911 = vmatmul.mubr.bf16.gmra.mrb[0].mxu0 %v2762
      %v2912 = vpop.f32.mrb[0].mxu0
      %v2913 = vadd.f32 0.0, %v2912
      %v2914 = vpop.f32.mrb[0].mxu0
      %v2915 = vpop.f32.mrb[0].mxu0
      %v2916 = vadd.f32 0.0, %v2915
      %v2917 = vpop.f32.mrb[0].mxu0
      %2918 = vmatprep.mubr.bf16.mxu0 0
      %2919 = vmatmul.mubr.bf16.gmra.mrb[0].mxu0 %v2764
      %v2920 = vpop.f32.mrb[0].mxu0
      %v2921 = vadd.f32 0.0, %v2920
      %v2922 = vpop.f32.mrb[0].mxu0
      %v2923 = vpop.f32.mrb[0].mxu0
      %v2924 = vpop.f32.mrb[0].mxu0
      %2925 = vdwg.mxu0
      %v2926 = vadd.f32 %v2639, %v2857
      %v2927 = vadd.f32 %v2642, %v2860
      %v2928 = vadd.f32 %v2647, %v2865
      %v2929 = vadd.f32 %v2650, %v2868
      %v2930 = vadd.f32 %v2655, %v2873
      %v2931 = vadd.f32 %v2658, %v2876
      %v2932 = vadd.f32 %v2663, %v2881
      %v2933 = vadd.f32 %v2666, %v2884
      %v2934 = vadd.f32 %v2671, %v2889
      %v2935 = vadd.f32 %v2674, %v2892
      %v2936 = vadd.f32 %v2679, %v2897
      %v2937 = vadd.f32 %v2682, %v2900
      %v2938 = vadd.f32 %v2687, %v2905
      %v2939 = vadd.f32 %v2690, %v2908
      %v2940 = vadd.f32 %v2695, %v2913
      %v2941 = vadd.f32 %v2698, %v2916
      %v2942 = vadd.f32 %v2703, %v2921
      %v2943 = vld [vmem:[#allocation4 + $0x10] sm:$0xe0]
      %v2944 = vld [vmem:[#allocation4 + $0x18] sm:$0xff]
      %v2945 = vld [vmem:[#allocation4 + $0x20] sm:$0xff]
      %v2946 = vld [vmem:[#allocation4 + $0x28] sm:$0xff]
      %v2947 = vld [vmem:[#allocation4 + $0x30] sm:$0xff]
      %v2948 = vld [vmem:[#allocation4 + $0x38] sm:$0xff]
      %v2949 = vld [vmem:[#allocation4 + $0x40] sm:$0xff]
      %v2950 = vld [vmem:[#allocation4 + $0x48] sm:$0xff]
      %v2951 = vld [vmem:[#allocation4 + $0x50] sm:$0xff]
      %v2952 = vld [vmem:[#allocation4 + $0x58] sm:$0x1]
      %s2953 = scalar_lea.vmem %s3, 192
      %v2954 = vld [vmem:[%s2953] sm:$0xf]
      %v2955 = vld [vmem:[%s2953 + $0x4] sm:$0xf]
      %v2956 = vld [vmem:[%s2953 + $0x8] sm:$0xf]
      %v2957 = vld [vmem:[%s2953 + $0xc] sm:$0xf]
      %v2958 = vld [vmem:[%s2953 + $0x10] sm:$0xf]
      %v2959 = vld [vmem:[%s2953 + $0x14] sm:$0xf]
      %v2960 = vld [vmem:[%s2953 + $0x18] sm:$0xf]
      %v2961 = vld [vmem:[%s2953 + $0x1c] sm:$0xf]
      %v2962 = vld [vmem:[%s2953 + $0x20] sm:$0xf]
      %v2963 = vld [vmem:[%s2953 + $0x24] sm:$0xf]
      %v2964 = vld [vmem:[%s2953 + $0x28] sm:$0xf]
      %v2965 = vld [vmem:[%s2953 + $0x2c] sm:$0xf]
      %v2966 = vld [vmem:[%s2953 + $0x30] sm:$0xf]
      %v2967 = vld [vmem:[%s2953 + $0x34] sm:$0xf]
      %v2968 = vld [vmem:[%s2953 + $0x38] sm:$0xf]
      %v2969 = vld [vmem:[%s2953 + $0x3c] sm:$0xf]
      %vm2980 = vcmask 1042432
      %v2981 = vrot.slane %v2943, 5
      %v2982 = vrot.slane %v2944, 5
      %v2983 = vsel %vm2980, %v2981, %v2982
      %v2984 = vrot.slane %v2945, 5
      %v2985 = vsel %vm2980, %v2982, %v2984
      %v2986 = vrot.slane %v2946, 5
      %v2987 = vsel %vm2980, %v2984, %v2986
      %v2988 = vrot.slane %v2947, 5
      %v2989 = vsel %vm2980, %v2986, %v2988
      %v2990 = vrot.slane %v2948, 5
      %v2991 = vsel %vm2980, %v2988, %v2990
      %v2992 = vrot.slane %v2949, 5
      %v2993 = vsel %vm2980, %v2990, %v2992
      %v2994 = vrot.slane %v2950, 5
      %v2995 = vsel %vm2980, %v2992, %v2994
      %v2996 = vrot.slane %v2951, 5
      %v2997 = vsel %vm2980, %v2994, %v2996
      %v2998 = vrot.slane %v2952, 5
      %v2999 = vsel %vm2980, %v2996, %v2998
      %v3025 = vunpack.c.l.b16 %v2954
      %v3026 = vunpack.c.l.b16 %v2955
      %v3027 = vunpack.c.l.b16 %v2956
      %v3028 = vunpack.c.l.b16 %v2957
      %v3029 = vunpack.c.l.b16 %v2958
      %v3030 = vunpack.c.l.b16 %v2959
      %v3031 = vunpack.c.l.b16 %v2960
      %v3032 = vunpack.c.l.b16 %v2961
      %v3033 = vunpack.c.l.b16 %v2962
      %v3034 = vunpack.c.l.b16 %v2963
      %v3035 = vunpack.c.l.b16 %v2964
      %v3036 = vunpack.c.l.b16 %v2965
      %v3037 = vunpack.c.l.b16 %v2966
      %v3038 = vunpack.c.l.b16 %v2967
      %v3039 = vunpack.c.l.b16 %v2968
      %v3040 = vunpack.c.l.b16 %v2969
      %v3041 = vpack.c.b16 %v3026, %v3025
      %v3042 = vpack.c.b16 %v3028, %v3027
      %v3043 = vpack.c.b16 %v3030, %v3029
      %v3044 = vpack.c.b16 %v3032, %v3031
      %v3045 = vpack.c.b16 %v3034, %v3033
      %v3046 = vpack.c.b16 %v3036, %v3035
      %v3047 = vpack.c.b16 %v3038, %v3037
      %v3048 = vpack.c.b16 %v3040, %v3039
      %3057 = vmatprep.subr.bf16.mxu0 0
      %3058 = vmatpush1.bf16.msra.mxu0 %v3041
      %3059 = vmatprep.subr.bf16.mxu0 0
      %3060 = vmatpush1.bf16.msra.mxu0 %v3042
      %3061 = vmatprep.subr.bf16.mxu0 0
      %3062 = vmatpush1.bf16.msra.mxu0 %v3043
      %3063 = vmatprep.subr.bf16.mxu0 0
      %3064 = vmatpush1.bf16.msra.mxu0 %v3044
      %3065 = vmatprep.subr.bf16.mxu0 0
      %3066 = vmatpush1.bf16.msra.mxu0 %v3045
      %3067 = vmatprep.subr.bf16.mxu0 0
      %3068 = vmatpush1.bf16.msra.mxu0 %v3046
      %3069 = vmatprep.subr.bf16.mxu0 0
      %3070 = vmatpush1.bf16.msra.mxu0 %v3047
      %3071 = vmatprep.subr.bf16.mxu0 0
      %3072 = vmatpush1.bf16.msra.mxu0 %v3048
      %3073 = vmatprep.subr.bf16.mxu0 0
      %3074 = vmatpush1.bf16.msra.mxu0 0
      %3075 = vmatprep.subr.bf16.mxu0 0
      %3076 = vmatpush1.bf16.msra.mxu0 0
      %3077 = vmatprep.subr.bf16.mxu0 0
      %3078 = vmatpush1.bf16.msra.mxu0 0
      %3079 = vmatprep.subr.bf16.mxu0 0
      %3080 = vmatpush1.bf16.msra.mxu0 0
      %3081 = vmatprep.subr.bf16.mxu0 0
      %3082 = vmatpush1.bf16.msra.mxu0 0
      %3083 = vmatprep.subr.bf16.mxu0 0
      %3084 = vmatpush1.bf16.msra.mxu0 0
      %3085 = vmatprep.subr.bf16.mxu0 0
      %3086 = vmatpush1.bf16.msra.mxu0 0
      %3087 = vmatprep.subr.bf16.mxu0 0
      %3088 = vmatpush1.bf16.msra.mxu0 0
      %3089 = vmatprep.mubr.bf16.mxu0 0
      %3090 = vmatmul.mubr.bf16.gmra.mrb[0].mxu0 %v2983
      %v3091 = vpop.f32.mrb[0].mxu0
      %v3092 = vadd.f32 0.0, %v3091
      %v3093 = vpop.f32.mrb[0].mxu0
      %v3094 = vpop.f32.mrb[0].mxu0
      %v3095 = vadd.f32 0.0, %v3094
      %v3096 = vpop.f32.mrb[0].mxu0
      %3097 = vmatprep.mubr.bf16.mxu0 0
      %3098 = vmatmul.mubr.bf16.gmra.mrb[0].mxu0 %v2985
      %v3099 = vpop.f32.mrb[0].mxu0
      %v3100 = vadd.f32 0.0, %v3099
      %v3101 = vpop.f32.mrb[0].mxu0
      %v3102 = vpop.f32.mrb[0].mxu0
      %v3103 = vadd.f32 0.0, %v3102
      %v3104 = vpop.f32.mrb[0].mxu0
      %3105 = vmatprep.mubr.bf16.mxu0 0
      %3106 = vmatmul.mubr.bf16.gmra.mrb[0].mxu0 %v2987
      %v3107 = vpop.f32.mrb[0].mxu0
      %v3108 = vadd.f32 0.0, %v3107
      %v3109 = vpop.f32.mrb[0].mxu0
      %v3110 = vpop.f32.mrb[0].mxu0
      %v3111 = vadd.f32 0.0, %v3110
      %v3112 = vpop.f32.mrb[0].mxu0
      %3113 = vmatprep.mubr.bf16.mxu0 0
      %3114 = vmatmul.mubr.bf16.gmra.mrb[0].mxu0 %v2989
      %v3115 = vpop.f32.mrb[0].mxu0
      %v3116 = vadd.f32 0.0, %v3115
      %v3117 = vpop.f32.mrb[0].mxu0
      %v3118 = vpop.f32.mrb[0].mxu0
      %v3119 = vadd.f32 0.0, %v3118
      %v3120 = vpop.f32.mrb[0].mxu0
      %3121 = vmatprep.mubr.bf16.mxu0 0
      %3122 = vmatmul.mubr.bf16.gmra.mrb[0].mxu0 %v2991
      %v3123 = vpop.f32.mrb[0].mxu0
      %v3124 = vadd.f32 0.0, %v3123
      %v3125 = vpop.f32.mrb[0].mxu0
      %v3126 = vpop.f32.mrb[0].mxu0
      %v3127 = vadd.f32 0.0, %v3126
      %v3128 = vpop.f32.mrb[0].mxu0
      %3129 = vmatprep.mubr.bf16.mxu0 0
      %3130 = vmatmul.mubr.bf16.gmra.mrb[0].mxu0 %v2993
      %v3131 = vpop.f32.mrb[0].mxu0
      %v3132 = vadd.f32 0.0, %v3131
      %v3133 = vpop.f32.mrb[0].mxu0
      %v3134 = vpop.f32.mrb[0].mxu0
      %v3135 = vadd.f32 0.0, %v3134
      %v3136 = vpop.f32.mrb[0].mxu0
      %3137 = vmatprep.mubr.bf16.mxu0 0
      %3138 = vmatmul.mubr.bf16.gmra.mrb[0].mxu0 %v2995
      %v3139 = vpop.f32.mrb[0].mxu0
      %v3140 = vadd.f32 0.0, %v3139
      %v3141 = vpop.f32.mrb[0].mxu0
      %v3142 = vpop.f32.mrb[0].mxu0
      %v3143 = vadd.f32 0.0, %v3142
      %v3144 = vpop.f32.mrb[0].mxu0
      %3145 = vmatprep.mubr.bf16.mxu0 0
      %3146 = vmatmul.mubr.bf16.gmra.mrb[0].mxu0 %v2997
      %v3147 = vpop.f32.mrb[0].mxu0
      %v3148 = vadd.f32 0.0, %v3147
      %v3149 = vpop.f32.mrb[0].mxu0
      %v3150 = vpop.f32.mrb[0].mxu0
      %v3151 = vadd.f32 0.0, %v3150
      %v3152 = vpop.f32.mrb[0].mxu0
      %3153 = vmatprep.mubr.bf16.mxu0 0
      %3154 = vmatmul.mubr.bf16.gmra.mrb[0].mxu0 %v2999
      %v3155 = vpop.f32.mrb[0].mxu0
      %v3156 = vadd.f32 0.0, %v3155
      %v3157 = vpop.f32.mrb[0].mxu0
      %v3158 = vpop.f32.mrb[0].mxu0
      %v3159 = vpop.f32.mrb[0].mxu0
      %3160 = vdwg.mxu0
      %v3161 = vadd.f32 %v2926, %v3092
      %v3162 = vadd.f32 %v2927, %v3095
      %v3163 = vadd.f32 %v2928, %v3100
      %v3164 = vadd.f32 %v2929, %v3103
      %v3165 = vadd.f32 %v2930, %v3108
      %v3166 = vadd.f32 %v2931, %v3111
      %v3167 = vadd.f32 %v2932, %v3116
      %v3168 = vadd.f32 %v2933, %v3119
      %v3169 = vadd.f32 %v2934, %v3124
      %v3170 = vadd.f32 %v2935, %v3127
      %v3171 = vadd.f32 %v2936, %v3132
      %v3172 = vadd.f32 %v2937, %v3135
      %v3173 = vadd.f32 %v2938, %v3140
      %v3174 = vadd.f32 %v2939, %v3143
      %v3175 = vadd.f32 %v2940, %v3148
      %v3176 = vadd.f32 %v2941, %v3151
      %v3177 = vadd.f32 %v2942, %v3156
      %v3178 = vld [vmem:[#allocation4 + $0x18] sm:$0xf0]
      %v3179 = vld [vmem:[#allocation4 + $0x58] sm:$0xff]
      %s3180 = scalar_lea.vmem %s3, 256
      %v3181 = vld [vmem:[%s3180] sm:$0xf]
      %v3182 = vld [vmem:[%s3180 + $0x4] sm:$0xf]
      %v3183 = vld [vmem:[%s3180 + $0x8] sm:$0xf]
      %v3184 = vld [vmem:[%s3180 + $0xc] sm:$0xf]
      %v3185 = vld [vmem:[%s3180 + $0x10] sm:$0xf]
      %v3186 = vld [vmem:[%s3180 + $0x14] sm:$0xf]
      %v3187 = vld [vmem:[%s3180 + $0x18] sm:$0xf]
      %v3188 = vld [vmem:[%s3180 + $0x1c] sm:$0xf]
      %v3189 = vld [vmem:[%s3180 + $0x20] sm:$0xf]
      %v3190 = vld [vmem:[%s3180 + $0x24] sm:$0xf]
      %v3191 = vld [vmem:[%s3180 + $0x28] sm:$0xf]
      %v3192 = vld [vmem:[%s3180 + $0x2c] sm:$0xf]
      %v3193 = vld [vmem:[%s3180 + $0x30] sm:$0xf]
      %v3194 = vld [vmem:[%s3180 + $0x34] sm:$0xf]
      %v3195 = vld [vmem:[%s3180 + $0x38] sm:$0xf]
      %v3196 = vld [vmem:[%s3180 + $0x3c] sm:$0xf]
      %vm3199 = vcmask 1043456
      %v3200 = vrot.slane %v3178, 4
      %v3201 = vrot.slane %v2945, 4
      %v3202 = vsel %vm3199, %v3200, %v3201
      %v3203 = vrot.slane %v2946, 4
      %v3204 = vsel %vm3199, %v3201, %v3203
      %v3205 = vrot.slane %v2947, 4
      %v3206 = vsel %vm3199, %v3203, %v3205
      %v3207 = vrot.slane %v2948, 4
      %v3208 = vsel %vm3199, %v3205, %v3207
      %v3209 = vrot.slane %v2949, 4
      %v3210 = vsel %vm3199, %v3207, %v3209
      %v3211 = vrot.slane %v2950, 4
      %v3212 = vsel %vm3199, %v3209, %v3211
      %v3213 = vrot.slane %v2951, 4
      %v3214 = vsel %vm3199, %v3211, %v3213
      %v3215 = vrot.slane %v3179, 4
      %v3216 = vsel %vm3199, %v3213, %v3215
      %v3242 = vunpack.c.l.b16 %v3181
      %v3243 = vunpack.c.l.b16 %v3182
      %v3244 = vunpack.c.l.b16 %v3183
      %v3245 = vunpack.c.l.b16 %v3184
      %v3246 = vunpack.c.l.b16 %v3185
      %v3247 = vunpack.c.l.b16 %v3186
      %v3248 = vunpack.c.l.b16 %v3187
      %v3249 = vunpack.c.l.b16 %v3188
      %v3250 = vunpack.c.l.b16 %v3189
      %v3251 = vunpack.c.l.b16 %v3190
      %v3252 = vunpack.c.l.b16 %v3191
      %v3253 = vunpack.c.l.b16 %v3192
      %v3254 = vunpack.c.l.b16 %v3193
      %v3255 = vunpack.c.l.b16 %v3194
      %v3256 = vunpack.c.l.b16 %v3195
      %v3257 = vunpack.c.l.b16 %v3196
      %v3258 = vpack.c.b16 %v3243, %v3242
      %v3259 = vpack.c.b16 %v3245, %v3244
      %v3260 = vpack.c.b16 %v3247, %v3246
      %v3261 = vpack.c.b16 %v3249, %v3248
      %v3262 = vpack.c.b16 %v3251, %v3250
      %v3263 = vpack.c.b16 %v3253, %v3252
      %v3264 = vpack.c.b16 %v3255, %v3254
      %v3265 = vpack.c.b16 %v3257, %v3256
      %3274 = vmatprep.subr.bf16.mxu0 0
      %3275 = vmatpush1.bf16.msra.mxu0 %v3258
      %3276 = vmatprep.subr.bf16.mxu0 0
      %3277 = vmatpush1.bf16.msra.mxu0 %v3259
      %3278 = vmatprep.subr.bf16.mxu0 0
      %3279 = vmatpush1.bf16.msra.mxu0 %v3260
      %3280 = vmatprep.subr.bf16.mxu0 0
      %3281 = vmatpush1.bf16.msra.mxu0 %v3261
      %3282 = vmatprep.subr.bf16.mxu0 0
      %3283 = vmatpush1.bf16.msra.mxu0 %v3262
      %3284 = vmatprep.subr.bf16.mxu0 0
      %3285 = vmatpush1.bf16.msra.mxu0 %v3263
      %3286 = vmatprep.subr.bf16.mxu0 0
      %3287 = vmatpush1.bf16.msra.mxu0 %v3264
      %3288 = vmatprep.subr.bf16.mxu0 0
      %3289 = vmatpush1.bf16.msra.mxu0 %v3265
      %3290 = vmatprep.subr.bf16.mxu0 0
      %3291 = vmatpush1.bf16.msra.mxu0 0
      %3292 = vmatprep.subr.bf16.mxu0 0
      %3293 = vmatpush1.bf16.msra.mxu0 0
      %3294 = vmatprep.subr.bf16.mxu0 0
      %3295 = vmatpush1.bf16.msra.mxu0 0
      %3296 = vmatprep.subr.bf16.mxu0 0
      %3297 = vmatpush1.bf16.msra.mxu0 0
      %3298 = vmatprep.subr.bf16.mxu0 0
      %3299 = vmatpush1.bf16.msra.mxu0 0
      %3300 = vmatprep.subr.bf16.mxu0 0
      %3301 = vmatpush1.bf16.msra.mxu0 0
      %3302 = vmatprep.subr.bf16.mxu0 0
      %3303 = vmatpush1.bf16.msra.mxu0 0
      %3304 = vmatprep.subr.bf16.mxu0 0
      %3305 = vmatpush1.bf16.msra.mxu0 0
      %3306 = vmatprep.mubr.bf16.mxu0 0
      %3307 = vmatmul.mubr.bf16.gmra.mrb[0].mxu0 %v3202
      %v3308 = vpop.f32.mrb[0].mxu0
      %v3309 = vadd.f32 0.0, %v3308
      %v3310 = vpop.f32.mrb[0].mxu0
      %v3311 = vpop.f32.mrb[0].mxu0
      %v3312 = vadd.f32 0.0, %v3311
      %v3313 = vpop.f32.mrb[0].mxu0
      %3314 = vmatprep.mubr.bf16.mxu0 0
      %3315 = vmatmul.mubr.bf16.gmra.mrb[0].mxu0 %v3204
      %v3316 = vpop.f32.mrb[0].mxu0
      %v3317 = vadd.f32 0.0, %v3316
      %v3318 = vpop.f32.mrb[0].mxu0
      %v3319 = vpop.f32.mrb[0].mxu0
      %v3320 = vadd.f32 0.0, %v3319
      %v3321 = vpop.f32.mrb[0].mxu0
      %3322 = vmatprep.mubr.bf16.mxu0 0
      %3323 = vmatmul.mubr.bf16.gmra.mrb[0].mxu0 %v3206
      %v3324 = vpop.f32.mrb[0].mxu0
      %v3325 = vadd.f32 0.0, %v3324
      %v3326 = vpop.f32.mrb[0].mxu0
      %v3327 = vpop.f32.mrb[0].mxu0
      %v3328 = vadd.f32 0.0, %v3327
      %v3329 = vpop.f32.mrb[0].mxu0
      %3330 = vmatprep.mubr.bf16.mxu0 0
      %3331 = vmatmul.mubr.bf16.gmra.mrb[0].mxu0 %v3208
      %v3332 = vpop.f32.mrb[0].mxu0
      %v3333 = vadd.f32 0.0, %v3332
      %v3334 = vpop.f32.mrb[0].mxu0
      %v3335 = vpop.f32.mrb[0].mxu0
      %v3336 = vadd.f32 0.0, %v3335
      %v3337 = vpop.f32.mrb[0].mxu0
      %3338 = vmatprep.mubr.bf16.mxu0 0
      %3339 = vmatmul.mubr.bf16.gmra.mrb[0].mxu0 %v3210
      %v3340 = vpop.f32.mrb[0].mxu0
      %v3341 = vadd.f32 0.0, %v3340
      %v3342 = vpop.f32.mrb[0].mxu0
      %v3343 = vpop.f32.mrb[0].mxu0
      %v3344 = vadd.f32 0.0, %v3343
      %v3345 = vpop.f32.mrb[0].mxu0
      %3346 = vmatprep.mubr.bf16.mxu0 0
      %3347 = vmatmul.mubr.bf16.gmra.mrb[0].mxu0 %v3212
      %v3348 = vpop.f32.mrb[0].mxu0
      %v3349 = vadd.f32 0.0, %v3348
      %v3350 = vpop.f32.mrb[0].mxu0
      %v3351 = vpop.f32.mrb[0].mxu0
      %v3352 = vadd.f32 0.0, %v3351
      %v3353 = vpop.f32.mrb[0].mxu0
      %3354 = vmatprep.mubr.bf16.mxu0 0
      %3355 = vmatmul.mubr.bf16.gmra.mrb[0].mxu0 %v3214
      %v3356 = vpop.f32.mrb[0].mxu0
      %v3357 = vadd.f32 0.0, %v3356
      %v3358 = vpop.f32.mrb[0].mxu0
      %v3359 = vpop.f32.mrb[0].mxu0
      %v3360 = vadd.f32 0.0, %v3359
      %v3361 = vpop.f32.mrb[0].mxu0
      %3362 = vmatprep.mubr.bf16.mxu0 0
      %3363 = vmatmul.mubr.bf16.gmra.mrb[0].mxu0 %v3216
      %v3364 = vpop.f32.mrb[0].mxu0
      %v3365 = vadd.f32 0.0, %v3364
      %v3366 = vpop.f32.mrb[0].mxu0
      %v3367 = vpop.f32.mrb[0].mxu0
      %v3368 = vadd.f32 0.0, %v3367
      %v3369 = vpop.f32.mrb[0].mxu0
      %3370 = vmatprep.mubr.bf16.mxu0 0
      %3371 = vmatmul.mubr.bf16.gmra.mrb[0].mxu0 %v3215
      %v3372 = vpop.f32.mrb[0].mxu0
      %v3373 = vadd.f32 0.0, %v3372
      %v3374 = vpop.f32.mrb[0].mxu0
      %v3375 = vpop.f32.mrb[0].mxu0
      %v3376 = vpop.f32.mrb[0].mxu0
      %3377 = vdwg.mxu0
      %v3378 = vadd.f32 %v3161, %v3309
      %v3379 = vadd.f32 %v3162, %v3312
      %v3380 = vadd.f32 %v3163, %v3317
      %v3381 = vadd.f32 %v3164, %v3320
      %v3382 = vadd.f32 %v3165, %v3325
      %v3383 = vadd.f32 %v3166, %v3328
      %v3384 = vadd.f32 %v3167, %v3333
      %v3385 = vadd.f32 %v3168, %v3336
      %v3386 = vadd.f32 %v3169, %v3341
      %v3387 = vadd.f32 %v3170, %v3344
      %v3388 = vadd.f32 %v3171, %v3349
      %v3389 = vadd.f32 %v3172, %v3352
      %v3390 = vadd.f32 %v3173, %v3357
      %v3391 = vadd.f32 %v3174, %v3360
      %v3392 = vadd.f32 %v3175, %v3365
      %v3393 = vadd.f32 %v3176, %v3368
      %v3394 = vadd.f32 %v3177, %v3373
      %v3395 = vld [vmem:[%s4] sm:$0x1]
      %v3397 = vlaneseq
      %v3398 = vshrl.u32 %v3397, 7
      %v3399 = vsub.s32 0, %v3398
      %v3400 = vrot.slane %v3395, %v3399
      %v3402 = vadd.f32 %v3378, %v3400
      %v3403 = vadd.f32 %v3379, %v3400
      %v3404 = vadd.f32 %v3380, %v3400
      %v3405 = vadd.f32 %v3381, %v3400
      %v3406 = vadd.f32 %v3382, %v3400
      %v3407 = vadd.f32 %v3383, %v3400
      %v3408 = vadd.f32 %v3384, %v3400
      %v3409 = vadd.f32 %v3385, %v3400
      %v3410 = vadd.f32 %v3386, %v3400
      %v3411 = vadd.f32 %v3387, %v3400
      %v3412 = vadd.f32 %v3388, %v3400
      %v3413 = vadd.f32 %v3389, %v3400
      %v3414 = vadd.f32 %v3390, %v3400
      %v3415 = vadd.f32 %v3391, %v3400
      %v3416 = vadd.f32 %v3392, %v3400
      %v3417 = vadd.f32 %v3393, %v3400
      %v3418 = vadd.f32 %v3394, %v3400
      %v3419 = vmax.f32 %v3402, 0.0
      %v3420 = vmax.f32 %v3403, 0.0
      %v3421 = vmax.f32 %v3404, 0.0
      %v3422 = vmax.f32 %v3405, 0.0
      %v3423 = vmax.f32 %v3406, 0.0
      %v3424 = vmax.f32 %v3407, 0.0
      %v3425 = vmax.f32 %v3408, 0.0
      %v3426 = vmax.f32 %v3409, 0.0
      %v3427 = vmax.f32 %v3410, 0.0
      %v3428 = vmax.f32 %v3411, 0.0
      %v3429 = vmax.f32 %v3412, 0.0
      %v3430 = vmax.f32 %v3413, 0.0
      %v3431 = vmax.f32 %v3414, 0.0
      %v3432 = vmax.f32 %v3415, 0.0
      %v3433 = vmax.f32 %v3416, 0.0
      %v3434 = vmax.f32 %v3417, 0.0
      %v3435 = vmax.f32 %v3418, 0.0
      %3436 = vst [vmem:[#allocation5] sm:$0xff] %v3419
      %3437 = vst [vmem:[#allocation5 + $0x8] sm:$0xff] %v3420
      %3438 = vst [vmem:[#allocation5 + $0x10] sm:$0xff] %v3421
      %3439 = vst [vmem:[#allocation5 + $0x18] sm:$0xff] %v3422
      %3440 = vst [vmem:[#allocation5 + $0x20] sm:$0xff] %v3423
      %3441 = vst [vmem:[#allocation5 + $0x28] sm:$0xff] %v3424
      %3442 = vst [vmem:[#allocation5 + $0x30] sm:$0xff] %v3425
      %3443 = vst [vmem:[#allocation5 + $0x38] sm:$0xff] %v3426
      %3444 = vst [vmem:[#allocation5 + $0x40] sm:$0xff] %v3427
      %3445 = vst [vmem:[#allocation5 + $0x48] sm:$0xff] %v3428
      %3446 = vst [vmem:[#allocation5 + $0x50] sm:$0xff] %v3429
      %3447 = vst [vmem:[#allocation5 + $0x58] sm:$0xff] %v3430
      %3448 = vst [vmem:[#allocation5 + $0x60] sm:$0xff] %v3431
      %3449 = vst [vmem:[#allocation5 + $0x68] sm:$0xff] %v3432
      %3450 = vst [vmem:[#allocation5 + $0x70] sm:$0xff] %v3433
      %3451 = vst [vmem:[#allocation5 + $0x78] sm:$0xff] %v3434
      %3452 = vst [vmem:[#allocation5 + $0x80] sm:$0xff] %v3435
      %v3453 = vld [vmem:[#allocation5] ss:$2 sm:$0x1f]
      %s3454 = scalar_lea.vmem [#allocation5], 1
      %v3455 = vld [vmem:[%s3454] ss:$2 sm:$0x1f]
      %v3456 = vmax.f32 %v3453, %v3455
      %s3457 = scalar_lea.vmem [#allocation5], 14
      %v3458 = vld [vmem:[%s3457] ss:$2 sm:$0x1f]
      %s3459 = scalar_lea.vmem [#allocation5], 15
      %v3460 = vld [vmem:[%s3459] ss:$2 sm:$0x1f]
      %v3461 = vmax.f32 %v3458, %v3460
      %v3462 = vmax.f32 %v3456, %v3461
      %3463 = vst [vmem:[#allocation6] sm:$0x1f] %v3462
      %s3464 = scalar_lea.vmem [#allocation5], 28
      %v3465 = vld [vmem:[%s3464] ss:$2 sm:$0x1f]
      %s3466 = scalar_lea.vmem [#allocation5], 29
      %v3467 = vld [vmem:[%s3466] ss:$2 sm:$0x1f]
      %v3468 = vmax.f32 %v3465, %v3467
      %s3469 = scalar_lea.vmem [#allocation5], 42
      %v3470 = vld [vmem:[%s3469] ss:$2 sm:$0x1f]
      %s3471 = scalar_lea.vmem [#allocation5], 43
      %v3472 = vld [vmem:[%s3471] ss:$2 sm:$0x1f]
      %v3473 = vmax.f32 %v3470, %v3472
      %v3474 = vmax.f32 %v3468, %v3473
      %3475 = vst [vmem:[#allocation6 + $0x5] sm:$0x1f] %v3474
      %s3476 = scalar_lea.vmem [#allocation5], 56
      %v3477 = vld [vmem:[%s3476] ss:$2 sm:$0x1f]
      %s3478 = scalar_lea.vmem [#allocation5], 57
      %v3479 = vld [vmem:[%s3478] ss:$2 sm:$0x1f]
      %v3480 = vmax.f32 %v3477, %v3479
      %s3481 = scalar_lea.vmem [#allocation5], 70
      %v3482 = vld [vmem:[%s3481] ss:$2 sm:$0x1f]
      %s3483 = scalar_lea.vmem [#allocation5], 71
      %v3484 = vld [vmem:[%s3483] ss:$2 sm:$0x1f]
      %v3485 = vmax.f32 %v3482, %v3484
      %v3486 = vmax.f32 %v3480, %v3485
      %3487 = vst [vmem:[#allocation6 + $0xa] sm:$0x1f] %v3486
      %s3488 = scalar_lea.vmem [#allocation5], 84
      %v3489 = vld [vmem:[%s3488] ss:$2 sm:$0x1f]
      %s3490 = scalar_lea.vmem [#allocation5], 85
      %v3491 = vld [vmem:[%s3490] ss:$2 sm:$0x1f]
      %v3492 = vmax.f32 %v3489, %v3491
      %s3493 = scalar_lea.vmem [#allocation5], 98
      %v3494 = vld [vmem:[%s3493] ss:$2 sm:$0x1f]
      %s3495 = scalar_lea.vmem [#allocation5], 99
      %v3496 = vld [vmem:[%s3495] ss:$2 sm:$0x1f]
      %v3497 = vmax.f32 %v3494, %v3496
      %v3498 = vmax.f32 %v3492, %v3497
      %3499 = vst [vmem:[#allocation6 + $0xf] sm:$0x1f] %v3498
      %s3500 = scalar_lea.vmem [#allocation5], 112
      %v3501 = vld [vmem:[%s3500] ss:$2 sm:$0x1f]
      %s3502 = scalar_lea.vmem [#allocation5], 113
      %v3503 = vld [vmem:[%s3502] ss:$2 sm:$0x1f]
      %v3504 = vmax.f32 %v3501, %v3503
      %s3505 = scalar_lea.vmem [#allocation5], 126
      %v3506 = vld [vmem:[%s3505] ss:$2 sm:$0x1f]
      %s3507 = scalar_lea.vmem [#allocation5], 127
      %v3508 = vld [vmem:[%s3507] ss:$2 sm:$0x1f]
      %v3509 = vmax.f32 %v3506, %v3508
      %v3510 = vmax.f32 %v3504, %v3509
      %3511 = vst [vmem:[#allocation6 + $0x14] sm:$0x1f] %v3510
      %v3512 = vld [vmem:[%s6] sm:$0x1]
      %v3513 = vld [vmem:[#allocation6] sm:$0x1]
      %v3514 = vpack.c.bf16 %v3513, %v3513
      %v3515 = vld [vmem:[%s5] sm:$0xf]
      %v3516 = vld [vmem:[%s5 + $0x4] sm:$0xf]
      %v3517 = vld [vmem:[%s5 + $0x8] sm:$0xf]
      %v3518 = vld [vmem:[%s5 + $0xc] sm:$0xf]
      %v3519 = vld [vmem:[%s5 + $0x10] sm:$0xf]
      %v3520 = vld [vmem:[%s5 + $0x14] sm:$0xf]
      %v3521 = vld [vmem:[%s5 + $0x18] sm:$0xf]
      %v3522 = vld [vmem:[%s5 + $0x1c] sm:$0xf]
      %v3523 = vld [vmem:[%s5 + $0x20] sm:$0xf]
      %v3524 = vld [vmem:[%s5 + $0x24] sm:$0xf]
      %v3525 = vld [vmem:[%s5 + $0x28] sm:$0xf]
      %v3526 = vld [vmem:[%s5 + $0x2c] sm:$0xf]
      %v3527 = vld [vmem:[%s5 + $0x30] sm:$0xf]
      %v3528 = vld [vmem:[%s5 + $0x34] sm:$0xf]
      %v3529 = vld [vmem:[%s5 + $0x38] sm:$0xf]
      %v3530 = vld [vmem:[%s5 + $0x3c] sm:$0xf]
      %v3547 = vunpack.c.l.b16 %v3515
      %v3548 = vunpack.c.l.b16 %v3516
      %v3549 = vunpack.c.l.b16 %v3517
      %v3550 = vunpack.c.l.b16 %v3518
      %v3551 = vunpack.c.l.b16 %v3519
      %v3552 = vunpack.c.l.b16 %v3520
      %v3553 = vunpack.c.l.b16 %v3521
      %v3554 = vunpack.c.l.b16 %v3522
      %v3555 = vunpack.c.l.b16 %v3523
      %v3556 = vunpack.c.l.b16 %v3524
      %v3557 = vunpack.c.l.b16 %v3525
      %v3558 = vunpack.c.l.b16 %v3526
      %v3559 = vunpack.c.l.b16 %v3527
      %v3560 = vunpack.c.l.b16 %v3528
      %v3561 = vunpack.c.l.b16 %v3529
      %v3562 = vunpack.c.l.b16 %v3530
      %v3563 = vpack.c.b16 %v3548, %v3547
      %v3564 = vpack.c.b16 %v3550, %v3549
      %v3565 = vpack.c.b16 %v3552, %v3551
      %v3566 = vpack.c.b16 %v3554, %v3553
      %v3567 = vpack.c.b16 %v3556, %v3555
      %v3568 = vpack.c.b16 %v3558, %v3557
      %v3569 = vpack.c.b16 %v3560, %v3559
      %v3570 = vpack.c.b16 %v3562, %v3561
      %3579 = vmatprep.subr.bf16.mxu0 0
      %3580 = vmatpush1.bf16.msra.mxu0 %v3563
      %3581 = vmatprep.subr.bf16.mxu0 0
      %3582 = vmatpush1.bf16.msra.mxu0 %v3564
      %3583 = vmatprep.subr.bf16.mxu0 0
      %3584 = vmatpush1.bf16.msra.mxu0 %v3565
      %3585 = vmatprep.subr.bf16.mxu0 0
      %3586 = vmatpush1.bf16.msra.mxu0 %v3566
      %3587 = vmatprep.subr.bf16.mxu0 0
      %3588 = vmatpush1.bf16.msra.mxu0 %v3567
      %3589 = vmatprep.subr.bf16.mxu0 0
      %3590 = vmatpush1.bf16.msra.mxu0 %v3568
      %3591 = vmatprep.subr.bf16.mxu0 0
      %3592 = vmatpush1.bf16.msra.mxu0 %v3569
      %3593 = vmatprep.subr.bf16.mxu0 0
      %3594 = vmatpush1.bf16.msra.mxu0 %v3570
      %3595 = vmatprep.subr.bf16.mxu0 0
      %3596 = vmatpush1.bf16.msra.mxu0 0
      %3597 = vmatprep.subr.bf16.mxu0 0
      %3598 = vmatpush1.bf16.msra.mxu0 0
      %3599 = vmatprep.subr.bf16.mxu0 0
      %3600 = vmatpush1.bf16.msra.mxu0 0
      %3601 = vmatprep.subr.bf16.mxu0 0
      %3602 = vmatpush1.bf16.msra.mxu0 0
      %3603 = vmatprep.subr.bf16.mxu0 0
      %3604 = vmatpush1.bf16.msra.mxu0 0
      %3605 = vmatprep.subr.bf16.mxu0 0
      %3606 = vmatpush1.bf16.msra.mxu0 0
      %3607 = vmatprep.subr.bf16.mxu0 0
      %3608 = vmatpush1.bf16.msra.mxu0 0
      %3609 = vmatprep.subr.bf16.mxu0 0
      %3610 = vmatpush1.bf16.msra.mxu0 0
      %3611 = vmatprep.mubr.bf16.mxu0 0
      %3612 = vmatmul.mubr.bf16.gmra.mrb[0].mxu0 %v3514
      %v3613 = vpop.f32.mrb[0].mxu0
      %v3614 = vadd.f32 0.0, %v3613
      %v3615 = vpop.f32.mrb[0].mxu0
      %v3616 = vpop.f32.mrb[0].mxu0
      %v3617 = vpop.f32.mrb[0].mxu0
      %3618 = vdwg.mxu0
      %v3619 = vadd.f32 %v3512, %v3614
      %v3620 = vld [vmem:[#allocation6 + $0x1] sm:$0x1]
      %v3621 = vpack.c.bf16 %v3620, %v3620
      %s3622 = scalar_lea.vmem %s5, 64
      %v3623 = vld [vmem:[%s3622] sm:$0xf]
      %v3624 = vld [vmem:[%s3622 + $0x4] sm:$0xf]
      %v3625 = vld [vmem:[%s3622 + $0x8] sm:$0xf]
      %v3626 = vld [vmem:[%s3622 + $0xc] sm:$0xf]
      %v3627 = vld [vmem:[%s3622 + $0x10] sm:$0xf]
      %v3628 = vld [vmem:[%s3622 + $0x14] sm:$0xf]
      %v3629 = vld [vmem:[%s3622 + $0x18] sm:$0xf]
      %v3630 = vld [vmem:[%s3622 + $0x1c] sm:$0xf]
      %v3631 = vld [vmem:[%s3622 + $0x20] sm:$0xf]
      %v3632 = vld [vmem:[%s3622 + $0x24] sm:$0xf]
      %v3633 = vld [vmem:[%s3622 + $0x28] sm:$0xf]
      %v3634 = vld [vmem:[%s3622 + $0x2c] sm:$0xf]
      %v3635 = vld [vmem:[%s3622 + $0x30] sm:$0xf]
      %v3636 = vld [vmem:[%s3622 + $0x34] sm:$0xf]
      %v3637 = vld [vmem:[%s3622 + $0x38] sm:$0xf]
      %v3638 = vld [vmem:[%s3622 + $0x3c] sm:$0xf]
      %v3655 = vunpack.c.l.b16 %v3623
      %v3656 = vunpack.c.l.b16 %v3624
      %v3657 = vunpack.c.l.b16 %v3625
      %v3658 = vunpack.c.l.b16 %v3626
      %v3659 = vunpack.c.l.b16 %v3627
      %v3660 = vunpack.c.l.b16 %v3628
      %v3661 = vunpack.c.l.b16 %v3629
      %v3662 = vunpack.c.l.b16 %v3630
      %v3663 = vunpack.c.l.b16 %v3631
      %v3664 = vunpack.c.l.b16 %v3632
      %v3665 = vunpack.c.l.b16 %v3633
      %v3666 = vunpack.c.l.b16 %v3634
      %v3667 = vunpack.c.l.b16 %v3635
      %v3668 = vunpack.c.l.b16 %v3636
      %v3669 = vunpack.c.l.b16 %v3637
      %v3670 = vunpack.c.l.b16 %v3638
      %v3671 = vpack.c.b16 %v3656, %v3655
      %v3672 = vpack.c.b16 %v3658, %v3657
      %v3673 = vpack.c.b16 %v3660, %v3659
      %v3674 = vpack.c.b16 %v3662, %v3661
      %v3675 = vpack.c.b16 %v3664, %v3663
      %v3676 = vpack.c.b16 %v3666, %v3665
      %v3677 = vpack.c.b16 %v3668, %v3667
      %v3678 = vpack.c.b16 %v3670, %v3669
      %3687 = vmatprep.subr.bf16.mxu0 0
      %3688 = vmatpush1.bf16.msra.mxu0 %v3671
      %3689 = vmatprep.subr.bf16.mxu0 0
      %3690 = vmatpush1.bf16.msra.mxu0 %v3672
      %3691 = vmatprep.subr.bf16.mxu0 0
      %3692 = vmatpush1.bf16.msra.mxu0 %v3673
      %3693 = vmatprep.subr.bf16.mxu0 0
      %3694 = vmatpush1.bf16.msra.mxu0 %v3674
      %3695 = vmatprep.subr.bf16.mxu0 0
      %3696 = vmatpush1.bf16.msra.mxu0 %v3675
      %3697 = vmatprep.subr.bf16.mxu0 0
      %3698 = vmatpush1.bf16.msra.mxu0 %v3676
      %3699 = vmatprep.subr.bf16.mxu0 0
      %3700 = vmatpush1.bf16.msra.mxu0 %v3677
      %3701 = vmatprep.subr.bf16.mxu0 0
      %3702 = vmatpush1.bf16.msra.mxu0 %v3678
      %3703 = vmatprep.subr.bf16.mxu0 0
      %3704 = vmatpush1.bf16.msra.mxu0 0
      %3705 = vmatprep.subr.bf16.mxu0 0
      %3706 = vmatpush1.bf16.msra.mxu0 0
      %3707 = vmatprep.subr.bf16.mxu0 0
      %3708 = vmatpush1.bf16.msra.mxu0 0
      %3709 = vmatprep.subr.bf16.mxu0 0
      %3710 = vmatpush1.bf16.msra.mxu0 0
      %3711 = vmatprep.subr.bf16.mxu0 0
      %3712 = vmatpush1.bf16.msra.mxu0 0
      %3713 = vmatprep.subr.bf16.mxu0 0
      %3714 = vmatpush1.bf16.msra.mxu0 0
      %3715 = vmatprep.subr.bf16.mxu0 0
      %3716 = vmatpush1.bf16.msra.mxu0 0
      %3717 = vmatprep.subr.bf16.mxu0 0
      %3718 = vmatpush1.bf16.msra.mxu0 0
      %3719 = vmatprep.mubr.bf16.mxu0 0
      %3720 = vmatmul.mubr.bf16.gmra.mrb[0].mxu0 %v3621
      %v3721 = vpop.f32.mrb[0].mxu0
      %v3722 = vadd.f32 0.0, %v3721
      %v3723 = vpop.f32.mrb[0].mxu0
      %v3724 = vpop.f32.mrb[0].mxu0
      %v3725 = vpop.f32.mrb[0].mxu0
      %3726 = vdwg.mxu0
      %v3727 = vadd.f32 %v3619, %v3722
      %v3728 = vld [vmem:[#allocation6 + $0x2] sm:$0x1]
      %v3729 = vpack.c.bf16 %v3728, %v3728
      %s3730 = scalar_lea.vmem %s5, 128
      %v3731 = vld [vmem:[%s3730] sm:$0xf]
      %v3732 = vld [vmem:[%s3730 + $0x4] sm:$0xf]
      %v3733 = vld [vmem:[%s3730 + $0x8] sm:$0xf]
      %v3734 = vld [vmem:[%s3730 + $0xc] sm:$0xf]
      %v3735 = vld [vmem:[%s3730 + $0x10] sm:$0xf]
      %v3736 = vld [vmem:[%s3730 + $0x14] sm:$0xf]
      %v3737 = vld [vmem:[%s3730 + $0x18] sm:$0xf]
      %v3738 = vld [vmem:[%s3730 + $0x1c] sm:$0xf]
      %v3739 = vld [vmem:[%s3730 + $0x20] sm:$0xf]
      %v3740 = vld [vmem:[%s3730 + $0x24] sm:$0xf]
      %v3741 = vld [vmem:[%s3730 + $0x28] sm:$0xf]
      %v3742 = vld [vmem:[%s3730 + $0x2c] sm:$0xf]
      %v3743 = vld [vmem:[%s3730 + $0x30] sm:$0xf]
      %v3744 = vld [vmem:[%s3730 + $0x34] sm:$0xf]
      %v3745 = vld [vmem:[%s3730 + $0x38] sm:$0xf]
      %v3746 = vld [vmem:[%s3730 + $0x3c] sm:$0xf]
      %v3763 = vunpack.c.l.b16 %v3731
      %v3764 = vunpack.c.l.b16 %v3732
      %v3765 = vunpack.c.l.b16 %v3733
      %v3766 = vunpack.c.l.b16 %v3734
      %v3767 = vunpack.c.l.b16 %v3735
      %v3768 = vunpack.c.l.b16 %v3736
      %v3769 = vunpack.c.l.b16 %v3737
      %v3770 = vunpack.c.l.b16 %v3738
      %v3771 = vunpack.c.l.b16 %v3739
      %v3772 = vunpack.c.l.b16 %v3740
      %v3773 = vunpack.c.l.b16 %v3741
      %v3774 = vunpack.c.l.b16 %v3742
      %v3775 = vunpack.c.l.b16 %v3743
      %v3776 = vunpack.c.l.b16 %v3744
      %v3777 = vunpack.c.l.b16 %v3745
      %v3778 = vunpack.c.l.b16 %v3746
      %v3779 = vpack.c.b16 %v3764, %v3763
      %v3780 = vpack.c.b16 %v3766, %v3765
      %v3781 = vpack.c.b16 %v3768, %v3767
      %v3782 = vpack.c.b16 %v3770, %v3769
      %v3783 = vpack.c.b16 %v3772, %v3771
      %v3784 = vpack.c.b16 %v3774, %v3773
      %v3785 = vpack.c.b16 %v3776, %v3775
      %v3786 = vpack.c.b16 %v3778, %v3777
      %3795 = vmatprep.subr.bf16.mxu0 0
      %3796 = vmatpush1.bf16.msra.mxu0 %v3779
      %3797 = vmatprep.subr.bf16.mxu0 0
      %3798 = vmatpush1.bf16.msra.mxu0 %v3780
      %3799 = vmatprep.subr.bf16.mxu0 0
      %3800 = vmatpush1.bf16.msra.mxu0 %v3781
      %3801 = vmatprep.subr.bf16.mxu0 0
      %3802 = vmatpush1.bf16.msra.mxu0 %v3782
      %3803 = vmatprep.subr.bf16.mxu0 0
      %3804 = vmatpush1.bf16.msra.mxu0 %v3783
      %3805 = vmatprep.subr.bf16.mxu0 0
      %3806 = vmatpush1.bf16.msra.mxu0 %v3784
      %3807 = vmatprep.subr.bf16.mxu0 0
      %3808 = vmatpush1.bf16.msra.mxu0 %v3785
      %3809 = vmatprep.subr.bf16.mxu0 0
      %3810 = vmatpush1.bf16.msra.mxu0 %v3786
      %3811 = vmatprep.subr.bf16.mxu0 0
      %3812 = vmatpush1.bf16.msra.mxu0 0
      %3813 = vmatprep.subr.bf16.mxu0 0
      %3814 = vmatpush1.bf16.msra.mxu0 0
      %3815 = vmatprep.subr.bf16.mxu0 0
      %3816 = vmatpush1.bf16.msra.mxu0 0
      %3817 = vmatprep.subr.bf16.mxu0 0
      %3818 = vmatpush1.bf16.msra.mxu0 0
      %3819 = vmatprep.subr.bf16.mxu0 0
      %3820 = vmatpush1.bf16.msra.mxu0 0
      %3821 = vmatprep.subr.bf16.mxu0 0
      %3822 = vmatpush1.bf16.msra.mxu0 0
      %3823 = vmatprep.subr.bf16.mxu0 0
      %3824 = vmatpush1.bf16.msra.mxu0 0
      %3825 = vmatprep.subr.bf16.mxu0 0
      %3826 = vmatpush1.bf16.msra.mxu0 0
      %3827 = vmatprep.mubr.bf16.mxu0 0
      %3828 = vmatmul.mubr.bf16.gmra.mrb[0].mxu0 %v3729
      %v3829 = vpop.f32.mrb[0].mxu0
      %v3830 = vadd.f32 0.0, %v3829
      %v3831 = vpop.f32.mrb[0].mxu0
      %v3832 = vpop.f32.mrb[0].mxu0
      %v3833 = vpop.f32.mrb[0].mxu0
      %3834 = vdwg.mxu0
      %v3835 = vadd.f32 %v3727, %v3830
      %v3836 = vld [vmem:[#allocation6 + $0x3] sm:$0x1]
      %v3837 = vpack.c.bf16 %v3836, %v3836
      %s3838 = scalar_lea.vmem %s5, 192
      %v3839 = vld [vmem:[%s3838] sm:$0xf]
      %v3840 = vld [vmem:[%s3838 + $0x4] sm:$0xf]
      %v3841 = vld [vmem:[%s3838 + $0x8] sm:$0xf]
      %v3842 = vld [vmem:[%s3838 + $0xc] sm:$0xf]
      %v3843 = vld [vmem:[%s3838 + $0x10] sm:$0xf]
      %v3844 = vld [vmem:[%s3838 + $0x14] sm:$0xf]
      %v3845 = vld [vmem:[%s3838 + $0x18] sm:$0xf]
      %v3846 = vld [vmem:[%s3838 + $0x1c] sm:$0xf]
      %v3847 = vld [vmem:[%s3838 + $0x20] sm:$0xf]
      %v3848 = vld [vmem:[%s3838 + $0x24] sm:$0xf]
      %v3849 = vld [vmem:[%s3838 + $0x28] sm:$0xf]
      %v3850 = vld [vmem:[%s3838 + $0x2c] sm:$0xf]
      %v3851 = vld [vmem:[%s3838 + $0x30] sm:$0xf]
      %v3852 = vld [vmem:[%s3838 + $0x34] sm:$0xf]
      %v3853 = vld [vmem:[%s3838 + $0x38] sm:$0xf]
      %v3854 = vld [vmem:[%s3838 + $0x3c] sm:$0xf]
      %v3871 = vunpack.c.l.b16 %v3839
      %v3872 = vunpack.c.l.b16 %v3840
      %v3873 = vunpack.c.l.b16 %v3841
      %v3874 = vunpack.c.l.b16 %v3842
      %v3875 = vunpack.c.l.b16 %v3843
      %v3876 = vunpack.c.l.b16 %v3844
      %v3877 = vunpack.c.l.b16 %v3845
      %v3878 = vunpack.c.l.b16 %v3846
      %v3879 = vunpack.c.l.b16 %v3847
      %v3880 = vunpack.c.l.b16 %v3848
      %v3881 = vunpack.c.l.b16 %v3849
      %v3882 = vunpack.c.l.b16 %v3850
      %v3883 = vunpack.c.l.b16 %v3851
      %v3884 = vunpack.c.l.b16 %v3852
      %v3885 = vunpack.c.l.b16 %v3853
      %v3886 = vunpack.c.l.b16 %v3854
      %v3887 = vpack.c.b16 %v3872, %v3871
      %v3888 = vpack.c.b16 %v3874, %v3873
      %v3889 = vpack.c.b16 %v3876, %v3875
      %v3890 = vpack.c.b16 %v3878, %v3877
      %v3891 = vpack.c.b16 %v3880, %v3879
      %v3892 = vpack.c.b16 %v3882, %v3881
      %v3893 = vpack.c.b16 %v3884, %v3883
      %v3894 = vpack.c.b16 %v3886, %v3885
      %3903 = vmatprep.subr.bf16.mxu0 0
      %3904 = vmatpush1.bf16.msra.mxu0 %v3887
      %3905 = vmatprep.subr.bf16.mxu0 0
      %3906 = vmatpush1.bf16.msra.mxu0 %v3888
      %3907 = vmatprep.subr.bf16.mxu0 0
      %3908 = vmatpush1.bf16.msra.mxu0 %v3889
      %3909 = vmatprep.subr.bf16.mxu0 0
      %3910 = vmatpush1.bf16.msra.mxu0 %v3890
      %3911 = vmatprep.subr.bf16.mxu0 0
      %3912 = vmatpush1.bf16.msra.mxu0 %v3891
      %3913 = vmatprep.subr.bf16.mxu0 0
      %3914 = vmatpush1.bf16.msra.mxu0 %v3892
      %3915 = vmatprep.subr.bf16.mxu0 0
      %3916 = vmatpush1.bf16.msra.mxu0 %v3893
      %3917 = vmatprep.subr.bf16.mxu0 0
      %3918 = vmatpush1.bf16.msra.mxu0 %v3894
      %3919 = vmatprep.subr.bf16.mxu0 0
      %3920 = vmatpush1.bf16.msra.mxu0 0
      %3921 = vmatprep.subr.bf16.mxu0 0
      %3922 = vmatpush1.bf16.msra.mxu0 0
      %3923 = vmatprep.subr.bf16.mxu0 0
      %3924 = vmatpush1.bf16.msra.mxu0 0
      %3925 = vmatprep.subr.bf16.mxu0 0
      %3926 = vmatpush1.bf16.msra.mxu0 0
      %3927 = vmatprep.subr.bf16.mxu0 0
      %3928 = vmatpush1.bf16.msra.mxu0 0
      %3929 = vmatprep.subr.bf16.mxu0 0
      %3930 = vmatpush1.bf16.msra.mxu0 0
      %3931 = vmatprep.subr.bf16.mxu0 0
      %3932 = vmatpush1.bf16.msra.mxu0 0
      %3933 = vmatprep.subr.bf16.mxu0 0
      %3934 = vmatpush1.bf16.msra.mxu0 0
      %3935 = vmatprep.mubr.bf16.mxu0 0
      %3936 = vmatmul.mubr.bf16.gmra.mrb[0].mxu0 %v3837
      %v3937 = vpop.f32.mrb[0].mxu0
      %v3938 = vadd.f32 0.0, %v3937
      %v3939 = vpop.f32.mrb[0].mxu0
      %v3940 = vpop.f32.mrb[0].mxu0
      %v3941 = vpop.f32.mrb[0].mxu0
      %3942 = vdwg.mxu0
      %v3943 = vadd.f32 %v3835, %v3938
      %v3944 = vld [vmem:[#allocation6 + $0x4] sm:$0x1]
      %v3945 = vpack.c.bf16 %v3944, %v3944
      %s3946 = scalar_lea.vmem %s5, 256
      %v3947 = vld [vmem:[%s3946] sm:$0xf]
      %v3948 = vld [vmem:[%s3946 + $0x4] sm:$0xf]
      %v3949 = vld [vmem:[%s3946 + $0x8] sm:$0xf]
      %v3950 = vld [vmem:[%s3946 + $0xc] sm:$0xf]
      %v3951 = vld [vmem:[%s3946 + $0x10] sm:$0xf]
      %v3952 = vld [vmem:[%s3946 + $0x14] sm:$0xf]
      %v3953 = vld [vmem:[%s3946 + $0x18] sm:$0xf]
      %v3954 = vld [vmem:[%s3946 + $0x1c] sm:$0xf]
      %v3955 = vld [vmem:[%s3946 + $0x20] sm:$0xf]
      %v3956 = vld [vmem:[%s3946 + $0x24] sm:$0xf]
      %v3957 = vld [vmem:[%s3946 + $0x28] sm:$0xf]
      %v3958 = vld [vmem:[%s3946 + $0x2c] sm:$0xf]
      %v3959 = vld [vmem:[%s3946 + $0x30] sm:$0xf]
      %v3960 = vld [vmem:[%s3946 + $0x34] sm:$0xf]
      %v3961 = vld [vmem:[%s3946 + $0x38] sm:$0xf]
      %v3962 = vld [vmem:[%s3946 + $0x3c] sm:$0xf]
      %v3979 = vunpack.c.l.b16 %v3947
      %v3980 = vunpack.c.l.b16 %v3948
      %v3981 = vunpack.c.l.b16 %v3949
      %v3982 = vunpack.c.l.b16 %v3950
      %v3983 = vunpack.c.l.b16 %v3951
      %v3984 = vunpack.c.l.b16 %v3952
      %v3985 = vunpack.c.l.b16 %v3953
      %v3986 = vunpack.c.l.b16 %v3954
      %v3987 = vunpack.c.l.b16 %v3955
      %v3988 = vunpack.c.l.b16 %v3956
      %v3989 = vunpack.c.l.b16 %v3957
      %v3990 = vunpack.c.l.b16 %v3958
      %v3991 = vunpack.c.l.b16 %v3959
      %v3992 = vunpack.c.l.b16 %v3960
      %v3993 = vunpack.c.l.b16 %v3961
      %v3994 = vunpack.c.l.b16 %v3962
      %v3995 = vpack.c.b16 %v3980, %v3979
      %v3996 = vpack.c.b16 %v3982, %v3981
      %v3997 = vpack.c.b16 %v3984, %v3983
      %v3998 = vpack.c.b16 %v3986, %v3985
      %v3999 = vpack.c.b16 %v3988, %v3987
      %v4000 = vpack.c.b16 %v3990, %v3989
      %v4001 = vpack.c.b16 %v3992, %v3991
      %v4002 = vpack.c.b16 %v3994, %v3993
      %4011 = vmatprep.subr.bf16.mxu0 0
      %4012 = vmatpush1.bf16.msra.mxu0 %v3995
      %4013 = vmatprep.subr.bf16.mxu0 0
      %4014 = vmatpush1.bf16.msra.mxu0 %v3996
      %4015 = vmatprep.subr.bf16.mxu0 0
      %4016 = vmatpush1.bf16.msra.mxu0 %v3997
      %4017 = vmatprep.subr.bf16.mxu0 0
      %4018 = vmatpush1.bf16.msra.mxu0 %v3998
      %4019 = vmatprep.subr.bf16.mxu0 0
      %4020 = vmatpush1.bf16.msra.mxu0 %v3999
      %4021 = vmatprep.subr.bf16.mxu0 0
      %4022 = vmatpush1.bf16.msra.mxu0 %v4000
      %4023 = vmatprep.subr.bf16.mxu0 0
      %4024 = vmatpush1.bf16.msra.mxu0 %v4001
      %4025 = vmatprep.subr.bf16.mxu0 0
      %4026 = vmatpush1.bf16.msra.mxu0 %v4002
      %4027 = vmatprep.subr.bf16.mxu0 0
      %4028 = vmatpush1.bf16.msra.mxu0 0
      %4029 = vmatprep.subr.bf16.mxu0 0
      %4030 = vmatpush1.bf16.msra.mxu0 0
      %4031 = vmatprep.subr.bf16.mxu0 0
      %4032 = vmatpush1.bf16.msra.mxu0 0
      %4033 = vmatprep.subr.bf16.mxu0 0
      %4034 = vmatpush1.bf16.msra.mxu0 0
      %4035 = vmatprep.subr.bf16.mxu0 0
      %4036 = vmatpush1.bf16.msra.mxu0 0
      %4037 = vmatprep.subr.bf16.mxu0 0
      %4038 = vmatpush1.bf16.msra.mxu0 0
      %4039 = vmatprep.subr.bf16.mxu0 0
      %4040 = vmatpush1.bf16.msra.mxu0 0
      %4041 = vmatprep.subr.bf16.mxu0 0
      %4042 = vmatpush1.bf16.msra.mxu0 0
      %4043 = vmatprep.mubr.bf16.mxu0 0
      %4044 = vmatmul.mubr.bf16.gmra.mrb[0].mxu0 %v3945
      %v4045 = vpop.f32.mrb[0].mxu0
      %v4046 = vadd.f32 0.0, %v4045
      %v4047 = vpop.f32.mrb[0].mxu0
      %v4048 = vpop.f32.mrb[0].mxu0
      %v4049 = vpop.f32.mrb[0].mxu0
      %4050 = vdwg.mxu0
      %v4051 = vadd.f32 %v3943, %v4046
      %v4052 = vld [vmem:[#allocation6 + $0x5] sm:$0x1]
      %v4053 = vpack.c.bf16 %v4052, %v4052
      %s4054 = scalar_lea.vmem %s5, 320
      %v4055 = vld [vmem:[%s4054] sm:$0xf]
      %v4056 = vld [vmem:[%s4054 + $0x4] sm:$0xf]
      %v4057 = vld [vmem:[%s4054 + $0x8] sm:$0xf]
      %v4058 = vld [vmem:[%s4054 + $0xc] sm:$0xf]
      %v4059 = vld [vmem:[%s4054 + $0x10] sm:$0xf]
      %v4060 = vld [vmem:[%s4054 + $0x14] sm:$0xf]
      %v4061 = vld [vmem:[%s4054 + $0x18] sm:$0xf]
      %v4062 = vld [vmem:[%s4054 + $0x1c] sm:$0xf]
      %v4063 = vld [vmem:[%s4054 + $0x20] sm:$0xf]
      %v4064 = vld [vmem:[%s4054 + $0x24] sm:$0xf]
      %v4065 = vld [vmem:[%s4054 + $0x28] sm:$0xf]
      %v4066 = vld [vmem:[%s4054 + $0x2c] sm:$0xf]
      %v4067 = vld [vmem:[%s4054 + $0x30] sm:$0xf]
      %v4068 = vld [vmem:[%s4054 + $0x34] sm:$0xf]
      %v4069 = vld [vmem:[%s4054 + $0x38] sm:$0xf]
      %v4070 = vld [vmem:[%s4054 + $0x3c] sm:$0xf]
      %v4087 = vunpack.c.l.b16 %v4055
      %v4088 = vunpack.c.l.b16 %v4056
      %v4089 = vunpack.c.l.b16 %v4057
      %v4090 = vunpack.c.l.b16 %v4058
      %v4091 = vunpack.c.l.b16 %v4059
      %v4092 = vunpack.c.l.b16 %v4060
      %v4093 = vunpack.c.l.b16 %v4061
      %v4094 = vunpack.c.l.b16 %v4062
      %v4095 = vunpack.c.l.b16 %v4063
      %v4096 = vunpack.c.l.b16 %v4064
      %v4097 = vunpack.c.l.b16 %v4065
      %v4098 = vunpack.c.l.b16 %v4066
      %v4099 = vunpack.c.l.b16 %v4067
      %v4100 = vunpack.c.l.b16 %v4068
      %v4101 = vunpack.c.l.b16 %v4069
      %v4102 = vunpack.c.l.b16 %v4070
      %v4103 = vpack.c.b16 %v4088, %v4087
      %v4104 = vpack.c.b16 %v4090, %v4089
      %v4105 = vpack.c.b16 %v4092, %v4091
      %v4106 = vpack.c.b16 %v4094, %v4093
      %v4107 = vpack.c.b16 %v4096, %v4095
      %v4108 = vpack.c.b16 %v4098, %v4097
      %v4109 = vpack.c.b16 %v4100, %v4099
      %v4110 = vpack.c.b16 %v4102, %v4101
      %4119 = vmatprep.subr.bf16.mxu0 0
      %4120 = vmatpush1.bf16.msra.mxu0 %v4103
      %4121 = vmatprep.subr.bf16.mxu0 0
      %4122 = vmatpush1.bf16.msra.mxu0 %v4104
      %4123 = vmatprep.subr.bf16.mxu0 0
      %4124 = vmatpush1.bf16.msra.mxu0 %v4105
      %4125 = vmatprep.subr.bf16.mxu0 0
      %4126 = vmatpush1.bf16.msra.mxu0 %v4106
      %4127 = vmatprep.subr.bf16.mxu0 0
      %4128 = vmatpush1.bf16.msra.mxu0 %v4107
      %4129 = vmatprep.subr.bf16.mxu0 0
      %4130 = vmatpush1.bf16.msra.mxu0 %v4108
      %4131 = vmatprep.subr.bf16.mxu0 0
      %4132 = vmatpush1.bf16.msra.mxu0 %v4109
      %4133 = vmatprep.subr.bf16.mxu0 0
      %4134 = vmatpush1.bf16.msra.mxu0 %v4110
      %4135 = vmatprep.subr.bf16.mxu0 0
      %4136 = vmatpush1.bf16.msra.mxu0 0
      %4137 = vmatprep.subr.bf16.mxu0 0
      %4138 = vmatpush1.bf16.msra.mxu0 0
      %4139 = vmatprep.subr.bf16.mxu0 0
      %4140 = vmatpush1.bf16.msra.mxu0 0
      %4141 = vmatprep.subr.bf16.mxu0 0
      %4142 = vmatpush1.bf16.msra.mxu0 0
      %4143 = vmatprep.subr.bf16.mxu0 0
      %4144 = vmatpush1.bf16.msra.mxu0 0
      %4145 = vmatprep.subr.bf16.mxu0 0
      %4146 = vmatpush1.bf16.msra.mxu0 0
      %4147 = vmatprep.subr.bf16.mxu0 0
      %4148 = vmatpush1.bf16.msra.mxu0 0
      %4149 = vmatprep.subr.bf16.mxu0 0
      %4150 = vmatpush1.bf16.msra.mxu0 0
      %4151 = vmatprep.mubr.bf16.mxu0 0
      %4152 = vmatmul.mubr.bf16.gmra.mrb[0].mxu0 %v4053
      %v4153 = vpop.f32.mrb[0].mxu0
      %v4154 = vadd.f32 0.0, %v4153
      %v4155 = vpop.f32.mrb[0].mxu0
      %v4156 = vpop.f32.mrb[0].mxu0
      %v4157 = vpop.f32.mrb[0].mxu0
      %4158 = vdwg.mxu0
      %v4159 = vadd.f32 %v4051, %v4154
      %v4160 = vld [vmem:[#allocation6 + $0x6] sm:$0x1]
      %v4161 = vpack.c.bf16 %v4160, %v4160
      %s4162 = scalar_lea.vmem %s5, 384
      %v4163 = vld [vmem:[%s4162] sm:$0xf]
      %v4164 = vld [vmem:[%s4162 + $0x4] sm:$0xf]
      %v4165 = vld [vmem:[%s4162 + $0x8] sm:$0xf]
      %v4166 = vld [vmem:[%s4162 + $0xc] sm:$0xf]
      %v4167 = vld [vmem:[%s4162 + $0x10] sm:$0xf]
      %v4168 = vld [vmem:[%s4162 + $0x14] sm:$0xf]
      %v4169 = vld [vmem:[%s4162 + $0x18] sm:$0xf]
      %v4170 = vld [vmem:[%s4162 + $0x1c] sm:$0xf]
      %v4171 = vld [vmem:[%s4162 + $0x20] sm:$0xf]
      %v4172 = vld [vmem:[%s4162 + $0x24] sm:$0xf]
      %v4173 = vld [vmem:[%s4162 + $0x28] sm:$0xf]
      %v4174 = vld [vmem:[%s4162 + $0x2c] sm:$0xf]
      %v4175 = vld [vmem:[%s4162 + $0x30] sm:$0xf]
      %v4176 = vld [vmem:[%s4162 + $0x34] sm:$0xf]
      %v4177 = vld [vmem:[%s4162 + $0x38] sm:$0xf]
      %v4178 = vld [vmem:[%s4162 + $0x3c] sm:$0xf]
      %v4195 = vunpack.c.l.b16 %v4163
      %v4196 = vunpack.c.l.b16 %v4164
      %v4197 = vunpack.c.l.b16 %v4165
      %v4198 = vunpack.c.l.b16 %v4166
      %v4199 = vunpack.c.l.b16 %v4167
      %v4200 = vunpack.c.l.b16 %v4168
      %v4201 = vunpack.c.l.b16 %v4169
      %v4202 = vunpack.c.l.b16 %v4170
      %v4203 = vunpack.c.l.b16 %v4171
      %v4204 = vunpack.c.l.b16 %v4172
      %v4205 = vunpack.c.l.b16 %v4173
      %v4206 = vunpack.c.l.b16 %v4174
      %v4207 = vunpack.c.l.b16 %v4175
      %v4208 = vunpack.c.l.b16 %v4176
      %v4209 = vunpack.c.l.b16 %v4177
      %v4210 = vunpack.c.l.b16 %v4178
      %v4211 = vpack.c.b16 %v4196, %v4195
      %v4212 = vpack.c.b16 %v4198, %v4197
      %v4213 = vpack.c.b16 %v4200, %v4199
      %v4214 = vpack.c.b16 %v4202, %v4201
      %v4215 = vpack.c.b16 %v4204, %v4203
      %v4216 = vpack.c.b16 %v4206, %v4205
      %v4217 = vpack.c.b16 %v4208, %v4207
      %v4218 = vpack.c.b16 %v4210, %v4209
      %4227 = vmatprep.subr.bf16.mxu0 0
      %4228 = vmatpush1.bf16.msra.mxu0 %v4211
      %4229 = vmatprep.subr.bf16.mxu0 0
      %4230 = vmatpush1.bf16.msra.mxu0 %v4212
      %4231 = vmatprep.subr.bf16.mxu0 0
      %4232 = vmatpush1.bf16.msra.mxu0 %v4213
      %4233 = vmatprep.subr.bf16.mxu0 0
      %4234 = vmatpush1.bf16.msra.mxu0 %v4214
      %4235 = vmatprep.subr.bf16.mxu0 0
      %4236 = vmatpush1.bf16.msra.mxu0 %v4215
      %4237 = vmatprep.subr.bf16.mxu0 0
      %4238 = vmatpush1.bf16.msra.mxu0 %v4216
      %4239 = vmatprep.subr.bf16.mxu0 0
      %4240 = vmatpush1.bf16.msra.mxu0 %v4217
      %4241 = vmatprep.subr.bf16.mxu0 0
      %4242 = vmatpush1.bf16.msra.mxu0 %v4218
      %4243 = vmatprep.subr.bf16.mxu0 0
      %4244 = vmatpush1.bf16.msra.mxu0 0
      %4245 = vmatprep.subr.bf16.mxu0 0
      %4246 = vmatpush1.bf16.msra.mxu0 0
      %4247 = vmatprep.subr.bf16.mxu0 0
      %4248 = vmatpush1.bf16.msra.mxu0 0
      %4249 = vmatprep.subr.bf16.mxu0 0
      %4250 = vmatpush1.bf16.msra.mxu0 0
      %4251 = vmatprep.subr.bf16.mxu0 0
      %4252 = vmatpush1.bf16.msra.mxu0 0
      %4253 = vmatprep.subr.bf16.mxu0 0
      %4254 = vmatpush1.bf16.msra.mxu0 0
      %4255 = vmatprep.subr.bf16.mxu0 0
      %4256 = vmatpush1.bf16.msra.mxu0 0
      %4257 = vmatprep.subr.bf16.mxu0 0
      %4258 = vmatpush1.bf16.msra.mxu0 0
      %4259 = vmatprep.mubr.bf16.mxu0 0
      %4260 = vmatmul.mubr.bf16.gmra.mrb[0].mxu0 %v4161
      %v4261 = vpop.f32.mrb[0].mxu0
      %v4262 = vadd.f32 0.0, %v4261
      %v4263 = vpop.f32.mrb[0].mxu0
      %v4264 = vpop.f32.mrb[0].mxu0
      %v4265 = vpop.f32.mrb[0].mxu0
      %4266 = vdwg.mxu0
      %v4267 = vadd.f32 %v4159, %v4262
      %v4268 = vld [vmem:[#allocation6 + $0x7] sm:$0x1]
      %v4269 = vpack.c.bf16 %v4268, %v4268
      %s4270 = scalar_lea.vmem %s5, 448
      %v4271 = vld [vmem:[%s4270] sm:$0xf]
      %v4272 = vld [vmem:[%s4270 + $0x4] sm:$0xf]
      %v4273 = vld [vmem:[%s4270 + $0x8] sm:$0xf]
      %v4274 = vld [vmem:[%s4270 + $0xc] sm:$0xf]
      %v4275 = vld [vmem:[%s4270 + $0x10] sm:$0xf]
      %v4276 = vld [vmem:[%s4270 + $0x14] sm:$0xf]
      %v4277 = vld [vmem:[%s4270 + $0x18] sm:$0xf]
      %v4278 = vld [vmem:[%s4270 + $0x1c] sm:$0xf]
      %v4279 = vld [vmem:[%s4270 + $0x20] sm:$0xf]
      %v4280 = vld [vmem:[%s4270 + $0x24] sm:$0xf]
      %v4281 = vld [vmem:[%s4270 + $0x28] sm:$0xf]
      %v4282 = vld [vmem:[%s4270 + $0x2c] sm:$0xf]
      %v4283 = vld [vmem:[%s4270 + $0x30] sm:$0xf]
      %v4284 = vld [vmem:[%s4270 + $0x34] sm:$0xf]
      %v4285 = vld [vmem:[%s4270 + $0x38] sm:$0xf]
      %v4286 = vld [vmem:[%s4270 + $0x3c] sm:$0xf]
      %v4303 = vunpack.c.l.b16 %v4271
      %v4304 = vunpack.c.l.b16 %v4272
      %v4305 = vunpack.c.l.b16 %v4273
      %v4306 = vunpack.c.l.b16 %v4274
      %v4307 = vunpack.c.l.b16 %v4275
      %v4308 = vunpack.c.l.b16 %v4276
      %v4309 = vunpack.c.l.b16 %v4277
      %v4310 = vunpack.c.l.b16 %v4278
      %v4311 = vunpack.c.l.b16 %v4279
      %v4312 = vunpack.c.l.b16 %v4280
      %v4313 = vunpack.c.l.b16 %v4281
      %v4314 = vunpack.c.l.b16 %v4282
      %v4315 = vunpack.c.l.b16 %v4283
      %v4316 = vunpack.c.l.b16 %v4284
      %v4317 = vunpack.c.l.b16 %v4285
      %v4318 = vunpack.c.l.b16 %v4286
      %v4319 = vpack.c.b16 %v4304, %v4303
      %v4320 = vpack.c.b16 %v4306, %v4305
      %v4321 = vpack.c.b16 %v4308, %v4307
      %v4322 = vpack.c.b16 %v4310, %v4309
      %v4323 = vpack.c.b16 %v4312, %v4311
      %v4324 = vpack.c.b16 %v4314, %v4313
      %v4325 = vpack.c.b16 %v4316, %v4315
      %v4326 = vpack.c.b16 %v4318, %v4317
      %4335 = vmatprep.subr.bf16.mxu0 0
      %4336 = vmatpush1.bf16.msra.mxu0 %v4319
      %4337 = vmatprep.subr.bf16.mxu0 0
      %4338 = vmatpush1.bf16.msra.mxu0 %v4320
      %4339 = vmatprep.subr.bf16.mxu0 0
      %4340 = vmatpush1.bf16.msra.mxu0 %v4321
      %4341 = vmatprep.subr.bf16.mxu0 0
      %4342 = vmatpush1.bf16.msra.mxu0 %v4322
      %4343 = vmatprep.subr.bf16.mxu0 0
      %4344 = vmatpush1.bf16.msra.mxu0 %v4323
      %4345 = vmatprep.subr.bf16.mxu0 0
      %4346 = vmatpush1.bf16.msra.mxu0 %v4324
      %4347 = vmatprep.subr.bf16.mxu0 0
      %4348 = vmatpush1.bf16.msra.mxu0 %v4325
      %4349 = vmatprep.subr.bf16.mxu0 0
      %4350 = vmatpush1.bf16.msra.mxu0 %v4326
      %4351 = vmatprep.subr.bf16.mxu0 0
      %4352 = vmatpush1.bf16.msra.mxu0 0
      %4353 = vmatprep.subr.bf16.mxu0 0
      %4354 = vmatpush1.bf16.msra.mxu0 0
      %4355 = vmatprep.subr.bf16.mxu0 0
      %4356 = vmatpush1.bf16.msra.mxu0 0
      %4357 = vmatprep.subr.bf16.mxu0 0
      %4358 = vmatpush1.bf16.msra.mxu0 0
      %4359 = vmatprep.subr.bf16.mxu0 0
      %4360 = vmatpush1.bf16.msra.mxu0 0
      %4361 = vmatprep.subr.bf16.mxu0 0
      %4362 = vmatpush1.bf16.msra.mxu0 0
      %4363 = vmatprep.subr.bf16.mxu0 0
      %4364 = vmatpush1.bf16.msra.mxu0 0
      %4365 = vmatprep.subr.bf16.mxu0 0
      %4366 = vmatpush1.bf16.msra.mxu0 0
      %4367 = vmatprep.mubr.bf16.mxu0 0
      %4368 = vmatmul.mubr.bf16.gmra.mrb[0].mxu0 %v4269
      %v4369 = vpop.f32.mrb[0].mxu0
      %v4370 = vadd.f32 0.0, %v4369
      %v4371 = vpop.f32.mrb[0].mxu0
      %v4372 = vpop.f32.mrb[0].mxu0
      %v4373 = vpop.f32.mrb[0].mxu0
      %4374 = vdwg.mxu0
      %v4375 = vadd.f32 %v4267, %v4370
      %v4376 = vld [vmem:[#allocation6 + $0x8] sm:$0x1]
      %v4377 = vpack.c.bf16 %v4376, %v4376
      %s4378 = scalar_lea.vmem %s5, 512
      %v4379 = vld [vmem:[%s4378] sm:$0xf]
      %v4380 = vld [vmem:[%s4378 + $0x4] sm:$0xf]
      %v4381 = vld [vmem:[%s4378 + $0x8] sm:$0xf]
      %v4382 = vld [vmem:[%s4378 + $0xc] sm:$0xf]
      %v4383 = vld [vmem:[%s4378 + $0x10] sm:$0xf]
      %v4384 = vld [vmem:[%s4378 + $0x14] sm:$0xf]
      %v4385 = vld [vmem:[%s4378 + $0x18] sm:$0xf]
      %v4386 = vld [vmem:[%s4378 + $0x1c] sm:$0xf]
      %v4387 = vld [vmem:[%s4378 + $0x20] sm:$0xf]
      %v4388 = vld [vmem:[%s4378 + $0x24] sm:$0xf]
      %v4389 = vld [vmem:[%s4378 + $0x28] sm:$0xf]
      %v4390 = vld [vmem:[%s4378 + $0x2c] sm:$0xf]
      %v4391 = vld [vmem:[%s4378 + $0x30] sm:$0xf]
      %v4392 = vld [vmem:[%s4378 + $0x34] sm:$0xf]
      %v4393 = vld [vmem:[%s4378 + $0x38] sm:$0xf]
      %v4394 = vld [vmem:[%s4378 + $0x3c] sm:$0xf]
      %v4411 = vunpack.c.l.b16 %v4379
      %v4412 = vunpack.c.l.b16 %v4380
      %v4413 = vunpack.c.l.b16 %v4381
      %v4414 = vunpack.c.l.b16 %v4382
      %v4415 = vunpack.c.l.b16 %v4383
      %v4416 = vunpack.c.l.b16 %v4384
      %v4417 = vunpack.c.l.b16 %v4385
      %v4418 = vunpack.c.l.b16 %v4386
      %v4419 = vunpack.c.l.b16 %v4387
      %v4420 = vunpack.c.l.b16 %v4388
      %v4421 = vunpack.c.l.b16 %v4389
      %v4422 = vunpack.c.l.b16 %v4390
      %v4423 = vunpack.c.l.b16 %v4391
      %v4424 = vunpack.c.l.b16 %v4392
      %v4425 = vunpack.c.l.b16 %v4393
      %v4426 = vunpack.c.l.b16 %v4394
      %v4427 = vpack.c.b16 %v4412, %v4411
      %v4428 = vpack.c.b16 %v4414, %v4413
      %v4429 = vpack.c.b16 %v4416, %v4415
      %v4430 = vpack.c.b16 %v4418, %v4417
      %v4431 = vpack.c.b16 %v4420, %v4419
      %v4432 = vpack.c.b16 %v4422, %v4421
      %v4433 = vpack.c.b16 %v4424, %v4423
      %v4434 = vpack.c.b16 %v4426, %v4425
      %4443 = vmatprep.subr.bf16.mxu0 0
      %4444 = vmatpush1.bf16.msra.mxu0 %v4427
      %4445 = vmatprep.subr.bf16.mxu0 0
      %4446 = vmatpush1.bf16.msra.mxu0 %v4428
      %4447 = vmatprep.subr.bf16.mxu0 0
      %4448 = vmatpush1.bf16.msra.mxu0 %v4429
      %4449 = vmatprep.subr.bf16.mxu0 0
      %4450 = vmatpush1.bf16.msra.mxu0 %v4430
      %4451 = vmatprep.subr.bf16.mxu0 0
      %4452 = vmatpush1.bf16.msra.mxu0 %v4431
      %4453 = vmatprep.subr.bf16.mxu0 0
      %4454 = vmatpush1.bf16.msra.mxu0 %v4432
      %4455 = vmatprep.subr.bf16.mxu0 0
      %4456 = vmatpush1.bf16.msra.mxu0 %v4433
      %4457 = vmatprep.subr.bf16.mxu0 0
      %4458 = vmatpush1.bf16.msra.mxu0 %v4434
      %4459 = vmatprep.subr.bf16.mxu0 0
      %4460 = vmatpush1.bf16.msra.mxu0 0
      %4461 = vmatprep.subr.bf16.mxu0 0
      %4462 = vmatpush1.bf16.msra.mxu0 0
      %4463 = vmatprep.subr.bf16.mxu0 0
      %4464 = vmatpush1.bf16.msra.mxu0 0
      %4465 = vmatprep.subr.bf16.mxu0 0
      %4466 = vmatpush1.bf16.msra.mxu0 0
      %4467 = vmatprep.subr.bf16.mxu0 0
      %4468 = vmatpush1.bf16.msra.mxu0 0
      %4469 = vmatprep.subr.bf16.mxu0 0
      %4470 = vmatpush1.bf16.msra.mxu0 0
      %4471 = vmatprep.subr.bf16.mxu0 0
      %4472 = vmatpush1.bf16.msra.mxu0 0
      %4473 = vmatprep.subr.bf16.mxu0 0
      %4474 = vmatpush1.bf16.msra.mxu0 0
      %4475 = vmatprep.mubr.bf16.mxu0 0
      %4476 = vmatmul.mubr.bf16.gmra.mrb[0].mxu0 %v4377
      %v4477 = vpop.f32.mrb[0].mxu0
      %v4478 = vadd.f32 0.0, %v4477
      %v4479 = vpop.f32.mrb[0].mxu0
      %v4480 = vpop.f32.mrb[0].mxu0
      %v4481 = vpop.f32.mrb[0].mxu0
      %4482 = vdwg.mxu0
      %v4483 = vadd.f32 %v4375, %v4478
      %v4484 = vld [vmem:[#allocation6 + $0x9] sm:$0x1]
      %v4485 = vpack.c.bf16 %v4484, %v4484
      %s4486 = scalar_lea.vmem %s5, 576
      %v4487 = vld [vmem:[%s4486] sm:$0xf]
      %v4488 = vld [vmem:[%s4486 + $0x4] sm:$0xf]
      %v4489 = vld [vmem:[%s4486 + $0x8] sm:$0xf]
      %v4490 = vld [vmem:[%s4486 + $0xc] sm:$0xf]
      %v4491 = vld [vmem:[%s4486 + $0x10] sm:$0xf]
      %v4492 = vld [vmem:[%s4486 + $0x14] sm:$0xf]
      %v4493 = vld [vmem:[%s4486 + $0x18] sm:$0xf]
      %v4494 = vld [vmem:[%s4486 + $0x1c] sm:$0xf]
      %v4495 = vld [vmem:[%s4486 + $0x20] sm:$0xf]
      %v4496 = vld [vmem:[%s4486 + $0x24] sm:$0xf]
      %v4497 = vld [vmem:[%s4486 + $0x28] sm:$0xf]
      %v4498 = vld [vmem:[%s4486 + $0x2c] sm:$0xf]
      %v4499 = vld [vmem:[%s4486 + $0x30] sm:$0xf]
      %v4500 = vld [vmem:[%s4486 + $0x34] sm:$0xf]
      %v4501 = vld [vmem:[%s4486 + $0x38] sm:$0xf]
      %v4502 = vld [vmem:[%s4486 + $0x3c] sm:$0xf]
      %v4519 = vunpack.c.l.b16 %v4487
      %v4520 = vunpack.c.l.b16 %v4488
      %v4521 = vunpack.c.l.b16 %v4489
      %v4522 = vunpack.c.l.b16 %v4490
      %v4523 = vunpack.c.l.b16 %v4491
      %v4524 = vunpack.c.l.b16 %v4492
      %v4525 = vunpack.c.l.b16 %v4493
      %v4526 = vunpack.c.l.b16 %v4494
      %v4527 = vunpack.c.l.b16 %v4495
      %v4528 = vunpack.c.l.b16 %v4496
      %v4529 = vunpack.c.l.b16 %v4497
      %v4530 = vunpack.c.l.b16 %v4498
      %v4531 = vunpack.c.l.b16 %v4499
      %v4532 = vunpack.c.l.b16 %v4500
      %v4533 = vunpack.c.l.b16 %v4501
      %v4534 = vunpack.c.l.b16 %v4502
      %v4535 = vpack.c.b16 %v4520, %v4519
      %v4536 = vpack.c.b16 %v4522, %v4521
      %v4537 = vpack.c.b16 %v4524, %v4523
      %v4538 = vpack.c.b16 %v4526, %v4525
      %v4539 = vpack.c.b16 %v4528, %v4527
      %v4540 = vpack.c.b16 %v4530, %v4529
      %v4541 = vpack.c.b16 %v4532, %v4531
      %v4542 = vpack.c.b16 %v4534, %v4533
      %4551 = vmatprep.subr.bf16.mxu0 0
      %4552 = vmatpush1.bf16.msra.mxu0 %v4535
      %4553 = vmatprep.subr.bf16.mxu0 0
      %4554 = vmatpush1.bf16.msra.mxu0 %v4536
      %4555 = vmatprep.subr.bf16.mxu0 0
      %4556 = vmatpush1.bf16.msra.mxu0 %v4537
      %4557 = vmatprep.subr.bf16.mxu0 0
      %4558 = vmatpush1.bf16.msra.mxu0 %v4538
      %4559 = vmatprep.subr.bf16.mxu0 0
      %4560 = vmatpush1.bf16.msra.mxu0 %v4539
      %4561 = vmatprep.subr.bf16.mxu0 0
      %4562 = vmatpush1.bf16.msra.mxu0 %v4540
      %4563 = vmatprep.subr.bf16.mxu0 0
      %4564 = vmatpush1.bf16.msra.mxu0 %v4541
      %4565 = vmatprep.subr.bf16.mxu0 0
      %4566 = vmatpush1.bf16.msra.mxu0 %v4542
      %4567 = vmatprep.subr.bf16.mxu0 0
      %4568 = vmatpush1.bf16.msra.mxu0 0
      %4569 = vmatprep.subr.bf16.mxu0 0
      %4570 = vmatpush1.bf16.msra.mxu0 0
      %4571 = vmatprep.subr.bf16.mxu0 0
      %4572 = vmatpush1.bf16.msra.mxu0 0
      %4573 = vmatprep.subr.bf16.mxu0 0
      %4574 = vmatpush1.bf16.msra.mxu0 0
      %4575 = vmatprep.subr.bf16.mxu0 0
      %4576 = vmatpush1.bf16.msra.mxu0 0
      %4577 = vmatprep.subr.bf16.mxu0 0
      %4578 = vmatpush1.bf16.msra.mxu0 0
      %4579 = vmatprep.subr.bf16.mxu0 0
      %4580 = vmatpush1.bf16.msra.mxu0 0
      %4581 = vmatprep.subr.bf16.mxu0 0
      %4582 = vmatpush1.bf16.msra.mxu0 0
      %4583 = vmatprep.mubr.bf16.mxu0 0
      %4584 = vmatmul.mubr.bf16.gmra.mrb[0].mxu0 %v4485
      %v4585 = vpop.f32.mrb[0].mxu0
      %v4586 = vadd.f32 0.0, %v4585
      %v4587 = vpop.f32.mrb[0].mxu0
      %v4588 = vpop.f32.mrb[0].mxu0
      %v4589 = vpop.f32.mrb[0].mxu0
      %4590 = vdwg.mxu0
      %v4591 = vadd.f32 %v4483, %v4586
      %v4592 = vld [vmem:[#allocation6 + $0xa] sm:$0x1]
      %v4593 = vpack.c.bf16 %v4592, %v4592
      %s4594 = scalar_lea.vmem %s5, 640
      %v4595 = vld [vmem:[%s4594] sm:$0xf]
      %v4596 = vld [vmem:[%s4594 + $0x4] sm:$0xf]
      %v4597 = vld [vmem:[%s4594 + $0x8] sm:$0xf]
      %v4598 = vld [vmem:[%s4594 + $0xc] sm:$0xf]
      %v4599 = vld [vmem:[%s4594 + $0x10] sm:$0xf]
      %v4600 = vld [vmem:[%s4594 + $0x14] sm:$0xf]
      %v4601 = vld [vmem:[%s4594 + $0x18] sm:$0xf]
      %v4602 = vld [vmem:[%s4594 + $0x1c] sm:$0xf]
      %v4603 = vld [vmem:[%s4594 + $0x20] sm:$0xf]
      %v4604 = vld [vmem:[%s4594 + $0x24] sm:$0xf]
      %v4605 = vld [vmem:[%s4594 + $0x28] sm:$0xf]
      %v4606 = vld [vmem:[%s4594 + $0x2c] sm:$0xf]
      %v4607 = vld [vmem:[%s4594 + $0x30] sm:$0xf]
      %v4608 = vld [vmem:[%s4594 + $0x34] sm:$0xf]
      %v4609 = vld [vmem:[%s4594 + $0x38] sm:$0xf]
      %v4610 = vld [vmem:[%s4594 + $0x3c] sm:$0xf]
      %v4627 = vunpack.c.l.b16 %v4595
      %v4628 = vunpack.c.l.b16 %v4596
      %v4629 = vunpack.c.l.b16 %v4597
      %v4630 = vunpack.c.l.b16 %v4598
      %v4631 = vunpack.c.l.b16 %v4599
      %v4632 = vunpack.c.l.b16 %v4600
      %v4633 = vunpack.c.l.b16 %v4601
      %v4634 = vunpack.c.l.b16 %v4602
      %v4635 = vunpack.c.l.b16 %v4603
      %v4636 = vunpack.c.l.b16 %v4604
      %v4637 = vunpack.c.l.b16 %v4605
      %v4638 = vunpack.c.l.b16 %v4606
      %v4639 = vunpack.c.l.b16 %v4607
      %v4640 = vunpack.c.l.b16 %v4608
      %v4641 = vunpack.c.l.b16 %v4609
      %v4642 = vunpack.c.l.b16 %v4610
      %v4643 = vpack.c.b16 %v4628, %v4627
      %v4644 = vpack.c.b16 %v4630, %v4629
      %v4645 = vpack.c.b16 %v4632, %v4631
      %v4646 = vpack.c.b16 %v4634, %v4633
      %v4647 = vpack.c.b16 %v4636, %v4635
      %v4648 = vpack.c.b16 %v4638, %v4637
      %v4649 = vpack.c.b16 %v4640, %v4639
      %v4650 = vpack.c.b16 %v4642, %v4641
      %4659 = vmatprep.subr.bf16.mxu0 0
      %4660 = vmatpush1.bf16.msra.mxu0 %v4643
      %4661 = vmatprep.subr.bf16.mxu0 0
      %4662 = vmatpush1.bf16.msra.mxu0 %v4644
      %4663 = vmatprep.subr.bf16.mxu0 0
      %4664 = vmatpush1.bf16.msra.mxu0 %v4645
      %4665 = vmatprep.subr.bf16.mxu0 0
      %4666 = vmatpush1.bf16.msra.mxu0 %v4646
      %4667 = vmatprep.subr.bf16.mxu0 0
      %4668 = vmatpush1.bf16.msra.mxu0 %v4647
      %4669 = vmatprep.subr.bf16.mxu0 0
      %4670 = vmatpush1.bf16.msra.mxu0 %v4648
      %4671 = vmatprep.subr.bf16.mxu0 0
      %4672 = vmatpush1.bf16.msra.mxu0 %v4649
      %4673 = vmatprep.subr.bf16.mxu0 0
      %4674 = vmatpush1.bf16.msra.mxu0 %v4650
      %4675 = vmatprep.subr.bf16.mxu0 0
      %4676 = vmatpush1.bf16.msra.mxu0 0
      %4677 = vmatprep.subr.bf16.mxu0 0
      %4678 = vmatpush1.bf16.msra.mxu0 0
      %4679 = vmatprep.subr.bf16.mxu0 0
      %4680 = vmatpush1.bf16.msra.mxu0 0
      %4681 = vmatprep.subr.bf16.mxu0 0
      %4682 = vmatpush1.bf16.msra.mxu0 0
      %4683 = vmatprep.subr.bf16.mxu0 0
      %4684 = vmatpush1.bf16.msra.mxu0 0
      %4685 = vmatprep.subr.bf16.mxu0 0
      %4686 = vmatpush1.bf16.msra.mxu0 0
      %4687 = vmatprep.subr.bf16.mxu0 0
      %4688 = vmatpush1.bf16.msra.mxu0 0
      %4689 = vmatprep.subr.bf16.mxu0 0
      %4690 = vmatpush1.bf16.msra.mxu0 0
      %4691 = vmatprep.mubr.bf16.mxu0 0
      %4692 = vmatmul.mubr.bf16.gmra.mrb[0].mxu0 %v4593
      %v4693 = vpop.f32.mrb[0].mxu0
      %v4694 = vadd.f32 0.0, %v4693
      %v4695 = vpop.f32.mrb[0].mxu0
      %v4696 = vpop.f32.mrb[0].mxu0
      %v4697 = vpop.f32.mrb[0].mxu0
      %4698 = vdwg.mxu0
      %v4699 = vadd.f32 %v4591, %v4694
      %v4700 = vld [vmem:[#allocation6 + $0xb] sm:$0x1]
      %v4701 = vpack.c.bf16 %v4700, %v4700
      %s4702 = scalar_lea.vmem %s5, 704
      %v4703 = vld [vmem:[%s4702] sm:$0xf]
      %v4704 = vld [vmem:[%s4702 + $0x4] sm:$0xf]
      %v4705 = vld [vmem:[%s4702 + $0x8] sm:$0xf]
      %v4706 = vld [vmem:[%s4702 + $0xc] sm:$0xf]
      %v4707 = vld [vmem:[%s4702 + $0x10] sm:$0xf]
      %v4708 = vld [vmem:[%s4702 + $0x14] sm:$0xf]
      %v4709 = vld [vmem:[%s4702 + $0x18] sm:$0xf]
      %v4710 = vld [vmem:[%s4702 + $0x1c] sm:$0xf]
      %v4711 = vld [vmem:[%s4702 + $0x20] sm:$0xf]
      %v4712 = vld [vmem:[%s4702 + $0x24] sm:$0xf]
      %v4713 = vld [vmem:[%s4702 + $0x28] sm:$0xf]
      %v4714 = vld [vmem:[%s4702 + $0x2c] sm:$0xf]
      %v4715 = vld [vmem:[%s4702 + $0x30] sm:$0xf]
      %v4716 = vld [vmem:[%s4702 + $0x34] sm:$0xf]
      %v4717 = vld [vmem:[%s4702 + $0x38] sm:$0xf]
      %v4718 = vld [vmem:[%s4702 + $0x3c] sm:$0xf]
      %v4735 = vunpack.c.l.b16 %v4703
      %v4736 = vunpack.c.l.b16 %v4704
      %v4737 = vunpack.c.l.b16 %v4705
      %v4738 = vunpack.c.l.b16 %v4706
      %v4739 = vunpack.c.l.b16 %v4707
      %v4740 = vunpack.c.l.b16 %v4708
      %v4741 = vunpack.c.l.b16 %v4709
      %v4742 = vunpack.c.l.b16 %v4710
      %v4743 = vunpack.c.l.b16 %v4711
      %v4744 = vunpack.c.l.b16 %v4712
      %v4745 = vunpack.c.l.b16 %v4713
      %v4746 = vunpack.c.l.b16 %v4714
      %v4747 = vunpack.c.l.b16 %v4715
      %v4748 = vunpack.c.l.b16 %v4716
      %v4749 = vunpack.c.l.b16 %v4717
      %v4750 = vunpack.c.l.b16 %v4718
      %v4751 = vpack.c.b16 %v4736, %v4735
      %v4752 = vpack.c.b16 %v4738, %v4737
      %v4753 = vpack.c.b16 %v4740, %v4739
      %v4754 = vpack.c.b16 %v4742, %v4741
      %v4755 = vpack.c.b16 %v4744, %v4743
      %v4756 = vpack.c.b16 %v4746, %v4745
      %v4757 = vpack.c.b16 %v4748, %v4747
      %v4758 = vpack.c.b16 %v4750, %v4749
      %4767 = vmatprep.subr.bf16.mxu0 0
      %4768 = vmatpush1.bf16.msra.mxu0 %v4751
      %4769 = vmatprep.subr.bf16.mxu0 0
      %4770 = vmatpush1.bf16.msra.mxu0 %v4752
      %4771 = vmatprep.subr.bf16.mxu0 0
      %4772 = vmatpush1.bf16.msra.mxu0 %v4753
      %4773 = vmatprep.subr.bf16.mxu0 0
      %4774 = vmatpush1.bf16.msra.mxu0 %v4754
      %4775 = vmatprep.subr.bf16.mxu0 0
      %4776 = vmatpush1.bf16.msra.mxu0 %v4755
      %4777 = vmatprep.subr.bf16.mxu0 0
      %4778 = vmatpush1.bf16.msra.mxu0 %v4756
      %4779 = vmatprep.subr.bf16.mxu0 0
      %4780 = vmatpush1.bf16.msra.mxu0 %v4757
      %4781 = vmatprep.subr.bf16.mxu0 0
      %4782 = vmatpush1.bf16.msra.mxu0 %v4758
      %4783 = vmatprep.subr.bf16.mxu0 0
      %4784 = vmatpush1.bf16.msra.mxu0 0
      %4785 = vmatprep.subr.bf16.mxu0 0
      %4786 = vmatpush1.bf16.msra.mxu0 0
      %4787 = vmatprep.subr.bf16.mxu0 0
      %4788 = vmatpush1.bf16.msra.mxu0 0
      %4789 = vmatprep.subr.bf16.mxu0 0
      %4790 = vmatpush1.bf16.msra.mxu0 0
      %4791 = vmatprep.subr.bf16.mxu0 0
      %4792 = vmatpush1.bf16.msra.mxu0 0
      %4793 = vmatprep.subr.bf16.mxu0 0
      %4794 = vmatpush1.bf16.msra.mxu0 0
      %4795 = vmatprep.subr.bf16.mxu0 0
      %4796 = vmatpush1.bf16.msra.mxu0 0
      %4797 = vmatprep.subr.bf16.mxu0 0
      %4798 = vmatpush1.bf16.msra.mxu0 0
      %4799 = vmatprep.mubr.bf16.mxu0 0
      %4800 = vmatmul.mubr.bf16.gmra.mrb[0].mxu0 %v4701
      %v4801 = vpop.f32.mrb[0].mxu0
      %v4802 = vadd.f32 0.0, %v4801
      %v4803 = vpop.f32.mrb[0].mxu0
      %v4804 = vpop.f32.mrb[0].mxu0
      %v4805 = vpop.f32.mrb[0].mxu0
      %4806 = vdwg.mxu0
      %v4807 = vadd.f32 %v4699, %v4802
      %v4808 = vld [vmem:[#allocation6 + $0xc] sm:$0x1]
      %v4809 = vpack.c.bf16 %v4808, %v4808
      %s4810 = scalar_lea.vmem %s5, 768
      %v4811 = vld [vmem:[%s4810] sm:$0xf]
      %v4812 = vld [vmem:[%s4810 + $0x4] sm:$0xf]
      %v4813 = vld [vmem:[%s4810 + $0x8] sm:$0xf]
      %v4814 = vld [vmem:[%s4810 + $0xc] sm:$0xf]
      %v4815 = vld [vmem:[%s4810 + $0x10] sm:$0xf]
      %v4816 = vld [vmem:[%s4810 + $0x14] sm:$0xf]
      %v4817 = vld [vmem:[%s4810 + $0x18] sm:$0xf]
      %v4818 = vld [vmem:[%s4810 + $0x1c] sm:$0xf]
      %v4819 = vld [vmem:[%s4810 + $0x20] sm:$0xf]
      %v4820 = vld [vmem:[%s4810 + $0x24] sm:$0xf]
      %v4821 = vld [vmem:[%s4810 + $0x28] sm:$0xf]
      %v4822 = vld [vmem:[%s4810 + $0x2c] sm:$0xf]
      %v4823 = vld [vmem:[%s4810 + $0x30] sm:$0xf]
      %v4824 = vld [vmem:[%s4810 + $0x34] sm:$0xf]
      %v4825 = vld [vmem:[%s4810 + $0x38] sm:$0xf]
      %v4826 = vld [vmem:[%s4810 + $0x3c] sm:$0xf]
      %v4843 = vunpack.c.l.b16 %v4811
      %v4844 = vunpack.c.l.b16 %v4812
      %v4845 = vunpack.c.l.b16 %v4813
      %v4846 = vunpack.c.l.b16 %v4814
      %v4847 = vunpack.c.l.b16 %v4815
      %v4848 = vunpack.c.l.b16 %v4816
      %v4849 = vunpack.c.l.b16 %v4817
      %v4850 = vunpack.c.l.b16 %v4818
      %v4851 = vunpack.c.l.b16 %v4819
      %v4852 = vunpack.c.l.b16 %v4820
      %v4853 = vunpack.c.l.b16 %v4821
      %v4854 = vunpack.c.l.b16 %v4822
      %v4855 = vunpack.c.l.b16 %v4823
      %v4856 = vunpack.c.l.b16 %v4824
      %v4857 = vunpack.c.l.b16 %v4825
      %v4858 = vunpack.c.l.b16 %v4826
      %v4859 = vpack.c.b16 %v4844, %v4843
      %v4860 = vpack.c.b16 %v4846, %v4845
      %v4861 = vpack.c.b16 %v4848, %v4847
      %v4862 = vpack.c.b16 %v4850, %v4849
      %v4863 = vpack.c.b16 %v4852, %v4851
      %v4864 = vpack.c.b16 %v4854, %v4853
      %v4865 = vpack.c.b16 %v4856, %v4855
      %v4866 = vpack.c.b16 %v4858, %v4857
      %4875 = vmatprep.subr.bf16.mxu0 0
      %4876 = vmatpush1.bf16.msra.mxu0 %v4859
      %4877 = vmatprep.subr.bf16.mxu0 0
      %4878 = vmatpush1.bf16.msra.mxu0 %v4860
      %4879 = vmatprep.subr.bf16.mxu0 0
      %4880 = vmatpush1.bf16.msra.mxu0 %v4861
      %4881 = vmatprep.subr.bf16.mxu0 0
      %4882 = vmatpush1.bf16.msra.mxu0 %v4862
      %4883 = vmatprep.subr.bf16.mxu0 0
      %4884 = vmatpush1.bf16.msra.mxu0 %v4863
      %4885 = vmatprep.subr.bf16.mxu0 0
      %4886 = vmatpush1.bf16.msra.mxu0 %v4864
      %4887 = vmatprep.subr.bf16.mxu0 0
      %4888 = vmatpush1.bf16.msra.mxu0 %v4865
      %4889 = vmatprep.subr.bf16.mxu0 0
      %4890 = vmatpush1.bf16.msra.mxu0 %v4866
      %4891 = vmatprep.subr.bf16.mxu0 0
      %4892 = vmatpush1.bf16.msra.mxu0 0
      %4893 = vmatprep.subr.bf16.mxu0 0
      %4894 = vmatpush1.bf16.msra.mxu0 0
      %4895 = vmatprep.subr.bf16.mxu0 0
      %4896 = vmatpush1.bf16.msra.mxu0 0
      %4897 = vmatprep.subr.bf16.mxu0 0
      %4898 = vmatpush1.bf16.msra.mxu0 0
      %4899 = vmatprep.subr.bf16.mxu0 0
      %4900 = vmatpush1.bf16.msra.mxu0 0
      %4901 = vmatprep.subr.bf16.mxu0 0
      %4902 = vmatpush1.bf16.msra.mxu0 0
      %4903 = vmatprep.subr.bf16.mxu0 0
      %4904 = vmatpush1.bf16.msra.mxu0 0
      %4905 = vmatprep.subr.bf16.mxu0 0
      %4906 = vmatpush1.bf16.msra.mxu0 0
      %4907 = vmatprep.mubr.bf16.mxu0 0
      %4908 = vmatmul.mubr.bf16.gmra.mrb[0].mxu0 %v4809
      %v4909 = vpop.f32.mrb[0].mxu0
      %v4910 = vadd.f32 0.0, %v4909
      %v4911 = vpop.f32.mrb[0].mxu0
      %v4912 = vpop.f32.mrb[0].mxu0
      %v4913 = vpop.f32.mrb[0].mxu0
      %4914 = vdwg.mxu0
      %v4915 = vadd.f32 %v4807, %v4910
      %v4916 = vld [vmem:[#allocation6 + $0xd] sm:$0x1]
      %v4917 = vpack.c.bf16 %v4916, %v4916
      %s4918 = scalar_lea.vmem %s5, 832
      %v4919 = vld [vmem:[%s4918] sm:$0xf]
      %v4920 = vld [vmem:[%s4918 + $0x4] sm:$0xf]
      %v4921 = vld [vmem:[%s4918 + $0x8] sm:$0xf]
      %v4922 = vld [vmem:[%s4918 + $0xc] sm:$0xf]
      %v4923 = vld [vmem:[%s4918 + $0x10] sm:$0xf]
      %v4924 = vld [vmem:[%s4918 + $0x14] sm:$0xf]
      %v4925 = vld [vmem:[%s4918 + $0x18] sm:$0xf]
      %v4926 = vld [vmem:[%s4918 + $0x1c] sm:$0xf]
      %v4927 = vld [vmem:[%s4918 + $0x20] sm:$0xf]
      %v4928 = vld [vmem:[%s4918 + $0x24] sm:$0xf]
      %v4929 = vld [vmem:[%s4918 + $0x28] sm:$0xf]
      %v4930 = vld [vmem:[%s4918 + $0x2c] sm:$0xf]
      %v4931 = vld [vmem:[%s4918 + $0x30] sm:$0xf]
      %v4932 = vld [vmem:[%s4918 + $0x34] sm:$0xf]
      %v4933 = vld [vmem:[%s4918 + $0x38] sm:$0xf]
      %v4934 = vld [vmem:[%s4918 + $0x3c] sm:$0xf]
      %v4951 = vunpack.c.l.b16 %v4919
      %v4952 = vunpack.c.l.b16 %v4920
      %v4953 = vunpack.c.l.b16 %v4921
      %v4954 = vunpack.c.l.b16 %v4922
      %v4955 = vunpack.c.l.b16 %v4923
      %v4956 = vunpack.c.l.b16 %v4924
      %v4957 = vunpack.c.l.b16 %v4925
      %v4958 = vunpack.c.l.b16 %v4926
      %v4959 = vunpack.c.l.b16 %v4927
      %v4960 = vunpack.c.l.b16 %v4928
      %v4961 = vunpack.c.l.b16 %v4929
      %v4962 = vunpack.c.l.b16 %v4930
      %v4963 = vunpack.c.l.b16 %v4931
      %v4964 = vunpack.c.l.b16 %v4932
      %v4965 = vunpack.c.l.b16 %v4933
      %v4966 = vunpack.c.l.b16 %v4934
      %v4967 = vpack.c.b16 %v4952, %v4951
      %v4968 = vpack.c.b16 %v4954, %v4953
      %v4969 = vpack.c.b16 %v4956, %v4955
      %v4970 = vpack.c.b16 %v4958, %v4957
      %v4971 = vpack.c.b16 %v4960, %v4959
      %v4972 = vpack.c.b16 %v4962, %v4961
      %v4973 = vpack.c.b16 %v4964, %v4963
      %v4974 = vpack.c.b16 %v4966, %v4965
      %4983 = vmatprep.subr.bf16.mxu0 0
      %4984 = vmatpush1.bf16.msra.mxu0 %v4967
      %4985 = vmatprep.subr.bf16.mxu0 0
      %4986 = vmatpush1.bf16.msra.mxu0 %v4968
      %4987 = vmatprep.subr.bf16.mxu0 0
      %4988 = vmatpush1.bf16.msra.mxu0 %v4969
      %4989 = vmatprep.subr.bf16.mxu0 0
      %4990 = vmatpush1.bf16.msra.mxu0 %v4970
      %4991 = vmatprep.subr.bf16.mxu0 0
      %4992 = vmatpush1.bf16.msra.mxu0 %v4971
      %4993 = vmatprep.subr.bf16.mxu0 0
      %4994 = vmatpush1.bf16.msra.mxu0 %v4972
      %4995 = vmatprep.subr.bf16.mxu0 0
      %4996 = vmatpush1.bf16.msra.mxu0 %v4973
      %4997 = vmatprep.subr.bf16.mxu0 0
      %4998 = vmatpush1.bf16.msra.mxu0 %v4974
      %4999 = vmatprep.subr.bf16.mxu0 0
      %5000 = vmatpush1.bf16.msra.mxu0 0
      %5001 = vmatprep.subr.bf16.mxu0 0
      %5002 = vmatpush1.bf16.msra.mxu0 0
      %5003 = vmatprep.subr.bf16.mxu0 0
      %5004 = vmatpush1.bf16.msra.mxu0 0
      %5005 = vmatprep.subr.bf16.mxu0 0
      %5006 = vmatpush1.bf16.msra.mxu0 0
      %5007 = vmatprep.subr.bf16.mxu0 0
      %5008 = vmatpush1.bf16.msra.mxu0 0
      %5009 = vmatprep.subr.bf16.mxu0 0
      %5010 = vmatpush1.bf16.msra.mxu0 0
      %5011 = vmatprep.subr.bf16.mxu0 0
      %5012 = vmatpush1.bf16.msra.mxu0 0
      %5013 = vmatprep.subr.bf16.mxu0 0
      %5014 = vmatpush1.bf16.msra.mxu0 0
      %5015 = vmatprep.mubr.bf16.mxu0 0
      %5016 = vmatmul.mubr.bf16.gmra.mrb[0].mxu0 %v4917
      %v5017 = vpop.f32.mrb[0].mxu0
      %v5018 = vadd.f32 0.0, %v5017
      %v5019 = vpop.f32.mrb[0].mxu0
      %v5020 = vpop.f32.mrb[0].mxu0
      %v5021 = vpop.f32.mrb[0].mxu0
      %5022 = vdwg.mxu0
      %v5023 = vadd.f32 %v4915, %v5018
      %v5024 = vld [vmem:[#allocation6 + $0xe] sm:$0x1]
      %v5025 = vpack.c.bf16 %v5024, %v5024
      %s5026 = scalar_lea.vmem %s5, 896
      %v5027 = vld [vmem:[%s5026] sm:$0xf]
      %v5028 = vld [vmem:[%s5026 + $0x4] sm:$0xf]
      %v5029 = vld [vmem:[%s5026 + $0x8] sm:$0xf]
      %v5030 = vld [vmem:[%s5026 + $0xc] sm:$0xf]
      %v5031 = vld [vmem:[%s5026 + $0x10] sm:$0xf]
      %v5032 = vld [vmem:[%s5026 + $0x14] sm:$0xf]
      %v5033 = vld [vmem:[%s5026 + $0x18] sm:$0xf]
      %v5034 = vld [vmem:[%s5026 + $0x1c] sm:$0xf]
      %v5035 = vld [vmem:[%s5026 + $0x20] sm:$0xf]
      %v5036 = vld [vmem:[%s5026 + $0x24] sm:$0xf]
      %v5037 = vld [vmem:[%s5026 + $0x28] sm:$0xf]
      %v5038 = vld [vmem:[%s5026 + $0x2c] sm:$0xf]
      %v5039 = vld [vmem:[%s5026 + $0x30] sm:$0xf]
      %v5040 = vld [vmem:[%s5026 + $0x34] sm:$0xf]
      %v5041 = vld [vmem:[%s5026 + $0x38] sm:$0xf]
      %v5042 = vld [vmem:[%s5026 + $0x3c] sm:$0xf]
      %v5059 = vunpack.c.l.b16 %v5027
      %v5060 = vunpack.c.l.b16 %v5028
      %v5061 = vunpack.c.l.b16 %v5029
      %v5062 = vunpack.c.l.b16 %v5030
      %v5063 = vunpack.c.l.b16 %v5031
      %v5064 = vunpack.c.l.b16 %v5032
      %v5065 = vunpack.c.l.b16 %v5033
      %v5066 = vunpack.c.l.b16 %v5034
      %v5067 = vunpack.c.l.b16 %v5035
      %v5068 = vunpack.c.l.b16 %v5036
      %v5069 = vunpack.c.l.b16 %v5037
      %v5070 = vunpack.c.l.b16 %v5038
      %v5071 = vunpack.c.l.b16 %v5039
      %v5072 = vunpack.c.l.b16 %v5040
      %v5073 = vunpack.c.l.b16 %v5041
      %v5074 = vunpack.c.l.b16 %v5042
      %v5075 = vpack.c.b16 %v5060, %v5059
      %v5076 = vpack.c.b16 %v5062, %v5061
      %v5077 = vpack.c.b16 %v5064, %v5063
      %v5078 = vpack.c.b16 %v5066, %v5065
      %v5079 = vpack.c.b16 %v5068, %v5067
      %v5080 = vpack.c.b16 %v5070, %v5069
      %v5081 = vpack.c.b16 %v5072, %v5071
      %v5082 = vpack.c.b16 %v5074, %v5073
      %5091 = vmatprep.subr.bf16.mxu0 0
      %5092 = vmatpush1.bf16.msra.mxu0 %v5075
      %5093 = vmatprep.subr.bf16.mxu0 0
      %5094 = vmatpush1.bf16.msra.mxu0 %v5076
      %5095 = vmatprep.subr.bf16.mxu0 0
      %5096 = vmatpush1.bf16.msra.mxu0 %v5077
      %5097 = vmatprep.subr.bf16.mxu0 0
      %5098 = vmatpush1.bf16.msra.mxu0 %v5078
      %5099 = vmatprep.subr.bf16.mxu0 0
      %5100 = vmatpush1.bf16.msra.mxu0 %v5079
      %5101 = vmatprep.subr.bf16.mxu0 0
      %5102 = vmatpush1.bf16.msra.mxu0 %v5080
      %5103 = vmatprep.subr.bf16.mxu0 0
      %5104 = vmatpush1.bf16.msra.mxu0 %v5081
      %5105 = vmatprep.subr.bf16.mxu0 0
      %5106 = vmatpush1.bf16.msra.mxu0 %v5082
      %5107 = vmatprep.subr.bf16.mxu0 0
      %5108 = vmatpush1.bf16.msra.mxu0 0
      %5109 = vmatprep.subr.bf16.mxu0 0
      %5110 = vmatpush1.bf16.msra.mxu0 0
      %5111 = vmatprep.subr.bf16.mxu0 0
      %5112 = vmatpush1.bf16.msra.mxu0 0
      %5113 = vmatprep.subr.bf16.mxu0 0
      %5114 = vmatpush1.bf16.msra.mxu0 0
      %5115 = vmatprep.subr.bf16.mxu0 0
      %5116 = vmatpush1.bf16.msra.mxu0 0
      %5117 = vmatprep.subr.bf16.mxu0 0
      %5118 = vmatpush1.bf16.msra.mxu0 0
      %5119 = vmatprep.subr.bf16.mxu0 0
      %5120 = vmatpush1.bf16.msra.mxu0 0
      %5121 = vmatprep.subr.bf16.mxu0 0
      %5122 = vmatpush1.bf16.msra.mxu0 0
      %5123 = vmatprep.mubr.bf16.mxu0 0
      %5124 = vmatmul.mubr.bf16.gmra.mrb[0].mxu0 %v5025
      %v5125 = vpop.f32.mrb[0].mxu0
      %v5126 = vadd.f32 0.0, %v5125
      %v5127 = vpop.f32.mrb[0].mxu0
      %v5128 = vpop.f32.mrb[0].mxu0
      %v5129 = vpop.f32.mrb[0].mxu0
      %5130 = vdwg.mxu0
      %v5131 = vadd.f32 %v5023, %v5126
      %v5132 = vld [vmem:[#allocation6 + $0xf] sm:$0x1]
      %v5133 = vpack.c.bf16 %v5132, %v5132
      %s5134 = scalar_lea.vmem %s5, 960
      %v5135 = vld [vmem:[%s5134] sm:$0xf]
      %v5136 = vld [vmem:[%s5134 + $0x4] sm:$0xf]
      %v5137 = vld [vmem:[%s5134 + $0x8] sm:$0xf]
      %v5138 = vld [vmem:[%s5134 + $0xc] sm:$0xf]
      %v5139 = vld [vmem:[%s5134 + $0x10] sm:$0xf]
      %v5140 = vld [vmem:[%s5134 + $0x14] sm:$0xf]
      %v5141 = vld [vmem:[%s5134 + $0x18] sm:$0xf]
      %v5142 = vld [vmem:[%s5134 + $0x1c] sm:$0xf]
      %v5143 = vld [vmem:[%s5134 + $0x20] sm:$0xf]
      %v5144 = vld [vmem:[%s5134 + $0x24] sm:$0xf]
      %v5145 = vld [vmem:[%s5134 + $0x28] sm:$0xf]
      %v5146 = vld [vmem:[%s5134 + $0x2c] sm:$0xf]
      %v5147 = vld [vmem:[%s5134 + $0x30] sm:$0xf]
      %v5148 = vld [vmem:[%s5134 + $0x34] sm:$0xf]
      %v5149 = vld [vmem:[%s5134 + $0x38] sm:$0xf]
      %v5150 = vld [vmem:[%s5134 + $0x3c] sm:$0xf]
      %v5167 = vunpack.c.l.b16 %v5135
      %v5168 = vunpack.c.l.b16 %v5136
      %v5169 = vunpack.c.l.b16 %v5137
      %v5170 = vunpack.c.l.b16 %v5138
      %v5171 = vunpack.c.l.b16 %v5139
      %v5172 = vunpack.c.l.b16 %v5140
      %v5173 = vunpack.c.l.b16 %v5141
      %v5174 = vunpack.c.l.b16 %v5142
      %v5175 = vunpack.c.l.b16 %v5143
      %v5176 = vunpack.c.l.b16 %v5144
      %v5177 = vunpack.c.l.b16 %v5145
      %v5178 = vunpack.c.l.b16 %v5146
      %v5179 = vunpack.c.l.b16 %v5147
      %v5180 = vunpack.c.l.b16 %v5148
      %v5181 = vunpack.c.l.b16 %v5149
      %v5182 = vunpack.c.l.b16 %v5150
      %v5183 = vpack.c.b16 %v5168, %v5167
      %v5184 = vpack.c.b16 %v5170, %v5169
      %v5185 = vpack.c.b16 %v5172, %v5171
      %v5186 = vpack.c.b16 %v5174, %v5173
      %v5187 = vpack.c.b16 %v5176, %v5175
      %v5188 = vpack.c.b16 %v5178, %v5177
      %v5189 = vpack.c.b16 %v5180, %v5179
      %v5190 = vpack.c.b16 %v5182, %v5181
      %5199 = vmatprep.subr.bf16.mxu0 0
      %5200 = vmatpush1.bf16.msra.mxu0 %v5183
      %5201 = vmatprep.subr.bf16.mxu0 0
      %5202 = vmatpush1.bf16.msra.mxu0 %v5184
      %5203 = vmatprep.subr.bf16.mxu0 0
      %5204 = vmatpush1.bf16.msra.mxu0 %v5185
      %5205 = vmatprep.subr.bf16.mxu0 0
      %5206 = vmatpush1.bf16.msra.mxu0 %v5186
      %5207 = vmatprep.subr.bf16.mxu0 0
      %5208 = vmatpush1.bf16.msra.mxu0 %v5187
      %5209 = vmatprep.subr.bf16.mxu0 0
      %5210 = vmatpush1.bf16.msra.mxu0 %v5188
      %5211 = vmatprep.subr.bf16.mxu0 0
      %5212 = vmatpush1.bf16.msra.mxu0 %v5189
      %5213 = vmatprep.subr.bf16.mxu0 0
      %5214 = vmatpush1.bf16.msra.mxu0 %v5190
      %5215 = vmatprep.subr.bf16.mxu0 0
      %5216 = vmatpush1.bf16.msra.mxu0 0
      %5217 = vmatprep.subr.bf16.mxu0 0
      %5218 = vmatpush1.bf16.msra.mxu0 0
      %5219 = vmatprep.subr.bf16.mxu0 0
      %5220 = vmatpush1.bf16.msra.mxu0 0
      %5221 = vmatprep.subr.bf16.mxu0 0
      %5222 = vmatpush1.bf16.msra.mxu0 0
      %5223 = vmatprep.subr.bf16.mxu0 0
      %5224 = vmatpush1.bf16.msra.mxu0 0
      %5225 = vmatprep.subr.bf16.mxu0 0
      %5226 = vmatpush1.bf16.msra.mxu0 0
      %5227 = vmatprep.subr.bf16.mxu0 0
      %5228 = vmatpush1.bf16.msra.mxu0 0
      %5229 = vmatprep.subr.bf16.mxu0 0
      %5230 = vmatpush1.bf16.msra.mxu0 0
      %5231 = vmatprep.mubr.bf16.mxu0 0
      %5232 = vmatmul.mubr.bf16.gmra.mrb[0].mxu0 %v5133
      %v5233 = vpop.f32.mrb[0].mxu0
      %v5234 = vadd.f32 0.0, %v5233
      %v5235 = vpop.f32.mrb[0].mxu0
      %v5236 = vpop.f32.mrb[0].mxu0
      %v5237 = vpop.f32.mrb[0].mxu0
      %5238 = vdwg.mxu0
      %v5239 = vadd.f32 %v5131, %v5234
      %v5240 = vld [vmem:[#allocation6 + $0x10] sm:$0x1]
      %v5241 = vpack.c.bf16 %v5240, %v5240
      %s5242 = scalar_lea.vmem %s5, 1024
      %v5243 = vld [vmem:[%s5242] sm:$0xf]
      %v5244 = vld [vmem:[%s5242 + $0x4] sm:$0xf]
      %v5245 = vld [vmem:[%s5242 + $0x8] sm:$0xf]
      %v5246 = vld [vmem:[%s5242 + $0xc] sm:$0xf]
      %v5247 = vld [vmem:[%s5242 + $0x10] sm:$0xf]
      %v5248 = vld [vmem:[%s5242 + $0x14] sm:$0xf]
      %v5249 = vld [vmem:[%s5242 + $0x18] sm:$0xf]
      %v5250 = vld [vmem:[%s5242 + $0x1c] sm:$0xf]
      %v5251 = vld [vmem:[%s5242 + $0x20] sm:$0xf]
      %v5252 = vld [vmem:[%s5242 + $0x24] sm:$0xf]
      %v5253 = vld [vmem:[%s5242 + $0x28] sm:$0xf]
      %v5254 = vld [vmem:[%s5242 + $0x2c] sm:$0xf]
      %v5255 = vld [vmem:[%s5242 + $0x30] sm:$0xf]
      %v5256 = vld [vmem:[%s5242 + $0x34] sm:$0xf]
      %v5257 = vld [vmem:[%s5242 + $0x38] sm:$0xf]
      %v5258 = vld [vmem:[%s5242 + $0x3c] sm:$0xf]
      %v5275 = vunpack.c.l.b16 %v5243
      %v5276 = vunpack.c.l.b16 %v5244
      %v5277 = vunpack.c.l.b16 %v5245
      %v5278 = vunpack.c.l.b16 %v5246
      %v5279 = vunpack.c.l.b16 %v5247
      %v5280 = vunpack.c.l.b16 %v5248
      %v5281 = vunpack.c.l.b16 %v5249
      %v5282 = vunpack.c.l.b16 %v5250
      %v5283 = vunpack.c.l.b16 %v5251
      %v5284 = vunpack.c.l.b16 %v5252
      %v5285 = vunpack.c.l.b16 %v5253
      %v5286 = vunpack.c.l.b16 %v5254
      %v5287 = vunpack.c.l.b16 %v5255
      %v5288 = vunpack.c.l.b16 %v5256
      %v5289 = vunpack.c.l.b16 %v5257
      %v5290 = vunpack.c.l.b16 %v5258
      %v5291 = vpack.c.b16 %v5276, %v5275
      %v5292 = vpack.c.b16 %v5278, %v5277
      %v5293 = vpack.c.b16 %v5280, %v5279
      %v5294 = vpack.c.b16 %v5282, %v5281
      %v5295 = vpack.c.b16 %v5284, %v5283
      %v5296 = vpack.c.b16 %v5286, %v5285
      %v5297 = vpack.c.b16 %v5288, %v5287
      %v5298 = vpack.c.b16 %v5290, %v5289
      %5307 = vmatprep.subr.bf16.mxu0 0
      %5308 = vmatpush1.bf16.msra.mxu0 %v5291
      %5309 = vmatprep.subr.bf16.mxu0 0
      %5310 = vmatpush1.bf16.msra.mxu0 %v5292
      %5311 = vmatprep.subr.bf16.mxu0 0
      %5312 = vmatpush1.bf16.msra.mxu0 %v5293
      %5313 = vmatprep.subr.bf16.mxu0 0
      %5314 = vmatpush1.bf16.msra.mxu0 %v5294
      %5315 = vmatprep.subr.bf16.mxu0 0
      %5316 = vmatpush1.bf16.msra.mxu0 %v5295
      %5317 = vmatprep.subr.bf16.mxu0 0
      %5318 = vmatpush1.bf16.msra.mxu0 %v5296
      %5319 = vmatprep.subr.bf16.mxu0 0
      %5320 = vmatpush1.bf16.msra.mxu0 %v5297
      %5321 = vmatprep.subr.bf16.mxu0 0
      %5322 = vmatpush1.bf16.msra.mxu0 %v5298
      %5323 = vmatprep.subr.bf16.mxu0 0
      %5324 = vmatpush1.bf16.msra.mxu0 0
      %5325 = vmatprep.subr.bf16.mxu0 0
      %5326 = vmatpush1.bf16.msra.mxu0 0
      %5327 = vmatprep.subr.bf16.mxu0 0
      %5328 = vmatpush1.bf16.msra.mxu0 0
      %5329 = vmatprep.subr.bf16.mxu0 0
      %5330 = vmatpush1.bf16.msra.mxu0 0
      %5331 = vmatprep.subr.bf16.mxu0 0
      %5332 = vmatpush1.bf16.msra.mxu0 0
      %5333 = vmatprep.subr.bf16.mxu0 0
      %5334 = vmatpush1.bf16.msra.mxu0 0
      %5335 = vmatprep.subr.bf16.mxu0 0
      %5336 = vmatpush1.bf16.msra.mxu0 0
      %5337 = vmatprep.subr.bf16.mxu0 0
      %5338 = vmatpush1.bf16.msra.mxu0 0
      %5339 = vmatprep.mubr.bf16.mxu0 0
      %5340 = vmatmul.mubr.bf16.gmra.mrb[0].mxu0 %v5241
      %v5341 = vpop.f32.mrb[0].mxu0
      %v5342 = vadd.f32 0.0, %v5341
      %v5343 = vpop.f32.mrb[0].mxu0
      %v5344 = vpop.f32.mrb[0].mxu0
      %v5345 = vpop.f32.mrb[0].mxu0
      %5346 = vdwg.mxu0
      %v5347 = vadd.f32 %v5239, %v5342
      %v5348 = vld [vmem:[#allocation6 + $0x11] sm:$0x1]
      %v5349 = vpack.c.bf16 %v5348, %v5348
      %s5350 = scalar_lea.vmem %s5, 1088
      %v5351 = vld [vmem:[%s5350] sm:$0xf]
      %v5352 = vld [vmem:[%s5350 + $0x4] sm:$0xf]
      %v5353 = vld [vmem:[%s5350 + $0x8] sm:$0xf]
      %v5354 = vld [vmem:[%s5350 + $0xc] sm:$0xf]
      %v5355 = vld [vmem:[%s5350 + $0x10] sm:$0xf]
      %v5356 = vld [vmem:[%s5350 + $0x14] sm:$0xf]
      %v5357 = vld [vmem:[%s5350 + $0x18] sm:$0xf]
      %v5358 = vld [vmem:[%s5350 + $0x1c] sm:$0xf]
      %v5359 = vld [vmem:[%s5350 + $0x20] sm:$0xf]
      %v5360 = vld [vmem:[%s5350 + $0x24] sm:$0xf]
      %v5361 = vld [vmem:[%s5350 + $0x28] sm:$0xf]
      %v5362 = vld [vmem:[%s5350 + $0x2c] sm:$0xf]
      %v5363 = vld [vmem:[%s5350 + $0x30] sm:$0xf]
      %v5364 = vld [vmem:[%s5350 + $0x34] sm:$0xf]
      %v5365 = vld [vmem:[%s5350 + $0x38] sm:$0xf]
      %v5366 = vld [vmem:[%s5350 + $0x3c] sm:$0xf]
      %v5383 = vunpack.c.l.b16 %v5351
      %v5384 = vunpack.c.l.b16 %v5352
      %v5385 = vunpack.c.l.b16 %v5353
      %v5386 = vunpack.c.l.b16 %v5354
      %v5387 = vunpack.c.l.b16 %v5355
      %v5388 = vunpack.c.l.b16 %v5356
      %v5389 = vunpack.c.l.b16 %v5357
      %v5390 = vunpack.c.l.b16 %v5358
      %v5391 = vunpack.c.l.b16 %v5359
      %v5392 = vunpack.c.l.b16 %v5360
      %v5393 = vunpack.c.l.b16 %v5361
      %v5394 = vunpack.c.l.b16 %v5362
      %v5395 = vunpack.c.l.b16 %v5363
      %v5396 = vunpack.c.l.b16 %v5364
      %v5397 = vunpack.c.l.b16 %v5365
      %v5398 = vunpack.c.l.b16 %v5366
      %v5399 = vpack.c.b16 %v5384, %v5383
      %v5400 = vpack.c.b16 %v5386, %v5385
      %v5401 = vpack.c.b16 %v5388, %v5387
      %v5402 = vpack.c.b16 %v5390, %v5389
      %v5403 = vpack.c.b16 %v5392, %v5391
      %v5404 = vpack.c.b16 %v5394, %v5393
      %v5405 = vpack.c.b16 %v5396, %v5395
      %v5406 = vpack.c.b16 %v5398, %v5397
      %5415 = vmatprep.subr.bf16.mxu0 0
      %5416 = vmatpush1.bf16.msra.mxu0 %v5399
      %5417 = vmatprep.subr.bf16.mxu0 0
      %5418 = vmatpush1.bf16.msra.mxu0 %v5400
      %5419 = vmatprep.subr.bf16.mxu0 0
      %5420 = vmatpush1.bf16.msra.mxu0 %v5401
      %5421 = vmatprep.subr.bf16.mxu0 0
      %5422 = vmatpush1.bf16.msra.mxu0 %v5402
      %5423 = vmatprep.subr.bf16.mxu0 0
      %5424 = vmatpush1.bf16.msra.mxu0 %v5403
      %5425 = vmatprep.subr.bf16.mxu0 0
      %5426 = vmatpush1.bf16.msra.mxu0 %v5404
      %5427 = vmatprep.subr.bf16.mxu0 0
      %5428 = vmatpush1.bf16.msra.mxu0 %v5405
      %5429 = vmatprep.subr.bf16.mxu0 0
      %5430 = vmatpush1.bf16.msra.mxu0 %v5406
      %5431 = vmatprep.subr.bf16.mxu0 0
      %5432 = vmatpush1.bf16.msra.mxu0 0
      %5433 = vmatprep.subr.bf16.mxu0 0
      %5434 = vmatpush1.bf16.msra.mxu0 0
      %5435 = vmatprep.subr.bf16.mxu0 0
      %5436 = vmatpush1.bf16.msra.mxu0 0
      %5437 = vmatprep.subr.bf16.mxu0 0
      %5438 = vmatpush1.bf16.msra.mxu0 0
      %5439 = vmatprep.subr.bf16.mxu0 0
      %5440 = vmatpush1.bf16.msra.mxu0 0
      %5441 = vmatprep.subr.bf16.mxu0 0
      %5442 = vmatpush1.bf16.msra.mxu0 0
      %5443 = vmatprep.subr.bf16.mxu0 0
      %5444 = vmatpush1.bf16.msra.mxu0 0
      %5445 = vmatprep.subr.bf16.mxu0 0
      %5446 = vmatpush1.bf16.msra.mxu0 0
      %5447 = vmatprep.mubr.bf16.mxu0 0
      %5448 = vmatmul.mubr.bf16.gmra.mrb[0].mxu0 %v5349
      %v5449 = vpop.f32.mrb[0].mxu0
      %v5450 = vadd.f32 0.0, %v5449
      %v5451 = vpop.f32.mrb[0].mxu0
      %v5452 = vpop.f32.mrb[0].mxu0
      %v5453 = vpop.f32.mrb[0].mxu0
      %5454 = vdwg.mxu0
      %v5455 = vadd.f32 %v5347, %v5450
      %v5456 = vld [vmem:[#allocation6 + $0x12] sm:$0x1]
      %v5457 = vpack.c.bf16 %v5456, %v5456
      %s5458 = scalar_lea.vmem %s5, 1152
      %v5459 = vld [vmem:[%s5458] sm:$0xf]
      %v5460 = vld [vmem:[%s5458 + $0x4] sm:$0xf]
      %v5461 = vld [vmem:[%s5458 + $0x8] sm:$0xf]
      %v5462 = vld [vmem:[%s5458 + $0xc] sm:$0xf]
      %v5463 = vld [vmem:[%s5458 + $0x10] sm:$0xf]
      %v5464 = vld [vmem:[%s5458 + $0x14] sm:$0xf]
      %v5465 = vld [vmem:[%s5458 + $0x18] sm:$0xf]
      %v5466 = vld [vmem:[%s5458 + $0x1c] sm:$0xf]
      %v5467 = vld [vmem:[%s5458 + $0x20] sm:$0xf]
      %v5468 = vld [vmem:[%s5458 + $0x24] sm:$0xf]
      %v5469 = vld [vmem:[%s5458 + $0x28] sm:$0xf]
      %v5470 = vld [vmem:[%s5458 + $0x2c] sm:$0xf]
      %v5471 = vld [vmem:[%s5458 + $0x30] sm:$0xf]
      %v5472 = vld [vmem:[%s5458 + $0x34] sm:$0xf]
      %v5473 = vld [vmem:[%s5458 + $0x38] sm:$0xf]
      %v5474 = vld [vmem:[%s5458 + $0x3c] sm:$0xf]
      %v5491 = vunpack.c.l.b16 %v5459
      %v5492 = vunpack.c.l.b16 %v5460
      %v5493 = vunpack.c.l.b16 %v5461
      %v5494 = vunpack.c.l.b16 %v5462
      %v5495 = vunpack.c.l.b16 %v5463
      %v5496 = vunpack.c.l.b16 %v5464
      %v5497 = vunpack.c.l.b16 %v5465
      %v5498 = vunpack.c.l.b16 %v5466
      %v5499 = vunpack.c.l.b16 %v5467
      %v5500 = vunpack.c.l.b16 %v5468
      %v5501 = vunpack.c.l.b16 %v5469
      %v5502 = vunpack.c.l.b16 %v5470
      %v5503 = vunpack.c.l.b16 %v5471
      %v5504 = vunpack.c.l.b16 %v5472
      %v5505 = vunpack.c.l.b16 %v5473
      %v5506 = vunpack.c.l.b16 %v5474
      %v5507 = vpack.c.b16 %v5492, %v5491
      %v5508 = vpack.c.b16 %v5494, %v5493
      %v5509 = vpack.c.b16 %v5496, %v5495
      %v5510 = vpack.c.b16 %v5498, %v5497
      %v5511 = vpack.c.b16 %v5500, %v5499
      %v5512 = vpack.c.b16 %v5502, %v5501
      %v5513 = vpack.c.b16 %v5504, %v5503
      %v5514 = vpack.c.b16 %v5506, %v5505
      %5523 = vmatprep.subr.bf16.mxu0 0
      %5524 = vmatpush1.bf16.msra.mxu0 %v5507
      %5525 = vmatprep.subr.bf16.mxu0 0
      %5526 = vmatpush1.bf16.msra.mxu0 %v5508
      %5527 = vmatprep.subr.bf16.mxu0 0
      %5528 = vmatpush1.bf16.msra.mxu0 %v5509
      %5529 = vmatprep.subr.bf16.mxu0 0
      %5530 = vmatpush1.bf16.msra.mxu0 %v5510
      %5531 = vmatprep.subr.bf16.mxu0 0
      %5532 = vmatpush1.bf16.msra.mxu0 %v5511
      %5533 = vmatprep.subr.bf16.mxu0 0
      %5534 = vmatpush1.bf16.msra.mxu0 %v5512
      %5535 = vmatprep.subr.bf16.mxu0 0
      %5536 = vmatpush1.bf16.msra.mxu0 %v5513
      %5537 = vmatprep.subr.bf16.mxu0 0
      %5538 = vmatpush1.bf16.msra.mxu0 %v5514
      %5539 = vmatprep.subr.bf16.mxu0 0
      %5540 = vmatpush1.bf16.msra.mxu0 0
      %5541 = vmatprep.subr.bf16.mxu0 0
      %5542 = vmatpush1.bf16.msra.mxu0 0
      %5543 = vmatprep.subr.bf16.mxu0 0
      %5544 = vmatpush1.bf16.msra.mxu0 0
      %5545 = vmatprep.subr.bf16.mxu0 0
      %5546 = vmatpush1.bf16.msra.mxu0 0
      %5547 = vmatprep.subr.bf16.mxu0 0
      %5548 = vmatpush1.bf16.msra.mxu0 0
      %5549 = vmatprep.subr.bf16.mxu0 0
      %5550 = vmatpush1.bf16.msra.mxu0 0
      %5551 = vmatprep.subr.bf16.mxu0 0
      %5552 = vmatpush1.bf16.msra.mxu0 0
      %5553 = vmatprep.subr.bf16.mxu0 0
      %5554 = vmatpush1.bf16.msra.mxu0 0
      %5555 = vmatprep.mubr.bf16.mxu0 0
      %5556 = vmatmul.mubr.bf16.gmra.mrb[0].mxu0 %v5457
      %v5557 = vpop.f32.mrb[0].mxu0
      %v5558 = vadd.f32 0.0, %v5557
      %v5559 = vpop.f32.mrb[0].mxu0
      %v5560 = vpop.f32.mrb[0].mxu0
      %v5561 = vpop.f32.mrb[0].mxu0
      %5562 = vdwg.mxu0
      %v5563 = vadd.f32 %v5455, %v5558
      %v5564 = vld [vmem:[#allocation6 + $0x13] sm:$0x1]
      %v5565 = vpack.c.bf16 %v5564, %v5564
      %s5566 = scalar_lea.vmem %s5, 1216
      %v5567 = vld [vmem:[%s5566] sm:$0xf]
      %v5568 = vld [vmem:[%s5566 + $0x4] sm:$0xf]
      %v5569 = vld [vmem:[%s5566 + $0x8] sm:$0xf]
      %v5570 = vld [vmem:[%s5566 + $0xc] sm:$0xf]
      %v5571 = vld [vmem:[%s5566 + $0x10] sm:$0xf]
      %v5572 = vld [vmem:[%s5566 + $0x14] sm:$0xf]
      %v5573 = vld [vmem:[%s5566 + $0x18] sm:$0xf]
      %v5574 = vld [vmem:[%s5566 + $0x1c] sm:$0xf]
      %v5575 = vld [vmem:[%s5566 + $0x20] sm:$0xf]
      %v5576 = vld [vmem:[%s5566 + $0x24] sm:$0xf]
      %v5577 = vld [vmem:[%s5566 + $0x28] sm:$0xf]
      %v5578 = vld [vmem:[%s5566 + $0x2c] sm:$0xf]
      %v5579 = vld [vmem:[%s5566 + $0x30] sm:$0xf]
      %v5580 = vld [vmem:[%s5566 + $0x34] sm:$0xf]
      %v5581 = vld [vmem:[%s5566 + $0x38] sm:$0xf]
      %v5582 = vld [vmem:[%s5566 + $0x3c] sm:$0xf]
      %v5599 = vunpack.c.l.b16 %v5567
      %v5600 = vunpack.c.l.b16 %v5568
      %v5601 = vunpack.c.l.b16 %v5569
      %v5602 = vunpack.c.l.b16 %v5570
      %v5603 = vunpack.c.l.b16 %v5571
      %v5604 = vunpack.c.l.b16 %v5572
      %v5605 = vunpack.c.l.b16 %v5573
      %v5606 = vunpack.c.l.b16 %v5574
      %v5607 = vunpack.c.l.b16 %v5575
      %v5608 = vunpack.c.l.b16 %v5576
      %v5609 = vunpack.c.l.b16 %v5577
      %v5610 = vunpack.c.l.b16 %v5578
      %v5611 = vunpack.c.l.b16 %v5579
      %v5612 = vunpack.c.l.b16 %v5580
      %v5613 = vunpack.c.l.b16 %v5581
      %v5614 = vunpack.c.l.b16 %v5582
      %v5615 = vpack.c.b16 %v5600, %v5599
      %v5616 = vpack.c.b16 %v5602, %v5601
      %v5617 = vpack.c.b16 %v5604, %v5603
      %v5618 = vpack.c.b16 %v5606, %v5605
      %v5619 = vpack.c.b16 %v5608, %v5607
      %v5620 = vpack.c.b16 %v5610, %v5609
      %v5621 = vpack.c.b16 %v5612, %v5611
      %v5622 = vpack.c.b16 %v5614, %v5613
      %5631 = vmatprep.subr.bf16.mxu0 0
      %5632 = vmatpush1.bf16.msra.mxu0 %v5615
      %5633 = vmatprep.subr.bf16.mxu0 0
      %5634 = vmatpush1.bf16.msra.mxu0 %v5616
      %5635 = vmatprep.subr.bf16.mxu0 0
      %5636 = vmatpush1.bf16.msra.mxu0 %v5617
      %5637 = vmatprep.subr.bf16.mxu0 0
      %5638 = vmatpush1.bf16.msra.mxu0 %v5618
      %5639 = vmatprep.subr.bf16.mxu0 0
      %5640 = vmatpush1.bf16.msra.mxu0 %v5619
      %5641 = vmatprep.subr.bf16.mxu0 0
      %5642 = vmatpush1.bf16.msra.mxu0 %v5620
      %5643 = vmatprep.subr.bf16.mxu0 0
      %5644 = vmatpush1.bf16.msra.mxu0 %v5621
      %5645 = vmatprep.subr.bf16.mxu0 0
      %5646 = vmatpush1.bf16.msra.mxu0 %v5622
      %5647 = vmatprep.subr.bf16.mxu0 0
      %5648 = vmatpush1.bf16.msra.mxu0 0
      %5649 = vmatprep.subr.bf16.mxu0 0
      %5650 = vmatpush1.bf16.msra.mxu0 0
      %5651 = vmatprep.subr.bf16.mxu0 0
      %5652 = vmatpush1.bf16.msra.mxu0 0
      %5653 = vmatprep.subr.bf16.mxu0 0
      %5654 = vmatpush1.bf16.msra.mxu0 0
      %5655 = vmatprep.subr.bf16.mxu0 0
      %5656 = vmatpush1.bf16.msra.mxu0 0
      %5657 = vmatprep.subr.bf16.mxu0 0
      %5658 = vmatpush1.bf16.msra.mxu0 0
      %5659 = vmatprep.subr.bf16.mxu0 0
      %5660 = vmatpush1.bf16.msra.mxu0 0
      %5661 = vmatprep.subr.bf16.mxu0 0
      %5662 = vmatpush1.bf16.msra.mxu0 0
      %5663 = vmatprep.mubr.bf16.mxu0 0
      %5664 = vmatmul.mubr.bf16.gmra.mrb[0].mxu0 %v5565
      %v5665 = vpop.f32.mrb[0].mxu0
      %v5666 = vadd.f32 0.0, %v5665
      %v5667 = vpop.f32.mrb[0].mxu0
      %v5668 = vpop.f32.mrb[0].mxu0
      %v5669 = vpop.f32.mrb[0].mxu0
      %5670 = vdwg.mxu0
      %v5671 = vadd.f32 %v5563, %v5666
      %v5672 = vld [vmem:[#allocation6 + $0x14] sm:$0x1]
      %v5673 = vpack.c.bf16 %v5672, %v5672
      %s5674 = scalar_lea.vmem %s5, 1280
      %v5675 = vld [vmem:[%s5674] sm:$0xf]
      %v5676 = vld [vmem:[%s5674 + $0x4] sm:$0xf]
      %v5677 = vld [vmem:[%s5674 + $0x8] sm:$0xf]
      %v5678 = vld [vmem:[%s5674 + $0xc] sm:$0xf]
      %v5679 = vld [vmem:[%s5674 + $0x10] sm:$0xf]
      %v5680 = vld [vmem:[%s5674 + $0x14] sm:$0xf]
      %v5681 = vld [vmem:[%s5674 + $0x18] sm:$0xf]
      %v5682 = vld [vmem:[%s5674 + $0x1c] sm:$0xf]
      %v5683 = vld [vmem:[%s5674 + $0x20] sm:$0xf]
      %v5684 = vld [vmem:[%s5674 + $0x24] sm:$0xf]
      %v5685 = vld [vmem:[%s5674 + $0x28] sm:$0xf]
      %v5686 = vld [vmem:[%s5674 + $0x2c] sm:$0xf]
      %v5687 = vld [vmem:[%s5674 + $0x30] sm:$0xf]
      %v5688 = vld [vmem:[%s5674 + $0x34] sm:$0xf]
      %v5689 = vld [vmem:[%s5674 + $0x38] sm:$0xf]
      %v5690 = vld [vmem:[%s5674 + $0x3c] sm:$0xf]
      %v5707 = vunpack.c.l.b16 %v5675
      %v5708 = vunpack.c.l.b16 %v5676
      %v5709 = vunpack.c.l.b16 %v5677
      %v5710 = vunpack.c.l.b16 %v5678
      %v5711 = vunpack.c.l.b16 %v5679
      %v5712 = vunpack.c.l.b16 %v5680
      %v5713 = vunpack.c.l.b16 %v5681
      %v5714 = vunpack.c.l.b16 %v5682
      %v5715 = vunpack.c.l.b16 %v5683
      %v5716 = vunpack.c.l.b16 %v5684
      %v5717 = vunpack.c.l.b16 %v5685
      %v5718 = vunpack.c.l.b16 %v5686
      %v5719 = vunpack.c.l.b16 %v5687
      %v5720 = vunpack.c.l.b16 %v5688
      %v5721 = vunpack.c.l.b16 %v5689
      %v5722 = vunpack.c.l.b16 %v5690
      %v5723 = vpack.c.b16 %v5708, %v5707
      %v5724 = vpack.c.b16 %v5710, %v5709
      %v5725 = vpack.c.b16 %v5712, %v5711
      %v5726 = vpack.c.b16 %v5714, %v5713
      %v5727 = vpack.c.b16 %v5716, %v5715
      %v5728 = vpack.c.b16 %v5718, %v5717
      %v5729 = vpack.c.b16 %v5720, %v5719
      %v5730 = vpack.c.b16 %v5722, %v5721
      %5739 = vmatprep.subr.bf16.mxu0 0
      %5740 = vmatpush1.bf16.msra.mxu0 %v5723
      %5741 = vmatprep.subr.bf16.mxu0 0
      %5742 = vmatpush1.bf16.msra.mxu0 %v5724
      %5743 = vmatprep.subr.bf16.mxu0 0
      %5744 = vmatpush1.bf16.msra.mxu0 %v5725
      %5745 = vmatprep.subr.bf16.mxu0 0
      %5746 = vmatpush1.bf16.msra.mxu0 %v5726
      %5747 = vmatprep.subr.bf16.mxu0 0
      %5748 = vmatpush1.bf16.msra.mxu0 %v5727
      %5749 = vmatprep.subr.bf16.mxu0 0
      %5750 = vmatpush1.bf16.msra.mxu0 %v5728
      %5751 = vmatprep.subr.bf16.mxu0 0
      %5752 = vmatpush1.bf16.msra.mxu0 %v5729
      %5753 = vmatprep.subr.bf16.mxu0 0
      %5754 = vmatpush1.bf16.msra.mxu0 %v5730
      %5755 = vmatprep.subr.bf16.mxu0 0
      %5756 = vmatpush1.bf16.msra.mxu0 0
      %5757 = vmatprep.subr.bf16.mxu0 0
      %5758 = vmatpush1.bf16.msra.mxu0 0
      %5759 = vmatprep.subr.bf16.mxu0 0
      %5760 = vmatpush1.bf16.msra.mxu0 0
      %5761 = vmatprep.subr.bf16.mxu0 0
      %5762 = vmatpush1.bf16.msra.mxu0 0
      %5763 = vmatprep.subr.bf16.mxu0 0
      %5764 = vmatpush1.bf16.msra.mxu0 0
      %5765 = vmatprep.subr.bf16.mxu0 0
      %5766 = vmatpush1.bf16.msra.mxu0 0
      %5767 = vmatprep.subr.bf16.mxu0 0
      %5768 = vmatpush1.bf16.msra.mxu0 0
      %5769 = vmatprep.subr.bf16.mxu0 0
      %5770 = vmatpush1.bf16.msra.mxu0 0
      %5771 = vmatprep.mubr.bf16.mxu0 0
      %5772 = vmatmul.mubr.bf16.gmra.mrb[0].mxu0 %v5673
      %v5773 = vpop.f32.mrb[0].mxu0
      %v5774 = vadd.f32 0.0, %v5773
      %v5775 = vpop.f32.mrb[0].mxu0
      %v5776 = vpop.f32.mrb[0].mxu0
      %v5777 = vpop.f32.mrb[0].mxu0
      %5778 = vdwg.mxu0
      %v5779 = vadd.f32 %v5671, %v5774
      %v5780 = vld [vmem:[#allocation6 + $0x15] sm:$0x1]
      %v5781 = vpack.c.bf16 %v5780, %v5780
      %s5782 = scalar_lea.vmem %s5, 1344
      %v5783 = vld [vmem:[%s5782] sm:$0xf]
      %v5784 = vld [vmem:[%s5782 + $0x4] sm:$0xf]
      %v5785 = vld [vmem:[%s5782 + $0x8] sm:$0xf]
      %v5786 = vld [vmem:[%s5782 + $0xc] sm:$0xf]
      %v5787 = vld [vmem:[%s5782 + $0x10] sm:$0xf]
      %v5788 = vld [vmem:[%s5782 + $0x14] sm:$0xf]
      %v5789 = vld [vmem:[%s5782 + $0x18] sm:$0xf]
      %v5790 = vld [vmem:[%s5782 + $0x1c] sm:$0xf]
      %v5791 = vld [vmem:[%s5782 + $0x20] sm:$0xf]
      %v5792 = vld [vmem:[%s5782 + $0x24] sm:$0xf]
      %v5793 = vld [vmem:[%s5782 + $0x28] sm:$0xf]
      %v5794 = vld [vmem:[%s5782 + $0x2c] sm:$0xf]
      %v5795 = vld [vmem:[%s5782 + $0x30] sm:$0xf]
      %v5796 = vld [vmem:[%s5782 + $0x34] sm:$0xf]
      %v5797 = vld [vmem:[%s5782 + $0x38] sm:$0xf]
      %v5798 = vld [vmem:[%s5782 + $0x3c] sm:$0xf]
      %v5815 = vunpack.c.l.b16 %v5783
      %v5816 = vunpack.c.l.b16 %v5784
      %v5817 = vunpack.c.l.b16 %v5785
      %v5818 = vunpack.c.l.b16 %v5786
      %v5819 = vunpack.c.l.b16 %v5787
      %v5820 = vunpack.c.l.b16 %v5788
      %v5821 = vunpack.c.l.b16 %v5789
      %v5822 = vunpack.c.l.b16 %v5790
      %v5823 = vunpack.c.l.b16 %v5791
      %v5824 = vunpack.c.l.b16 %v5792
      %v5825 = vunpack.c.l.b16 %v5793
      %v5826 = vunpack.c.l.b16 %v5794
      %v5827 = vunpack.c.l.b16 %v5795
      %v5828 = vunpack.c.l.b16 %v5796
      %v5829 = vunpack.c.l.b16 %v5797
      %v5830 = vunpack.c.l.b16 %v5798
      %v5831 = vpack.c.b16 %v5816, %v5815
      %v5832 = vpack.c.b16 %v5818, %v5817
      %v5833 = vpack.c.b16 %v5820, %v5819
      %v5834 = vpack.c.b16 %v5822, %v5821
      %v5835 = vpack.c.b16 %v5824, %v5823
      %v5836 = vpack.c.b16 %v5826, %v5825
      %v5837 = vpack.c.b16 %v5828, %v5827
      %v5838 = vpack.c.b16 %v5830, %v5829
      %5847 = vmatprep.subr.bf16.mxu0 0
      %5848 = vmatpush1.bf16.msra.mxu0 %v5831
      %5849 = vmatprep.subr.bf16.mxu0 0
      %5850 = vmatpush1.bf16.msra.mxu0 %v5832
      %5851 = vmatprep.subr.bf16.mxu0 0
      %5852 = vmatpush1.bf16.msra.mxu0 %v5833
      %5853 = vmatprep.subr.bf16.mxu0 0
      %5854 = vmatpush1.bf16.msra.mxu0 %v5834
      %5855 = vmatprep.subr.bf16.mxu0 0
      %5856 = vmatpush1.bf16.msra.mxu0 %v5835
      %5857 = vmatprep.subr.bf16.mxu0 0
      %5858 = vmatpush1.bf16.msra.mxu0 %v5836
      %5859 = vmatprep.subr.bf16.mxu0 0
      %5860 = vmatpush1.bf16.msra.mxu0 %v5837
      %5861 = vmatprep.subr.bf16.mxu0 0
      %5862 = vmatpush1.bf16.msra.mxu0 %v5838
      %5863 = vmatprep.subr.bf16.mxu0 0
      %5864 = vmatpush1.bf16.msra.mxu0 0
      %5865 = vmatprep.subr.bf16.mxu0 0
      %5866 = vmatpush1.bf16.msra.mxu0 0
      %5867 = vmatprep.subr.bf16.mxu0 0
      %5868 = vmatpush1.bf16.msra.mxu0 0
      %5869 = vmatprep.subr.bf16.mxu0 0
      %5870 = vmatpush1.bf16.msra.mxu0 0
      %5871 = vmatprep.subr.bf16.mxu0 0
      %5872 = vmatpush1.bf16.msra.mxu0 0
      %5873 = vmatprep.subr.bf16.mxu0 0
      %5874 = vmatpush1.bf16.msra.mxu0 0
      %5875 = vmatprep.subr.bf16.mxu0 0
      %5876 = vmatpush1.bf16.msra.mxu0 0
      %5877 = vmatprep.subr.bf16.mxu0 0
      %5878 = vmatpush1.bf16.msra.mxu0 0
      %5879 = vmatprep.mubr.bf16.mxu0 0
      %5880 = vmatmul.mubr.bf16.gmra.mrb[0].mxu0 %v5781
      %v5881 = vpop.f32.mrb[0].mxu0
      %v5882 = vadd.f32 0.0, %v5881
      %v5883 = vpop.f32.mrb[0].mxu0
      %v5884 = vpop.f32.mrb[0].mxu0
      %v5885 = vpop.f32.mrb[0].mxu0
      %5886 = vdwg.mxu0
      %v5887 = vadd.f32 %v5779, %v5882
      %v5888 = vld [vmem:[#allocation6 + $0x16] sm:$0x1]
      %v5889 = vpack.c.bf16 %v5888, %v5888
      %s5890 = scalar_lea.vmem %s5, 1408
      %v5891 = vld [vmem:[%s5890] sm:$0xf]
      %v5892 = vld [vmem:[%s5890 + $0x4] sm:$0xf]
      %v5893 = vld [vmem:[%s5890 + $0x8] sm:$0xf]
      %v5894 = vld [vmem:[%s5890 + $0xc] sm:$0xf]
      %v5895 = vld [vmem:[%s5890 + $0x10] sm:$0xf]
      %v5896 = vld [vmem:[%s5890 + $0x14] sm:$0xf]
      %v5897 = vld [vmem:[%s5890 + $0x18] sm:$0xf]
      %v5898 = vld [vmem:[%s5890 + $0x1c] sm:$0xf]
      %v5899 = vld [vmem:[%s5890 + $0x20] sm:$0xf]
      %v5900 = vld [vmem:[%s5890 + $0x24] sm:$0xf]
      %v5901 = vld [vmem:[%s5890 + $0x28] sm:$0xf]
      %v5902 = vld [vmem:[%s5890 + $0x2c] sm:$0xf]
      %v5903 = vld [vmem:[%s5890 + $0x30] sm:$0xf]
      %v5904 = vld [vmem:[%s5890 + $0x34] sm:$0xf]
      %v5905 = vld [vmem:[%s5890 + $0x38] sm:$0xf]
      %v5906 = vld [vmem:[%s5890 + $0x3c] sm:$0xf]
      %v5923 = vunpack.c.l.b16 %v5891
      %v5924 = vunpack.c.l.b16 %v5892
      %v5925 = vunpack.c.l.b16 %v5893
      %v5926 = vunpack.c.l.b16 %v5894
      %v5927 = vunpack.c.l.b16 %v5895
      %v5928 = vunpack.c.l.b16 %v5896
      %v5929 = vunpack.c.l.b16 %v5897
      %v5930 = vunpack.c.l.b16 %v5898
      %v5931 = vunpack.c.l.b16 %v5899
      %v5932 = vunpack.c.l.b16 %v5900
      %v5933 = vunpack.c.l.b16 %v5901
      %v5934 = vunpack.c.l.b16 %v5902
      %v5935 = vunpack.c.l.b16 %v5903
      %v5936 = vunpack.c.l.b16 %v5904
      %v5937 = vunpack.c.l.b16 %v5905
      %v5938 = vunpack.c.l.b16 %v5906
      %v5939 = vpack.c.b16 %v5924, %v5923
      %v5940 = vpack.c.b16 %v5926, %v5925
      %v5941 = vpack.c.b16 %v5928, %v5927
      %v5942 = vpack.c.b16 %v5930, %v5929
      %v5943 = vpack.c.b16 %v5932, %v5931
      %v5944 = vpack.c.b16 %v5934, %v5933
      %v5945 = vpack.c.b16 %v5936, %v5935
      %v5946 = vpack.c.b16 %v5938, %v5937
      %5955 = vmatprep.subr.bf16.mxu0 0
      %5956 = vmatpush1.bf16.msra.mxu0 %v5939
      %5957 = vmatprep.subr.bf16.mxu0 0
      %5958 = vmatpush1.bf16.msra.mxu0 %v5940
      %5959 = vmatprep.subr.bf16.mxu0 0
      %5960 = vmatpush1.bf16.msra.mxu0 %v5941
      %5961 = vmatprep.subr.bf16.mxu0 0
      %5962 = vmatpush1.bf16.msra.mxu0 %v5942
      %5963 = vmatprep.subr.bf16.mxu0 0
      %5964 = vmatpush1.bf16.msra.mxu0 %v5943
      %5965 = vmatprep.subr.bf16.mxu0 0
      %5966 = vmatpush1.bf16.msra.mxu0 %v5944
      %5967 = vmatprep.subr.bf16.mxu0 0
      %5968 = vmatpush1.bf16.msra.mxu0 %v5945
      %5969 = vmatprep.subr.bf16.mxu0 0
      %5970 = vmatpush1.bf16.msra.mxu0 %v5946
      %5971 = vmatprep.subr.bf16.mxu0 0
      %5972 = vmatpush1.bf16.msra.mxu0 0
      %5973 = vmatprep.subr.bf16.mxu0 0
      %5974 = vmatpush1.bf16.msra.mxu0 0
      %5975 = vmatprep.subr.bf16.mxu0 0
      %5976 = vmatpush1.bf16.msra.mxu0 0
      %5977 = vmatprep.subr.bf16.mxu0 0
      %5978 = vmatpush1.bf16.msra.mxu0 0
      %5979 = vmatprep.subr.bf16.mxu0 0
      %5980 = vmatpush1.bf16.msra.mxu0 0
      %5981 = vmatprep.subr.bf16.mxu0 0
      %5982 = vmatpush1.bf16.msra.mxu0 0
      %5983 = vmatprep.subr.bf16.mxu0 0
      %5984 = vmatpush1.bf16.msra.mxu0 0
      %5985 = vmatprep.subr.bf16.mxu0 0
      %5986 = vmatpush1.bf16.msra.mxu0 0
      %5987 = vmatprep.mubr.bf16.mxu0 0
      %5988 = vmatmul.mubr.bf16.gmra.mrb[0].mxu0 %v5889
      %v5989 = vpop.f32.mrb[0].mxu0
      %v5990 = vadd.f32 0.0, %v5989
      %v5991 = vpop.f32.mrb[0].mxu0
      %v5992 = vpop.f32.mrb[0].mxu0
      %v5993 = vpop.f32.mrb[0].mxu0
      %5994 = vdwg.mxu0
      %v5995 = vadd.f32 %v5887, %v5990
      %v5996 = vld [vmem:[#allocation6 + $0x17] sm:$0x1]
      %v5997 = vpack.c.bf16 %v5996, %v5996
      %s5998 = scalar_lea.vmem %s5, 1472
      %v5999 = vld [vmem:[%s5998] sm:$0xf]
      %v6000 = vld [vmem:[%s5998 + $0x4] sm:$0xf]
      %v6001 = vld [vmem:[%s5998 + $0x8] sm:$0xf]
      %v6002 = vld [vmem:[%s5998 + $0xc] sm:$0xf]
      %v6003 = vld [vmem:[%s5998 + $0x10] sm:$0xf]
      %v6004 = vld [vmem:[%s5998 + $0x14] sm:$0xf]
      %v6005 = vld [vmem:[%s5998 + $0x18] sm:$0xf]
      %v6006 = vld [vmem:[%s5998 + $0x1c] sm:$0xf]
      %v6007 = vld [vmem:[%s5998 + $0x20] sm:$0xf]
      %v6008 = vld [vmem:[%s5998 + $0x24] sm:$0xf]
      %v6009 = vld [vmem:[%s5998 + $0x28] sm:$0xf]
      %v6010 = vld [vmem:[%s5998 + $0x2c] sm:$0xf]
      %v6011 = vld [vmem:[%s5998 + $0x30] sm:$0xf]
      %v6012 = vld [vmem:[%s5998 + $0x34] sm:$0xf]
      %v6013 = vld [vmem:[%s5998 + $0x38] sm:$0xf]
      %v6014 = vld [vmem:[%s5998 + $0x3c] sm:$0xf]
      %v6031 = vunpack.c.l.b16 %v5999
      %v6032 = vunpack.c.l.b16 %v6000
      %v6033 = vunpack.c.l.b16 %v6001
      %v6034 = vunpack.c.l.b16 %v6002
      %v6035 = vunpack.c.l.b16 %v6003
      %v6036 = vunpack.c.l.b16 %v6004
      %v6037 = vunpack.c.l.b16 %v6005
      %v6038 = vunpack.c.l.b16 %v6006
      %v6039 = vunpack.c.l.b16 %v6007
      %v6040 = vunpack.c.l.b16 %v6008
      %v6041 = vunpack.c.l.b16 %v6009
      %v6042 = vunpack.c.l.b16 %v6010
      %v6043 = vunpack.c.l.b16 %v6011
      %v6044 = vunpack.c.l.b16 %v6012
      %v6045 = vunpack.c.l.b16 %v6013
      %v6046 = vunpack.c.l.b16 %v6014
      %v6047 = vpack.c.b16 %v6032, %v6031
      %v6048 = vpack.c.b16 %v6034, %v6033
      %v6049 = vpack.c.b16 %v6036, %v6035
      %v6050 = vpack.c.b16 %v6038, %v6037
      %v6051 = vpack.c.b16 %v6040, %v6039
      %v6052 = vpack.c.b16 %v6042, %v6041
      %v6053 = vpack.c.b16 %v6044, %v6043
      %v6054 = vpack.c.b16 %v6046, %v6045
      %6063 = vmatprep.subr.bf16.mxu0 0
      %6064 = vmatpush1.bf16.msra.mxu0 %v6047
      %6065 = vmatprep.subr.bf16.mxu0 0
      %6066 = vmatpush1.bf16.msra.mxu0 %v6048
      %6067 = vmatprep.subr.bf16.mxu0 0
      %6068 = vmatpush1.bf16.msra.mxu0 %v6049
      %6069 = vmatprep.subr.bf16.mxu0 0
      %6070 = vmatpush1.bf16.msra.mxu0 %v6050
      %6071 = vmatprep.subr.bf16.mxu0 0
      %6072 = vmatpush1.bf16.msra.mxu0 %v6051
      %6073 = vmatprep.subr.bf16.mxu0 0
      %6074 = vmatpush1.bf16.msra.mxu0 %v6052
      %6075 = vmatprep.subr.bf16.mxu0 0
      %6076 = vmatpush1.bf16.msra.mxu0 %v6053
      %6077 = vmatprep.subr.bf16.mxu0 0
      %6078 = vmatpush1.bf16.msra.mxu0 %v6054
      %6079 = vmatprep.subr.bf16.mxu0 0
      %6080 = vmatpush1.bf16.msra.mxu0 0
      %6081 = vmatprep.subr.bf16.mxu0 0
      %6082 = vmatpush1.bf16.msra.mxu0 0
      %6083 = vmatprep.subr.bf16.mxu0 0
      %6084 = vmatpush1.bf16.msra.mxu0 0
      %6085 = vmatprep.subr.bf16.mxu0 0
      %6086 = vmatpush1.bf16.msra.mxu0 0
      %6087 = vmatprep.subr.bf16.mxu0 0
      %6088 = vmatpush1.bf16.msra.mxu0 0
      %6089 = vmatprep.subr.bf16.mxu0 0
      %6090 = vmatpush1.bf16.msra.mxu0 0
      %6091 = vmatprep.subr.bf16.mxu0 0
      %6092 = vmatpush1.bf16.msra.mxu0 0
      %6093 = vmatprep.subr.bf16.mxu0 0
      %6094 = vmatpush1.bf16.msra.mxu0 0
      %6095 = vmatprep.mubr.bf16.mxu0 0
      %6096 = vmatmul.mubr.bf16.gmra.mrb[0].mxu0 %v5997
      %v6097 = vpop.f32.mrb[0].mxu0
      %v6098 = vadd.f32 0.0, %v6097
      %v6099 = vpop.f32.mrb[0].mxu0
      %v6100 = vpop.f32.mrb[0].mxu0
      %v6101 = vpop.f32.mrb[0].mxu0
      %6102 = vdwg.mxu0
      %v6103 = vadd.f32 %v5995, %v6098
      %v6104 = vld [vmem:[#allocation6 + $0x18] sm:$0x1]
      %v6105 = vpack.c.bf16 %v6104, %v6104
      %s6106 = scalar_lea.vmem %s5, 1536
      %v6107 = vld [vmem:[%s6106] sm:$0xf]
      %v6108 = vld [vmem:[%s6106 + $0x4] sm:$0xf]
      %v6109 = vld [vmem:[%s6106 + $0x8] sm:$0xf]
      %v6110 = vld [vmem:[%s6106 + $0xc] sm:$0xf]
      %v6111 = vld [vmem:[%s6106 + $0x10] sm:$0xf]
      %v6112 = vld [vmem:[%s6106 + $0x14] sm:$0xf]
      %v6113 = vld [vmem:[%s6106 + $0x18] sm:$0xf]
      %v6114 = vld [vmem:[%s6106 + $0x1c] sm:$0xf]
      %v6115 = vld [vmem:[%s6106 + $0x20] sm:$0xf]
      %v6116 = vld [vmem:[%s6106 + $0x24] sm:$0xf]
      %v6117 = vld [vmem:[%s6106 + $0x28] sm:$0xf]
      %v6118 = vld [vmem:[%s6106 + $0x2c] sm:$0xf]
      %v6119 = vld [vmem:[%s6106 + $0x30] sm:$0xf]
      %v6120 = vld [vmem:[%s6106 + $0x34] sm:$0xf]
      %v6121 = vld [vmem:[%s6106 + $0x38] sm:$0xf]
      %v6122 = vld [vmem:[%s6106 + $0x3c] sm:$0xf]
      %v6139 = vunpack.c.l.b16 %v6107
      %v6140 = vunpack.c.l.b16 %v6108
      %v6141 = vunpack.c.l.b16 %v6109
      %v6142 = vunpack.c.l.b16 %v6110
      %v6143 = vunpack.c.l.b16 %v6111
      %v6144 = vunpack.c.l.b16 %v6112
      %v6145 = vunpack.c.l.b16 %v6113
      %v6146 = vunpack.c.l.b16 %v6114
      %v6147 = vunpack.c.l.b16 %v6115
      %v6148 = vunpack.c.l.b16 %v6116
      %v6149 = vunpack.c.l.b16 %v6117
      %v6150 = vunpack.c.l.b16 %v6118
      %v6151 = vunpack.c.l.b16 %v6119
      %v6152 = vunpack.c.l.b16 %v6120
      %v6153 = vunpack.c.l.b16 %v6121
      %v6154 = vunpack.c.l.b16 %v6122
      %v6155 = vpack.c.b16 %v6140, %v6139
      %v6156 = vpack.c.b16 %v6142, %v6141
      %v6157 = vpack.c.b16 %v6144, %v6143
      %v6158 = vpack.c.b16 %v6146, %v6145
      %v6159 = vpack.c.b16 %v6148, %v6147
      %v6160 = vpack.c.b16 %v6150, %v6149
      %v6161 = vpack.c.b16 %v6152, %v6151
      %v6162 = vpack.c.b16 %v6154, %v6153
      %6171 = vmatprep.subr.bf16.mxu0 0
      %6172 = vmatpush1.bf16.msra.mxu0 %v6155
      %6173 = vmatprep.subr.bf16.mxu0 0
      %6174 = vmatpush1.bf16.msra.mxu0 %v6156
      %6175 = vmatprep.subr.bf16.mxu0 0
      %6176 = vmatpush1.bf16.msra.mxu0 %v6157
      %6177 = vmatprep.subr.bf16.mxu0 0
      %6178 = vmatpush1.bf16.msra.mxu0 %v6158
      %6179 = vmatprep.subr.bf16.mxu0 0
      %6180 = vmatpush1.bf16.msra.mxu0 %v6159
      %6181 = vmatprep.subr.bf16.mxu0 0
      %6182 = vmatpush1.bf16.msra.mxu0 %v6160
      %6183 = vmatprep.subr.bf16.mxu0 0
      %6184 = vmatpush1.bf16.msra.mxu0 %v6161
      %6185 = vmatprep.subr.bf16.mxu0 0
      %6186 = vmatpush1.bf16.msra.mxu0 %v6162
      %6187 = vmatprep.subr.bf16.mxu0 0
      %6188 = vmatpush1.bf16.msra.mxu0 0
      %6189 = vmatprep.subr.bf16.mxu0 0
      %6190 = vmatpush1.bf16.msra.mxu0 0
      %6191 = vmatprep.subr.bf16.mxu0 0
      %6192 = vmatpush1.bf16.msra.mxu0 0
      %6193 = vmatprep.subr.bf16.mxu0 0
      %6194 = vmatpush1.bf16.msra.mxu0 0
      %6195 = vmatprep.subr.bf16.mxu0 0
      %6196 = vmatpush1.bf16.msra.mxu0 0
      %6197 = vmatprep.subr.bf16.mxu0 0
      %6198 = vmatpush1.bf16.msra.mxu0 0
      %6199 = vmatprep.subr.bf16.mxu0 0
      %6200 = vmatpush1.bf16.msra.mxu0 0
      %6201 = vmatprep.subr.bf16.mxu0 0
      %6202 = vmatpush1.bf16.msra.mxu0 0
      %6203 = vmatprep.mubr.bf16.mxu0 0
      %6204 = vmatmul.mubr.bf16.gmra.mrb[0].mxu0 %v6105
      %v6205 = vpop.f32.mrb[0].mxu0
      %v6206 = vadd.f32 0.0, %v6205
      %v6207 = vpop.f32.mrb[0].mxu0
      %v6208 = vpop.f32.mrb[0].mxu0
      %v6209 = vpop.f32.mrb[0].mxu0
      %6210 = vdwg.mxu0
      %v6211 = vadd.f32 %v6103, %v6206
      %v6212 = vmax.f32 %v6211, 0.0
      %v6213 = vpack.c.bf16 %v6212, %v6212
      %v6214 = vld [vmem:[%s7] sm:$0xf]
      %v6215 = vld [vmem:[%s7 + $0x4] sm:$0xf]
      %v6216 = vld [vmem:[%s7 + $0x8] sm:$0xf]
      %v6217 = vld [vmem:[%s7 + $0xc] sm:$0xf]
      %v6218 = vld [vmem:[%s7 + $0x10] sm:$0xf]
      %v6219 = vld [vmem:[%s7 + $0x14] sm:$0xf]
      %v6220 = vld [vmem:[%s7 + $0x18] sm:$0xf]
      %v6221 = vld [vmem:[%s7 + $0x1c] sm:$0xf]
      %v6222 = vld [vmem:[%s7 + $0x20] sm:$0xf]
      %v6223 = vld [vmem:[%s7 + $0x24] sm:$0xf]
      %v6224 = vld [vmem:[%s7 + $0x28] sm:$0xf]
      %v6225 = vld [vmem:[%s7 + $0x2c] sm:$0xf]
      %v6226 = vld [vmem:[%s7 + $0x30] sm:$0xf]
      %v6227 = vld [vmem:[%s7 + $0x34] sm:$0xf]
      %v6228 = vld [vmem:[%s7 + $0x38] sm:$0xf]
      %v6229 = vld [vmem:[%s7 + $0x3c] sm:$0xf]
      %v6230 = vld [vmem:[%s8] sm:$0x1]
      %v6247 = vunpack.c.l.b16 %v6214
      %v6248 = vunpack.c.l.b16 %v6215
      %v6249 = vunpack.c.l.b16 %v6216
      %v6250 = vunpack.c.l.b16 %v6217
      %v6251 = vunpack.c.l.b16 %v6218
      %v6252 = vunpack.c.l.b16 %v6219
      %v6253 = vunpack.c.l.b16 %v6220
      %v6254 = vunpack.c.l.b16 %v6221
      %v6255 = vunpack.c.l.b16 %v6222
      %v6256 = vunpack.c.l.b16 %v6223
      %v6257 = vunpack.c.l.b16 %v6224
      %v6258 = vunpack.c.l.b16 %v6225
      %v6259 = vunpack.c.l.b16 %v6226
      %v6260 = vunpack.c.l.b16 %v6227
      %v6261 = vunpack.c.l.b16 %v6228
      %v6262 = vunpack.c.l.b16 %v6229
      %v6263 = vpack.c.b16 %v6248, %v6247
      %v6264 = vpack.c.b16 %v6250, %v6249
      %v6265 = vpack.c.b16 %v6252, %v6251
      %v6266 = vpack.c.b16 %v6254, %v6253
      %v6267 = vpack.c.b16 %v6256, %v6255
      %v6268 = vpack.c.b16 %v6258, %v6257
      %v6269 = vpack.c.b16 %v6260, %v6259
      %v6270 = vpack.c.b16 %v6262, %v6261
      %6279 = vmatprep.subr.bf16.mxu0 0
      %6280 = vmatpush1.bf16.msra.mxu0 %v6263
      %6281 = vmatprep.subr.bf16.mxu0 0
      %6282 = vmatpush1.bf16.msra.mxu0 %v6264
      %6283 = vmatprep.subr.bf16.mxu0 0
      %6284 = vmatpush1.bf16.msra.mxu0 %v6265
      %6285 = vmatprep.subr.bf16.mxu0 0
      %6286 = vmatpush1.bf16.msra.mxu0 %v6266
      %6287 = vmatprep.subr.bf16.mxu0 0
      %6288 = vmatpush1.bf16.msra.mxu0 %v6267
      %6289 = vmatprep.subr.bf16.mxu0 0
      %6290 = vmatpush1.bf16.msra.mxu0 %v6268
      %6291 = vmatprep.subr.bf16.mxu0 0
      %6292 = vmatpush1.bf16.msra.mxu0 %v6269
      %6293 = vmatprep.subr.bf16.mxu0 0
      %6294 = vmatpush1.bf16.msra.mxu0 %v6270
      %6295 = vmatprep.subr.bf16.mxu0 0
      %6296 = vmatpush1.bf16.msra.mxu0 0
      %6297 = vmatprep.subr.bf16.mxu0 0
      %6298 = vmatpush1.bf16.msra.mxu0 0
      %6299 = vmatprep.subr.bf16.mxu0 0
      %6300 = vmatpush1.bf16.msra.mxu0 0
      %6301 = vmatprep.subr.bf16.mxu0 0
      %6302 = vmatpush1.bf16.msra.mxu0 0
      %6303 = vmatprep.subr.bf16.mxu0 0
      %6304 = vmatpush1.bf16.msra.mxu0 0
      %6305 = vmatprep.subr.bf16.mxu0 0
      %6306 = vmatpush1.bf16.msra.mxu0 0
      %6307 = vmatprep.subr.bf16.mxu0 0
      %6308 = vmatpush1.bf16.msra.mxu0 0
      %6309 = vmatprep.subr.bf16.mxu0 0
      %6310 = vmatpush1.bf16.msra.mxu0 0
      %6311 = vmatprep.mubr.bf16.mxu0 0
      %6312 = vmatmul.mubr.bf16.gmra.mrb[0].mxu0 %v6213
      %v6313 = vpop.f32.mrb[0].mxu0
      %v6314 = vadd.f32 %v6230, %v6313
      %v6315 = vpop.f32.mrb[0].mxu0
      %v6316 = vpop.f32.mrb[0].mxu0
      %v6317 = vpop.f32.mrb[0].mxu0
      %6318 = vdwg.mxu0
      %v6319 = vmax.f32 %v6314, 0.0
      %v6320 = vpack.c.bf16 %v6319, %v6319
      %v6321 = vld [vmem:[%s9] sm:$0xf]
      %v6322 = vld [vmem:[%s9 + $0x4] sm:$0xf]
      %v6323 = vld [vmem:[%s9 + $0x8] sm:$0xf]
      %v6324 = vld [vmem:[%s9 + $0xc] sm:$0xf]
      %v6325 = vld [vmem:[%s9 + $0x10] sm:$0xf]
      %v6326 = vld [vmem:[%s9 + $0x14] sm:$0xf]
      %v6327 = vld [vmem:[%s9 + $0x18] sm:$0xf]
      %v6328 = vld [vmem:[%s9 + $0x1c] sm:$0xf]
      %v6329 = vld [vmem:[%s9 + $0x20] sm:$0xf]
      %v6330 = vld [vmem:[%s9 + $0x24] sm:$0xf]
      %v6331 = vld [vmem:[%s9 + $0x28] sm:$0xf]
      %v6332 = vld [vmem:[%s9 + $0x2c] sm:$0xf]
      %v6333 = vld [vmem:[%s9 + $0x30] sm:$0xf]
      %v6334 = vld [vmem:[%s9 + $0x34] sm:$0xf]
      %v6335 = vld [vmem:[%s9 + $0x38] sm:$0xf]
      %v6336 = vld [vmem:[%s9 + $0x3c] sm:$0xf]
      %v6337 = vld [vmem:[%s10] sm:$0x1]
      %v6354 = vunpack.c.l.b16 %v6321
      %v6355 = vunpack.c.l.b16 %v6322
      %v6356 = vunpack.c.l.b16 %v6323
      %v6357 = vunpack.c.l.b16 %v6324
      %v6358 = vunpack.c.l.b16 %v6325
      %v6359 = vunpack.c.l.b16 %v6326
      %v6360 = vunpack.c.l.b16 %v6327
      %v6361 = vunpack.c.l.b16 %v6328
      %v6362 = vunpack.c.l.b16 %v6329
      %v6363 = vunpack.c.l.b16 %v6330
      %v6364 = vunpack.c.l.b16 %v6331
      %v6365 = vunpack.c.l.b16 %v6332
      %v6366 = vunpack.c.l.b16 %v6333
      %v6367 = vunpack.c.l.b16 %v6334
      %v6368 = vunpack.c.l.b16 %v6335
      %v6369 = vunpack.c.l.b16 %v6336
      %v6370 = vpack.c.b16 %v6355, %v6354
      %v6371 = vpack.c.b16 %v6357, %v6356
      %v6372 = vpack.c.b16 %v6359, %v6358
      %v6373 = vpack.c.b16 %v6361, %v6360
      %v6374 = vpack.c.b16 %v6363, %v6362
      %v6375 = vpack.c.b16 %v6365, %v6364
      %v6376 = vpack.c.b16 %v6367, %v6366
      %v6377 = vpack.c.b16 %v6369, %v6368
      %6386 = vmatprep.subr.bf16.mxu0 0
      %6387 = vmatpush1.bf16.msra.mxu0 %v6370
      %6388 = vmatprep.subr.bf16.mxu0 0
      %6389 = vmatpush1.bf16.msra.mxu0 %v6371
      %6390 = vmatprep.subr.bf16.mxu0 0
      %6391 = vmatpush1.bf16.msra.mxu0 %v6372
      %6392 = vmatprep.subr.bf16.mxu0 0
      %6393 = vmatpush1.bf16.msra.mxu0 %v6373
      %6394 = vmatprep.subr.bf16.mxu0 0
      %6395 = vmatpush1.bf16.msra.mxu0 %v6374
      %6396 = vmatprep.subr.bf16.mxu0 0
      %6397 = vmatpush1.bf16.msra.mxu0 %v6375
      %6398 = vmatprep.subr.bf16.mxu0 0
      %6399 = vmatpush1.bf16.msra.mxu0 %v6376
      %6400 = vmatprep.subr.bf16.mxu0 0
      %6401 = vmatpush1.bf16.msra.mxu0 %v6377
      %6402 = vmatprep.subr.bf16.mxu0 0
      %6403 = vmatpush1.bf16.msra.mxu0 0
      %6404 = vmatprep.subr.bf16.mxu0 0
      %6405 = vmatpush1.bf16.msra.mxu0 0
      %6406 = vmatprep.subr.bf16.mxu0 0
      %6407 = vmatpush1.bf16.msra.mxu0 0
      %6408 = vmatprep.subr.bf16.mxu0 0
      %6409 = vmatpush1.bf16.msra.mxu0 0
      %6410 = vmatprep.subr.bf16.mxu0 0
      %6411 = vmatpush1.bf16.msra.mxu0 0
      %6412 = vmatprep.subr.bf16.mxu0 0
      %6413 = vmatpush1.bf16.msra.mxu0 0
      %6414 = vmatprep.subr.bf16.mxu0 0
      %6415 = vmatpush1.bf16.msra.mxu0 0
      %6416 = vmatprep.subr.bf16.mxu0 0
      %6417 = vmatpush1.bf16.msra.mxu0 0
      %6418 = vmatprep.mubr.bf16.mxu0 0
      %6419 = vmatmul.mubr.bf16.gmra.mrb[0].mxu0 %v6320
      %v6420 = vpop.f32.mrb[0].mxu0
      %v6421 = vadd.f32 %v6337, %v6420
      %v6422 = vpop.f32.mrb[0].mxu0
      %v6423 = vpop.f32.mrb[0].mxu0
      %v6424 = vpop.f32.mrb[0].mxu0
      %6425 = vdwg.mxu0
      %v6426 = vlaneseq
      %v6427 = vshrl.u32 %v6426, 7
      %v6428 = vsub.s32 0, %v6427
      %v6429 = vrot.slane %v6421, %v6428
      %6430 = vst [vmem:[%s384] sm:$0xff] %v6429
      %p6431 = scmp.lt.s32.totalorder %s22, 1
      %s6432 = scalar_select %p6431, %s22, 1
      %s6433 = smul.addr %s6432, 8
      %s6434 = scalar_lea.vmem %s11, %s6433
      // Predicated region
      $region65: #{net_forward.1} parent=63 // pred_check
        %p6435 = pneg %p276
      $region66: #{net_forward.1} parent=63 // pred_check_branch
        %6437 = sbr.rel (%p6435) target = $region68
      $region67: #{net_forward.1} parent=63 // pred_region
        _
      $region68: #{net_forward.1} parent=63 // pred_fallthru
        _
    $region64: #{net_forward.1} parent=5 // pred_fallthru
      _
    %p6438 = scmp.le.s32.totalorder 2, %s17
    // Predicated region
    $region69: #{net_forward.1} parent=5 // pred_check
      %p6439 = pneg %p6438
    $region70: #{net_forward.1} parent=5 // pred_check_branch
      %6441 = sbr.rel (%p6439) target = $region72
    $region71: #{net_forward.1} parent=5 // pred_region
      %s6442 = ssub.s32 %s17, 2
      // Predicated region
      $region73: #{net_forward.1} parent=71 // pred_check
        %p6443 = pneg %p282
      $region74: #{net_forward.1} parent=71 // pred_check_branch
        %6445 = sbr.rel (%p6443) target = $region76
      $region75: #{net_forward.1} parent=71 // pred_region
        %p6446 = scmp.lt.s32.totalorder %s23, 1
        %s6447 = scalar_select %p6446, %s23, 1
        %s6448 = smul.addr %s6447, 8
        %s6449 = scalar_lea.vmem %s11, %s6448
      $region76: #{net_forward.1} parent=71 // pred_fallthru
        _
    $region72: #{net_forward.1} parent=5 // pred_fallthru
      _
  $region6: #{net_forward.1} parent=0 // loop_footer
    %s21 = sadd.s32 1, %s17
  $region7: #{net_forward.1} parent=0 // loop_footer_branch
    %16 = sbr.rel target = $region3
  $region8: #{net_forward.1} parent=0 // loop_exit
    _

</llo_original>
